<compile_context>
chip_gen: v7x
topology: tpu7x:2x2x1
jax: 0.10.0
libtpu: 0.0.40
codegen_flags: <defaults>
</compile_context>

<pallas_src>
import numpy as np

import jax
import jax.numpy as jnp
from jax.experimental import pallas as pl
from jax.experimental.pallas import tpu as pltpu


_LAYERS = ("a1", "a2", "a3", "b1", "b2", "b3", "c1", "c2", "c3", "d1", "d2", "d3")

# (kernel_size, stride, padding) per conv layer -- mirrors the PyTorch module.
_CONV_CFG = {
    "a1": (3, 1, 1), "a2": (3, 1, 1), "a3": (3, 2, 0),
    "b1": (3, 1, 1), "b2": (3, 1, 1), "b3": (3, 2, 0),
    "c1": (2, 1, 1), "c2": (2, 1, 1), "c3": (2, 2, 0),
    "d1": (1, 1, 0), "d2": (1, 1, 0), "d3": (1, 1, 0),
}

# (Cout, Cin, kh, kw) per conv layer.
_CONV_SHAPES = {
    "a1": (16, 5, 3, 3), "a2": (16, 16, 3, 3), "a3": (32, 16, 3, 3),
    "b1": (32, 32, 3, 3), "b2": (32, 32, 3, 3), "b3": (64, 32, 3, 3),
    "c1": (64, 64, 2, 2), "c2": (64, 64, 2, 2), "c3": (128, 64, 2, 2),
    "d1": (128, 128, 1, 1), "d2": (128, 128, 1, 1), "d3": (128, 128, 1, 1),
}

_C = 128  # channel / output lane width


def _pad8(m):
    return ((m + 7) // 8) * 8


def _vmem_spec():
    return pl.BlockSpec(memory_space=pltpu.MemorySpace.VMEM)


# ---------------------------------------------------------------------------
# Static plan: per-layer formulation + compile-time offsets into packed blobs.
# ---------------------------------------------------------------------------
def _build_plan(n, h0, w0, c0):
    layers = []
    h, w, c = h0, w0, c0
    wa_rows = wb_rows = s_rows = 0
    mask_col = 0
    for li, name in enumerate(_LAYERS):
        k, s, p = _CONV_CFG[name]
        cout, cin, kh, kw = _CONV_SHAPES[name]
        assert cin == c and kh == k and kw == k
        ho = (h + 2 * p - k) // s + 1
        wo = (w + 2 * p - k) // s + 1
        rp_in = _pad8(n * h * w)
        rv_out, rp_out = n * ho * wo, _pad8(n * ho * wo)
        assert rp_in <= _C and rp_out <= _C, "row counts > 128 need a row grid"
        meta = dict(name=name, k=k, cin=cin, cout=cout, bias_row=li,
                    rp_in=rp_in, rp_out=rp_out, rv_out=rv_out, rv_col=None)
        if k == 1 and s == 1 and p == 0:
            meta["kind"] = "pw"                      # 1x1 conv: plain matmul
            meta["wb_off"], wb_rows = wb_rows, wb_rows + _C
        elif s == 1 and 2 * p == k - 1:
            meta["kind"] = "roll"                    # same-size conv: shift+mask
            assert rp_in == rp_out
            meta["kdim"] = max(16, _pad8(cin))       # bf16 sublane tile = 16
            meta["wa_off"], wa_rows = wa_rows, wa_rows + meta["kdim"]
            meta["mask_col"], mask_col = mask_col, mask_col + k * k
            meta["deltas"] = [(ti - p) * w + (tj - p)
                              for ti in range(k) for tj in range(k)]
            meta["hw"] = (h, w)
        else:
            meta["kind"] = "gather"                  # strided / size-changing
            meta["wb_off"], wb_rows = wb_rows, wb_rows + k * k * _C
            meta["s_off"], s_rows = s_rows, s_rows + k * k * rp_out
            meta["geom"] = (h, w, ho, wo, s, p)
        layers.append(meta)
        h, w, c = ho, wo, cout
    assert (h, w, c) == (1, 1, _C), "net must collapse to (1,1,128) for view(-1,128)"

    # Row-validity columns: zero out relu(bias) garbage on padded rows.
    rv_col = mask_col
    for meta in layers:
        if meta["rp_out"] > meta["rv_out"]:
            meta["rv_col"], rv_col = rv_col, rv_col + 1
    assert rv_col <= _C

    wa_lanes = max([m["k"] * m["k"] * _C for m in layers if m["kind"] == "roll"] + [_C])
    mask_rows = max([_pad8(n * h0 * w0)] + [m["rp_out"] for m in layers])
    return dict(n=n, layers=layers, n_layers=len(layers),
                rows0=_pad8(n * h0 * w0),
                wa_shape=(max(wa_rows, 16), wa_lanes),
                wb_shape=(max(wb_rows, _C), _C),
                s_shape=(max(s_rows, 8), _C),
                mask_shape=(mask_rows, _C))


# ---------------------------------------------------------------------------
# Host-side, one-time operator construction (parameter independent).
# ---------------------------------------------------------------------------
def _build_operators(plan):
    n = plan["n"]
    mask = np.zeros(plan["mask_shape"], np.float32)
    sblob = np.zeros(plan["s_shape"], np.float32)
    for meta in plan["layers"]:
        if meta["kind"] == "roll":
            h, w = meta["hw"]
            k = meta["k"]
            p = (k - 1) // 2
            for t in range(k * k):
                dy, dx = t // k - p, t % k - p
                col = meta["mask_col"] + t
                for r in range(n * h * w):
                    y, x = (r % (h * w)) // w, r % w
                    if 0 <= y + dy < h and 0 <= x + dx < w:
                        mask[r, col] = 1.0
        elif meta["kind"] == "gather":
            h, w, ho, wo, s, p = meta["geom"]
            k, rp_out = meta["k"], meta["rp_out"]
            for b in range(n):
                for oy in range(ho):
                    for ox in range(wo):
                        r = b * ho * wo + oy * wo + ox
                        for ti in range(k):
                            for tj in range(k):
                                iy, ix = s * oy + ti - p, s * ox + tj - p
                                if 0 <= iy < h and 0 <= ix < w:
                                    row = meta["s_off"] + (ti * k + tj) * rp_out + r
                                    sblob[row, b * h * w + iy * w + ix] = 1.0
        if meta["rv_col"] is not None:
            mask[:meta["rv_out"], meta["rv_col"]] = 1.0
    return jnp.asarray(sblob, jnp.bfloat16), jnp.asarray(mask, jnp.float32)


# ---------------------------------------------------------------------------
# Host-side, one-time weight packing (NOT on the per-step path).
# ---------------------------------------------------------------------------
def _pack_params(plan, params):
    layers = plan["layers"]
    wa = np.zeros(plan["wa_shape"], np.float32)     # roll layers: (Cin_tight, k2*128)
    wb = np.zeros(plan["wb_shape"], np.float32)     # gather/1x1:  (k2*128, 128)
    misc = np.zeros((plan["n_layers"] + 2, _C), np.float32)
    for meta in layers:
        wgt = np.asarray(jax.device_get(params[meta["name"]][0]), np.float32)
        b = np.asarray(jax.device_get(params[meta["name"]][1]), np.float32)
        cout, cin, k, _ = wgt.shape
        misc[meta["bias_row"], :cout] = b
        if meta["kind"] == "roll":
            blk = np.transpose(wgt, (1, 2, 3, 0)).reshape(cin, k * k, cout)
            off = meta["wa_off"]
            for t in range(k * k):
                wa[off:off + cin, t * _C:t * _C + cout] = blk[:, t, :]
        else:
            blk = np.transpose(wgt, (2, 3, 1, 0)).reshape(k * k, cin, cout)
            off = meta["wb_off"]
            for t in range(k * k):
                wb[off + t * _C:off + t * _C + cin, :cout] = blk[t]
    wl, bl = params["last"]
    misc[plan["n_layers"], :] = np.asarray(jax.device_get(wl), np.float32).reshape(-1)
    misc[plan["n_layers"] + 1, 0] = float(np.asarray(jax.device_get(bl)).reshape(-1)[0])
    return dict(wa=jnp.asarray(wa, jnp.bfloat16),
                wb=jnp.asarray(wb, jnp.bfloat16),
                misc=jnp.asarray(misc, jnp.float32))


# ---------------------------------------------------------------------------
# Row-shift helper: out[r, :] = v[(r + delta) % rows, :].
# Prefers a single pltpu.roll (XLU sublane rotate); a tiny build-time probe
# pins its shift-sign convention; falls back to slice+concat if unavailable.
# ---------------------------------------------------------------------------
def _make_row_shift():
    try:
        def probe(x_ref, o_ref):
            o_ref[...] = pltpu.roll(x_ref[...], 1, 0)

        xp = jax.lax.broadcasted_iota(jnp.float32, (8, _C), 0)
        yp = pl.pallas_call(
            probe,
            out_shape=jax.ShapeDtypeStruct((8, _C), jnp.float32),
            in_specs=[_vmem_spec()],
            out_specs=_vmem_spec())(xp)
        v = float(yp[1, 0])
        if v == 0.0:      # jnp.roll convention: out[i] = in[i - shift]
            sign = 1
        elif v == 2.0:    # inverse convention:  out[i] = in[i + shift]
            sign = -1
        else:
            raise RuntimeError("unrecognized pltpu.roll convention")

        def shift_rows(val, delta):
            d = (-sign * delta) % val.shape[0]
            return pltpu.roll(val, d, 0) if d else val

    except Exception:
        def shift_rows(val, delta):   # slower but exact fallback
            d = delta % val.shape[0]
            return jnp.concatenate([val[d:], val[:d]], axis=0) if d else val

    return shift_rows


# ---------------------------------------------------------------------------
# Fused forward builder.
# ---------------------------------------------------------------------------
def make_forward(n, h, w, cin):
    """Returns (pack_fn, jitted forward) for a fixed input shape (n, cin, h, w)."""
    plan = _build_plan(n, h, w, cin)
    sblob, maskblob = _build_operators(plan)
    shift_rows = _make_row_shift()
    layers = plan["layers"]
    nl = plan["n_layers"]
    rows0 = plan["rows0"]

    def kernel(x_ref, wa_ref, wb_ref, s_ref, m_ref, misc_ref, o_ref):
        x = x_ref[...]                                        # (rows0, 128) bf16
        for meta in layers:                                   # static unroll
            kind = meta["kind"]
            rp = meta["rp_out"]
            if kind == "roll":
                k2 = meta["k"] * meta["k"]
                kd = meta["kdim"]
                # Tight-stored weights; zero-pad contraction dim inside VMEM.
                w_t = wa_ref[meta["wa_off"]:meta["wa_off"] + kd, :k2 * _C]
                if kd < _C:
                    w_full = jnp.concatenate(
                        [w_t, jnp.zeros((_C - kd, k2 * _C), jnp.bfloat16)], axis=0)
                else:
                    w_full = w_t
                # ONE MXU matmul for all k^2 taps: (rp,128) @ (128, k2*128).
                xw = jnp.dot(x, w_full, preferred_element_type=jnp.float32)
                acc = jnp.zeros((rp, _C), jnp.float32)
                for t in range(k2):
                    blk = shift_rows(xw[:, t * _C:(t + 1) * _C], meta["deltas"][t])
                    mt = m_ref[:rp, meta["mask_col"] + t:meta["mask_col"] + t + 1]
                    acc = acc + blk * mt
            elif kind == "gather":
                k2 = meta["k"] * meta["k"]
                rpi = meta["rp_in"]
                soff = meta["s_off"]
                parts = []
                for t in range(k2):       # tiny exact 0/1 gathers (bf16-safe)
                    st = s_ref[soff + t * rp:soff + (t + 1) * rp, :rpi]
                    parts.append(jnp.dot(st, x, preferred_element_type=jnp.float32))
                patch = jnp.concatenate(parts, axis=-1).astype(jnp.bfloat16)
                w_f = wb_ref[meta["wb_off"]:meta["wb_off"] + k2 * _C, :]
                # ONE fused weight matmul over all taps (K = k2*128).
                acc = jnp.dot(patch, w_f, preferred_element_type=jnp.float32)
            else:                                             # 1x1 conv
                w_f = wb_ref[meta["wb_off"]:meta["wb_off"] + _C, :]
                acc = jnp.dot(x, w_f, preferred_element_type=jnp.float32)

            bias = misc_ref[meta["bias_row"]:meta["bias_row"] + 1, :]
            y = jnp.maximum(acc + bias, 0.0)                  # bias + ReLU in f32
            if meta["rv_col"] is not None:                    # zero padded rows
                y = y * m_ref[:rp, meta["rv_col"]:meta["rv_col"] + 1]
            x = y.astype(jnp.bfloat16)

        # Final Linear(128 -> 1) + tanh: VPU multiply + lane reduction.
        wl = misc_ref[nl:nl + 1, :]                           # (1, 128) f32
        bl = misc_ref[nl + 1:nl + 2, 0:1]                     # (1, 1)   f32
        logits = jnp.sum(x.astype(jnp.float32) * wl, axis=-1, keepdims=True) + bl
        o_ref[...] = jnp.tanh(logits[:o_ref.shape[0], :])

    call = pl.pallas_call(
        kernel,
        out_shape=jax.ShapeDtypeStruct((n, 1), jnp.float32),
        in_specs=[_vmem_spec()] * 6,
        out_specs=_vmem_spec(),
    )

    @jax.jit
    def forward(packed, x_nchw):
        # NCHW -> flattened NHWC rows, channels zero-padded to 128 lanes, bf16.
        x2d = jnp.transpose(x_nchw.astype(jnp.float32), (0, 2, 3, 1))
        x2d = x2d.reshape(n * h * w, cin)
        x2d = jnp.pad(x2d, ((0, rows0 - n * h * w), (0, _C - cin)))
        return call(x2d.astype(jnp.bfloat16), packed["wa"], packed["wb"],
                    sblob, maskblob, packed["misc"])

    return (lambda params: _pack_params(plan, params)), forward


# ---------------------------------------------------------------------------
# Parameter init (PyTorch default) + pure-XLA f32 reference for cross-check.
# ---------------------------------------------------------------------------
def _init_conv(key, cout, cin, kh, kw):
    k1, k2 = jax.random.split(key)
    bound = 1.0 / float(np.sqrt(cin * kh * kw))
    wgt = jax.random.uniform(k1, (cout, cin, kh, kw), jnp.float32, -bound, bound)
    b = jax.random.uniform(k2, (cout,), jnp.float32, -bound, bound)
    return wgt, b


def _init_linear(key, out_f, in_f):
    k1, k2 = jax.random.split(key)
    bound = 1.0 / float(np.sqrt(in_f))
    wgt = jax.random.uniform(k1, (out_f, in_f), jnp.float32, -bound, bound)
    b = jax.random.uniform(k2, (out_f,), jnp.float32, -bound, bound)
    return wgt, b


def init_params(key):
    params = {}
    keys = jax.random.split(key, len(_LAYERS) + 1)
    for k, name in zip(keys[:-1], _LAYERS):
        params[name] = _init_conv(k, *_CONV_SHAPES[name])
    params["last"] = _init_linear(keys[-1], 1, 128)
    return params


@jax.jit
def reference_forward(params, x_nchw):
    x = x_nchw.astype(jnp.float32)
    for name in _LAYERS:
        wgt, b = params[name]
        k, s, p = _CONV_CFG[name]
        x = jax.lax.conv_general_dilated(
            x, wgt, window_strides=(s, s), padding=[(p, p), (p, p)],
            dimension_numbers=("NCHW", "OIHW", "NCHW"),
            precision=jax.lax.Precision.HIGHEST)
        x = jnp.maximum(x + b.reshape(1, -1, 1, 1), 0.0)
    x = x.reshape(-1, 128)
    wl, bl = params["last"]
    y = jnp.dot(x, wl.T, precision=jax.lax.Precision.HIGHEST) + bl
    return jnp.tanh(y)


if __name__ == "__main__":
    key = jax.random.PRNGKey(0)
    k_param, k_input = jax.random.split(key)
    params = init_params(k_param)

    # Input 8x8 so the net collapses to 1x1 spatial before view(-1, 128).
    N, C, H, W = 2, 5, 8, 8
    x = jax.random.normal(k_input, (N, C, H, W), dtype=jnp.float32)

    pack, forward = make_forward(N, H, W, C)   # one-time plan/operator build
    packed = pack(params)                      # one-time weight packing

    y = forward(packed, x)
    jax.block_until_ready(y)
    assert y.shape == (N, 1)
    assert bool(jnp.all(jnp.abs(y) <= 1.0))    # tanh range sanity check

    # Cross-check the fused bf16 kernel against a pure-XLA f32 reference.
    y_ref = reference_forward(params, x)
    np.testing.assert_allclose(np.asarray(y), np.asarray(y_ref),
                               rtol=0.1, atol=0.02)

    print("KERNEL_OK")
</pallas_src>

<mosaic_0001>
module attributes {stable_mosaic.version = 11 : i64} {
  func.func @probe(%arg0: memref<8x128xf32, #tpu.memory_space<vmem>>, %arg1: memref<8x128xf32, #tpu.memory_space<vmem>>) attributes {dimension_semantics = [], scalar_prefetch = 0 : i64, scratch_operands = 0 : i64, tpu.core_type = #tpu.core_type<tc>} {
    %c0 = arith.constant 0 : index
    %c0_0 = arith.constant 0 : index
    %0 = vector.load %arg0[%c0, %c0_0] : memref<8x128xf32, #tpu.memory_space<vmem>>, vector<8x128xf32>
    %c1_i32 = arith.constant 1 : i32
    %1 = tpu.dynamic_rotate %0 by %c1_i32 dim 0 : vector<8x128xf32>, i32 -> vector<8x128xf32>
    %c0_1 = arith.constant 0 : index
    %c0_2 = arith.constant 0 : index
    %2 = vector.load %arg1[%c0_1, %c0_2] : memref<8x128xf32, #tpu.memory_space<vmem>>, vector<8x128xf32>
    tpu.vector_store %arg1[%c0_1, %c0_2], %1 {strides = array<i32>} : memref<8x128xf32, #tpu.memory_space<vmem>>, vector<8x128xf32>,
    return
  }
}

module attributes {stable_mosaic.version = 11 : i64} {
  func.func @kernel(%arg0: memref<128x128xbf16, #tpu.memory_space<vmem>>, %arg1: memref<96x1152xbf16, #tpu.memory_space<vmem>>, %arg2: memref<4224x128xbf16, #tpu.memory_space<vmem>>, %arg3: memref<448x128xbf16, #tpu.memory_space<vmem>>, %arg4: memref<128x128xf32, #tpu.memory_space<vmem>>, %arg5: memref<14x128xf32, #tpu.memory_space<vmem>>, %arg6: memref<2x1xf32, #tpu.memory_space<vmem>>) attributes {dimension_semantics = [], scalar_prefetch = 0 : i64, scratch_operands = 0 : i64, tpu.core_type = #tpu.core_type<tc>} {
    %c0 = arith.constant 0 : index
    %c0_0 = arith.constant 0 : index
    %0 = vector.load %arg0[%c0, %c0_0] : memref<128x128xbf16, #tpu.memory_space<vmem>>, vector<128x128xbf16>
    %c0_1 = arith.constant 0 : index
    %c0_2 = arith.constant 0 : index
    %1 = vector.load %arg1[%c0_1, %c0_2] : memref<96x1152xbf16, #tpu.memory_space<vmem>>, vector<16x1152xbf16>
    %cst = arith.constant 0.000000e+00 : bf16
    %2 = vector.broadcast %cst : bf16 to vector<112x1152xbf16>
    %3 = tpu.concatenate %1, %2 in 0 : vector<16x1152xbf16>, vector<112x1152xbf16> -> vector<128x1152xbf16>
    %cst_3 = arith.constant dense<0.000000e+00> : vector<128x1152xf32>
    %4 = tpu.matmul %0, %3, %cst_3 {dimension_numbers = #tpu.dot_dimension_numbers<[1], [0], [0], [1], [0, 0, 1, 1], [], []>} : vector<128x128xbf16>, vector<128x1152xbf16>, vector<128x1152xf32> -> vector<128x1152xf32>
    %cst_4 = arith.constant 0.000000e+00 : f32
    %5 = vector.broadcast %cst_4 : f32 to vector<128x128xf32>
    %6 = vector.extract_strided_slice %4 {offsets = [0, 0], sizes = [128, 128], strides = [1, 1]} : vector<128x1152xf32> to vector<128x128xf32>
    %7 = vector.extract_strided_slice %6 {offsets = [119, 0], sizes = [9, 128], strides = [1, 1]} : vector<128x128xf32> to vector<9x128xf32>
    %8 = vector.extract_strided_slice %6 {offsets = [0, 0], sizes = [119, 128], strides = [1, 1]} : vector<128x128xf32> to vector<119x128xf32>
    %9 = tpu.concatenate %7, %8 in 0 : vector<9x128xf32>, vector<119x128xf32> -> vector<128x128xf32>
    %c0_5 = arith.constant 0 : index
    %c0_6 = arith.constant 0 : index
    %10 = vector.load %arg4[%c0_5, %c0_6] : memref<128x128xf32, #tpu.memory_space<vmem>>, vector<128x1xf32>
    %11 = vector.broadcast %10 : vector<128x1xf32> to vector<128x128xf32>
    %12 = arith.mulf %9, %11 : vector<128x128xf32>
    %13 = arith.addf %5, %12 : vector<128x128xf32>
    %14 = vector.extract_strided_slice %4 {offsets = [0, 128], sizes = [128, 128], strides = [1, 1]} : vector<128x1152xf32> to vector<128x128xf32>
    %15 = vector.extract_strided_slice %14 {offsets = [120, 0], sizes = [8, 128], strides = [1, 1]} : vector<128x128xf32> to vector<8x128xf32>
    %16 = vector.extract_strided_slice %14 {offsets = [0, 0], sizes = [120, 128], strides = [1, 1]} : vector<128x128xf32> to vector<120x128xf32>
    %17 = tpu.concatenate %15, %16 in 0 : vector<8x128xf32>, vector<120x128xf32> -> vector<128x128xf32>
    %c0_7 = arith.constant 0 : index
    %c1 = arith.constant 1 : index
    %18 = vector.load %arg4[%c0_7, %c1] : memref<128x128xf32, #tpu.memory_space<vmem>>, vector<128x1xf32>
    %19 = vector.broadcast %18 : vector<128x1xf32> to vector<128x128xf32>
    %20 = arith.mulf %17, %19 : vector<128x128xf32>
    %21 = arith.addf %13, %20 : vector<128x128xf32>
    %22 = vector.extract_strided_slice %4 {offsets = [0, 256], sizes = [128, 128], strides = [1, 1]} : vector<128x1152xf32> to vector<128x128xf32>
    %23 = vector.extract_strided_slice %22 {offsets = [121, 0], sizes = [7, 128], strides = [1, 1]} : vector<128x128xf32> to vector<7x128xf32>
    %24 = vector.extract_strided_slice %22 {offsets = [0, 0], sizes = [121, 128], strides = [1, 1]} : vector<128x128xf32> to vector<121x128xf32>
    %25 = tpu.concatenate %23, %24 in 0 : vector<7x128xf32>, vector<121x128xf32> -> vector<128x128xf32>
    %c0_8 = arith.constant 0 : index
    %c2 = arith.constant 2 : index
    %26 = vector.load %arg4[%c0_8, %c2] : memref<128x128xf32, #tpu.memory_space<vmem>>, vector<128x1xf32>
    %27 = vector.broadcast %26 : vector<128x1xf32> to vector<128x128xf32>
    %28 = arith.mulf %25, %27 : vector<128x128xf32>
    %29 = arith.addf %21, %28 : vector<128x128xf32>
    %30 = vector.extract_strided_slice %4 {offsets = [0, 384], sizes = [128, 128], strides = [1, 1]} : vector<128x1152xf32> to vector<128x128xf32>
    %31 = vector.extract_strided_slice %30 {offsets = [127, 0], sizes = [1, 128], strides = [1, 1]} : vector<128x128xf32> to vector<1x128xf32>
    %32 = vector.extract_strided_slice %30 {offsets = [0, 0], sizes = [127, 128], strides = [1, 1]} : vector<128x128xf32> to vector<127x128xf32>
    %33 = tpu.concatenate %31, %32 in 0 : vector<1x128xf32>, vector<127x128xf32> -> vector<128x128xf32>
    %c0_9 = arith.constant 0 : index
    %c3 = arith.constant 3 : index
    %34 = vector.load %arg4[%c0_9, %c3] : memref<128x128xf32, #tpu.memory_space<vmem>>, vector<128x1xf32>
    %35 = vector.broadcast %34 : vector<128x1xf32> to vector<128x128xf32>
    %36 = arith.mulf %33, %35 : vector<128x128xf32>
    %37 = arith.addf %29, %36 : vector<128x128xf32>
    %38 = vector.extract_strided_slice %4 {offsets = [0, 512], sizes = [128, 128], strides = [1, 1]} : vector<128x1152xf32> to vector<128x128xf32>
    %c0_10 = arith.constant 0 : index
    %c4 = arith.constant 4 : index
    %39 = vector.load %arg4[%c0_10, %c4] : memref<128x128xf32, #tpu.memory_space<vmem>>, vector<128x1xf32>
    %40 = vector.broadcast %39 : vector<128x1xf32> to vector<128x128xf32>
    %41 = arith.mulf %38, %40 : vector<128x128xf32>
    %42 = arith.addf %37, %41 : vector<128x128xf32>
    %43 = vector.extract_strided_slice %4 {offsets = [0, 640], sizes = [128, 128], strides = [1, 1]} : vector<128x1152xf32> to vector<128x128xf32>
    %44 = vector.extract_strided_slice %43 {offsets = [1, 0], sizes = [127, 128], strides = [1, 1]} : vector<128x128xf32> to vector<127x128xf32>
    %45 = vector.extract_strided_slice %43 {offsets = [0, 0], sizes = [1, 128], strides = [1, 1]} : vector<128x128xf32> to vector<1x128xf32>
    %46 = tpu.concatenate %44, %45 in 0 : vector<127x128xf32>, vector<1x128xf32> -> vector<128x128xf32>
    %c0_11 = arith.constant 0 : index
    %c5 = arith.constant 5 : index
    %47 = vector.load %arg4[%c0_11, %c5] : memref<128x128xf32, #tpu.memory_space<vmem>>, vector<128x1xf32>
    %48 = vector.broadcast %47 : vector<128x1xf32> to vector<128x128xf32>
    %49 = arith.mulf %46, %48 : vector<128x128xf32>
    %50 = arith.addf %42, %49 : vector<128x128xf32>
    %51 = vector.extract_strided_slice %4 {offsets = [0, 768], sizes = [128, 128], strides = [1, 1]} : vector<128x1152xf32> to vector<128x128xf32>
    %52 = vector.extract_strided_slice %51 {offsets = [7, 0], sizes = [121, 128], strides = [1, 1]} : vector<128x128xf32> to vector<121x128xf32>
    %53 = vector.extract_strided_slice %51 {offsets = [0, 0], sizes = [7, 128], strides = [1, 1]} : vector<128x128xf32> to vector<7x128xf32>
    %54 = tpu.concatenate %52, %53 in 0 : vector<121x128xf32>, vector<7x128xf32> -> vector<128x128xf32>
    %c0_12 = arith.constant 0 : index
    %c6 = arith.constant 6 : index
    %55 = vector.load %arg4[%c0_12, %c6] : memref<128x128xf32, #tpu.memory_space<vmem>>, vector<128x1xf32>
    %56 = vector.broadcast %55 : vector<128x1xf32> to vector<128x128xf32>
    %57 = arith.mulf %54, %56 : vector<128x128xf32>
    %58 = arith.addf %50, %57 : vector<128x128xf32>
    %59 = vector.extract_strided_slice %4 {offsets = [0, 896], sizes = [128, 128], strides = [1, 1]} : vector<128x1152xf32> to vector<128x128xf32>
    %60 = vector.extract_strided_slice %59 {offsets = [8, 0], sizes = [120, 128], strides = [1, 1]} : vector<128x128xf32> to vector<120x128xf32>
    %61 = vector.extract_strided_slice %59 {offsets = [0, 0], sizes = [8, 128], strides = [1, 1]} : vector<128x128xf32> to vector<8x128xf32>
    %62 = tpu.concatenate %60, %61 in 0 : vector<120x128xf32>, vector<8x128xf32> -> vector<128x128xf32>
    %c0_13 = arith.constant 0 : index
    %c7 = arith.constant 7 : index
    %63 = vector.load %arg4[%c0_13, %c7] : memref<128x128xf32, #tpu.memory_space<vmem>>, vector<128x1xf32>
    %64 = vector.broadcast %63 : vector<128x1xf32> to vector<128x128xf32>
    %65 = arith.mulf %62, %64 : vector<128x128xf32>
    %66 = arith.addf %58, %65 : vector<128x128xf32>
    %67 = vector.extract_strided_slice %4 {offsets = [0, 1024], sizes = [128, 128], strides = [1, 1]} : vector<128x1152xf32> to vector<128x128xf32>
    %68 = vector.extract_strided_slice %67 {offsets = [9, 0], sizes = [119, 128], strides = [1, 1]} : vector<128x128xf32> to vector<119x128xf32>
    %69 = vector.extract_strided_slice %67 {offsets = [0, 0], sizes = [9, 128], strides = [1, 1]} : vector<128x128xf32> to vector<9x128xf32>
    %70 = tpu.concatenate %68, %69 in 0 : vector<119x128xf32>, vector<9x128xf32> -> vector<128x128xf32>
    %c0_14 = arith.constant 0 : index
    %c8 = arith.constant 8 : index
    %71 = vector.load %arg4[%c0_14, %c8] : memref<128x128xf32, #tpu.memory_space<vmem>>, vector<128x1xf32>
    %72 = vector.broadcast %71 : vector<128x1xf32> to vector<128x128xf32>
    %73 = arith.mulf %70, %72 : vector<128x128xf32>
    %74 = arith.addf %66, %73 : vector<128x128xf32>
    %c0_15 = arith.constant 0 : index
    %c0_16 = arith.constant 0 : index
    %75 = vector.load %arg5[%c0_15, %c0_16] : memref<14x128xf32, #tpu.memory_space<vmem>>, vector<1x128xf32>
    %76 = vector.broadcast %75 : vector<1x128xf32> to vector<128x128xf32>
    %77 = arith.addf %74, %76 : vector<128x128xf32>
    %cst_17 = arith.constant 0.000000e+00 : f32
    %78 = vector.broadcast %cst_17 : f32 to vector<128x128xf32>
    %79 = arith.maximumf %77, %78 : vector<128x128xf32>
    %80 = arith.truncf %79 : vector<128x128xf32> to vector<128x128xbf16>
    %c16 = arith.constant 16 : index
    %c0_18 = arith.constant 0 : index
    %81 = vector.load %arg1[%c16, %c0_18] : memref<96x1152xbf16, #tpu.memory_space<vmem>>, vector<16x1152xbf16>
    %cst_19 = arith.constant 0.000000e+00 : bf16
    %82 = vector.broadcast %cst_19 : bf16 to vector<112x1152xbf16>
    %83 = tpu.concatenate %81, %82 in 0 : vector<16x1152xbf16>, vector<112x1152xbf16> -> vector<128x1152xbf16>
    %cst_20 = arith.constant dense<0.000000e+00> : vector<128x1152xf32>
    %84 = tpu.matmul %80, %83, %cst_20 {dimension_numbers = #tpu.dot_dimension_numbers<[1], [0], [0], [1], [0, 0, 1, 1], [], []>} : vector<128x128xbf16>, vector<128x1152xbf16>, vector<128x1152xf32> -> vector<128x1152xf32>
    %cst_21 = arith.constant 0.000000e+00 : f32
    %85 = vector.broadcast %cst_21 : f32 to vector<128x128xf32>
    %86 = vector.extract_strided_slice %84 {offsets = [0, 0], sizes = [128, 128], strides = [1, 1]} : vector<128x1152xf32> to vector<128x128xf32>
    %87 = vector.extract_strided_slice %86 {offsets = [119, 0], sizes = [9, 128], strides = [1, 1]} : vector<128x128xf32> to vector<9x128xf32>
    %88 = vector.extract_strided_slice %86 {offsets = [0, 0], sizes = [119, 128], strides = [1, 1]} : vector<128x128xf32> to vector<119x128xf32>
    %89 = tpu.concatenate %87, %88 in 0 : vector<9x128xf32>, vector<119x128xf32> -> vector<128x128xf32>
    %c0_22 = arith.constant 0 : index
    %c9 = arith.constant 9 : index
    %90 = vector.load %arg4[%c0_22, %c9] : memref<128x128xf32, #tpu.memory_space<vmem>>, vector<128x1xf32>
    %91 = vector.broadcast %90 : vector<128x1xf32> to vector<128x128xf32>
    %92 = arith.mulf %89, %91 : vector<128x128xf32>
    %93 = arith.addf %85, %92 : vector<128x128xf32>
    %94 = vector.extract_strided_slice %84 {offsets = [0, 128], sizes = [128, 128], strides = [1, 1]} : vector<128x1152xf32> to vector<128x128xf32>
    %95 = vector.extract_strided_slice %94 {offsets = [120, 0], sizes = [8, 128], strides = [1, 1]} : vector<128x128xf32> to vector<8x128xf32>
    %96 = vector.extract_strided_slice %94 {offsets = [0, 0], sizes = [120, 128], strides = [1, 1]} : vector<128x128xf32> to vector<120x128xf32>
    %97 = tpu.concatenate %95, %96 in 0 : vector<8x128xf32>, vector<120x128xf32> -> vector<128x128xf32>
    %c0_23 = arith.constant 0 : index
    %c10 = arith.constant 10 : index
    %98 = vector.load %arg4[%c0_23, %c10] : memref<128x128xf32, #tpu.memory_space<vmem>>, vector<128x1xf32>
    %99 = vector.broadcast %98 : vector<128x1xf32> to vector<128x128xf32>
    %100 = arith.mulf %97, %99 : vector<128x128xf32>
    %101 = arith.addf %93, %100 : vector<128x128xf32>
    %102 = vector.extract_strided_slice %84 {offsets = [0, 256], sizes = [128, 128], strides = [1, 1]} : vector<128x1152xf32> to vector<128x128xf32>
    %103 = vector.extract_strided_slice %102 {offsets = [121, 0], sizes = [7, 128], strides = [1, 1]} : vector<128x128xf32> to vector<7x128xf32>
    %104 = vector.extract_strided_slice %102 {offsets = [0, 0], sizes = [121, 128], strides = [1, 1]} : vector<128x128xf32> to vector<121x128xf32>
    %105 = tpu.concatenate %103, %104 in 0 : vector<7x128xf32>, vector<121x128xf32> -> vector<128x128xf32>
    %c0_24 = arith.constant 0 : index
    %c11 = arith.constant 11 : index
    %106 = vector.load %arg4[%c0_24, %c11] : memref<128x128xf32, #tpu.memory_space<vmem>>, vector<128x1xf32>
    %107 = vector.broadcast %106 : vector<128x1xf32> to vector<128x128xf32>
    %108 = arith.mulf %105, %107 : vector<128x128xf32>
    %109 = arith.addf %101, %108 : vector<128x128xf32>
    %110 = vector.extract_strided_slice %84 {offsets = [0, 384], sizes = [128, 128], strides = [1, 1]} : vector<128x1152xf32> to vector<128x128xf32>
    %111 = vector.extract_strided_slice %110 {offsets = [127, 0], sizes = [1, 128], strides = [1, 1]} : vector<128x128xf32> to vector<1x128xf32>
    %112 = vector.extract_strided_slice %110 {offsets = [0, 0], sizes = [127, 128], strides = [1, 1]} : vector<128x128xf32> to vector<127x128xf32>
    %113 = tpu.concatenate %111, %112 in 0 : vector<1x128xf32>, vector<127x128xf32> -> vector<128x128xf32>
    %c0_25 = arith.constant 0 : index
    %c12 = arith.constant 12 : index
    %114 = vector.load %arg4[%c0_25, %c12] : memref<128x128xf32, #tpu.memory_space<vmem>>, vector<128x1xf32>
    %115 = vector.broadcast %114 : vector<128x1xf32> to vector<128x128xf32>
    %116 = arith.mulf %113, %115 : vector<128x128xf32>
    %117 = arith.addf %109, %116 : vector<128x128xf32>
    %118 = vector.extract_strided_slice %84 {offsets = [0, 512], sizes = [128, 128], strides = [1, 1]} : vector<128x1152xf32> to vector<128x128xf32>
    %c0_26 = arith.constant 0 : index
    %c13 = arith.constant 13 : index
    %119 = vector.load %arg4[%c0_26, %c13] : memref<128x128xf32, #tpu.memory_space<vmem>>, vector<128x1xf32>
    %120 = vector.broadcast %119 : vector<128x1xf32> to vector<128x128xf32>
    %121 = arith.mulf %118, %120 : vector<128x128xf32>
    %122 = arith.addf %117, %121 : vector<128x128xf32>
    %123 = vector.extract_strided_slice %84 {offsets = [0, 640], sizes = [128, 128], strides = [1, 1]} : vector<128x1152xf32> to vector<128x128xf32>
    %124 = vector.extract_strided_slice %123 {offsets = [1, 0], sizes = [127, 128], strides = [1, 1]} : vector<128x128xf32> to vector<127x128xf32>
    %125 = vector.extract_strided_slice %123 {offsets = [0, 0], sizes = [1, 128], strides = [1, 1]} : vector<128x128xf32> to vector<1x128xf32>
    %126 = tpu.concatenate %124, %125 in 0 : vector<127x128xf32>, vector<1x128xf32> -> vector<128x128xf32>
    %c0_27 = arith.constant 0 : index
    %c14 = arith.constant 14 : index
    %127 = vector.load %arg4[%c0_27, %c14] : memref<128x128xf32, #tpu.memory_space<vmem>>, vector<128x1xf32>
    %128 = vector.broadcast %127 : vector<128x1xf32> to vector<128x128xf32>
    %129 = arith.mulf %126, %128 : vector<128x128xf32>
    %130 = arith.addf %122, %129 : vector<128x128xf32>
    %131 = vector.extract_strided_slice %84 {offsets = [0, 768], sizes = [128, 128], strides = [1, 1]} : vector<128x1152xf32> to vector<128x128xf32>
    %132 = vector.extract_strided_slice %131 {offsets = [7, 0], sizes = [121, 128], strides = [1, 1]} : vector<128x128xf32> to vector<121x128xf32>
    %133 = vector.extract_strided_slice %131 {offsets = [0, 0], sizes = [7, 128], strides = [1, 1]} : vector<128x128xf32> to vector<7x128xf32>
    %134 = tpu.concatenate %132, %133 in 0 : vector<121x128xf32>, vector<7x128xf32> -> vector<128x128xf32>
    %c0_28 = arith.constant 0 : index
    %c15 = arith.constant 15 : index
    %135 = vector.load %arg4[%c0_28, %c15] : memref<128x128xf32, #tpu.memory_space<vmem>>, vector<128x1xf32>
    %136 = vector.broadcast %135 : vector<128x1xf32> to vector<128x128xf32>
    %137 = arith.mulf %134, %136 : vector<128x128xf32>
    %138 = arith.addf %130, %137 : vector<128x128xf32>
    %139 = vector.extract_strided_slice %84 {offsets = [0, 896], sizes = [128, 128], strides = [1, 1]} : vector<128x1152xf32> to vector<128x128xf32>
    %140 = vector.extract_strided_slice %139 {offsets = [8, 0], sizes = [120, 128], strides = [1, 1]} : vector<128x128xf32> to vector<120x128xf32>
    %141 = vector.extract_strided_slice %139 {offsets = [0, 0], sizes = [8, 128], strides = [1, 1]} : vector<128x128xf32> to vector<8x128xf32>
    %142 = tpu.concatenate %140, %141 in 0 : vector<120x128xf32>, vector<8x128xf32> -> vector<128x128xf32>
    %c0_29 = arith.constant 0 : index
    %c16_30 = arith.constant 16 : index
    %143 = vector.load %arg4[%c0_29, %c16_30] : memref<128x128xf32, #tpu.memory_space<vmem>>, vector<128x1xf32>
    %144 = vector.broadcast %143 : vector<128x1xf32> to vector<128x128xf32>
    %145 = arith.mulf %142, %144 : vector<128x128xf32>
    %146 = arith.addf %138, %145 : vector<128x128xf32>
    %147 = vector.extract_strided_slice %84 {offsets = [0, 1024], sizes = [128, 128], strides = [1, 1]} : vector<128x1152xf32> to vector<128x128xf32>
    %148 = vector.extract_strided_slice %147 {offsets = [9, 0], sizes = [119, 128], strides = [1, 1]} : vector<128x128xf32> to vector<119x128xf32>
    %149 = vector.extract_strided_slice %147 {offsets = [0, 0], sizes = [9, 128], strides = [1, 1]} : vector<128x128xf32> to vector<9x128xf32>
    %150 = tpu.concatenate %148, %149 in 0 : vector<119x128xf32>, vector<9x128xf32> -> vector<128x128xf32>
    %c0_31 = arith.constant 0 : index
    %c17 = arith.constant 17 : index
    %151 = vector.load %arg4[%c0_31, %c17] : memref<128x128xf32, #tpu.memory_space<vmem>>, vector<128x1xf32>
    %152 = vector.broadcast %151 : vector<128x1xf32> to vector<128x128xf32>
    %153 = arith.mulf %150, %152 : vector<128x128xf32>
    %154 = arith.addf %146, %153 : vector<128x128xf32>
    %c1_32 = arith.constant 1 : index
    %c0_33 = arith.constant 0 : index
    %155 = vector.load %arg5[%c1_32, %c0_33] : memref<14x128xf32, #tpu.memory_space<vmem>>, vector<1x128xf32>
    %156 = vector.broadcast %155 : vector<1x128xf32> to vector<128x128xf32>
    %157 = arith.addf %154, %156 : vector<128x128xf32>
    %cst_34 = arith.constant 0.000000e+00 : f32
    %158 = vector.broadcast %cst_34 : f32 to vector<128x128xf32>
    %159 = arith.maximumf %157, %158 : vector<128x128xf32>
    %160 = arith.truncf %159 : vector<128x128xf32> to vector<128x128xbf16>
    %c0_35 = arith.constant 0 : index
    %c0_36 = arith.constant 0 : index
    %161 = vector.load %arg3[%c0_35, %c0_36] : memref<448x128xbf16, #tpu.memory_space<vmem>>, vector<24x128xbf16>
    %cst_37 = arith.constant dense<0.000000e+00> : vector<24x128xf32>
    %162 = tpu.matmul %161, %160, %cst_37 {dimension_numbers = #tpu.dot_dimension_numbers<[1], [0], [0], [1], [0, 0, 1, 1], [], []>} : vector<24x128xbf16>, vector<128x128xbf16>, vector<24x128xf32> -> vector<24x128xf32>
    %c24 = arith.constant 24 : index
    %c0_38 = arith.constant 0 : index
    %163 = vector.load %arg3[%c24, %c0_38] : memref<448x128xbf16, #tpu.memory_space<vmem>>, vector<24x128xbf16>
    %cst_39 = arith.constant dense<0.000000e+00> : vector<24x128xf32>
    %164 = tpu.matmul %163, %160, %cst_39 {dimension_numbers = #tpu.dot_dimension_numbers<[1], [0], [0], [1], [0, 0, 1, 1], [], []>} : vector<24x128xbf16>, vector<128x128xbf16>, vector<24x128xf32> -> vector<24x128xf32>
    %c48 = arith.constant 48 : index
    %c0_40 = arith.constant 0 : index
    %165 = vector.load %arg3[%c48, %c0_40] : memref<448x128xbf16, #tpu.memory_space<vmem>>, vector<24x128xbf16>
    %cst_41 = arith.constant dense<0.000000e+00> : vector<24x128xf32>
    %166 = tpu.matmul %165, %160, %cst_41 {dimension_numbers = #tpu.dot_dimension_numbers<[1], [0], [0], [1], [0, 0, 1, 1], [], []>} : vector<24x128xbf16>, vector<128x128xbf16>, vector<24x128xf32> -> vector<24x128xf32>
    %c72 = arith.constant 72 : index
    %c0_42 = arith.constant 0 : index
    %167 = vector.load %arg3[%c72, %c0_42] : memref<448x128xbf16, #tpu.memory_space<vmem>>, vector<24x128xbf16>
    %cst_43 = arith.constant dense<0.000000e+00> : vector<24x128xf32>
    %168 = tpu.matmul %167, %160, %cst_43 {dimension_numbers = #tpu.dot_dimension_numbers<[1], [0], [0], [1], [0, 0, 1, 1], [], []>} : vector<24x128xbf16>, vector<128x128xbf16>, vector<24x128xf32> -> vector<24x128xf32>
    %c96 = arith.constant 96 : index
    %c0_44 = arith.constant 0 : index
    %169 = vector.load %arg3[%c96, %c0_44] : memref<448x128xbf16, #tpu.memory_space<vmem>>, vector<24x128xbf16>
    %cst_45 = arith.constant dense<0.000000e+00> : vector<24x128xf32>
    %170 = tpu.matmul %169, %160, %cst_45 {dimension_numbers = #tpu.dot_dimension_numbers<[1], [0], [0], [1], [0, 0, 1, 1], [], []>} : vector<24x128xbf16>, vector<128x128xbf16>, vector<24x128xf32> -> vector<24x128xf32>
    %c120 = arith.constant 120 : index
    %c0_46 = arith.constant 0 : index
    %171 = vector.load %arg3[%c120, %c0_46] : memref<448x128xbf16, #tpu.memory_space<vmem>>, vector<24x128xbf16>
    %cst_47 = arith.constant dense<0.000000e+00> : vector<24x128xf32>
    %172 = tpu.matmul %171, %160, %cst_47 {dimension_numbers = #tpu.dot_dimension_numbers<[1], [0], [0], [1], [0, 0, 1, 1], [], []>} : vector<24x128xbf16>, vector<128x128xbf16>, vector<24x128xf32> -> vector<24x128xf32>
    %c144 = arith.constant 144 : index
    %c0_48 = arith.constant 0 : index
    %173 = vector.load %arg3[%c144, %c0_48] : memref<448x128xbf16, #tpu.memory_space<vmem>>, vector<24x128xbf16>
    %cst_49 = arith.constant dense<0.000000e+00> : vector<24x128xf32>
    %174 = tpu.matmul %173, %160, %cst_49 {dimension_numbers = #tpu.dot_dimension_numbers<[1], [0], [0], [1], [0, 0, 1, 1], [], []>} : vector<24x128xbf16>, vector<128x128xbf16>, vector<24x128xf32> -> vector<24x128xf32>
    %c168 = arith.constant 168 : index
    %c0_50 = arith.constant 0 : index
    %175 = vector.load %arg3[%c168, %c0_50] : memref<448x128xbf16, #tpu.memory_space<vmem>>, vector<24x128xbf16>
    %cst_51 = arith.constant dense<0.000000e+00> : vector<24x128xf32>
    %176 = tpu.matmul %175, %160, %cst_51 {dimension_numbers = #tpu.dot_dimension_numbers<[1], [0], [0], [1], [0, 0, 1, 1], [], []>} : vector<24x128xbf16>, vector<128x128xbf16>, vector<24x128xf32> -> vector<24x128xf32>
    %c192 = arith.constant 192 : index
    %c0_52 = arith.constant 0 : index
    %177 = vector.load %arg3[%c192, %c0_52] : memref<448x128xbf16, #tpu.memory_space<vmem>>, vector<24x128xbf16>
    %cst_53 = arith.constant dense<0.000000e+00> : vector<24x128xf32>
    %178 = tpu.matmul %177, %160, %cst_53 {dimension_numbers = #tpu.dot_dimension_numbers<[1], [0], [0], [1], [0, 0, 1, 1], [], []>} : vector<24x128xbf16>, vector<128x128xbf16>, vector<24x128xf32> -> vector<24x128xf32>
    %179 = tpu.concatenate %162, %164, %166, %168, %170, %172, %174, %176, %178 in 1 : vector<24x128xf32>, vector<24x128xf32>, vector<24x128xf32>, vector<24x128xf32>, vector<24x128xf32>, vector<24x128xf32>, vector<24x128xf32>, vector<24x128xf32>, vector<24x128xf32> -> vector<24x1152xf32>
    %180 = arith.truncf %179 : vector<24x1152xf32> to vector<24x1152xbf16>
    %c0_54 = arith.constant 0 : index
    %c0_55 = arith.constant 0 : index
    %181 = vector.load %arg2[%c0_54, %c0_55] : memref<4224x128xbf16, #tpu.memory_space<vmem>>, vector<1152x128xbf16>
    %cst_56 = arith.constant dense<0.000000e+00> : vector<24x128xf32>
    %182 = tpu.matmul %180, %181, %cst_56 {dimension_numbers = #tpu.dot_dimension_numbers<[1], [0], [0], [1], [0, 0, 1, 1], [], []>} : vector<24x1152xbf16>, vector<1152x128xbf16>, vector<24x128xf32> -> vector<24x128xf32>
    %c2_57 = arith.constant 2 : index
    %c0_58 = arith.constant 0 : index
    %183 = vector.load %arg5[%c2_57, %c0_58] : memref<14x128xf32, #tpu.memory_space<vmem>>, vector<1x128xf32>
    %184 = vector.broadcast %183 : vector<1x128xf32> to vector<24x128xf32>
    %185 = arith.addf %182, %184 : vector<24x128xf32>
    %cst_59 = arith.constant 0.000000e+00 : f32
    %186 = vector.broadcast %cst_59 : f32 to vector<24x128xf32>
    %187 = arith.maximumf %185, %186 : vector<24x128xf32>
    %c0_60 = arith.constant 0 : index
    %c36 = arith.constant 36 : index
    %188 = vector.load %arg4[%c0_60, %c36] : memref<128x128xf32, #tpu.memory_space<vmem>>, vector<24x1xf32>
    %189 = vector.broadcast %188 : vector<24x1xf32> to vector<24x128xf32>
    %190 = arith.mulf %187, %189 : vector<24x128xf32>
    %191 = arith.truncf %190 : vector<24x128xf32> to vector<24x128xbf16>
    %c32 = arith.constant 32 : index
    %c0_61 = arith.constant 0 : index
    %192 = vector.load %arg1[%c32, %c0_61] : memref<96x1152xbf16, #tpu.memory_space<vmem>>, vector<32x1152xbf16>
    %cst_62 = arith.constant 0.000000e+00 : bf16
    %193 = vector.broadcast %cst_62 : bf16 to vector<96x1152xbf16>
    %194 = tpu.concatenate %192, %193 in 0 : vector<32x1152xbf16>, vector<96x1152xbf16> -> vector<128x1152xbf16>
    %cst_63 = arith.constant dense<0.000000e+00> : vector<24x1152xf32>
    %195 = tpu.matmul %191, %194, %cst_63 {dimension_numbers = #tpu.dot_dimension_numbers<[1], [0], [0], [1], [0, 0, 1, 1], [], []>} : vector<24x128xbf16>, vector<128x1152xbf16>, vector<24x1152xf32> -> vector<24x1152xf32>
    %cst_64 = arith.constant 0.000000e+00 : f32
    %196 = vector.broadcast %cst_64 : f32 to vector<24x128xf32>
    %197 = vector.extract_strided_slice %195 {offsets = [0, 0], sizes = [24, 128], strides = [1, 1]} : vector<24x1152xf32> to vector<24x128xf32>
    %198 = vector.extract_strided_slice %197 {offsets = [20, 0], sizes = [4, 128], strides = [1, 1]} : vector<24x128xf32> to vector<4x128xf32>
    %199 = vector.extract_strided_slice %197 {offsets = [0, 0], sizes = [20, 128], strides = [1, 1]} : vector<24x128xf32> to vector<20x128xf32>
    %200 = tpu.concatenate %198, %199 in 0 : vector<4x128xf32>, vector<20x128xf32> -> vector<24x128xf32>
    %c0_65 = arith.constant 0 : index
    %c18 = arith.constant 18 : index
    %201 = vector.load %arg4[%c0_65, %c18] : memref<128x128xf32, #tpu.memory_space<vmem>>, vector<24x1xf32>
    %202 = vector.broadcast %201 : vector<24x1xf32> to vector<24x128xf32>
    %203 = arith.mulf %200, %202 : vector<24x128xf32>
    %204 = arith.addf %196, %203 : vector<24x128xf32>
    %205 = vector.extract_strided_slice %195 {offsets = [0, 128], sizes = [24, 128], strides = [1, 1]} : vector<24x1152xf32> to vector<24x128xf32>
    %206 = vector.extract_strided_slice %205 {offsets = [21, 0], sizes = [3, 128], strides = [1, 1]} : vector<24x128xf32> to vector<3x128xf32>
    %207 = vector.extract_strided_slice %205 {offsets = [0, 0], sizes = [21, 128], strides = [1, 1]} : vector<24x128xf32> to vector<21x128xf32>
    %208 = tpu.concatenate %206, %207 in 0 : vector<3x128xf32>, vector<21x128xf32> -> vector<24x128xf32>
    %c0_66 = arith.constant 0 : index
    %c19 = arith.constant 19 : index
    %209 = vector.load %arg4[%c0_66, %c19] : memref<128x128xf32, #tpu.memory_space<vmem>>, vector<24x1xf32>
    %210 = vector.broadcast %209 : vector<24x1xf32> to vector<24x128xf32>
    %211 = arith.mulf %208, %210 : vector<24x128xf32>
    %212 = arith.addf %204, %211 : vector<24x128xf32>
    %213 = vector.extract_strided_slice %195 {offsets = [0, 256], sizes = [24, 128], strides = [1, 1]} : vector<24x1152xf32> to vector<24x128xf32>
    %214 = vector.extract_strided_slice %213 {offsets = [22, 0], sizes = [2, 128], strides = [1, 1]} : vector<24x128xf32> to vector<2x128xf32>
    %215 = vector.extract_strided_slice %213 {offsets = [0, 0], sizes = [22, 128], strides = [1, 1]} : vector<24x128xf32> to vector<22x128xf32>
    %216 = tpu.concatenate %214, %215 in 0 : vector<2x128xf32>, vector<22x128xf32> -> vector<24x128xf32>
    %c0_67 = arith.constant 0 : index
    %c20 = arith.constant 20 : index
    %217 = vector.load %arg4[%c0_67, %c20] : memref<128x128xf32, #tpu.memory_space<vmem>>, vector<24x1xf32>
    %218 = vector.broadcast %217 : vector<24x1xf32> to vector<24x128xf32>
    %219 = arith.mulf %216, %218 : vector<24x128xf32>
    %220 = arith.addf %212, %219 : vector<24x128xf32>
    %221 = vector.extract_strided_slice %195 {offsets = [0, 384], sizes = [24, 128], strides = [1, 1]} : vector<24x1152xf32> to vector<24x128xf32>
    %222 = vector.extract_strided_slice %221 {offsets = [23, 0], sizes = [1, 128], strides = [1, 1]} : vector<24x128xf32> to vector<1x128xf32>
    %223 = vector.extract_strided_slice %221 {offsets = [0, 0], sizes = [23, 128], strides = [1, 1]} : vector<24x128xf32> to vector<23x128xf32>
    %224 = tpu.concatenate %222, %223 in 0 : vector<1x128xf32>, vector<23x128xf32> -> vector<24x128xf32>
    %c0_68 = arith.constant 0 : index
    %c21 = arith.constant 21 : index
    %225 = vector.load %arg4[%c0_68, %c21] : memref<128x128xf32, #tpu.memory_space<vmem>>, vector<24x1xf32>
    %226 = vector.broadcast %225 : vector<24x1xf32> to vector<24x128xf32>
    %227 = arith.mulf %224, %226 : vector<24x128xf32>
    %228 = arith.addf %220, %227 : vector<24x128xf32>
    %229 = vector.extract_strided_slice %195 {offsets = [0, 512], sizes = [24, 128], strides = [1, 1]} : vector<24x1152xf32> to vector<24x128xf32>
    %c0_69 = arith.constant 0 : index
    %c22 = arith.constant 22 : index
    %230 = vector.load %arg4[%c0_69, %c22] : memref<128x128xf32, #tpu.memory_space<vmem>>, vector<24x1xf32>
    %231 = vector.broadcast %230 : vector<24x1xf32> to vector<24x128xf32>
    %232 = arith.mulf %229, %231 : vector<24x128xf32>
    %233 = arith.addf %228, %232 : vector<24x128xf32>
    %234 = vector.extract_strided_slice %195 {offsets = [0, 640], sizes = [24, 128], strides = [1, 1]} : vector<24x1152xf32> to vector<24x128xf32>
    %235 = vector.extract_strided_slice %234 {offsets = [1, 0], sizes = [23, 128], strides = [1, 1]} : vector<24x128xf32> to vector<23x128xf32>
    %236 = vector.extract_strided_slice %234 {offsets = [0, 0], sizes = [1, 128], strides = [1, 1]} : vector<24x128xf32> to vector<1x128xf32>
    %237 = tpu.concatenate %235, %236 in 0 : vector<23x128xf32>, vector<1x128xf32> -> vector<24x128xf32>
    %c0_70 = arith.constant 0 : index
    %c23 = arith.constant 23 : index
    %238 = vector.load %arg4[%c0_70, %c23] : memref<128x128xf32, #tpu.memory_space<vmem>>, vector<24x1xf32>
    %239 = vector.broadcast %238 : vector<24x1xf32> to vector<24x128xf32>
    %240 = arith.mulf %237, %239 : vector<24x128xf32>
    %241 = arith.addf %233, %240 : vector<24x128xf32>
    %242 = vector.extract_strided_slice %195 {offsets = [0, 768], sizes = [24, 128], strides = [1, 1]} : vector<24x1152xf32> to vector<24x128xf32>
    %243 = vector.extract_strided_slice %242 {offsets = [2, 0], sizes = [22, 128], strides = [1, 1]} : vector<24x128xf32> to vector<22x128xf32>
    %244 = vector.extract_strided_slice %242 {offsets = [0, 0], sizes = [2, 128], strides = [1, 1]} : vector<24x128xf32> to vector<2x128xf32>
    %245 = tpu.concatenate %243, %244 in 0 : vector<22x128xf32>, vector<2x128xf32> -> vector<24x128xf32>
    %c0_71 = arith.constant 0 : index
    %c24_72 = arith.constant 24 : index
    %246 = vector.load %arg4[%c0_71, %c24_72] : memref<128x128xf32, #tpu.memory_space<vmem>>, vector<24x1xf32>
    %247 = vector.broadcast %246 : vector<24x1xf32> to vector<24x128xf32>
    %248 = arith.mulf %245, %247 : vector<24x128xf32>
    %249 = arith.addf %241, %248 : vector<24x128xf32>
    %250 = vector.extract_strided_slice %195 {offsets = [0, 896], sizes = [24, 128], strides = [1, 1]} : vector<24x1152xf32> to vector<24x128xf32>
    %251 = vector.extract_strided_slice %250 {offsets = [3, 0], sizes = [21, 128], strides = [1, 1]} : vector<24x128xf32> to vector<21x128xf32>
    %252 = vector.extract_strided_slice %250 {offsets = [0, 0], sizes = [3, 128], strides = [1, 1]} : vector<24x128xf32> to vector<3x128xf32>
    %253 = tpu.concatenate %251, %252 in 0 : vector<21x128xf32>, vector<3x128xf32> -> vector<24x128xf32>
    %c0_73 = arith.constant 0 : index
    %c25 = arith.constant 25 : index
    %254 = vector.load %arg4[%c0_73, %c25] : memref<128x128xf32, #tpu.memory_space<vmem>>, vector<24x1xf32>
    %255 = vector.broadcast %254 : vector<24x1xf32> to vector<24x128xf32>
    %256 = arith.mulf %253, %255 : vector<24x128xf32>
    %257 = arith.addf %249, %256 : vector<24x128xf32>
    %258 = vector.extract_strided_slice %195 {offsets = [0, 1024], sizes = [24, 128], strides = [1, 1]} : vector<24x1152xf32> to vector<24x128xf32>
    %259 = vector.extract_strided_slice %258 {offsets = [4, 0], sizes = [20, 128], strides = [1, 1]} : vector<24x128xf32> to vector<20x128xf32>
    %260 = vector.extract_strided_slice %258 {offsets = [0, 0], sizes = [4, 128], strides = [1, 1]} : vector<24x128xf32> to vector<4x128xf32>
    %261 = tpu.concatenate %259, %260 in 0 : vector<20x128xf32>, vector<4x128xf32> -> vector<24x128xf32>
    %c0_74 = arith.constant 0 : index
    %c26 = arith.constant 26 : index
    %262 = vector.load %arg4[%c0_74, %c26] : memref<128x128xf32, #tpu.memory_space<vmem>>, vector<24x1xf32>
    %263 = vector.broadcast %262 : vector<24x1xf32> to vector<24x128xf32>
    %264 = arith.mulf %261, %263 : vector<24x128xf32>
    %265 = arith.addf %257, %264 : vector<24x128xf32>
    %c3_75 = arith.constant 3 : index
    %c0_76 = arith.constant 0 : index
    %266 = vector.load %arg5[%c3_75, %c0_76] : memref<14x128xf32, #tpu.memory_space<vmem>>, vector<1x128xf32>
    %267 = vector.broadcast %266 : vector<1x128xf32> to vector<24x128xf32>
    %268 = arith.addf %265, %267 : vector<24x128xf32>
    %cst_77 = arith.constant 0.000000e+00 : f32
    %269 = vector.broadcast %cst_77 : f32 to vector<24x128xf32>
    %270 = arith.maximumf %268, %269 : vector<24x128xf32>
    %c0_78 = arith.constant 0 : index
    %c37 = arith.constant 37 : index
    %271 = vector.load %arg4[%c0_78, %c37] : memref<128x128xf32, #tpu.memory_space<vmem>>, vector<24x1xf32>
    %272 = vector.broadcast %271 : vector<24x1xf32> to vector<24x128xf32>
    %273 = arith.mulf %270, %272 : vector<24x128xf32>
    %274 = arith.truncf %273 : vector<24x128xf32> to vector<24x128xbf16>
    %c64 = arith.constant 64 : index
    %c0_79 = arith.constant 0 : index
    %275 = vector.load %arg1[%c64, %c0_79] : memref<96x1152xbf16, #tpu.memory_space<vmem>>, vector<32x1152xbf16>
    %cst_80 = arith.constant 0.000000e+00 : bf16
    %276 = vector.broadcast %cst_80 : bf16 to vector<96x1152xbf16>
    %277 = tpu.concatenate %275, %276 in 0 : vector<32x1152xbf16>, vector<96x1152xbf16> -> vector<128x1152xbf16>
    %cst_81 = arith.constant dense<0.000000e+00> : vector<24x1152xf32>
    %278 = tpu.matmul %274, %277, %cst_81 {dimension_numbers = #tpu.dot_dimension_numbers<[1], [0], [0], [1], [0, 0, 1, 1], [], []>} : vector<24x128xbf16>, vector<128x1152xbf16>, vector<24x1152xf32> -> vector<24x1152xf32>
    %cst_82 = arith.constant 0.000000e+00 : f32
    %279 = vector.broadcast %cst_82 : f32 to vector<24x128xf32>
    %280 = vector.extract_strided_slice %278 {offsets = [0, 0], sizes = [24, 128], strides = [1, 1]} : vector<24x1152xf32> to vector<24x128xf32>
    %281 = vector.extract_strided_slice %280 {offsets = [20, 0], sizes = [4, 128], strides = [1, 1]} : vector<24x128xf32> to vector<4x128xf32>
    %282 = vector.extract_strided_slice %280 {offsets = [0, 0], sizes = [20, 128], strides = [1, 1]} : vector<24x128xf32> to vector<20x128xf32>
    %283 = tpu.concatenate %281, %282 in 0 : vector<4x128xf32>, vector<20x128xf32> -> vector<24x128xf32>
    %c0_83 = arith.constant 0 : index
    %c27 = arith.constant 27 : index
    %284 = vector.load %arg4[%c0_83, %c27] : memref<128x128xf32, #tpu.memory_space<vmem>>, vector<24x1xf32>
    %285 = vector.broadcast %284 : vector<24x1xf32> to vector<24x128xf32>
    %286 = arith.mulf %283, %285 : vector<24x128xf32>
    %287 = arith.addf %279, %286 : vector<24x128xf32>
    %288 = vector.extract_strided_slice %278 {offsets = [0, 128], sizes = [24, 128], strides = [1, 1]} : vector<24x1152xf32> to vector<24x128xf32>
    %289 = vector.extract_strided_slice %288 {offsets = [21, 0], sizes = [3, 128], strides = [1, 1]} : vector<24x128xf32> to vector<3x128xf32>
    %290 = vector.extract_strided_slice %288 {offsets = [0, 0], sizes = [21, 128], strides = [1, 1]} : vector<24x128xf32> to vector<21x128xf32>
    %291 = tpu.concatenate %289, %290 in 0 : vector<3x128xf32>, vector<21x128xf32> -> vector<24x128xf32>
    %c0_84 = arith.constant 0 : index
    %c28 = arith.constant 28 : index
    %292 = vector.load %arg4[%c0_84, %c28] : memref<128x128xf32, #tpu.memory_space<vmem>>, vector<24x1xf32>
    %293 = vector.broadcast %292 : vector<24x1xf32> to vector<24x128xf32>
    %294 = arith.mulf %291, %293 : vector<24x128xf32>
    %295 = arith.addf %287, %294 : vector<24x128xf32>
    %296 = vector.extract_strided_slice %278 {offsets = [0, 256], sizes = [24, 128], strides = [1, 1]} : vector<24x1152xf32> to vector<24x128xf32>
    %297 = vector.extract_strided_slice %296 {offsets = [22, 0], sizes = [2, 128], strides = [1, 1]} : vector<24x128xf32> to vector<2x128xf32>
    %298 = vector.extract_strided_slice %296 {offsets = [0, 0], sizes = [22, 128], strides = [1, 1]} : vector<24x128xf32> to vector<22x128xf32>
    %299 = tpu.concatenate %297, %298 in 0 : vector<2x128xf32>, vector<22x128xf32> -> vector<24x128xf32>
    %c0_85 = arith.constant 0 : index
    %c29 = arith.constant 29 : index
    %300 = vector.load %arg4[%c0_85, %c29] : memref<128x128xf32, #tpu.memory_space<vmem>>, vector<24x1xf32>
    %301 = vector.broadcast %300 : vector<24x1xf32> to vector<24x128xf32>
    %302 = arith.mulf %299, %301 : vector<24x128xf32>
    %303 = arith.addf %295, %302 : vector<24x128xf32>
    %304 = vector.extract_strided_slice %278 {offsets = [0, 384], sizes = [24, 128], strides = [1, 1]} : vector<24x1152xf32> to vector<24x128xf32>
    %305 = vector.extract_strided_slice %304 {offsets = [23, 0], sizes = [1, 128], strides = [1, 1]} : vector<24x128xf32> to vector<1x128xf32>
    %306 = vector.extract_strided_slice %304 {offsets = [0, 0], sizes = [23, 128], strides = [1, 1]} : vector<24x128xf32> to vector<23x128xf32>
    %307 = tpu.concatenate %305, %306 in 0 : vector<1x128xf32>, vector<23x128xf32> -> vector<24x128xf32>
    %c0_86 = arith.constant 0 : index
    %c30 = arith.constant 30 : index
    %308 = vector.load %arg4[%c0_86, %c30] : memref<128x128xf32, #tpu.memory_space<vmem>>, vector<24x1xf32>
    %309 = vector.broadcast %308 : vector<24x1xf32> to vector<24x128xf32>
    %310 = arith.mulf %307, %309 : vector<24x128xf32>
    %311 = arith.addf %303, %310 : vector<24x128xf32>
    %312 = vector.extract_strided_slice %278 {offsets = [0, 512], sizes = [24, 128], strides = [1, 1]} : vector<24x1152xf32> to vector<24x128xf32>
    %c0_87 = arith.constant 0 : index
    %c31 = arith.constant 31 : index
    %313 = vector.load %arg4[%c0_87, %c31] : memref<128x128xf32, #tpu.memory_space<vmem>>, vector<24x1xf32>
    %314 = vector.broadcast %313 : vector<24x1xf32> to vector<24x128xf32>
    %315 = arith.mulf %312, %314 : vector<24x128xf32>
    %316 = arith.addf %311, %315 : vector<24x128xf32>
    %317 = vector.extract_strided_slice %278 {offsets = [0, 640], sizes = [24, 128], strides = [1, 1]} : vector<24x1152xf32> to vector<24x128xf32>
    %318 = vector.extract_strided_slice %317 {offsets = [1, 0], sizes = [23, 128], strides = [1, 1]} : vector<24x128xf32> to vector<23x128xf32>
    %319 = vector.extract_strided_slice %317 {offsets = [0, 0], sizes = [1, 128], strides = [1, 1]} : vector<24x128xf32> to vector<1x128xf32>
    %320 = tpu.concatenate %318, %319 in 0 : vector<23x128xf32>, vector<1x128xf32> -> vector<24x128xf32>
    %c0_88 = arith.constant 0 : index
    %c32_89 = arith.constant 32 : index
    %321 = vector.load %arg4[%c0_88, %c32_89] : memref<128x128xf32, #tpu.memory_space<vmem>>, vector<24x1xf32>
    %322 = vector.broadcast %321 : vector<24x1xf32> to vector<24x128xf32>
    %323 = arith.mulf %320, %322 : vector<24x128xf32>
    %324 = arith.addf %316, %323 : vector<24x128xf32>
    %325 = vector.extract_strided_slice %278 {offsets = [0, 768], sizes = [24, 128], strides = [1, 1]} : vector<24x1152xf32> to vector<24x128xf32>
    %326 = vector.extract_strided_slice %325 {offsets = [2, 0], sizes = [22, 128], strides = [1, 1]} : vector<24x128xf32> to vector<22x128xf32>
    %327 = vector.extract_strided_slice %325 {offsets = [0, 0], sizes = [2, 128], strides = [1, 1]} : vector<24x128xf32> to vector<2x128xf32>
    %328 = tpu.concatenate %326, %327 in 0 : vector<22x128xf32>, vector<2x128xf32> -> vector<24x128xf32>
    %c0_90 = arith.constant 0 : index
    %c33 = arith.constant 33 : index
    %329 = vector.load %arg4[%c0_90, %c33] : memref<128x128xf32, #tpu.memory_space<vmem>>, vector<24x1xf32>
    %330 = vector.broadcast %329 : vector<24x1xf32> to vector<24x128xf32>
    %331 = arith.mulf %328, %330 : vector<24x128xf32>
    %332 = arith.addf %324, %331 : vector<24x128xf32>
    %333 = vector.extract_strided_slice %278 {offsets = [0, 896], sizes = [24, 128], strides = [1, 1]} : vector<24x1152xf32> to vector<24x128xf32>
    %334 = vector.extract_strided_slice %333 {offsets = [3, 0], sizes = [21, 128], strides = [1, 1]} : vector<24x128xf32> to vector<21x128xf32>
    %335 = vector.extract_strided_slice %333 {offsets = [0, 0], sizes = [3, 128], strides = [1, 1]} : vector<24x128xf32> to vector<3x128xf32>
    %336 = tpu.concatenate %334, %335 in 0 : vector<21x128xf32>, vector<3x128xf32> -> vector<24x128xf32>
    %c0_91 = arith.constant 0 : index
    %c34 = arith.constant 34 : index
    %337 = vector.load %arg4[%c0_91, %c34] : memref<128x128xf32, #tpu.memory_space<vmem>>, vector<24x1xf32>
    %338 = vector.broadcast %337 : vector<24x1xf32> to vector<24x128xf32>
    %339 = arith.mulf %336, %338 : vector<24x128xf32>
    %340 = arith.addf %332, %339 : vector<24x128xf32>
    %341 = vector.extract_strided_slice %278 {offsets = [0, 1024], sizes = [24, 128], strides = [1, 1]} : vector<24x1152xf32> to vector<24x128xf32>
    %342 = vector.extract_strided_slice %341 {offsets = [4, 0], sizes = [20, 128], strides = [1, 1]} : vector<24x128xf32> to vector<20x128xf32>
    %343 = vector.extract_strided_slice %341 {offsets = [0, 0], sizes = [4, 128], strides = [1, 1]} : vector<24x128xf32> to vector<4x128xf32>
    %344 = tpu.concatenate %342, %343 in 0 : vector<20x128xf32>, vector<4x128xf32> -> vector<24x128xf32>
    %c0_92 = arith.constant 0 : index
    %c35 = arith.constant 35 : index
    %345 = vector.load %arg4[%c0_92, %c35] : memref<128x128xf32, #tpu.memory_space<vmem>>, vector<24x1xf32>
    %346 = vector.broadcast %345 : vector<24x1xf32> to vector<24x128xf32>
    %347 = arith.mulf %344, %346 : vector<24x128xf32>
    %348 = arith.addf %340, %347 : vector<24x128xf32>
    %c4_93 = arith.constant 4 : index
    %c0_94 = arith.constant 0 : index
    %349 = vector.load %arg5[%c4_93, %c0_94] : memref<14x128xf32, #tpu.memory_space<vmem>>, vector<1x128xf32>
    %350 = vector.broadcast %349 : vector<1x128xf32> to vector<24x128xf32>
    %351 = arith.addf %348, %350 : vector<24x128xf32>
    %cst_95 = arith.constant 0.000000e+00 : f32
    %352 = vector.broadcast %cst_95 : f32 to vector<24x128xf32>
    %353 = arith.maximumf %351, %352 : vector<24x128xf32>
    %c0_96 = arith.constant 0 : index
    %c38 = arith.constant 38 : index
    %354 = vector.load %arg4[%c0_96, %c38] : memref<128x128xf32, #tpu.memory_space<vmem>>, vector<24x1xf32>
    %355 = vector.broadcast %354 : vector<24x1xf32> to vector<24x128xf32>
    %356 = arith.mulf %353, %355 : vector<24x128xf32>
    %357 = arith.truncf %356 : vector<24x128xf32> to vector<24x128xbf16>
    %c216 = arith.constant 216 : index
    %c0_97 = arith.constant 0 : index
    %358 = vector.load %arg3[%c216, %c0_97] : memref<448x128xbf16, #tpu.memory_space<vmem>>, vector<8x24xbf16>
    %cst_98 = arith.constant dense<0.000000e+00> : vector<8x128xf32>
    %359 = tpu.matmul %358, %357, %cst_98 {dimension_numbers = #tpu.dot_dimension_numbers<[1], [0], [0], [1], [0, 0, 1, 1], [], []>} : vector<8x24xbf16>, vector<24x128xbf16>, vector<8x128xf32> -> vector<8x128xf32>
    %c224 = arith.constant 224 : index
    %c0_99 = arith.constant 0 : index
    %360 = vector.load %arg3[%c224, %c0_99] : memref<448x128xbf16, #tpu.memory_space<vmem>>, vector<8x24xbf16>
    %cst_100 = arith.constant dense<0.000000e+00> : vector<8x128xf32>
    %361 = tpu.matmul %360, %357, %cst_100 {dimension_numbers = #tpu.dot_dimension_numbers<[1], [0], [0], [1], [0, 0, 1, 1], [], []>} : vector<8x24xbf16>, vector<24x128xbf16>, vector<8x128xf32> -> vector<8x128xf32>
    %c232 = arith.constant 232 : index
    %c0_101 = arith.constant 0 : index
    %362 = vector.load %arg3[%c232, %c0_101] : memref<448x128xbf16, #tpu.memory_space<vmem>>, vector<8x24xbf16>
    %cst_102 = arith.constant dense<0.000000e+00> : vector<8x128xf32>
    %363 = tpu.matmul %362, %357, %cst_102 {dimension_numbers = #tpu.dot_dimension_numbers<[1], [0], [0], [1], [0, 0, 1, 1], [], []>} : vector<8x24xbf16>, vector<24x128xbf16>, vector<8x128xf32> -> vector<8x128xf32>
    %c240 = arith.constant 240 : index
    %c0_103 = arith.constant 0 : index
    %364 = vector.load %arg3[%c240, %c0_103] : memref<448x128xbf16, #tpu.memory_space<vmem>>, vector<8x24xbf16>
    %cst_104 = arith.constant dense<0.000000e+00> : vector<8x128xf32>
    %365 = tpu.matmul %364, %357, %cst_104 {dimension_numbers = #tpu.dot_dimension_numbers<[1], [0], [0], [1], [0, 0, 1, 1], [], []>} : vector<8x24xbf16>, vector<24x128xbf16>, vector<8x128xf32> -> vector<8x128xf32>
    %c248 = arith.constant 248 : index
    %c0_105 = arith.constant 0 : index
    %366 = vector.load %arg3[%c248, %c0_105] : memref<448x128xbf16, #tpu.memory_space<vmem>>, vector<8x24xbf16>
    %cst_106 = arith.constant dense<0.000000e+00> : vector<8x128xf32>
    %367 = tpu.matmul %366, %357, %cst_106 {dimension_numbers = #tpu.dot_dimension_numbers<[1], [0], [0], [1], [0, 0, 1, 1], [], []>} : vector<8x24xbf16>, vector<24x128xbf16>, vector<8x128xf32> -> vector<8x128xf32>
    %c256 = arith.constant 256 : index
    %c0_107 = arith.constant 0 : index
    %368 = vector.load %arg3[%c256, %c0_107] : memref<448x128xbf16, #tpu.memory_space<vmem>>, vector<8x24xbf16>
    %cst_108 = arith.constant dense<0.000000e+00> : vector<8x128xf32>
    %369 = tpu.matmul %368, %357, %cst_108 {dimension_numbers = #tpu.dot_dimension_numbers<[1], [0], [0], [1], [0, 0, 1, 1], [], []>} : vector<8x24xbf16>, vector<24x128xbf16>, vector<8x128xf32> -> vector<8x128xf32>
    %c264 = arith.constant 264 : index
    %c0_109 = arith.constant 0 : index
    %370 = vector.load %arg3[%c264, %c0_109] : memref<448x128xbf16, #tpu.memory_space<vmem>>, vector<8x24xbf16>
    %cst_110 = arith.constant dense<0.000000e+00> : vector<8x128xf32>
    %371 = tpu.matmul %370, %357, %cst_110 {dimension_numbers = #tpu.dot_dimension_numbers<[1], [0], [0], [1], [0, 0, 1, 1], [], []>} : vector<8x24xbf16>, vector<24x128xbf16>, vector<8x128xf32> -> vector<8x128xf32>
    %c272 = arith.constant 272 : index
    %c0_111 = arith.constant 0 : index
    %372 = vector.load %arg3[%c272, %c0_111] : memref<448x128xbf16, #tpu.memory_space<vmem>>, vector<8x24xbf16>
    %cst_112 = arith.constant dense<0.000000e+00> : vector<8x128xf32>
    %373 = tpu.matmul %372, %357, %cst_112 {dimension_numbers = #tpu.dot_dimension_numbers<[1], [0], [0], [1], [0, 0, 1, 1], [], []>} : vector<8x24xbf16>, vector<24x128xbf16>, vector<8x128xf32> -> vector<8x128xf32>
    %c280 = arith.constant 280 : index
    %c0_113 = arith.constant 0 : index
    %374 = vector.load %arg3[%c280, %c0_113] : memref<448x128xbf16, #tpu.memory_space<vmem>>, vector<8x24xbf16>
    %cst_114 = arith.constant dense<0.000000e+00> : vector<8x128xf32>
    %375 = tpu.matmul %374, %357, %cst_114 {dimension_numbers = #tpu.dot_dimension_numbers<[1], [0], [0], [1], [0, 0, 1, 1], [], []>} : vector<8x24xbf16>, vector<24x128xbf16>, vector<8x128xf32> -> vector<8x128xf32>
    %376 = tpu.concatenate %359, %361, %363, %365, %367, %369, %371, %373, %375 in 1 : vector<8x128xf32>, vector<8x128xf32>, vector<8x128xf32>, vector<8x128xf32>, vector<8x128xf32>, vector<8x128xf32>, vector<8x128xf32>, vector<8x128xf32>, vector<8x128xf32> -> vector<8x1152xf32>
    %377 = arith.truncf %376 : vector<8x1152xf32> to vector<8x1152xbf16>
    %c1152 = arith.constant 1152 : index
    %c0_115 = arith.constant 0 : index
    %378 = vector.load %arg2[%c1152, %c0_115] : memref<4224x128xbf16, #tpu.memory_space<vmem>>, vector<1152x128xbf16>
    %cst_116 = arith.constant dense<0.000000e+00> : vector<8x128xf32>
    %379 = tpu.matmul %377, %378, %cst_116 {dimension_numbers = #tpu.dot_dimension_numbers<[1], [0], [0], [1], [0, 0, 1, 1], [], []>} : vector<8x1152xbf16>, vector<1152x128xbf16>, vector<8x128xf32> -> vector<8x128xf32>
    %c5_117 = arith.constant 5 : index
    %c0_118 = arith.constant 0 : index
    %380 = vector.load %arg5[%c5_117, %c0_118] : memref<14x128xf32, #tpu.memory_space<vmem>>, vector<1x128xf32>
    %381 = vector.broadcast %380 : vector<1x128xf32> to vector<8x128xf32>
    %382 = arith.addf %379, %381 : vector<8x128xf32>
    %cst_119 = arith.constant 0.000000e+00 : f32
    %383 = vector.broadcast %cst_119 : f32 to vector<8x128xf32>
    %384 = arith.maximumf %382, %383 : vector<8x128xf32>
    %c0_120 = arith.constant 0 : index
    %c39 = arith.constant 39 : index
    %385 = vector.load %arg4[%c0_120, %c39] : memref<128x128xf32, #tpu.memory_space<vmem>>, vector<8x1xf32>
    %386 = vector.broadcast %385 : vector<8x1xf32> to vector<8x128xf32>
    %387 = arith.mulf %384, %386 : vector<8x128xf32>
    %388 = arith.truncf %387 : vector<8x128xf32> to vector<8x128xbf16>
    %c288 = arith.constant 288 : index
    %c0_121 = arith.constant 0 : index
    %389 = vector.load %arg3[%c288, %c0_121] : memref<448x128xbf16, #tpu.memory_space<vmem>>, vector<8x8xbf16>
    %cst_122 = arith.constant dense<0.000000e+00> : vector<8x128xf32>
    %390 = tpu.matmul %389, %388, %cst_122 {dimension_numbers = #tpu.dot_dimension_numbers<[1], [0], [0], [1], [0, 0, 1, 1], [], []>} : vector<8x8xbf16>, vector<8x128xbf16>, vector<8x128xf32> -> vector<8x128xf32>
    %c296 = arith.constant 296 : index
    %c0_123 = arith.constant 0 : index
    %391 = vector.load %arg3[%c296, %c0_123] : memref<448x128xbf16, #tpu.memory_space<vmem>>, vector<8x8xbf16>
    %cst_124 = arith.constant dense<0.000000e+00> : vector<8x128xf32>
    %392 = tpu.matmul %391, %388, %cst_124 {dimension_numbers = #tpu.dot_dimension_numbers<[1], [0], [0], [1], [0, 0, 1, 1], [], []>} : vector<8x8xbf16>, vector<8x128xbf16>, vector<8x128xf32> -> vector<8x128xf32>
    %c304 = arith.constant 304 : index
    %c0_125 = arith.constant 0 : index
    %393 = vector.load %arg3[%c304, %c0_125] : memref<448x128xbf16, #tpu.memory_space<vmem>>, vector<8x8xbf16>
    %cst_126 = arith.constant dense<0.000000e+00> : vector<8x128xf32>
    %394 = tpu.matmul %393, %388, %cst_126 {dimension_numbers = #tpu.dot_dimension_numbers<[1], [0], [0], [1], [0, 0, 1, 1], [], []>} : vector<8x8xbf16>, vector<8x128xbf16>, vector<8x128xf32> -> vector<8x128xf32>
    %c312 = arith.constant 312 : index
    %c0_127 = arith.constant 0 : index
    %395 = vector.load %arg3[%c312, %c0_127] : memref<448x128xbf16, #tpu.memory_space<vmem>>, vector<8x8xbf16>
    %cst_128 = arith.constant dense<0.000000e+00> : vector<8x128xf32>
    %396 = tpu.matmul %395, %388, %cst_128 {dimension_numbers = #tpu.dot_dimension_numbers<[1], [0], [0], [1], [0, 0, 1, 1], [], []>} : vector<8x8xbf16>, vector<8x128xbf16>, vector<8x128xf32> -> vector<8x128xf32>
    %397 = tpu.concatenate %390, %392, %394, %396 in 1 : vector<8x128xf32>, vector<8x128xf32>, vector<8x128xf32>, vector<8x128xf32> -> vector<8x512xf32>
    %398 = arith.truncf %397 : vector<8x512xf32> to vector<8x512xbf16>
    %c2304 = arith.constant 2304 : index
    %c0_129 = arith.constant 0 : index
    %399 = vector.load %arg2[%c2304, %c0_129] : memref<4224x128xbf16, #tpu.memory_space<vmem>>, vector<512x128xbf16>
    %cst_130 = arith.constant dense<0.000000e+00> : vector<8x128xf32>
    %400 = tpu.matmul %398, %399, %cst_130 {dimension_numbers = #tpu.dot_dimension_numbers<[1], [0], [0], [1], [0, 0, 1, 1], [], []>} : vector<8x512xbf16>, vector<512x128xbf16>, vector<8x128xf32> -> vector<8x128xf32>
    %c6_131 = arith.constant 6 : index
    %c0_132 = arith.constant 0 : index
    %401 = vector.load %arg5[%c6_131, %c0_132] : memref<14x128xf32, #tpu.memory_space<vmem>>, vector<1x128xf32>
    %402 = vector.broadcast %401 : vector<1x128xf32> to vector<8x128xf32>
    %403 = arith.addf %400, %402 : vector<8x128xf32>
    %cst_133 = arith.constant 0.000000e+00 : f32
    %404 = vector.broadcast %cst_133 : f32 to vector<8x128xf32>
    %405 = arith.maximumf %403, %404 : vector<8x128xf32>
    %406 = arith.truncf %405 : vector<8x128xf32> to vector<8x128xbf16>
    %c320 = arith.constant 320 : index
    %c0_134 = arith.constant 0 : index
    %407 = vector.load %arg3[%c320, %c0_134] : memref<448x128xbf16, #tpu.memory_space<vmem>>, vector<24x8xbf16>
    %cst_135 = arith.constant dense<0.000000e+00> : vector<24x128xf32>
    %408 = tpu.matmul %407, %406, %cst_135 {dimension_numbers = #tpu.dot_dimension_numbers<[1], [0], [0], [1], [0, 0, 1, 1], [], []>} : vector<24x8xbf16>, vector<8x128xbf16>, vector<24x128xf32> -> vector<24x128xf32>
    %c344 = arith.constant 344 : index
    %c0_136 = arith.constant 0 : index
    %409 = vector.load %arg3[%c344, %c0_136] : memref<448x128xbf16, #tpu.memory_space<vmem>>, vector<24x8xbf16>
    %cst_137 = arith.constant dense<0.000000e+00> : vector<24x128xf32>
    %410 = tpu.matmul %409, %406, %cst_137 {dimension_numbers = #tpu.dot_dimension_numbers<[1], [0], [0], [1], [0, 0, 1, 1], [], []>} : vector<24x8xbf16>, vector<8x128xbf16>, vector<24x128xf32> -> vector<24x128xf32>
    %c368 = arith.constant 368 : index
    %c0_138 = arith.constant 0 : index
    %411 = vector.load %arg3[%c368, %c0_138] : memref<448x128xbf16, #tpu.memory_space<vmem>>, vector<24x8xbf16>
    %cst_139 = arith.constant dense<0.000000e+00> : vector<24x128xf32>
    %412 = tpu.matmul %411, %406, %cst_139 {dimension_numbers = #tpu.dot_dimension_numbers<[1], [0], [0], [1], [0, 0, 1, 1], [], []>} : vector<24x8xbf16>, vector<8x128xbf16>, vector<24x128xf32> -> vector<24x128xf32>
    %c392 = arith.constant 392 : index
    %c0_140 = arith.constant 0 : index
    %413 = vector.load %arg3[%c392, %c0_140] : memref<448x128xbf16, #tpu.memory_space<vmem>>, vector<24x8xbf16>
    %cst_141 = arith.constant dense<0.000000e+00> : vector<24x128xf32>
    %414 = tpu.matmul %413, %406, %cst_141 {dimension_numbers = #tpu.dot_dimension_numbers<[1], [0], [0], [1], [0, 0, 1, 1], [], []>} : vector<24x8xbf16>, vector<8x128xbf16>, vector<24x128xf32> -> vector<24x128xf32>
    %415 = tpu.concatenate %408, %410, %412, %414 in 1 : vector<24x128xf32>, vector<24x128xf32>, vector<24x128xf32>, vector<24x128xf32> -> vector<24x512xf32>
    %416 = arith.truncf %415 : vector<24x512xf32> to vector<24x512xbf16>
    %c2816 = arith.constant 2816 : index
    %c0_142 = arith.constant 0 : index
    %417 = vector.load %arg2[%c2816, %c0_142] : memref<4224x128xbf16, #tpu.memory_space<vmem>>, vector<512x128xbf16>
    %cst_143 = arith.constant dense<0.000000e+00> : vector<24x128xf32>
    %418 = tpu.matmul %416, %417, %cst_143 {dimension_numbers = #tpu.dot_dimension_numbers<[1], [0], [0], [1], [0, 0, 1, 1], [], []>} : vector<24x512xbf16>, vector<512x128xbf16>, vector<24x128xf32> -> vector<24x128xf32>
    %c7_144 = arith.constant 7 : index
    %c0_145 = arith.constant 0 : index
    %419 = vector.load %arg5[%c7_144, %c0_145] : memref<14x128xf32, #tpu.memory_space<vmem>>, vector<1x128xf32>
    %420 = vector.broadcast %419 : vector<1x128xf32> to vector<24x128xf32>
    %421 = arith.addf %418, %420 : vector<24x128xf32>
    %cst_146 = arith.constant 0.000000e+00 : f32
    %422 = vector.broadcast %cst_146 : f32 to vector<24x128xf32>
    %423 = arith.maximumf %421, %422 : vector<24x128xf32>
    %c0_147 = arith.constant 0 : index
    %c40 = arith.constant 40 : index
    %424 = vector.load %arg4[%c0_147, %c40] : memref<128x128xf32, #tpu.memory_space<vmem>>, vector<24x1xf32>
    %425 = vector.broadcast %424 : vector<24x1xf32> to vector<24x128xf32>
    %426 = arith.mulf %423, %425 : vector<24x128xf32>
    %427 = arith.truncf %426 : vector<24x128xf32> to vector<24x128xbf16>
    %c416 = arith.constant 416 : index
    %c0_148 = arith.constant 0 : index
    %428 = vector.load %arg3[%c416, %c0_148] : memref<448x128xbf16, #tpu.memory_space<vmem>>, vector<8x24xbf16>
    %cst_149 = arith.constant dense<0.000000e+00> : vector<8x128xf32>
    %429 = tpu.matmul %428, %427, %cst_149 {dimension_numbers = #tpu.dot_dimension_numbers<[1], [0], [0], [1], [0, 0, 1, 1], [], []>} : vector<8x24xbf16>, vector<24x128xbf16>, vector<8x128xf32> -> vector<8x128xf32>
    %c424 = arith.constant 424 : index
    %c0_150 = arith.constant 0 : index
    %430 = vector.load %arg3[%c424, %c0_150] : memref<448x128xbf16, #tpu.memory_space<vmem>>, vector<8x24xbf16>
    %cst_151 = arith.constant dense<0.000000e+00> : vector<8x128xf32>
    %431 = tpu.matmul %430, %427, %cst_151 {dimension_numbers = #tpu.dot_dimension_numbers<[1], [0], [0], [1], [0, 0, 1, 1], [], []>} : vector<8x24xbf16>, vector<24x128xbf16>, vector<8x128xf32> -> vector<8x128xf32>
    %c432 = arith.constant 432 : index
    %c0_152 = arith.constant 0 : index
    %432 = vector.load %arg3[%c432, %c0_152] : memref<448x128xbf16, #tpu.memory_space<vmem>>, vector<8x24xbf16>
    %cst_153 = arith.constant dense<0.000000e+00> : vector<8x128xf32>
    %433 = tpu.matmul %432, %427, %cst_153 {dimension_numbers = #tpu.dot_dimension_numbers<[1], [0], [0], [1], [0, 0, 1, 1], [], []>} : vector<8x24xbf16>, vector<24x128xbf16>, vector<8x128xf32> -> vector<8x128xf32>
    %c440 = arith.constant 440 : index
    %c0_154 = arith.constant 0 : index
    %434 = vector.load %arg3[%c440, %c0_154] : memref<448x128xbf16, #tpu.memory_space<vmem>>, vector<8x24xbf16>
    %cst_155 = arith.constant dense<0.000000e+00> : vector<8x128xf32>
    %435 = tpu.matmul %434, %427, %cst_155 {dimension_numbers = #tpu.dot_dimension_numbers<[1], [0], [0], [1], [0, 0, 1, 1], [], []>} : vector<8x24xbf16>, vector<24x128xbf16>, vector<8x128xf32> -> vector<8x128xf32>
    %436 = tpu.concatenate %429, %431, %433, %435 in 1 : vector<8x128xf32>, vector<8x128xf32>, vector<8x128xf32>, vector<8x128xf32> -> vector<8x512xf32>
    %437 = arith.truncf %436 : vector<8x512xf32> to vector<8x512xbf16>
    %c3328 = arith.constant 3328 : index
    %c0_156 = arith.constant 0 : index
    %438 = vector.load %arg2[%c3328, %c0_156] : memref<4224x128xbf16, #tpu.memory_space<vmem>>, vector<512x128xbf16>
    %cst_157 = arith.constant dense<0.000000e+00> : vector<8x128xf32>
    %439 = tpu.matmul %437, %438, %cst_157 {dimension_numbers = #tpu.dot_dimension_numbers<[1], [0], [0], [1], [0, 0, 1, 1], [], []>} : vector<8x512xbf16>, vector<512x128xbf16>, vector<8x128xf32> -> vector<8x128xf32>
    %c8_158 = arith.constant 8 : index
    %c0_159 = arith.constant 0 : index
    %440 = vector.load %arg5[%c8_158, %c0_159] : memref<14x128xf32, #tpu.memory_space<vmem>>, vector<1x128xf32>
    %441 = vector.broadcast %440 : vector<1x128xf32> to vector<8x128xf32>
    %442 = arith.addf %439, %441 : vector<8x128xf32>
    %cst_160 = arith.constant 0.000000e+00 : f32
    %443 = vector.broadcast %cst_160 : f32 to vector<8x128xf32>
    %444 = arith.maximumf %442, %443 : vector<8x128xf32>
    %c0_161 = arith.constant 0 : index
    %c41 = arith.constant 41 : index
    %445 = vector.load %arg4[%c0_161, %c41] : memref<128x128xf32, #tpu.memory_space<vmem>>, vector<8x1xf32>
    %446 = vector.broadcast %445 : vector<8x1xf32> to vector<8x128xf32>
    %447 = arith.mulf %444, %446 : vector<8x128xf32>
    %448 = arith.truncf %447 : vector<8x128xf32> to vector<8x128xbf16>
    %c3840 = arith.constant 3840 : index
    %c0_162 = arith.constant 0 : index
    %449 = vector.load %arg2[%c3840, %c0_162] : memref<4224x128xbf16, #tpu.memory_space<vmem>>, vector<128x128xbf16>
    %cst_163 = arith.constant dense<0.000000e+00> : vector<8x128xf32>
    %450 = tpu.matmul %448, %449, %cst_163 {dimension_numbers = #tpu.dot_dimension_numbers<[1], [0], [0], [1], [0, 0, 1, 1], [], []>} : vector<8x128xbf16>, vector<128x128xbf16>, vector<8x128xf32> -> vector<8x128xf32>
    %c9_164 = arith.constant 9 : index
    %c0_165 = arith.constant 0 : index
    %451 = vector.load %arg5[%c9_164, %c0_165] : memref<14x128xf32, #tpu.memory_space<vmem>>, vector<1x128xf32>
    %452 = vector.broadcast %451 : vector<1x128xf32> to vector<8x128xf32>
    %453 = arith.addf %450, %452 : vector<8x128xf32>
    %cst_166 = arith.constant 0.000000e+00 : f32
    %454 = vector.broadcast %cst_166 : f32 to vector<8x128xf32>
    %455 = arith.maximumf %453, %454 : vector<8x128xf32>
    %c0_167 = arith.constant 0 : index
    %c42 = arith.constant 42 : index
    %456 = vector.load %arg4[%c0_167, %c42] : memref<128x128xf32, #tpu.memory_space<vmem>>, vector<8x1xf32>
    %457 = vector.broadcast %456 : vector<8x1xf32> to vector<8x128xf32>
    %458 = arith.mulf %455, %457 : vector<8x128xf32>
    %459 = arith.truncf %458 : vector<8x128xf32> to vector<8x128xbf16>
    %c3968 = arith.constant 3968 : index
    %c0_168 = arith.constant 0 : index
    %460 = vector.load %arg2[%c3968, %c0_168] : memref<4224x128xbf16, #tpu.memory_space<vmem>>, vector<128x128xbf16>
    %cst_169 = arith.constant dense<0.000000e+00> : vector<8x128xf32>
    %461 = tpu.matmul %459, %460, %cst_169 {dimension_numbers = #tpu.dot_dimension_numbers<[1], [0], [0], [1], [0, 0, 1, 1], [], []>} : vector<8x128xbf16>, vector<128x128xbf16>, vector<8x128xf32> -> vector<8x128xf32>
    %c10_170 = arith.constant 10 : index
    %c0_171 = arith.constant 0 : index
    %462 = vector.load %arg5[%c10_170, %c0_171] : memref<14x128xf32, #tpu.memory_space<vmem>>, vector<1x128xf32>
    %463 = vector.broadcast %462 : vector<1x128xf32> to vector<8x128xf32>
    %464 = arith.addf %461, %463 : vector<8x128xf32>
    %cst_172 = arith.constant 0.000000e+00 : f32
    %465 = vector.broadcast %cst_172 : f32 to vector<8x128xf32>
    %466 = arith.maximumf %464, %465 : vector<8x128xf32>
    %c0_173 = arith.constant 0 : index
    %c43 = arith.constant 43 : index
    %467 = vector.load %arg4[%c0_173, %c43] : memref<128x128xf32, #tpu.memory_space<vmem>>, vector<8x1xf32>
    %468 = vector.broadcast %467 : vector<8x1xf32> to vector<8x128xf32>
    %469 = arith.mulf %466, %468 : vector<8x128xf32>
    %470 = arith.truncf %469 : vector<8x128xf32> to vector<8x128xbf16>
    %c4096 = arith.constant 4096 : index
    %c0_174 = arith.constant 0 : index
    %471 = vector.load %arg2[%c4096, %c0_174] : memref<4224x128xbf16, #tpu.memory_space<vmem>>, vector<128x128xbf16>
    %cst_175 = arith.constant dense<0.000000e+00> : vector<8x128xf32>
    %472 = tpu.matmul %470, %471, %cst_175 {dimension_numbers = #tpu.dot_dimension_numbers<[1], [0], [0], [1], [0, 0, 1, 1], [], []>} : vector<8x128xbf16>, vector<128x128xbf16>, vector<8x128xf32> -> vector<8x128xf32>
    %c11_176 = arith.constant 11 : index
    %c0_177 = arith.constant 0 : index
    %473 = vector.load %arg5[%c11_176, %c0_177] : memref<14x128xf32, #tpu.memory_space<vmem>>, vector<1x128xf32>
    %474 = vector.broadcast %473 : vector<1x128xf32> to vector<8x128xf32>
    %475 = arith.addf %472, %474 : vector<8x128xf32>
    %cst_178 = arith.constant 0.000000e+00 : f32
    %476 = vector.broadcast %cst_178 : f32 to vector<8x128xf32>
    %477 = arith.maximumf %475, %476 : vector<8x128xf32>
    %c0_179 = arith.constant 0 : index
    %c44 = arith.constant 44 : index
    %478 = vector.load %arg4[%c0_179, %c44] : memref<128x128xf32, #tpu.memory_space<vmem>>, vector<8x1xf32>
    %479 = vector.broadcast %478 : vector<8x1xf32> to vector<8x128xf32>
    %480 = arith.mulf %477, %479 : vector<8x128xf32>
    %481 = arith.truncf %480 : vector<8x128xf32> to vector<8x128xbf16>
    %c12_180 = arith.constant 12 : index
    %c0_181 = arith.constant 0 : index
    %482 = vector.load %arg5[%c12_180, %c0_181] : memref<14x128xf32, #tpu.memory_space<vmem>>, vector<1x128xf32>
    %c13_182 = arith.constant 13 : index
    %c0_183 = arith.constant 0 : index
    %483 = vector.load %arg5[%c13_182, %c0_183] : memref<14x128xf32, #tpu.memory_space<vmem>>, vector<1x1xf32>
    %484 = arith.extf %481 : vector<8x128xbf16> to vector<8x128xf32>
    %485 = vector.broadcast %482 : vector<1x128xf32> to vector<8x128xf32>
    %486 = arith.mulf %484, %485 : vector<8x128xf32>
    %cst_184 = arith.constant dense<0.000000e+00> : vector<8xf32>
    %487 = vector.multi_reduction <add>, %486, %cst_184 [1] : vector<8x128xf32> to vector<8xf32>
    %488 = vector.shape_cast %487 : vector<8xf32> to vector<8x1xf32>
    %489 = vector.broadcast %483 : vector<1x1xf32> to vector<8x1xf32>
    %490 = arith.addf %488, %489 : vector<8x1xf32>
    %491 = vector.extract_strided_slice %490 {offsets = [0, 0], sizes = [2, 1], strides = [1, 1]} : vector<8x1xf32> to vector<2x1xf32>
    %492 = math.tanh %491 : vector<2x1xf32>
    %c0_185 = arith.constant 0 : index
    %c0_186 = arith.constant 0 : index
    %493 = vector.load %arg6[%c0_185, %c0_186] : memref<2x1xf32, #tpu.memory_space<vmem>>, vector<2x1xf32>
    tpu.vector_store %arg6[%c0_185, %c0_186], %492 {strides = array<i32>} : memref<2x1xf32, #tpu.memory_space<vmem>>, vector<2x1xf32>,
    return
  }
}

</mosaic_0001>

<llo_original>
// kernel: tpu_custom_call.1
$region0: #{tpu_custom_call.1}
  #allocation0 [shape = 'u32[]', space=smem, size = 0x4, offset = 0x4, fixed_abs, tag = 'smem constant byte address 0x4 - core index']
  #allocation1 [shape = 'u32[144,128]{1,0:T(1,128)}', space=vmem, size = 0x12000, scoped, tag = 'internal scratch']
  %s0 = inlined_call_operand.hbm [shape: f32[8,128], index: 0, kind: input, shape index: {}]
  %s1 = inlined_call_operand.hbm [shape: f32[8,128], index: 1, kind: output, shape index: {}]
  %s2 = sld [smem:[#allocation0]]
  $region18: #{tpu_custom_call.1} parent=0
    _
  %s4 = ssub.s32 1, %s2
  %s5 = scalar_select 0, %s4, %s2
  $region1: #{tpu_custom_call.1} parent=0
    #allocation2 [shape = 'u8[4096]{0}', space=vmem, size = 0x1000, scoped, tag = 'input window, operand 0, single buffered']
    #allocation3 [shape = 's32[1]{0}', space=sflag, size = 0x4, scoped, tag = 'scoped memory for tpu_custom_call.1']
    #allocation4 [shape = 's32[1]{0}', space=sflag, size = 0x4, scoped, tag = 'scoped memory for tpu_custom_call.1']
    #allocation5 [shape = 'u8[4096]{0}', space=vmem, size = 0x1000, scoped, tag = 'output window, operand 0, single buffered']
    %6 = vsyncpa [#allocation3], 0
    %7 = vsyncpa [#allocation4], 0
    // Predicated region
    $region2: #{tpu_custom_call.1} parent=1 // pred_check
      _
    $region3: #{tpu_custom_call.1} parent=1 // pred_check_branch
      %9 = sbr.rel (0) target = $region5
    $region4: #{tpu_custom_call.1} parent=1 // pred_region
      %s11 = ssub.s32 128, 128
      %12 = vsyncadd [#allocation3], %s11
      %s14 = sshll.u32 [#allocation2], 4
      %s15 = int_to_ptr.vmem [resolvable:$true] %s14
      %17 = dma.hbm_to_vmem [thread:$0]  %s0, 128, %s15, [#allocation3]
    $region5: #{tpu_custom_call.1} parent=1 // pred_fallthru
      _
    // Predicated region
    $region6: #{tpu_custom_call.1} parent=1 // pred_check
      _
    $region7: #{tpu_custom_call.1} parent=1 // pred_check_branch
      %19 = sbr.rel (0) target = $region9
    $region8: #{tpu_custom_call.1} parent=1 // pred_region
      %20 = dma.done [#allocation3], 128
    $region9: #{tpu_custom_call.1} parent=1 // pred_fallthru
      _
    %v21 = vld [vmem:[#allocation2] sm:$0xff]
    %v22 = vrot.slane %v21, 7
    %23 = vst [vmem:[#allocation5] sm:$0xff] %v22
    // Predicated region
    $region10: #{tpu_custom_call.1} parent=1 // pred_check
      _
    $region11: #{tpu_custom_call.1} parent=1 // pred_check_branch
      %25 = sbr.rel (0) target = $region13
    $region12: #{tpu_custom_call.1} parent=1 // pred_region
      %s27 = ssub.s32 128, 128
      %28 = vsyncadd [#allocation4], %s27
      %s30 = sshll.u32 [#allocation5], 4
      %s31 = int_to_ptr.vmem [resolvable:$true] %s30
      %33 = dma.vmem_to_hbm [thread:$0]  %s31, 128, %s1, [#allocation4]
    $region13: #{tpu_custom_call.1} parent=1 // pred_fallthru
      _
    // Predicated region
    $region14: #{tpu_custom_call.1} parent=1 // pred_check
      _
    $region15: #{tpu_custom_call.1} parent=1 // pred_check_branch
      %35 = sbr.rel (0) target = $region17
    $region16: #{tpu_custom_call.1} parent=1 // pred_region
      %36 = dma.done [#allocation4], 128
    $region17: #{tpu_custom_call.1} parent=1 // pred_fallthru
      _
    %37 = vsyncpa [#allocation3], 1
    %38 = vsyncpa [#allocation4], 1

// kernel: forward.1
$region0: #{forward.1}
  #allocation0 [shape = 'u32[]', space=smem, size = 0x4, offset = 0x4, fixed_abs, tag = 'smem constant byte address 0x4 - core index']
  #allocation1 [shape = 'u32[144,128]{1,0:T(1,128)}', space=vmem, size = 0x12000, scoped, tag = 'internal scratch']
  %s0 = inlined_call_operand.vmem [shape: bf16[128,128], index: 0, kind: input, shape index: {}]
  %s1 = inlined_call_operand.hbm [shape: bf16[96,1152], index: 1, kind: input, shape index: {}]
  %s2 = inlined_call_operand.hbm [shape: bf16[4224,128], index: 2, kind: input, shape index: {}]
  %s3 = inlined_call_operand.hbm [shape: bf16[448,128], index: 3, kind: input, shape index: {}]
  %s4 = inlined_call_operand.hbm [shape: f32[128,128], index: 4, kind: input, shape index: {}]
  %s5 = inlined_call_operand.hbm [shape: f32[14,128], index: 5, kind: input, shape index: {}]
  %s6 = inlined_call_operand.vmem [shape: f32[2,1], index: 6, kind: output, shape index: {}]
  %s7 = sld [smem:[#allocation0]]
  $region54: #{forward.1} parent=0
    _
  %s9 = ssub.s32 1, %s7
  %s10 = scalar_select 0, %s9, %s7
  $region1: #{forward.1} parent=0
    #allocation2 [shape = 'u8[221184]{0}', space=vmem, size = 0x36000, scoped, tag = 'input window, operand 1, single buffered']
    #allocation3 [shape = 's32[1]{0}', space=sflag, size = 0x4, scoped, tag = 'scoped memory for forward.1']
    #allocation4 [shape = 'u8[1081344]{0}', space=vmem, size = 0x108000, scoped, tag = 'input window, operand 2, single buffered']
    #allocation5 [shape = 's32[1]{0}', space=sflag, size = 0x4, scoped, tag = 'scoped memory for forward.1']
    #allocation6 [shape = 'u8[114688]{0}', space=vmem, size = 0x1c000, scoped, tag = 'input window, operand 3, single buffered']
    #allocation7 [shape = 'u8[65536]{0}', space=vmem, size = 0x10000, scoped, tag = 'input window, operand 4, single buffered']
    #allocation8 [shape = 's32[1]{0}', space=sflag, size = 0x4, scoped, tag = 'scoped memory for forward.1']
    #allocation9 [shape = 'u8[8192]{0}', space=vmem, size = 0x2000, scoped, tag = 'input window, operand 5, single buffered']
    %11 = vsyncpa [#allocation3], 0
    %12 = vsyncpa [#allocation5], 0
    %13 = vsyncpa [#allocation8], 0
    // Predicated region
    $region2: #{forward.1} parent=1 // pred_check
      _
    $region3: #{forward.1} parent=1 // pred_check_branch
      %15 = sbr.rel (0) target = $region5
    $region4: #{forward.1} parent=1 // pred_region
      _
    $region5: #{forward.1} parent=1 // pred_fallthru
      _
    // Predicated region
    $region6: #{forward.1} parent=1 // pred_check
      _
    $region7: #{forward.1} parent=1 // pred_check_branch
      %17 = sbr.rel (0) target = $region9
    $region8: #{forward.1} parent=1 // pred_region
      %s19 = ssub.s32 6912, 6912
      %20 = vsyncadd [#allocation3], %s19
      %s21 = sshll.u32 [#allocation2], 4
      %s22 = int_to_ptr.vmem [resolvable:$true] %s21
      %27 = dma.hbm_to_vmem [thread:$0]  %s1, 6912, %s22, [#allocation3], 576, 576, 36
    $region9: #{forward.1} parent=1 // pred_fallthru
      _
    // Predicated region
    $region10: #{forward.1} parent=1 // pred_check
      _
    $region11: #{forward.1} parent=1 // pred_check_branch
      %29 = sbr.rel (0) target = $region13
    $region12: #{forward.1} parent=1 // pred_region
      %s31 = ssub.s32 33792, 33792
      %32 = vsyncadd [#allocation5], %s31
      %s33 = sshll.u32 [#allocation4], 4
      %s34 = int_to_ptr.vmem [resolvable:$true] %s33
      %39 = dma.hbm_to_vmem [thread:$0]  %s2, 33792, %s34, [#allocation5], 64, 64, 4
    $region13: #{forward.1} parent=1 // pred_fallthru
      _
    // Predicated region
    $region14: #{forward.1} parent=1 // pred_check
      _
    $region15: #{forward.1} parent=1 // pred_check_branch
      %41 = sbr.rel (0) target = $region17
    $region16: #{forward.1} parent=1 // pred_region
      %s43 = ssub.s32 3584, 3584
      %44 = vsyncadd [#allocation5], %s43
      %s45 = sshll.u32 [#allocation6], 4
      %s46 = int_to_ptr.vmem [resolvable:$true] %s45
      %51 = dma.hbm_to_vmem [thread:$0]  %s3, 3584, %s46, [#allocation5], 64, 64, 4
    $region17: #{forward.1} parent=1 // pred_fallthru
      _
    // Predicated region
    $region18: #{forward.1} parent=1 // pred_check
      _
    $region19: #{forward.1} parent=1 // pred_check_branch
      %53 = sbr.rel (0) target = $region21
    $region20: #{forward.1} parent=1 // pred_region
      %s55 = ssub.s32 2048, 2048
      %56 = vsyncadd [#allocation8], %s55
      %s57 = sshll.u32 [#allocation7], 4
      %s58 = int_to_ptr.vmem [resolvable:$true] %s57
      %63 = dma.hbm_to_vmem [thread:$0]  %s4, 2048, %s58, [#allocation8], 128, 128, 8
    $region21: #{forward.1} parent=1 // pred_fallthru
      _
    // Predicated region
    $region22: #{forward.1} parent=1 // pred_check
      _
    $region23: #{forward.1} parent=1 // pred_check_branch
      %65 = sbr.rel (0) target = $region25
    $region24: #{forward.1} parent=1 // pred_region
      %s67 = ssub.s32 256, 256
      %68 = vsyncadd [#allocation8], %s67
      %s69 = sshll.u32 [#allocation9], 4
      %s70 = int_to_ptr.vmem [resolvable:$true] %s69
      %75 = dma.hbm_to_vmem [thread:$0]  %s5, 256, %s70, [#allocation8], 128, 128, 8
    $region25: #{forward.1} parent=1 // pred_fallthru
      _
    // Predicated region
    $region26: #{forward.1} parent=1 // pred_check
      _
    $region27: #{forward.1} parent=1 // pred_check_branch
      %77 = sbr.rel (0) target = $region29
    $region28: #{forward.1} parent=1 // pred_region
      %78 = dma.done [#allocation3], 6912
    $region29: #{forward.1} parent=1 // pred_fallthru
      _
    // Predicated region
    $region30: #{forward.1} parent=1 // pred_check
      _
    $region31: #{forward.1} parent=1 // pred_check_branch
      %80 = sbr.rel (0) target = $region33
    $region32: #{forward.1} parent=1 // pred_region
      %81 = dma.done [#allocation5], 33792
    $region33: #{forward.1} parent=1 // pred_fallthru
      _
    // Predicated region
    $region34: #{forward.1} parent=1 // pred_check
      _
    $region35: #{forward.1} parent=1 // pred_check_branch
      %83 = sbr.rel (0) target = $region37
    $region36: #{forward.1} parent=1 // pred_region
      %84 = dma.done [#allocation5], 3584
    $region37: #{forward.1} parent=1 // pred_fallthru
      _
    // Predicated region
    $region38: #{forward.1} parent=1 // pred_check
      _
    $region39: #{forward.1} parent=1 // pred_check_branch
      %86 = sbr.rel (0) target = $region41
    $region40: #{forward.1} parent=1 // pred_region
      %87 = dma.done [#allocation8], 2048
    $region41: #{forward.1} parent=1 // pred_fallthru
      _
    // Predicated region
    $region42: #{forward.1} parent=1 // pred_check
      _
    $region43: #{forward.1} parent=1 // pred_check_branch
      %89 = sbr.rel (0) target = $region45
    $region44: #{forward.1} parent=1 // pred_region
      %90 = dma.done [#allocation8], 256
    $region45: #{forward.1} parent=1 // pred_fallthru
      _
    %v92 = vld [vmem:[%s0] sm:$0xf]
    %v93 = vld [vmem:[%s0 + $0x4] sm:$0xf]
    %v94 = vld [vmem:[%s0 + $0x8] sm:$0xf]
    %v95 = vld [vmem:[%s0 + $0xc] sm:$0xf]
    %v96 = vld [vmem:[%s0 + $0x10] sm:$0xf]
    %v97 = vld [vmem:[%s0 + $0x14] sm:$0xf]
    %v98 = vld [vmem:[%s0 + $0x18] sm:$0xf]
    %v99 = vld [vmem:[%s0 + $0x1c] sm:$0xf]
    %v100 = vld [vmem:[%s0 + $0x20] sm:$0xf]
    %v101 = vld [vmem:[%s0 + $0x24] sm:$0xf]
    %v102 = vld [vmem:[%s0 + $0x28] sm:$0xf]
    %v103 = vld [vmem:[%s0 + $0x2c] sm:$0xf]
    %v104 = vld [vmem:[%s0 + $0x30] sm:$0xf]
    %v105 = vld [vmem:[%s0 + $0x34] sm:$0xf]
    %v106 = vld [vmem:[%s0 + $0x38] sm:$0xf]
    %v107 = vld [vmem:[%s0 + $0x3c] sm:$0xf]
    %v108 = vld [vmem:[#allocation2] sm:$0xff]
    %v109 = vld [vmem:[#allocation2 + $0x8] sm:$0xff]
    %v110 = vld [vmem:[#allocation2 + $0x10] sm:$0xff]
    %v111 = vld [vmem:[#allocation2 + $0x18] sm:$0xff]
    %v112 = vld [vmem:[#allocation2 + $0x20] sm:$0xf]
    %v113 = vld [vmem:[#allocation2 + $0x24] sm:$0xff]
    %v114 = vld [vmem:[#allocation2 + $0x2c] sm:$0xff]
    %v115 = vld [vmem:[#allocation2 + $0x34] sm:$0xff]
    %v116 = vld [vmem:[#allocation2 + $0x3c] sm:$0xff]
    %v117 = vld [vmem:[#allocation2 + $0x44] sm:$0xf]
    %v128 = vunpack.c.l.b16 %v108
    %v129 = vunpack.c.h.b16 %v108
    %v130 = vunpack.c.l.b16 %v109
    %v131 = vunpack.c.h.b16 %v109
    %v132 = vunpack.c.l.b16 %v110
    %v133 = vunpack.c.h.b16 %v110
    %v134 = vunpack.c.l.b16 %v111
    %v135 = vunpack.c.h.b16 %v111
    %v136 = vunpack.c.l.b16 %v112
    %v137 = vunpack.c.l.b16 %v113
    %v138 = vunpack.c.h.b16 %v113
    %v139 = vunpack.c.l.b16 %v114
    %v140 = vunpack.c.h.b16 %v114
    %v141 = vunpack.c.l.b16 %v115
    %v142 = vunpack.c.h.b16 %v115
    %v143 = vunpack.c.l.b16 %v116
    %v144 = vunpack.c.h.b16 %v116
    %v145 = vunpack.c.l.b16 %v117
    %v146 = vpack.c.b16 %v137, %v128
    %v147 = vpack.c.b16 %v138, %v129
    %v148 = vpack.c.b16 %v139, %v130
    %v149 = vpack.c.b16 %v140, %v131
    %v150 = vpack.c.b16 %v141, %v132
    %v151 = vpack.c.b16 %v142, %v133
    %v152 = vpack.c.b16 %v143, %v134
    %v153 = vpack.c.b16 %v144, %v135
    %v154 = vpack.c.b16 %v145, %v136
    %v180 = vunpack.c.l.b16 %v92
    %v181 = vunpack.c.l.b16 %v93
    %v182 = vunpack.c.l.b16 %v94
    %v183 = vunpack.c.l.b16 %v95
    %v184 = vunpack.c.l.b16 %v96
    %v185 = vunpack.c.l.b16 %v97
    %v186 = vunpack.c.l.b16 %v98
    %v187 = vunpack.c.l.b16 %v99
    %v188 = vunpack.c.l.b16 %v100
    %v189 = vunpack.c.l.b16 %v101
    %v190 = vunpack.c.l.b16 %v102
    %v191 = vunpack.c.l.b16 %v103
    %v192 = vunpack.c.l.b16 %v104
    %v193 = vunpack.c.l.b16 %v105
    %v194 = vunpack.c.l.b16 %v106
    %v195 = vunpack.c.l.b16 %v107
    %v196 = vpack.c.b16 %v181, %v180
    %v197 = vpack.c.b16 %v183, %v182
    %v198 = vpack.c.b16 %v185, %v184
    %v199 = vpack.c.b16 %v187, %v186
    %v200 = vpack.c.b16 %v189, %v188
    %v201 = vpack.c.b16 %v191, %v190
    %v202 = vpack.c.b16 %v193, %v192
    %v203 = vpack.c.b16 %v195, %v194
    %212 = vmatprep.subr.bf16.mxu0 %v147
    %213 = vmatpush1.bf16.msra.mxu0 %v146
    %214 = vmatprep.subr.bf16.mxu0 0
    %215 = vmatpush1.bf16.msra.mxu0 0
    %216 = vmatprep.subr.bf16.mxu0 0
    %217 = vmatpush1.bf16.msra.mxu0 0
    %218 = vmatprep.subr.bf16.mxu0 0
    %219 = vmatpush1.bf16.msra.mxu0 0
    %220 = vmatprep.subr.bf16.mxu0 0
    %221 = vmatpush1.bf16.msra.mxu0 0
    %222 = vmatprep.subr.bf16.mxu0 0
    %223 = vmatpush1.bf16.msra.mxu0 0
    %224 = vmatprep.subr.bf16.mxu0 0
    %225 = vmatpush1.bf16.msra.mxu0 0
    %226 = vmatprep.subr.bf16.mxu0 0
    %227 = vmatpush1.bf16.msra.mxu0 0
    %228 = vmatprep.subr.bf16.mxu0 0
    %229 = vmatpush1.bf16.msra.mxu0 0
    %230 = vmatprep.subr.bf16.mxu0 0
    %231 = vmatpush1.bf16.msra.mxu0 0
    %232 = vmatprep.subr.bf16.mxu0 0
    %233 = vmatpush1.bf16.msra.mxu0 0
    %234 = vmatprep.subr.bf16.mxu0 0
    %235 = vmatpush1.bf16.msra.mxu0 0
    %236 = vmatprep.subr.bf16.mxu0 0
    %237 = vmatpush1.bf16.msra.mxu0 0
    %238 = vmatprep.subr.bf16.mxu0 0
    %239 = vmatpush1.bf16.msra.mxu0 0
    %240 = vmatprep.subr.bf16.mxu0 0
    %241 = vmatpush1.bf16.msra.mxu0 0
    %242 = vmatprep.subr.bf16.mxu0 0
    %243 = vmatpush1.bf16.msra.mxu0 0
    %244 = vmatprep.mubr.bf16.mxu0 0
    %245 = vmatmul.mubr.bf16.gmra.mrb[0].mxu0 %v196
    %v246 = vpop.f32.mrb[0].mxu0
    %v247 = vadd.f32 0.0, %v246
    %v248 = vpop.f32.mrb[0].mxu0
    %v249 = vadd.f32 0.0, %v248
    %v250 = vpop.f32.mrb[0].mxu0
    %v251 = vadd.f32 0.0, %v250
    %v252 = vpop.f32.mrb[0].mxu0
    %v253 = vadd.f32 0.0, %v252
    %254 = vmatprep.mubr.bf16.mxu0 0
    %255 = vmatmul.mubr.bf16.gmra.mrb[0].mxu0 %v197
    %v256 = vpop.f32.mrb[0].mxu0
    %v257 = vadd.f32 0.0, %v256
    %v258 = vpop.f32.mrb[0].mxu0
    %v259 = vadd.f32 0.0, %v258
    %v260 = vpop.f32.mrb[0].mxu0
    %v261 = vadd.f32 0.0, %v260
    %v262 = vpop.f32.mrb[0].mxu0
    %v263 = vadd.f32 0.0, %v262
    %264 = vmatprep.mubr.bf16.mxu0 0
    %265 = vmatmul.mubr.bf16.gmra.mrb[0].mxu0 %v198
    %v266 = vpop.f32.mrb[0].mxu0
    %v267 = vadd.f32 0.0, %v266
    %v268 = vpop.f32.mrb[0].mxu0
    %v269 = vadd.f32 0.0, %v268
    %v270 = vpop.f32.mrb[0].mxu0
    %v271 = vadd.f32 0.0, %v270
    %v272 = vpop.f32.mrb[0].mxu0
    %v273 = vadd.f32 0.0, %v272
    %274 = vmatprep.mubr.bf16.mxu0 0
    %275 = vmatmul.mubr.bf16.gmra.mrb[0].mxu0 %v199
    %v276 = vpop.f32.mrb[0].mxu0
    %v277 = vadd.f32 0.0, %v276
    %v278 = vpop.f32.mrb[0].mxu0
    %v279 = vadd.f32 0.0, %v278
    %v280 = vpop.f32.mrb[0].mxu0
    %v281 = vadd.f32 0.0, %v280
    %v282 = vpop.f32.mrb[0].mxu0
    %v283 = vadd.f32 0.0, %v282
    %284 = vmatprep.mubr.bf16.mxu0 0
    %285 = vmatmul.mubr.bf16.gmra.mrb[0].mxu0 %v200
    %v286 = vpop.f32.mrb[0].mxu0
    %v287 = vadd.f32 0.0, %v286
    %v288 = vpop.f32.mrb[0].mxu0
    %v289 = vadd.f32 0.0, %v288
    %v290 = vpop.f32.mrb[0].mxu0
    %v291 = vadd.f32 0.0, %v290
    %v292 = vpop.f32.mrb[0].mxu0
    %v293 = vadd.f32 0.0, %v292
    %294 = vmatprep.mubr.bf16.mxu0 0
    %295 = vmatmul.mubr.bf16.gmra.mrb[0].mxu0 %v201
    %v296 = vpop.f32.mrb[0].mxu0
    %v297 = vadd.f32 0.0, %v296
    %v298 = vpop.f32.mrb[0].mxu0
    %v299 = vadd.f32 0.0, %v298
    %v300 = vpop.f32.mrb[0].mxu0
    %v301 = vadd.f32 0.0, %v300
    %v302 = vpop.f32.mrb[0].mxu0
    %v303 = vadd.f32 0.0, %v302
    %304 = vmatprep.mubr.bf16.mxu0 0
    %305 = vmatmul.mubr.bf16.gmra.mrb[0].mxu0 %v202
    %v306 = vpop.f32.mrb[0].mxu0
    %v307 = vadd.f32 0.0, %v306
    %v308 = vpop.f32.mrb[0].mxu0
    %v309 = vadd.f32 0.0, %v308
    %v310 = vpop.f32.mrb[0].mxu0
    %v311 = vadd.f32 0.0, %v310
    %v312 = vpop.f32.mrb[0].mxu0
    %v313 = vadd.f32 0.0, %v312
    %314 = vmatprep.mubr.bf16.mxu0 0
    %315 = vmatmul.mubr.bf16.gmra.mrb[0].mxu0 %v203
    %v316 = vpop.f32.mrb[0].mxu0
    %v317 = vadd.f32 0.0, %v316
    %v318 = vpop.f32.mrb[0].mxu0
    %v319 = vadd.f32 0.0, %v318
    %v320 = vpop.f32.mrb[0].mxu0
    %v321 = vadd.f32 0.0, %v320
    %v322 = vpop.f32.mrb[0].mxu0
    %v323 = vadd.f32 0.0, %v322
    %324 = vdwg.mxu0
    %325 = vmatprep.subr.bf16.mxu0 %v149
    %326 = vmatpush1.bf16.msra.mxu0 %v148
    %327 = vmatprep.subr.bf16.mxu0 0
    %328 = vmatpush1.bf16.msra.mxu0 0
    %329 = vmatprep.subr.bf16.mxu0 0
    %330 = vmatpush1.bf16.msra.mxu0 0
    %331 = vmatprep.subr.bf16.mxu0 0
    %332 = vmatpush1.bf16.msra.mxu0 0
    %333 = vmatprep.subr.bf16.mxu0 0
    %334 = vmatpush1.bf16.msra.mxu0 0
    %335 = vmatprep.subr.bf16.mxu0 0
    %336 = vmatpush1.bf16.msra.mxu0 0
    %337 = vmatprep.subr.bf16.mxu0 0
    %338 = vmatpush1.bf16.msra.mxu0 0
    %339 = vmatprep.subr.bf16.mxu0 0
    %340 = vmatpush1.bf16.msra.mxu0 0
    %341 = vmatprep.subr.bf16.mxu0 0
    %342 = vmatpush1.bf16.msra.mxu0 0
    %343 = vmatprep.subr.bf16.mxu0 0
    %344 = vmatpush1.bf16.msra.mxu0 0
    %345 = vmatprep.subr.bf16.mxu0 0
    %346 = vmatpush1.bf16.msra.mxu0 0
    %347 = vmatprep.subr.bf16.mxu0 0
    %348 = vmatpush1.bf16.msra.mxu0 0
    %349 = vmatprep.subr.bf16.mxu0 0
    %350 = vmatpush1.bf16.msra.mxu0 0
    %351 = vmatprep.subr.bf16.mxu0 0
    %352 = vmatpush1.bf16.msra.mxu0 0
    %353 = vmatprep.subr.bf16.mxu0 0
    %354 = vmatpush1.bf16.msra.mxu0 0
    %355 = vmatprep.subr.bf16.mxu0 0
    %356 = vmatpush1.bf16.msra.mxu0 0
    %357 = vmatprep.mubr.bf16.mxu0 0
    %358 = vmatmul.mubr.bf16.gmra.mrb[0].mxu0 %v196
    %v359 = vpop.f32.mrb[0].mxu0
    %v360 = vadd.f32 0.0, %v359
    %v361 = vpop.f32.mrb[0].mxu0
    %v362 = vadd.f32 0.0, %v361
    %v363 = vpop.f32.mrb[0].mxu0
    %v364 = vadd.f32 0.0, %v363
    %v365 = vpop.f32.mrb[0].mxu0
    %v366 = vadd.f32 0.0, %v365
    %367 = vmatprep.mubr.bf16.mxu0 0
    %368 = vmatmul.mubr.bf16.gmra.mrb[0].mxu0 %v197
    %v369 = vpop.f32.mrb[0].mxu0
    %v370 = vadd.f32 0.0, %v369
    %v371 = vpop.f32.mrb[0].mxu0
    %v372 = vadd.f32 0.0, %v371
    %v373 = vpop.f32.mrb[0].mxu0
    %v374 = vadd.f32 0.0, %v373
    %v375 = vpop.f32.mrb[0].mxu0
    %v376 = vadd.f32 0.0, %v375
    %377 = vmatprep.mubr.bf16.mxu0 0
    %378 = vmatmul.mubr.bf16.gmra.mrb[0].mxu0 %v198
    %v379 = vpop.f32.mrb[0].mxu0
    %v380 = vadd.f32 0.0, %v379
    %v381 = vpop.f32.mrb[0].mxu0
    %v382 = vadd.f32 0.0, %v381
    %v383 = vpop.f32.mrb[0].mxu0
    %v384 = vadd.f32 0.0, %v383
    %v385 = vpop.f32.mrb[0].mxu0
    %v386 = vadd.f32 0.0, %v385
    %387 = vmatprep.mubr.bf16.mxu0 0
    %388 = vmatmul.mubr.bf16.gmra.mrb[0].mxu0 %v199
    %v389 = vpop.f32.mrb[0].mxu0
    %v390 = vadd.f32 0.0, %v389
    %v391 = vpop.f32.mrb[0].mxu0
    %v392 = vadd.f32 0.0, %v391
    %v393 = vpop.f32.mrb[0].mxu0
    %v394 = vadd.f32 0.0, %v393
    %v395 = vpop.f32.mrb[0].mxu0
    %v396 = vadd.f32 0.0, %v395
    %397 = vmatprep.mubr.bf16.mxu0 0
    %398 = vmatmul.mubr.bf16.gmra.mrb[0].mxu0 %v200
    %v399 = vpop.f32.mrb[0].mxu0
    %v400 = vadd.f32 0.0, %v399
    %v401 = vpop.f32.mrb[0].mxu0
    %v402 = vadd.f32 0.0, %v401
    %v403 = vpop.f32.mrb[0].mxu0
    %v404 = vadd.f32 0.0, %v403
    %v405 = vpop.f32.mrb[0].mxu0
    %v406 = vadd.f32 0.0, %v405
    %407 = vmatprep.mubr.bf16.mxu0 0
    %408 = vmatmul.mubr.bf16.gmra.mrb[0].mxu0 %v201
    %v409 = vpop.f32.mrb[0].mxu0
    %v410 = vadd.f32 0.0, %v409
    %v411 = vpop.f32.mrb[0].mxu0
    %v412 = vadd.f32 0.0, %v411
    %v413 = vpop.f32.mrb[0].mxu0
    %v414 = vadd.f32 0.0, %v413
    %v415 = vpop.f32.mrb[0].mxu0
    %v416 = vadd.f32 0.0, %v415
    %417 = vmatprep.mubr.bf16.mxu0 0
    %418 = vmatmul.mubr.bf16.gmra.mrb[0].mxu0 %v202
    %v419 = vpop.f32.mrb[0].mxu0
    %v420 = vadd.f32 0.0, %v419
    %v421 = vpop.f32.mrb[0].mxu0
    %v422 = vadd.f32 0.0, %v421
    %v423 = vpop.f32.mrb[0].mxu0
    %v424 = vadd.f32 0.0, %v423
    %v425 = vpop.f32.mrb[0].mxu0
    %v426 = vadd.f32 0.0, %v425
    %427 = vmatprep.mubr.bf16.mxu0 0
    %428 = vmatmul.mubr.bf16.gmra.mrb[0].mxu0 %v203
    %v429 = vpop.f32.mrb[0].mxu0
    %v430 = vadd.f32 0.0, %v429
    %v431 = vpop.f32.mrb[0].mxu0
    %v432 = vadd.f32 0.0, %v431
    %v433 = vpop.f32.mrb[0].mxu0
    %v434 = vadd.f32 0.0, %v433
    %v435 = vpop.f32.mrb[0].mxu0
    %v436 = vadd.f32 0.0, %v435
    %437 = vdwg.mxu0
    %438 = vmatprep.subr.bf16.mxu0 %v151
    %439 = vmatpush1.bf16.msra.mxu0 %v150
    %440 = vmatprep.subr.bf16.mxu0 0
    %441 = vmatpush1.bf16.msra.mxu0 0
    %442 = vmatprep.subr.bf16.mxu0 0
    %443 = vmatpush1.bf16.msra.mxu0 0
    %444 = vmatprep.subr.bf16.mxu0 0
    %445 = vmatpush1.bf16.msra.mxu0 0
    %446 = vmatprep.subr.bf16.mxu0 0
    %447 = vmatpush1.bf16.msra.mxu0 0
    %448 = vmatprep.subr.bf16.mxu0 0
    %449 = vmatpush1.bf16.msra.mxu0 0
    %450 = vmatprep.subr.bf16.mxu0 0
    %451 = vmatpush1.bf16.msra.mxu0 0
    %452 = vmatprep.subr.bf16.mxu0 0
    %453 = vmatpush1.bf16.msra.mxu0 0
    %454 = vmatprep.subr.bf16.mxu0 0
    %455 = vmatpush1.bf16.msra.mxu0 0
    %456 = vmatprep.subr.bf16.mxu0 0
    %457 = vmatpush1.bf16.msra.mxu0 0
    %458 = vmatprep.subr.bf16.mxu0 0
    %459 = vmatpush1.bf16.msra.mxu0 0
    %460 = vmatprep.subr.bf16.mxu0 0
    %461 = vmatpush1.bf16.msra.mxu0 0
    %462 = vmatprep.subr.bf16.mxu0 0
    %463 = vmatpush1.bf16.msra.mxu0 0
    %464 = vmatprep.subr.bf16.mxu0 0
    %465 = vmatpush1.bf16.msra.mxu0 0
    %466 = vmatprep.subr.bf16.mxu0 0
    %467 = vmatpush1.bf16.msra.mxu0 0
    %468 = vmatprep.subr.bf16.mxu0 0
    %469 = vmatpush1.bf16.msra.mxu0 0
    %470 = vmatprep.mubr.bf16.mxu0 0
    %471 = vmatmul.mubr.bf16.gmra.mrb[0].mxu0 %v196
    %v472 = vpop.f32.mrb[0].mxu0
    %v473 = vadd.f32 0.0, %v472
    %v474 = vpop.f32.mrb[0].mxu0
    %v475 = vadd.f32 0.0, %v474
    %v476 = vpop.f32.mrb[0].mxu0
    %v477 = vadd.f32 0.0, %v476
    %v478 = vpop.f32.mrb[0].mxu0
    %v479 = vadd.f32 0.0, %v478
    %480 = vmatprep.mubr.bf16.mxu0 0
    %481 = vmatmul.mubr.bf16.gmra.mrb[0].mxu0 %v197
    %v482 = vpop.f32.mrb[0].mxu0
    %v483 = vadd.f32 0.0, %v482
    %v484 = vpop.f32.mrb[0].mxu0
    %v485 = vadd.f32 0.0, %v484
    %v486 = vpop.f32.mrb[0].mxu0
    %v487 = vadd.f32 0.0, %v486
    %v488 = vpop.f32.mrb[0].mxu0
    %v489 = vadd.f32 0.0, %v488
    %490 = vmatprep.mubr.bf16.mxu0 0
    %491 = vmatmul.mubr.bf16.gmra.mrb[0].mxu0 %v198
    %v492 = vpop.f32.mrb[0].mxu0
    %v493 = vadd.f32 0.0, %v492
    %v494 = vpop.f32.mrb[0].mxu0
    %v495 = vadd.f32 0.0, %v494
    %v496 = vpop.f32.mrb[0].mxu0
    %v497 = vadd.f32 0.0, %v496
    %v498 = vpop.f32.mrb[0].mxu0
    %v499 = vadd.f32 0.0, %v498
    %500 = vmatprep.mubr.bf16.mxu0 0
    %501 = vmatmul.mubr.bf16.gmra.mrb[0].mxu0 %v199
    %v502 = vpop.f32.mrb[0].mxu0
    %v503 = vadd.f32 0.0, %v502
    %v504 = vpop.f32.mrb[0].mxu0
    %v505 = vadd.f32 0.0, %v504
    %v506 = vpop.f32.mrb[0].mxu0
    %v507 = vadd.f32 0.0, %v506
    %v508 = vpop.f32.mrb[0].mxu0
    %v509 = vadd.f32 0.0, %v508
    %510 = vmatprep.mubr.bf16.mxu0 0
    %511 = vmatmul.mubr.bf16.gmra.mrb[0].mxu0 %v200
    %v512 = vpop.f32.mrb[0].mxu0
    %v513 = vadd.f32 0.0, %v512
    %v514 = vpop.f32.mrb[0].mxu0
    %v515 = vadd.f32 0.0, %v514
    %v516 = vpop.f32.mrb[0].mxu0
    %v517 = vadd.f32 0.0, %v516
    %v518 = vpop.f32.mrb[0].mxu0
    %v519 = vadd.f32 0.0, %v518
    %520 = vmatprep.mubr.bf16.mxu0 0
    %521 = vmatmul.mubr.bf16.gmra.mrb[0].mxu0 %v201
    %v522 = vpop.f32.mrb[0].mxu0
    %v523 = vadd.f32 0.0, %v522
    %v524 = vpop.f32.mrb[0].mxu0
    %v525 = vadd.f32 0.0, %v524
    %v526 = vpop.f32.mrb[0].mxu0
    %v527 = vadd.f32 0.0, %v526
    %v528 = vpop.f32.mrb[0].mxu0
    %v529 = vadd.f32 0.0, %v528
    %530 = vmatprep.mubr.bf16.mxu0 0
    %531 = vmatmul.mubr.bf16.gmra.mrb[0].mxu0 %v202
    %v532 = vpop.f32.mrb[0].mxu0
    %v533 = vadd.f32 0.0, %v532
    %v534 = vpop.f32.mrb[0].mxu0
    %v535 = vadd.f32 0.0, %v534
    %v536 = vpop.f32.mrb[0].mxu0
    %v537 = vadd.f32 0.0, %v536
    %v538 = vpop.f32.mrb[0].mxu0
    %v539 = vadd.f32 0.0, %v538
    %540 = vmatprep.mubr.bf16.mxu0 0
    %541 = vmatmul.mubr.bf16.gmra.mrb[0].mxu0 %v203
    %v542 = vpop.f32.mrb[0].mxu0
    %v543 = vadd.f32 0.0, %v542
    %v544 = vpop.f32.mrb[0].mxu0
    %v545 = vadd.f32 0.0, %v544
    %v546 = vpop.f32.mrb[0].mxu0
    %v547 = vadd.f32 0.0, %v546
    %v548 = vpop.f32.mrb[0].mxu0
    %v549 = vadd.f32 0.0, %v548
    %550 = vdwg.mxu0
    %551 = vmatprep.subr.bf16.mxu0 %v153
    %552 = vmatpush1.bf16.msra.mxu0 %v152
    %553 = vmatprep.subr.bf16.mxu0 0
    %554 = vmatpush1.bf16.msra.mxu0 0
    %555 = vmatprep.subr.bf16.mxu0 0
    %556 = vmatpush1.bf16.msra.mxu0 0
    %557 = vmatprep.subr.bf16.mxu0 0
    %558 = vmatpush1.bf16.msra.mxu0 0
    %559 = vmatprep.subr.bf16.mxu0 0
    %560 = vmatpush1.bf16.msra.mxu0 0
    %561 = vmatprep.subr.bf16.mxu0 0
    %562 = vmatpush1.bf16.msra.mxu0 0
    %563 = vmatprep.subr.bf16.mxu0 0
    %564 = vmatpush1.bf16.msra.mxu0 0
    %565 = vmatprep.subr.bf16.mxu0 0
    %566 = vmatpush1.bf16.msra.mxu0 0
    %567 = vmatprep.subr.bf16.mxu0 0
    %568 = vmatpush1.bf16.msra.mxu0 0
    %569 = vmatprep.subr.bf16.mxu0 0
    %570 = vmatpush1.bf16.msra.mxu0 0
    %571 = vmatprep.subr.bf16.mxu0 0
    %572 = vmatpush1.bf16.msra.mxu0 0
    %573 = vmatprep.subr.bf16.mxu0 0
    %574 = vmatpush1.bf16.msra.mxu0 0
    %575 = vmatprep.subr.bf16.mxu0 0
    %576 = vmatpush1.bf16.msra.mxu0 0
    %577 = vmatprep.subr.bf16.mxu0 0
    %578 = vmatpush1.bf16.msra.mxu0 0
    %579 = vmatprep.subr.bf16.mxu0 0
    %580 = vmatpush1.bf16.msra.mxu0 0
    %581 = vmatprep.subr.bf16.mxu0 0
    %582 = vmatpush1.bf16.msra.mxu0 0
    %583 = vmatprep.mubr.bf16.mxu0 0
    %584 = vmatmul.mubr.bf16.gmra.mrb[0].mxu0 %v196
    %v585 = vpop.f32.mrb[0].mxu0
    %v586 = vadd.f32 0.0, %v585
    %v587 = vpop.f32.mrb[0].mxu0
    %v588 = vadd.f32 0.0, %v587
    %v589 = vpop.f32.mrb[0].mxu0
    %v590 = vadd.f32 0.0, %v589
    %v591 = vpop.f32.mrb[0].mxu0
    %v592 = vadd.f32 0.0, %v591
    %593 = vmatprep.mubr.bf16.mxu0 0
    %594 = vmatmul.mubr.bf16.gmra.mrb[0].mxu0 %v197
    %v595 = vpop.f32.mrb[0].mxu0
    %v596 = vadd.f32 0.0, %v595
    %v597 = vpop.f32.mrb[0].mxu0
    %v598 = vadd.f32 0.0, %v597
    %v599 = vpop.f32.mrb[0].mxu0
    %v600 = vadd.f32 0.0, %v599
    %v601 = vpop.f32.mrb[0].mxu0
    %v602 = vadd.f32 0.0, %v601
    %603 = vmatprep.mubr.bf16.mxu0 0
    %604 = vmatmul.mubr.bf16.gmra.mrb[0].mxu0 %v198
    %v605 = vpop.f32.mrb[0].mxu0
    %v606 = vadd.f32 0.0, %v605
    %v607 = vpop.f32.mrb[0].mxu0
    %v608 = vadd.f32 0.0, %v607
    %v609 = vpop.f32.mrb[0].mxu0
    %v610 = vadd.f32 0.0, %v609
    %v611 = vpop.f32.mrb[0].mxu0
    %v612 = vadd.f32 0.0, %v611
    %613 = vmatprep.mubr.bf16.mxu0 0
    %614 = vmatmul.mubr.bf16.gmra.mrb[0].mxu0 %v199
    %v615 = vpop.f32.mrb[0].mxu0
    %v616 = vadd.f32 0.0, %v615
    %v617 = vpop.f32.mrb[0].mxu0
    %v618 = vadd.f32 0.0, %v617
    %v619 = vpop.f32.mrb[0].mxu0
    %v620 = vadd.f32 0.0, %v619
    %v621 = vpop.f32.mrb[0].mxu0
    %v622 = vadd.f32 0.0, %v621
    %623 = vmatprep.mubr.bf16.mxu0 0
    %624 = vmatmul.mubr.bf16.gmra.mrb[0].mxu0 %v200
    %v625 = vpop.f32.mrb[0].mxu0
    %v626 = vadd.f32 0.0, %v625
    %v627 = vpop.f32.mrb[0].mxu0
    %v628 = vadd.f32 0.0, %v627
    %v629 = vpop.f32.mrb[0].mxu0
    %v630 = vadd.f32 0.0, %v629
    %v631 = vpop.f32.mrb[0].mxu0
    %v632 = vadd.f32 0.0, %v631
    %633 = vmatprep.mubr.bf16.mxu0 0
    %634 = vmatmul.mubr.bf16.gmra.mrb[0].mxu0 %v201
    %v635 = vpop.f32.mrb[0].mxu0
    %v636 = vadd.f32 0.0, %v635
    %v637 = vpop.f32.mrb[0].mxu0
    %v638 = vadd.f32 0.0, %v637
    %v639 = vpop.f32.mrb[0].mxu0
    %v640 = vadd.f32 0.0, %v639
    %v641 = vpop.f32.mrb[0].mxu0
    %v642 = vadd.f32 0.0, %v641
    %643 = vmatprep.mubr.bf16.mxu0 0
    %644 = vmatmul.mubr.bf16.gmra.mrb[0].mxu0 %v202
    %v645 = vpop.f32.mrb[0].mxu0
    %v646 = vadd.f32 0.0, %v645
    %v647 = vpop.f32.mrb[0].mxu0
    %v648 = vadd.f32 0.0, %v647
    %v649 = vpop.f32.mrb[0].mxu0
    %v650 = vadd.f32 0.0, %v649
    %v651 = vpop.f32.mrb[0].mxu0
    %v652 = vadd.f32 0.0, %v651
    %653 = vmatprep.mubr.bf16.mxu0 0
    %654 = vmatmul.mubr.bf16.gmra.mrb[0].mxu0 %v203
    %v655 = vpop.f32.mrb[0].mxu0
    %v656 = vadd.f32 0.0, %v655
    %v657 = vpop.f32.mrb[0].mxu0
    %v658 = vadd.f32 0.0, %v657
    %v659 = vpop.f32.mrb[0].mxu0
    %v660 = vadd.f32 0.0, %v659
    %v661 = vpop.f32.mrb[0].mxu0
    %v662 = vadd.f32 0.0, %v661
    %663 = vdwg.mxu0
    %664 = vmatprep.subr.bf16.mxu0 0
    %665 = vmatpush1.bf16.msra.mxu0 %v154
    %666 = vmatprep.subr.bf16.mxu0 0
    %667 = vmatpush1.bf16.msra.mxu0 0
    %668 = vmatprep.subr.bf16.mxu0 0
    %669 = vmatpush1.bf16.msra.mxu0 0
    %670 = vmatprep.subr.bf16.mxu0 0
    %671 = vmatpush1.bf16.msra.mxu0 0
    %672 = vmatprep.subr.bf16.mxu0 0
    %673 = vmatpush1.bf16.msra.mxu0 0
    %674 = vmatprep.subr.bf16.mxu0 0
    %675 = vmatpush1.bf16.msra.mxu0 0
    %676 = vmatprep.subr.bf16.mxu0 0
    %677 = vmatpush1.bf16.msra.mxu0 0
    %678 = vmatprep.subr.bf16.mxu0 0
    %679 = vmatpush1.bf16.msra.mxu0 0
    %680 = vmatprep.subr.bf16.mxu0 0
    %681 = vmatpush1.bf16.msra.mxu0 0
    %682 = vmatprep.subr.bf16.mxu0 0
    %683 = vmatpush1.bf16.msra.mxu0 0
    %684 = vmatprep.subr.bf16.mxu0 0
    %685 = vmatpush1.bf16.msra.mxu0 0
    %686 = vmatprep.subr.bf16.mxu0 0
    %687 = vmatpush1.bf16.msra.mxu0 0
    %688 = vmatprep.subr.bf16.mxu0 0
    %689 = vmatpush1.bf16.msra.mxu0 0
    %690 = vmatprep.subr.bf16.mxu0 0
    %691 = vmatpush1.bf16.msra.mxu0 0
    %692 = vmatprep.subr.bf16.mxu0 0
    %693 = vmatpush1.bf16.msra.mxu0 0
    %694 = vmatprep.subr.bf16.mxu0 0
    %695 = vmatpush1.bf16.msra.mxu0 0
    %696 = vmatprep.mubr.bf16.mxu0 0
    %697 = vmatmul.mubr.bf16.gmra.mrb[0].mxu0 %v196
    %v698 = vpop.f32.mrb[0].mxu0
    %v699 = vadd.f32 0.0, %v698
    %v700 = vpop.f32.mrb[0].mxu0
    %v701 = vpop.f32.mrb[0].mxu0
    %v702 = vadd.f32 0.0, %v701
    %v703 = vpop.f32.mrb[0].mxu0
    %704 = vmatprep.mubr.bf16.mxu0 0
    %705 = vmatmul.mubr.bf16.gmra.mrb[0].mxu0 %v197
    %v706 = vpop.f32.mrb[0].mxu0
    %v707 = vadd.f32 0.0, %v706
    %v708 = vpop.f32.mrb[0].mxu0
    %v709 = vpop.f32.mrb[0].mxu0
    %v710 = vadd.f32 0.0, %v709
    %v711 = vpop.f32.mrb[0].mxu0
    %712 = vmatprep.mubr.bf16.mxu0 0
    %713 = vmatmul.mubr.bf16.gmra.mrb[0].mxu0 %v198
    %v714 = vpop.f32.mrb[0].mxu0
    %v715 = vadd.f32 0.0, %v714
    %v716 = vpop.f32.mrb[0].mxu0
    %v717 = vpop.f32.mrb[0].mxu0
    %v718 = vadd.f32 0.0, %v717
    %v719 = vpop.f32.mrb[0].mxu0
    %720 = vmatprep.mubr.bf16.mxu0 0
    %721 = vmatmul.mubr.bf16.gmra.mrb[0].mxu0 %v199
    %v722 = vpop.f32.mrb[0].mxu0
    %v723 = vadd.f32 0.0, %v722
    %v724 = vpop.f32.mrb[0].mxu0
    %v725 = vpop.f32.mrb[0].mxu0
    %v726 = vadd.f32 0.0, %v725
    %v727 = vpop.f32.mrb[0].mxu0
    %728 = vmatprep.mubr.bf16.mxu0 0
    %729 = vmatmul.mubr.bf16.gmra.mrb[0].mxu0 %v200
    %v730 = vpop.f32.mrb[0].mxu0
    %v731 = vadd.f32 0.0, %v730
    %v732 = vpop.f32.mrb[0].mxu0
    %v733 = vpop.f32.mrb[0].mxu0
    %v734 = vadd.f32 0.0, %v733
    %v735 = vpop.f32.mrb[0].mxu0
    %736 = vmatprep.mubr.bf16.mxu0 0
    %737 = vmatmul.mubr.bf16.gmra.mrb[0].mxu0 %v201
    %v738 = vpop.f32.mrb[0].mxu0
    %v739 = vadd.f32 0.0, %v738
    %v740 = vpop.f32.mrb[0].mxu0
    %v741 = vpop.f32.mrb[0].mxu0
    %v742 = vadd.f32 0.0, %v741
    %v743 = vpop.f32.mrb[0].mxu0
    %744 = vmatprep.mubr.bf16.mxu0 0
    %745 = vmatmul.mubr.bf16.gmra.mrb[0].mxu0 %v202
    %v746 = vpop.f32.mrb[0].mxu0
    %v747 = vadd.f32 0.0, %v746
    %v748 = vpop.f32.mrb[0].mxu0
    %v749 = vpop.f32.mrb[0].mxu0
    %v750 = vadd.f32 0.0, %v749
    %v751 = vpop.f32.mrb[0].mxu0
    %752 = vmatprep.mubr.bf16.mxu0 0
    %753 = vmatmul.mubr.bf16.gmra.mrb[0].mxu0 %v203
    %v754 = vpop.f32.mrb[0].mxu0
    %v755 = vadd.f32 0.0, %v754
    %v756 = vpop.f32.mrb[0].mxu0
    %v757 = vpop.f32.mrb[0].mxu0
    %v758 = vadd.f32 0.0, %v757
    %v759 = vpop.f32.mrb[0].mxu0
    %760 = vdwg.mxu0
    %vm763 = vcmask 1040384
    %v764 = vrot.slane %v317, 7
    %v765 = vrot.slane %v321, 7
    %v766 = vsel %vm763, %v764, %v765
    %v783 = vrot.slane %v247, 7
    %v784 = vrot.slane %v251, 7
    %v785 = vsel %vm763, %v783, %v784
    %v786 = vrot.slane %v257, 7
    %v787 = vsel %vm763, %v784, %v786
    %v788 = vrot.slane %v261, 7
    %v789 = vsel %vm763, %v786, %v788
    %v790 = vrot.slane %v267, 7
    %v791 = vsel %vm763, %v788, %v790
    %v792 = vrot.slane %v271, 7
    %v793 = vsel %vm763, %v790, %v792
    %v794 = vrot.slane %v277, 7
    %v795 = vsel %vm763, %v792, %v794
    %v796 = vrot.slane %v281, 7
    %v797 = vsel %vm763, %v794, %v796
    %v798 = vrot.slane %v287, 7
    %v799 = vsel %vm763, %v796, %v798
    %v800 = vrot.slane %v291, 7
    %v801 = vsel %vm763, %v798, %v800
    %v802 = vrot.slane %v297, 7
    %v803 = vsel %vm763, %v800, %v802
    %v804 = vrot.slane %v301, 7
    %v805 = vsel %vm763, %v802, %v804
    %v806 = vrot.slane %v307, 7
    %v807 = vsel %vm763, %v804, %v806
    %v808 = vrot.slane %v311, 7
    %v809 = vsel %vm763, %v806, %v808
    %v810 = vsel %vm763, %v808, %v764
    %v826 = vsel %vm763, %v765, %v783
    %v827 = vld [vmem:[#allocation7] sm:$0xff]
    %v828 = vld [vmem:[#allocation7 + $0x8] sm:$0xff]
    %v829 = vld [vmem:[#allocation7 + $0x10] sm:$0xff]
    %v830 = vld [vmem:[#allocation7 + $0x18] sm:$0xff]
    %v831 = vld [vmem:[#allocation7 + $0x20] sm:$0xff]
    %v832 = vld [vmem:[#allocation7 + $0x28] sm:$0xff]
    %v833 = vld [vmem:[#allocation7 + $0x30] sm:$0xff]
    %v834 = vld [vmem:[#allocation7 + $0x38] sm:$0xff]
    %v835 = vld [vmem:[#allocation7 + $0x40] sm:$0xff]
    %v836 = vld [vmem:[#allocation7 + $0x48] sm:$0xff]
    %v837 = vld [vmem:[#allocation7 + $0x50] sm:$0xff]
    %v838 = vld [vmem:[#allocation7 + $0x58] sm:$0xff]
    %v839 = vld [vmem:[#allocation7 + $0x60] sm:$0xff]
    %v840 = vld [vmem:[#allocation7 + $0x68] sm:$0xff]
    %v841 = vld [vmem:[#allocation7 + $0x70] sm:$0xff]
    %v842 = vld [vmem:[#allocation7 + $0x78] sm:$0xff]
    %844 = vset.pattern.permute.xlu0 0
    %845 = vperm.xlu0 %844, %v827
    %v846 = vpop.permute.xlu0 %845
    %849 = vset.pattern.permute.xlu0 0
    %850 = vperm.xlu0 %849, %v828
    %v851 = vpop.permute.xlu0 %850
    %854 = vset.pattern.permute.xlu0 0
    %855 = vperm.xlu0 %854, %v829
    %v856 = vpop.permute.xlu0 %855
    %859 = vset.pattern.permute.xlu0 0
    %860 = vperm.xlu0 %859, %v830
    %v861 = vpop.permute.xlu0 %860
    %864 = vset.pattern.permute.xlu0 0
    %865 = vperm.xlu0 %864, %v831
    %v866 = vpop.permute.xlu0 %865
    %869 = vset.pattern.permute.xlu0 0
    %870 = vperm.xlu0 %869, %v832
    %v871 = vpop.permute.xlu0 %870
    %874 = vset.pattern.permute.xlu0 0
    %875 = vperm.xlu0 %874, %v833
    %v876 = vpop.permute.xlu0 %875
    %879 = vset.pattern.permute.xlu0 0
    %880 = vperm.xlu0 %879, %v834
    %v881 = vpop.permute.xlu0 %880
    %884 = vset.pattern.permute.xlu0 0
    %885 = vperm.xlu0 %884, %v835
    %v886 = vpop.permute.xlu0 %885
    %889 = vset.pattern.permute.xlu0 0
    %890 = vperm.xlu0 %889, %v836
    %v891 = vpop.permute.xlu0 %890
    %894 = vset.pattern.permute.xlu0 0
    %895 = vperm.xlu0 %894, %v837
    %v896 = vpop.permute.xlu0 %895
    %899 = vset.pattern.permute.xlu0 0
    %900 = vperm.xlu0 %899, %v838
    %v901 = vpop.permute.xlu0 %900
    %904 = vset.pattern.permute.xlu0 0
    %905 = vperm.xlu0 %904, %v839
    %v906 = vpop.permute.xlu0 %905
    %909 = vset.pattern.permute.xlu0 0
    %910 = vperm.xlu0 %909, %v840
    %v911 = vpop.permute.xlu0 %910
    %914 = vset.pattern.permute.xlu0 0
    %915 = vperm.xlu0 %914, %v841
    %v916 = vpop.permute.xlu0 %915
    %919 = vset.pattern.permute.xlu0 0
    %920 = vperm.xlu0 %919, %v842
    %v921 = vpop.permute.xlu0 %920
    %v923 = vmul.f32 %v766, %v846
    %v924 = vmul.f32 %v826, %v851
    %v925 = vmul.f32 %v785, %v856
    %v926 = vmul.f32 %v787, %v861
    %v927 = vmul.f32 %v789, %v866
    %v928 = vmul.f32 %v791, %v871
    %v929 = vmul.f32 %v793, %v876
    %v930 = vmul.f32 %v795, %v881
    %v931 = vmul.f32 %v797, %v886
    %v932 = vmul.f32 %v799, %v891
    %v933 = vmul.f32 %v801, %v896
    %v934 = vmul.f32 %v803, %v901
    %v935 = vmul.f32 %v805, %v906
    %v936 = vmul.f32 %v807, %v911
    %v937 = vmul.f32 %v809, %v916
    %v938 = vmul.f32 %v810, %v921
    %v939 = vadd.f32 %v923, 0.0
    %v940 = vadd.f32 %v924, 0.0
    %v941 = vadd.f32 %v925, 0.0
    %v942 = vadd.f32 %v926, 0.0
    %v943 = vadd.f32 %v927, 0.0
    %v944 = vadd.f32 %v928, 0.0
    %v945 = vadd.f32 %v929, 0.0
    %v946 = vadd.f32 %v930, 0.0
    %v947 = vadd.f32 %v931, 0.0
    %v948 = vadd.f32 %v932, 0.0
    %v949 = vadd.f32 %v933, 0.0
    %v950 = vadd.f32 %v934, 0.0
    %v951 = vadd.f32 %v935, 0.0
    %v952 = vadd.f32 %v936, 0.0
    %v953 = vadd.f32 %v937, 0.0
    %v954 = vadd.f32 %v938, 0.0
    %955 = vset.pattern.permute.xlu0 1
    %956 = vperm.xlu0 %955, %v827
    %v957 = vpop.permute.xlu0 %956
    %959 = vset.pattern.permute.xlu0 1
    %960 = vperm.xlu0 %959, %v828
    %v961 = vpop.permute.xlu0 %960
    %963 = vset.pattern.permute.xlu0 1
    %964 = vperm.xlu0 %963, %v829
    %v965 = vpop.permute.xlu0 %964
    %967 = vset.pattern.permute.xlu0 1
    %968 = vperm.xlu0 %967, %v830
    %v969 = vpop.permute.xlu0 %968
    %971 = vset.pattern.permute.xlu0 1
    %972 = vperm.xlu0 %971, %v831
    %v973 = vpop.permute.xlu0 %972
    %975 = vset.pattern.permute.xlu0 1
    %976 = vperm.xlu0 %975, %v832
    %v977 = vpop.permute.xlu0 %976
    %979 = vset.pattern.permute.xlu0 1
    %980 = vperm.xlu0 %979, %v833
    %v981 = vpop.permute.xlu0 %980
    %983 = vset.pattern.permute.xlu0 1
    %984 = vperm.xlu0 %983, %v834
    %v985 = vpop.permute.xlu0 %984
    %987 = vset.pattern.permute.xlu0 1
    %988 = vperm.xlu0 %987, %v835
    %v989 = vpop.permute.xlu0 %988
    %991 = vset.pattern.permute.xlu0 1
    %992 = vperm.xlu0 %991, %v836
    %v993 = vpop.permute.xlu0 %992
    %995 = vset.pattern.permute.xlu0 1
    %996 = vperm.xlu0 %995, %v837
    %v997 = vpop.permute.xlu0 %996
    %999 = vset.pattern.permute.xlu0 1
    %1000 = vperm.xlu0 %999, %v838
    %v1001 = vpop.permute.xlu0 %1000
    %1003 = vset.pattern.permute.xlu0 1
    %1004 = vperm.xlu0 %1003, %v839
    %v1005 = vpop.permute.xlu0 %1004
    %1007 = vset.pattern.permute.xlu0 1
    %1008 = vperm.xlu0 %1007, %v840
    %v1009 = vpop.permute.xlu0 %1008
    %1011 = vset.pattern.permute.xlu0 1
    %1012 = vperm.xlu0 %1011, %v841
    %v1013 = vpop.permute.xlu0 %1012
    %1015 = vset.pattern.permute.xlu0 1
    %1016 = vperm.xlu0 %1015, %v842
    %v1017 = vpop.permute.xlu0 %1016
    %v1019 = vmul.f32 %v323, %v957
    %v1020 = vmul.f32 %v249, %v961
    %v1021 = vmul.f32 %v253, %v965
    %v1022 = vmul.f32 %v259, %v969
    %v1023 = vmul.f32 %v263, %v973
    %v1024 = vmul.f32 %v269, %v977
    %v1025 = vmul.f32 %v273, %v981
    %v1026 = vmul.f32 %v279, %v985
    %v1027 = vmul.f32 %v283, %v989
    %v1028 = vmul.f32 %v289, %v993
    %v1029 = vmul.f32 %v293, %v997
    %v1030 = vmul.f32 %v299, %v1001
    %v1031 = vmul.f32 %v303, %v1005
    %v1032 = vmul.f32 %v309, %v1009
    %v1033 = vmul.f32 %v313, %v1013
    %v1034 = vmul.f32 %v319, %v1017
    %v1035 = vadd.f32 %v939, %v1019
    %v1036 = vadd.f32 %v940, %v1020
    %v1037 = vadd.f32 %v941, %v1021
    %v1038 = vadd.f32 %v942, %v1022
    %v1039 = vadd.f32 %v943, %v1023
    %v1040 = vadd.f32 %v944, %v1024
    %v1041 = vadd.f32 %v945, %v1025
    %v1042 = vadd.f32 %v946, %v1026
    %v1043 = vadd.f32 %v947, %v1027
    %v1044 = vadd.f32 %v948, %v1028
    %v1045 = vadd.f32 %v949, %v1029
    %v1046 = vadd.f32 %v950, %v1030
    %v1047 = vadd.f32 %v951, %v1031
    %v1048 = vadd.f32 %v952, %v1032
    %v1049 = vadd.f32 %v953, %v1033
    %v1050 = vadd.f32 %v954, %v1034
    %v1052 = vrot.slane %v434, 1
    %vm1069 = vcmask 1046528
    %v1070 = vrot.slane %v360, 1
    %v1071 = vrot.slane %v364, 1
    %v1072 = vsel %vm1069, %v1070, %v1071
    %v1073 = vrot.slane %v370, 1
    %v1074 = vsel %vm1069, %v1071, %v1073
    %v1075 = vrot.slane %v374, 1
    %v1076 = vsel %vm1069, %v1073, %v1075
    %v1077 = vrot.slane %v380, 1
    %v1078 = vsel %vm1069, %v1075, %v1077
    %v1079 = vrot.slane %v384, 1
    %v1080 = vsel %vm1069, %v1077, %v1079
    %v1081 = vrot.slane %v390, 1
    %v1082 = vsel %vm1069, %v1079, %v1081
    %v1083 = vrot.slane %v394, 1
    %v1084 = vsel %vm1069, %v1081, %v1083
    %v1085 = vrot.slane %v400, 1
    %v1086 = vsel %vm1069, %v1083, %v1085
    %v1087 = vrot.slane %v404, 1
    %v1088 = vsel %vm1069, %v1085, %v1087
    %v1089 = vrot.slane %v410, 1
    %v1090 = vsel %vm1069, %v1087, %v1089
    %v1091 = vrot.slane %v414, 1
    %v1092 = vsel %vm1069, %v1089, %v1091
    %v1093 = vrot.slane %v420, 1
    %v1094 = vsel %vm1069, %v1091, %v1093
    %v1095 = vrot.slane %v424, 1
    %v1096 = vsel %vm1069, %v1093, %v1095
    %v1097 = vrot.slane %v430, 1
    %v1098 = vsel %vm1069, %v1095, %v1097
    %v1099 = vsel %vm1069, %v1097, %v1052
    %v1116 = vsel %vm1069, %v1052, %v1070
    %1117 = vset.pattern.permute.xlu0 2
    %1118 = vperm.xlu0 %1117, %v827
    %v1119 = vpop.permute.xlu0 %1118
    %1121 = vset.pattern.permute.xlu0 2
    %1122 = vperm.xlu0 %1121, %v828
    %v1123 = vpop.permute.xlu0 %1122
    %1125 = vset.pattern.permute.xlu0 2
    %1126 = vperm.xlu0 %1125, %v829
    %v1127 = vpop.permute.xlu0 %1126
    %1129 = vset.pattern.permute.xlu0 2
    %1130 = vperm.xlu0 %1129, %v830
    %v1131 = vpop.permute.xlu0 %1130
    %1133 = vset.pattern.permute.xlu0 2
    %1134 = vperm.xlu0 %1133, %v831
    %v1135 = vpop.permute.xlu0 %1134
    %1137 = vset.pattern.permute.xlu0 2
    %1138 = vperm.xlu0 %1137, %v832
    %v1139 = vpop.permute.xlu0 %1138
    %1141 = vset.pattern.permute.xlu0 2
    %1142 = vperm.xlu0 %1141, %v833
    %v1143 = vpop.permute.xlu0 %1142
    %1145 = vset.pattern.permute.xlu0 2
    %1146 = vperm.xlu0 %1145, %v834
    %v1147 = vpop.permute.xlu0 %1146
    %1149 = vset.pattern.permute.xlu0 2
    %1150 = vperm.xlu0 %1149, %v835
    %v1151 = vpop.permute.xlu0 %1150
    %1153 = vset.pattern.permute.xlu0 2
    %1154 = vperm.xlu0 %1153, %v836
    %v1155 = vpop.permute.xlu0 %1154
    %1157 = vset.pattern.permute.xlu0 2
    %1158 = vperm.xlu0 %1157, %v837
    %v1159 = vpop.permute.xlu0 %1158
    %1161 = vset.pattern.permute.xlu0 2
    %1162 = vperm.xlu0 %1161, %v838
    %v1163 = vpop.permute.xlu0 %1162
    %1165 = vset.pattern.permute.xlu0 2
    %1166 = vperm.xlu0 %1165, %v839
    %v1167 = vpop.permute.xlu0 %1166
    %1169 = vset.pattern.permute.xlu0 2
    %1170 = vperm.xlu0 %1169, %v840
    %v1171 = vpop.permute.xlu0 %1170
    %1173 = vset.pattern.permute.xlu0 2
    %1174 = vperm.xlu0 %1173, %v841
    %v1175 = vpop.permute.xlu0 %1174
    %1177 = vset.pattern.permute.xlu0 2
    %1178 = vperm.xlu0 %1177, %v842
    %v1179 = vpop.permute.xlu0 %1178
    %v1181 = vmul.f32 %v1116, %v1119
    %v1182 = vmul.f32 %v1072, %v1123
    %v1183 = vmul.f32 %v1074, %v1127
    %v1184 = vmul.f32 %v1076, %v1131
    %v1185 = vmul.f32 %v1078, %v1135
    %v1186 = vmul.f32 %v1080, %v1139
    %v1187 = vmul.f32 %v1082, %v1143
    %v1188 = vmul.f32 %v1084, %v1147
    %v1189 = vmul.f32 %v1086, %v1151
    %v1190 = vmul.f32 %v1088, %v1155
    %v1191 = vmul.f32 %v1090, %v1159
    %v1192 = vmul.f32 %v1092, %v1163
    %v1193 = vmul.f32 %v1094, %v1167
    %v1194 = vmul.f32 %v1096, %v1171
    %v1195 = vmul.f32 %v1098, %v1175
    %v1196 = vmul.f32 %v1099, %v1179
    %v1197 = vadd.f32 %v1035, %v1181
    %v1198 = vadd.f32 %v1036, %v1182
    %v1199 = vadd.f32 %v1037, %v1183
    %v1200 = vadd.f32 %v1038, %v1184
    %v1201 = vadd.f32 %v1039, %v1185
    %v1202 = vadd.f32 %v1040, %v1186
    %v1203 = vadd.f32 %v1041, %v1187
    %v1204 = vadd.f32 %v1042, %v1188
    %v1205 = vadd.f32 %v1043, %v1189
    %v1206 = vadd.f32 %v1044, %v1190
    %v1207 = vadd.f32 %v1045, %v1191
    %v1208 = vadd.f32 %v1046, %v1192
    %v1209 = vadd.f32 %v1047, %v1193
    %v1210 = vadd.f32 %v1048, %v1194
    %v1211 = vadd.f32 %v1049, %v1195
    %v1212 = vadd.f32 %v1050, %v1196
    %v1214 = vrot.slane %v436, 7
    %v1231 = vrot.slane %v362, 7
    %v1232 = vrot.slane %v366, 7
    %v1233 = vsel %vm763, %v1231, %v1232
    %v1234 = vrot.slane %v372, 7
    %v1235 = vsel %vm763, %v1232, %v1234
    %v1236 = vrot.slane %v376, 7
    %v1237 = vsel %vm763, %v1234, %v1236
    %v1238 = vrot.slane %v382, 7
    %v1239 = vsel %vm763, %v1236, %v1238
    %v1240 = vrot.slane %v386, 7
    %v1241 = vsel %vm763, %v1238, %v1240
    %v1242 = vrot.slane %v392, 7
    %v1243 = vsel %vm763, %v1240, %v1242
    %v1244 = vrot.slane %v396, 7
    %v1245 = vsel %vm763, %v1242, %v1244
    %v1246 = vrot.slane %v402, 7
    %v1247 = vsel %vm763, %v1244, %v1246
    %v1248 = vrot.slane %v406, 7
    %v1249 = vsel %vm763, %v1246, %v1248
    %v1250 = vrot.slane %v412, 7
    %v1251 = vsel %vm763, %v1248, %v1250
    %v1252 = vrot.slane %v416, 7
    %v1253 = vsel %vm763, %v1250, %v1252
    %v1254 = vrot.slane %v422, 7
    %v1255 = vsel %vm763, %v1252, %v1254
    %v1256 = vrot.slane %v426, 7
    %v1257 = vsel %vm763, %v1254, %v1256
    %v1258 = vrot.slane %v432, 7
    %v1259 = vsel %vm763, %v1256, %v1258
    %v1260 = vsel %vm763, %v1258, %v1214
    %v1277 = vsel %vm763, %v1214, %v1231
    %1278 = vset.pattern.permute.xlu0 3
    %1279 = vperm.xlu0 %1278, %v827
    %v1280 = vpop.permute.xlu0 %1279
    %1282 = vset.pattern.permute.xlu0 3
    %1283 = vperm.xlu0 %1282, %v828
    %v1284 = vpop.permute.xlu0 %1283
    %1286 = vset.pattern.permute.xlu0 3
    %1287 = vperm.xlu0 %1286, %v829
    %v1288 = vpop.permute.xlu0 %1287
    %1290 = vset.pattern.permute.xlu0 3
    %1291 = vperm.xlu0 %1290, %v830
    %v1292 = vpop.permute.xlu0 %1291
    %1294 = vset.pattern.permute.xlu0 3
    %1295 = vperm.xlu0 %1294, %v831
    %v1296 = vpop.permute.xlu0 %1295
    %1298 = vset.pattern.permute.xlu0 3
    %1299 = vperm.xlu0 %1298, %v832
    %v1300 = vpop.permute.xlu0 %1299
    %1302 = vset.pattern.permute.xlu0 3
    %1303 = vperm.xlu0 %1302, %v833
    %v1304 = vpop.permute.xlu0 %1303
    %1306 = vset.pattern.permute.xlu0 3
    %1307 = vperm.xlu0 %1306, %v834
    %v1308 = vpop.permute.xlu0 %1307
    %1310 = vset.pattern.permute.xlu0 3
    %1311 = vperm.xlu0 %1310, %v835
    %v1312 = vpop.permute.xlu0 %1311
    %1314 = vset.pattern.permute.xlu0 3
    %1315 = vperm.xlu0 %1314, %v836
    %v1316 = vpop.permute.xlu0 %1315
    %1318 = vset.pattern.permute.xlu0 3
    %1319 = vperm.xlu0 %1318, %v837
    %v1320 = vpop.permute.xlu0 %1319
    %1322 = vset.pattern.permute.xlu0 3
    %1323 = vperm.xlu0 %1322, %v838
    %v1324 = vpop.permute.xlu0 %1323
    %1326 = vset.pattern.permute.xlu0 3
    %1327 = vperm.xlu0 %1326, %v839
    %v1328 = vpop.permute.xlu0 %1327
    %1330 = vset.pattern.permute.xlu0 3
    %1331 = vperm.xlu0 %1330, %v840
    %v1332 = vpop.permute.xlu0 %1331
    %1334 = vset.pattern.permute.xlu0 3
    %1335 = vperm.xlu0 %1334, %v841
    %v1336 = vpop.permute.xlu0 %1335
    %1338 = vset.pattern.permute.xlu0 3
    %1339 = vperm.xlu0 %1338, %v842
    %v1340 = vpop.permute.xlu0 %1339
    %v1342 = vmul.f32 %v1277, %v1280
    %v1343 = vmul.f32 %v1233, %v1284
    %v1344 = vmul.f32 %v1235, %v1288
    %v1345 = vmul.f32 %v1237, %v1292
    %v1346 = vmul.f32 %v1239, %v1296
    %v1347 = vmul.f32 %v1241, %v1300
    %v1348 = vmul.f32 %v1243, %v1304
    %v1349 = vmul.f32 %v1245, %v1308
    %v1350 = vmul.f32 %v1247, %v1312
    %v1351 = vmul.f32 %v1249, %v1316
    %v1352 = vmul.f32 %v1251, %v1320
    %v1353 = vmul.f32 %v1253, %v1324
    %v1354 = vmul.f32 %v1255, %v1328
    %v1355 = vmul.f32 %v1257, %v1332
    %v1356 = vmul.f32 %v1259, %v1336
    %v1357 = vmul.f32 %v1260, %v1340
    %v1358 = vadd.f32 %v1197, %v1342
    %v1359 = vadd.f32 %v1198, %v1343
    %v1360 = vadd.f32 %v1199, %v1344
    %v1361 = vadd.f32 %v1200, %v1345
    %v1362 = vadd.f32 %v1201, %v1346
    %v1363 = vadd.f32 %v1202, %v1347
    %v1364 = vadd.f32 %v1203, %v1348
    %v1365 = vadd.f32 %v1204, %v1349
    %v1366 = vadd.f32 %v1205, %v1350
    %v1367 = vadd.f32 %v1206, %v1351
    %v1368 = vadd.f32 %v1207, %v1352
    %v1369 = vadd.f32 %v1208, %v1353
    %v1370 = vadd.f32 %v1209, %v1354
    %v1371 = vadd.f32 %v1210, %v1355
    %v1372 = vadd.f32 %v1211, %v1356
    %v1373 = vadd.f32 %v1212, %v1357
    %1374 = vset.pattern.permute.xlu0 4
    %1375 = vperm.xlu0 %1374, %v827
    %v1376 = vpop.permute.xlu0 %1375
    %1378 = vset.pattern.permute.xlu0 4
    %1379 = vperm.xlu0 %1378, %v828
    %v1380 = vpop.permute.xlu0 %1379
    %1382 = vset.pattern.permute.xlu0 4
    %1383 = vperm.xlu0 %1382, %v829
    %v1384 = vpop.permute.xlu0 %1383
    %1386 = vset.pattern.permute.xlu0 4
    %1387 = vperm.xlu0 %1386, %v830
    %v1388 = vpop.permute.xlu0 %1387
    %1390 = vset.pattern.permute.xlu0 4
    %1391 = vperm.xlu0 %1390, %v831
    %v1392 = vpop.permute.xlu0 %1391
    %1394 = vset.pattern.permute.xlu0 4
    %1395 = vperm.xlu0 %1394, %v832
    %v1396 = vpop.permute.xlu0 %1395
    %1398 = vset.pattern.permute.xlu0 4
    %1399 = vperm.xlu0 %1398, %v833
    %v1400 = vpop.permute.xlu0 %1399
    %1402 = vset.pattern.permute.xlu0 4
    %1403 = vperm.xlu0 %1402, %v834
    %v1404 = vpop.permute.xlu0 %1403
    %1406 = vset.pattern.permute.xlu0 4
    %1407 = vperm.xlu0 %1406, %v835
    %v1408 = vpop.permute.xlu0 %1407
    %1410 = vset.pattern.permute.xlu0 4
    %1411 = vperm.xlu0 %1410, %v836
    %v1412 = vpop.permute.xlu0 %1411
    %1414 = vset.pattern.permute.xlu0 4
    %1415 = vperm.xlu0 %1414, %v837
    %v1416 = vpop.permute.xlu0 %1415
    %1418 = vset.pattern.permute.xlu0 4
    %1419 = vperm.xlu0 %1418, %v838
    %v1420 = vpop.permute.xlu0 %1419
    %1422 = vset.pattern.permute.xlu0 4
    %1423 = vperm.xlu0 %1422, %v839
    %v1424 = vpop.permute.xlu0 %1423
    %1426 = vset.pattern.permute.xlu0 4
    %1427 = vperm.xlu0 %1426, %v840
    %v1428 = vpop.permute.xlu0 %1427
    %1430 = vset.pattern.permute.xlu0 4
    %1431 = vperm.xlu0 %1430, %v841
    %v1432 = vpop.permute.xlu0 %1431
    %1434 = vset.pattern.permute.xlu0 4
    %1435 = vperm.xlu0 %1434, %v842
    %v1436 = vpop.permute.xlu0 %1435
    %v1438 = vmul.f32 %v473, %v1376
    %v1439 = vmul.f32 %v477, %v1380
    %v1440 = vmul.f32 %v483, %v1384
    %v1441 = vmul.f32 %v487, %v1388
    %v1442 = vmul.f32 %v493, %v1392
    %v1443 = vmul.f32 %v497, %v1396
    %v1444 = vmul.f32 %v503, %v1400
    %v1445 = vmul.f32 %v507, %v1404
    %v1446 = vmul.f32 %v513, %v1408
    %v1447 = vmul.f32 %v517, %v1412
    %v1448 = vmul.f32 %v523, %v1416
    %v1449 = vmul.f32 %v527, %v1420
    %v1450 = vmul.f32 %v533, %v1424
    %v1451 = vmul.f32 %v537, %v1428
    %v1452 = vmul.f32 %v543, %v1432
    %v1453 = vmul.f32 %v547, %v1436
    %v1454 = vadd.f32 %v1358, %v1438
    %v1455 = vadd.f32 %v1359, %v1439
    %v1456 = vadd.f32 %v1360, %v1440
    %v1457 = vadd.f32 %v1361, %v1441
    %v1458 = vadd.f32 %v1362, %v1442
    %v1459 = vadd.f32 %v1363, %v1443
    %v1460 = vadd.f32 %v1364, %v1444
    %v1461 = vadd.f32 %v1365, %v1445
    %v1462 = vadd.f32 %v1366, %v1446
    %v1463 = vadd.f32 %v1367, %v1447
    %v1464 = vadd.f32 %v1368, %v1448
    %v1465 = vadd.f32 %v1369, %v1449
    %v1466 = vadd.f32 %v1370, %v1450
    %v1467 = vadd.f32 %v1371, %v1451
    %v1468 = vadd.f32 %v1372, %v1452
    %v1469 = vadd.f32 %v1373, %v1453
    %v1486 = vrot.slane %v475, 1
    %v1487 = vrot.slane %v479, 1
    %v1488 = vsel %vm1069, %v1486, %v1487
    %v1489 = vrot.slane %v485, 1
    %v1490 = vsel %vm1069, %v1487, %v1489
    %v1491 = vrot.slane %v489, 1
    %v1492 = vsel %vm1069, %v1489, %v1491
    %v1493 = vrot.slane %v495, 1
    %v1494 = vsel %vm1069, %v1491, %v1493
    %v1495 = vrot.slane %v499, 1
    %v1496 = vsel %vm1069, %v1493, %v1495
    %v1497 = vrot.slane %v505, 1
    %v1498 = vsel %vm1069, %v1495, %v1497
    %v1499 = vrot.slane %v509, 1
    %v1500 = vsel %vm1069, %v1497, %v1499
    %v1501 = vrot.slane %v515, 1
    %v1502 = vsel %vm1069, %v1499, %v1501
    %v1503 = vrot.slane %v519, 1
    %v1504 = vsel %vm1069, %v1501, %v1503
    %v1505 = vrot.slane %v525, 1
    %v1506 = vsel %vm1069, %v1503, %v1505
    %v1507 = vrot.slane %v529, 1
    %v1508 = vsel %vm1069, %v1505, %v1507
    %v1509 = vrot.slane %v535, 1
    %v1510 = vsel %vm1069, %v1507, %v1509
    %v1511 = vrot.slane %v539, 1
    %v1512 = vsel %vm1069, %v1509, %v1511
    %v1513 = vrot.slane %v545, 1
    %v1514 = vsel %vm1069, %v1511, %v1513
    %v1515 = vrot.slane %v549, 1
    %v1516 = vsel %vm1069, %v1513, %v1515
    %v1534 = vsel %vm1069, %v1515, %v1486
    %1535 = vset.pattern.permute.xlu0 5
    %1536 = vperm.xlu0 %1535, %v827
    %v1537 = vpop.permute.xlu0 %1536
    %1539 = vset.pattern.permute.xlu0 5
    %1540 = vperm.xlu0 %1539, %v828
    %v1541 = vpop.permute.xlu0 %1540
    %1543 = vset.pattern.permute.xlu0 5
    %1544 = vperm.xlu0 %1543, %v829
    %v1545 = vpop.permute.xlu0 %1544
    %1547 = vset.pattern.permute.xlu0 5
    %1548 = vperm.xlu0 %1547, %v830
    %v1549 = vpop.permute.xlu0 %1548
    %1551 = vset.pattern.permute.xlu0 5
    %1552 = vperm.xlu0 %1551, %v831
    %v1553 = vpop.permute.xlu0 %1552
    %1555 = vset.pattern.permute.xlu0 5
    %1556 = vperm.xlu0 %1555, %v832
    %v1557 = vpop.permute.xlu0 %1556
    %1559 = vset.pattern.permute.xlu0 5
    %1560 = vperm.xlu0 %1559, %v833
    %v1561 = vpop.permute.xlu0 %1560
    %1563 = vset.pattern.permute.xlu0 5
    %1564 = vperm.xlu0 %1563, %v834
    %v1565 = vpop.permute.xlu0 %1564
    %1567 = vset.pattern.permute.xlu0 5
    %1568 = vperm.xlu0 %1567, %v835
    %v1569 = vpop.permute.xlu0 %1568
    %1571 = vset.pattern.permute.xlu0 5
    %1572 = vperm.xlu0 %1571, %v836
    %v1573 = vpop.permute.xlu0 %1572
    %1575 = vset.pattern.permute.xlu0 5
    %1576 = vperm.xlu0 %1575, %v837
    %v1577 = vpop.permute.xlu0 %1576
    %1579 = vset.pattern.permute.xlu0 5
    %1580 = vperm.xlu0 %1579, %v838
    %v1581 = vpop.permute.xlu0 %1580
    %1583 = vset.pattern.permute.xlu0 5
    %1584 = vperm.xlu0 %1583, %v839
    %v1585 = vpop.permute.xlu0 %1584
    %1587 = vset.pattern.permute.xlu0 5
    %1588 = vperm.xlu0 %1587, %v840
    %v1589 = vpop.permute.xlu0 %1588
    %1591 = vset.pattern.permute.xlu0 5
    %1592 = vperm.xlu0 %1591, %v841
    %v1593 = vpop.permute.xlu0 %1592
    %1595 = vset.pattern.permute.xlu0 5
    %1596 = vperm.xlu0 %1595, %v842
    %v1597 = vpop.permute.xlu0 %1596
    %v1599 = vmul.f32 %v1488, %v1537
    %v1600 = vmul.f32 %v1490, %v1541
    %v1601 = vmul.f32 %v1492, %v1545
    %v1602 = vmul.f32 %v1494, %v1549
    %v1603 = vmul.f32 %v1496, %v1553
    %v1604 = vmul.f32 %v1498, %v1557
    %v1605 = vmul.f32 %v1500, %v1561
    %v1606 = vmul.f32 %v1502, %v1565
    %v1607 = vmul.f32 %v1504, %v1569
    %v1608 = vmul.f32 %v1506, %v1573
    %v1609 = vmul.f32 %v1508, %v1577
    %v1610 = vmul.f32 %v1510, %v1581
    %v1611 = vmul.f32 %v1512, %v1585
    %v1612 = vmul.f32 %v1514, %v1589
    %v1613 = vmul.f32 %v1516, %v1593
    %v1614 = vmul.f32 %v1534, %v1597
    %v1615 = vadd.f32 %v1454, %v1599
    %v1616 = vadd.f32 %v1455, %v1600
    %v1617 = vadd.f32 %v1456, %v1601
    %v1618 = vadd.f32 %v1457, %v1602
    %v1619 = vadd.f32 %v1458, %v1603
    %v1620 = vadd.f32 %v1459, %v1604
    %v1621 = vadd.f32 %v1460, %v1605
    %v1622 = vadd.f32 %v1461, %v1606
    %v1623 = vadd.f32 %v1462, %v1607
    %v1624 = vadd.f32 %v1463, %v1608
    %v1625 = vadd.f32 %v1464, %v1609
    %v1626 = vadd.f32 %v1465, %v1610
    %v1627 = vadd.f32 %v1466, %v1611
    %v1628 = vadd.f32 %v1467, %v1612
    %v1629 = vadd.f32 %v1468, %v1613
    %v1630 = vadd.f32 %v1469, %v1614
    %v1647 = vrot.slane %v586, 7
    %v1648 = vrot.slane %v590, 7
    %v1649 = vsel %vm763, %v1647, %v1648
    %v1650 = vrot.slane %v596, 7
    %v1651 = vsel %vm763, %v1648, %v1650
    %v1652 = vrot.slane %v600, 7
    %v1653 = vsel %vm763, %v1650, %v1652
    %v1654 = vrot.slane %v606, 7
    %v1655 = vsel %vm763, %v1652, %v1654
    %v1656 = vrot.slane %v610, 7
    %v1657 = vsel %vm763, %v1654, %v1656
    %v1658 = vrot.slane %v616, 7
    %v1659 = vsel %vm763, %v1656, %v1658
    %v1660 = vrot.slane %v620, 7
    %v1661 = vsel %vm763, %v1658, %v1660
    %v1662 = vrot.slane %v626, 7
    %v1663 = vsel %vm763, %v1660, %v1662
    %v1664 = vrot.slane %v630, 7
    %v1665 = vsel %vm763, %v1662, %v1664
    %v1666 = vrot.slane %v636, 7
    %v1667 = vsel %vm763, %v1664, %v1666
    %v1668 = vrot.slane %v640, 7
    %v1669 = vsel %vm763, %v1666, %v1668
    %v1670 = vrot.slane %v646, 7
    %v1671 = vsel %vm763, %v1668, %v1670
    %v1672 = vrot.slane %v650, 7
    %v1673 = vsel %vm763, %v1670, %v1672
    %v1674 = vrot.slane %v656, 7
    %v1675 = vsel %vm763, %v1672, %v1674
    %v1676 = vrot.slane %v660, 7
    %v1677 = vsel %vm763, %v1674, %v1676
    %v1695 = vsel %vm763, %v1676, %v1647
    %1696 = vset.pattern.permute.xlu0 6
    %1697 = vperm.xlu0 %1696, %v827
    %v1698 = vpop.permute.xlu0 %1697
    %1700 = vset.pattern.permute.xlu0 6
    %1701 = vperm.xlu0 %1700, %v828
    %v1702 = vpop.permute.xlu0 %1701
    %1704 = vset.pattern.permute.xlu0 6
    %1705 = vperm.xlu0 %1704, %v829
    %v1706 = vpop.permute.xlu0 %1705
    %1708 = vset.pattern.permute.xlu0 6
    %1709 = vperm.xlu0 %1708, %v830
    %v1710 = vpop.permute.xlu0 %1709
    %1712 = vset.pattern.permute.xlu0 6
    %1713 = vperm.xlu0 %1712, %v831
    %v1714 = vpop.permute.xlu0 %1713
    %1716 = vset.pattern.permute.xlu0 6
    %1717 = vperm.xlu0 %1716, %v832
    %v1718 = vpop.permute.xlu0 %1717
    %1720 = vset.pattern.permute.xlu0 6
    %1721 = vperm.xlu0 %1720, %v833
    %v1722 = vpop.permute.xlu0 %1721
    %1724 = vset.pattern.permute.xlu0 6
    %1725 = vperm.xlu0 %1724, %v834
    %v1726 = vpop.permute.xlu0 %1725
    %1728 = vset.pattern.permute.xlu0 6
    %1729 = vperm.xlu0 %1728, %v835
    %v1730 = vpop.permute.xlu0 %1729
    %1732 = vset.pattern.permute.xlu0 6
    %1733 = vperm.xlu0 %1732, %v836
    %v1734 = vpop.permute.xlu0 %1733
    %1736 = vset.pattern.permute.xlu0 6
    %1737 = vperm.xlu0 %1736, %v837
    %v1738 = vpop.permute.xlu0 %1737
    %1740 = vset.pattern.permute.xlu0 6
    %1741 = vperm.xlu0 %1740, %v838
    %v1742 = vpop.permute.xlu0 %1741
    %1744 = vset.pattern.permute.xlu0 6
    %1745 = vperm.xlu0 %1744, %v839
    %v1746 = vpop.permute.xlu0 %1745
    %1748 = vset.pattern.permute.xlu0 6
    %1749 = vperm.xlu0 %1748, %v840
    %v1750 = vpop.permute.xlu0 %1749
    %1752 = vset.pattern.permute.xlu0 6
    %1753 = vperm.xlu0 %1752, %v841
    %v1754 = vpop.permute.xlu0 %1753
    %1756 = vset.pattern.permute.xlu0 6
    %1757 = vperm.xlu0 %1756, %v842
    %v1758 = vpop.permute.xlu0 %1757
    %v1760 = vmul.f32 %v1649, %v1698
    %v1761 = vmul.f32 %v1651, %v1702
    %v1762 = vmul.f32 %v1653, %v1706
    %v1763 = vmul.f32 %v1655, %v1710
    %v1764 = vmul.f32 %v1657, %v1714
    %v1765 = vmul.f32 %v1659, %v1718
    %v1766 = vmul.f32 %v1661, %v1722
    %v1767 = vmul.f32 %v1663, %v1726
    %v1768 = vmul.f32 %v1665, %v1730
    %v1769 = vmul.f32 %v1667, %v1734
    %v1770 = vmul.f32 %v1669, %v1738
    %v1771 = vmul.f32 %v1671, %v1742
    %v1772 = vmul.f32 %v1673, %v1746
    %v1773 = vmul.f32 %v1675, %v1750
    %v1774 = vmul.f32 %v1677, %v1754
    %v1775 = vmul.f32 %v1695, %v1758
    %v1776 = vadd.f32 %v1615, %v1760
    %v1777 = vadd.f32 %v1616, %v1761
    %v1778 = vadd.f32 %v1617, %v1762
    %v1779 = vadd.f32 %v1618, %v1763
    %v1780 = vadd.f32 %v1619, %v1764
    %v1781 = vadd.f32 %v1620, %v1765
    %v1782 = vadd.f32 %v1621, %v1766
    %v1783 = vadd.f32 %v1622, %v1767
    %v1784 = vadd.f32 %v1623, %v1768
    %v1785 = vadd.f32 %v1624, %v1769
    %v1786 = vadd.f32 %v1625, %v1770
    %v1787 = vadd.f32 %v1626, %v1771
    %v1788 = vadd.f32 %v1627, %v1772
    %v1789 = vadd.f32 %v1628, %v1773
    %v1790 = vadd.f32 %v1629, %v1774
    %v1791 = vadd.f32 %v1630, %v1775
    %1792 = vset.pattern.permute.xlu0 7
    %1793 = vperm.xlu0 %1792, %v827
    %v1794 = vpop.permute.xlu0 %1793
    %1796 = vset.pattern.permute.xlu0 7
    %1797 = vperm.xlu0 %1796, %v828
    %v1798 = vpop.permute.xlu0 %1797
    %1800 = vset.pattern.permute.xlu0 7
    %1801 = vperm.xlu0 %1800, %v829
    %v1802 = vpop.permute.xlu0 %1801
    %1804 = vset.pattern.permute.xlu0 7
    %1805 = vperm.xlu0 %1804, %v830
    %v1806 = vpop.permute.xlu0 %1805
    %1808 = vset.pattern.permute.xlu0 7
    %1809 = vperm.xlu0 %1808, %v831
    %v1810 = vpop.permute.xlu0 %1809
    %1812 = vset.pattern.permute.xlu0 7
    %1813 = vperm.xlu0 %1812, %v832
    %v1814 = vpop.permute.xlu0 %1813
    %1816 = vset.pattern.permute.xlu0 7
    %1817 = vperm.xlu0 %1816, %v833
    %v1818 = vpop.permute.xlu0 %1817
    %1820 = vset.pattern.permute.xlu0 7
    %1821 = vperm.xlu0 %1820, %v834
    %v1822 = vpop.permute.xlu0 %1821
    %1824 = vset.pattern.permute.xlu0 7
    %1825 = vperm.xlu0 %1824, %v835
    %v1826 = vpop.permute.xlu0 %1825
    %1828 = vset.pattern.permute.xlu0 7
    %1829 = vperm.xlu0 %1828, %v836
    %v1830 = vpop.permute.xlu0 %1829
    %1832 = vset.pattern.permute.xlu0 7
    %1833 = vperm.xlu0 %1832, %v837
    %v1834 = vpop.permute.xlu0 %1833
    %1836 = vset.pattern.permute.xlu0 7
    %1837 = vperm.xlu0 %1836, %v838
    %v1838 = vpop.permute.xlu0 %1837
    %1840 = vset.pattern.permute.xlu0 7
    %1841 = vperm.xlu0 %1840, %v839
    %v1842 = vpop.permute.xlu0 %1841
    %1844 = vset.pattern.permute.xlu0 7
    %1845 = vperm.xlu0 %1844, %v840
    %v1846 = vpop.permute.xlu0 %1845
    %1848 = vset.pattern.permute.xlu0 7
    %1849 = vperm.xlu0 %1848, %v841
    %v1850 = vpop.permute.xlu0 %1849
    %1852 = vset.pattern.permute.xlu0 7
    %1853 = vperm.xlu0 %1852, %v842
    %v1854 = vpop.permute.xlu0 %1853
    %v1856 = vmul.f32 %v592, %v1794
    %v1857 = vmul.f32 %v598, %v1798
    %v1858 = vmul.f32 %v602, %v1802
    %v1859 = vmul.f32 %v608, %v1806
    %v1860 = vmul.f32 %v612, %v1810
    %v1861 = vmul.f32 %v618, %v1814
    %v1862 = vmul.f32 %v622, %v1818
    %v1863 = vmul.f32 %v628, %v1822
    %v1864 = vmul.f32 %v632, %v1826
    %v1865 = vmul.f32 %v638, %v1830
    %v1866 = vmul.f32 %v642, %v1834
    %v1867 = vmul.f32 %v648, %v1838
    %v1868 = vmul.f32 %v652, %v1842
    %v1869 = vmul.f32 %v658, %v1846
    %v1870 = vmul.f32 %v662, %v1850
    %v1871 = vmul.f32 %v588, %v1854
    %v1872 = vadd.f32 %v1776, %v1856
    %v1873 = vadd.f32 %v1777, %v1857
    %v1874 = vadd.f32 %v1778, %v1858
    %v1875 = vadd.f32 %v1779, %v1859
    %v1876 = vadd.f32 %v1780, %v1860
    %v1877 = vadd.f32 %v1781, %v1861
    %v1878 = vadd.f32 %v1782, %v1862
    %v1879 = vadd.f32 %v1783, %v1863
    %v1880 = vadd.f32 %v1784, %v1864
    %v1881 = vadd.f32 %v1785, %v1865
    %v1882 = vadd.f32 %v1786, %v1866
    %v1883 = vadd.f32 %v1787, %v1867
    %v1884 = vadd.f32 %v1788, %v1868
    %v1885 = vadd.f32 %v1789, %v1869
    %v1886 = vadd.f32 %v1790, %v1870
    %v1887 = vadd.f32 %v1791, %v1871
    %v1903 = vrot.slane %v702, 1
    %v1904 = vrot.slane %v707, 1
    %v1905 = vsel %vm1069, %v1903, %v1904
    %v1906 = vrot.slane %v710, 1
    %v1907 = vsel %vm1069, %v1904, %v1906
    %v1908 = vrot.slane %v715, 1
    %v1909 = vsel %vm1069, %v1906, %v1908
    %v1910 = vrot.slane %v718, 1
    %v1911 = vsel %vm1069, %v1908, %v1910
    %v1912 = vrot.slane %v723, 1
    %v1913 = vsel %vm1069, %v1910, %v1912
    %v1914 = vrot.slane %v726, 1
    %v1915 = vsel %vm1069, %v1912, %v1914
    %v1916 = vrot.slane %v731, 1
    %v1917 = vsel %vm1069, %v1914, %v1916
    %v1918 = vrot.slane %v734, 1
    %v1919 = vsel %vm1069, %v1916, %v1918
    %v1920 = vrot.slane %v739, 1
    %v1921 = vsel %vm1069, %v1918, %v1920
    %v1922 = vrot.slane %v742, 1
    %v1923 = vsel %vm1069, %v1920, %v1922
    %v1924 = vrot.slane %v747, 1
    %v1925 = vsel %vm1069, %v1922, %v1924
    %v1926 = vrot.slane %v750, 1
    %v1927 = vsel %vm1069, %v1924, %v1926
    %v1928 = vrot.slane %v755, 1
    %v1929 = vsel %vm1069, %v1926, %v1928
    %v1930 = vrot.slane %v758, 1
    %v1931 = vsel %vm1069, %v1928, %v1930
    %v1948 = vrot.slane %v699, 1
    %v1949 = vsel %vm1069, %v1948, %v1903
    %v1952 = vsel %vm1069, %v1930, %v1948
    %1953 = vset.pattern.permute.xlu0 8
    %1954 = vperm.xlu0 %1953, %v827
    %v1955 = vpop.permute.xlu0 %1954
    %1957 = vset.pattern.permute.xlu0 8
    %1958 = vperm.xlu0 %1957, %v828
    %v1959 = vpop.permute.xlu0 %1958
    %1961 = vset.pattern.permute.xlu0 8
    %1962 = vperm.xlu0 %1961, %v829
    %v1963 = vpop.permute.xlu0 %1962
    %1965 = vset.pattern.permute.xlu0 8
    %1966 = vperm.xlu0 %1965, %v830
    %v1967 = vpop.permute.xlu0 %1966
    %1969 = vset.pattern.permute.xlu0 8
    %1970 = vperm.xlu0 %1969, %v831
    %v1971 = vpop.permute.xlu0 %1970
    %1973 = vset.pattern.permute.xlu0 8
    %1974 = vperm.xlu0 %1973, %v832
    %v1975 = vpop.permute.xlu0 %1974
    %1977 = vset.pattern.permute.xlu0 8
    %1978 = vperm.xlu0 %1977, %v833
    %v1979 = vpop.permute.xlu0 %1978
    %1981 = vset.pattern.permute.xlu0 8
    %1982 = vperm.xlu0 %1981, %v834
    %v1983 = vpop.permute.xlu0 %1982
    %1985 = vset.pattern.permute.xlu0 8
    %1986 = vperm.xlu0 %1985, %v835
    %v1987 = vpop.permute.xlu0 %1986
    %1989 = vset.pattern.permute.xlu0 8
    %1990 = vperm.xlu0 %1989, %v836
    %v1991 = vpop.permute.xlu0 %1990
    %1993 = vset.pattern.permute.xlu0 8
    %1994 = vperm.xlu0 %1993, %v837
    %v1995 = vpop.permute.xlu0 %1994
    %1997 = vset.pattern.permute.xlu0 8
    %1998 = vperm.xlu0 %1997, %v838
    %v1999 = vpop.permute.xlu0 %1998
    %2001 = vset.pattern.permute.xlu0 8
    %2002 = vperm.xlu0 %2001, %v839
    %v2003 = vpop.permute.xlu0 %2002
    %2005 = vset.pattern.permute.xlu0 8
    %2006 = vperm.xlu0 %2005, %v840
    %v2007 = vpop.permute.xlu0 %2006
    %2009 = vset.pattern.permute.xlu0 8
    %2010 = vperm.xlu0 %2009, %v841
    %v2011 = vpop.permute.xlu0 %2010
    %2013 = vset.pattern.permute.xlu0 8
    %2014 = vperm.xlu0 %2013, %v842
    %v2015 = vpop.permute.xlu0 %2014
    %v2017 = vmul.f32 %v1905, %v1955
    %v2018 = vmul.f32 %v1907, %v1959
    %v2019 = vmul.f32 %v1909, %v1963
    %v2020 = vmul.f32 %v1911, %v1967
    %v2021 = vmul.f32 %v1913, %v1971
    %v2022 = vmul.f32 %v1915, %v1975
    %v2023 = vmul.f32 %v1917, %v1979
    %v2024 = vmul.f32 %v1919, %v1983
    %v2025 = vmul.f32 %v1921, %v1987
    %v2026 = vmul.f32 %v1923, %v1991
    %v2027 = vmul.f32 %v1925, %v1995
    %v2028 = vmul.f32 %v1927, %v1999
    %v2029 = vmul.f32 %v1929, %v2003
    %v2030 = vmul.f32 %v1931, %v2007
    %v2031 = vmul.f32 %v1952, %v2011
    %v2032 = vmul.f32 %v1949, %v2015
    %v2033 = vadd.f32 %v1872, %v2017
    %v2034 = vadd.f32 %v1873, %v2018
    %v2035 = vadd.f32 %v1874, %v2019
    %v2036 = vadd.f32 %v1875, %v2020
    %v2037 = vadd.f32 %v1876, %v2021
    %v2038 = vadd.f32 %v1877, %v2022
    %v2039 = vadd.f32 %v1878, %v2023
    %v2040 = vadd.f32 %v1879, %v2024
    %v2041 = vadd.f32 %v1880, %v2025
    %v2042 = vadd.f32 %v1881, %v2026
    %v2043 = vadd.f32 %v1882, %v2027
    %v2044 = vadd.f32 %v1883, %v2028
    %v2045 = vadd.f32 %v1884, %v2029
    %v2046 = vadd.f32 %v1885, %v2030
    %v2047 = vadd.f32 %v1886, %v2031
    %v2048 = vadd.f32 %v1887, %v2032
    %v2049 = vld [vmem:[#allocation9] sm:$0x1]
    %v2050 = vlaneseq
    %v2051 = vshrl.u32 %v2050, 7
    %v2052 = vsub.s32 0, %v2051
    %v2053 = vrot.slane %v2049, %v2052
    %v2054 = vadd.f32 %v2033, %v2053
    %v2055 = vadd.f32 %v2034, %v2053
    %v2056 = vadd.f32 %v2035, %v2053
    %v2057 = vadd.f32 %v2036, %v2053
    %v2058 = vadd.f32 %v2037, %v2053
    %v2059 = vadd.f32 %v2038, %v2053
    %v2060 = vadd.f32 %v2039, %v2053
    %v2061 = vadd.f32 %v2040, %v2053
    %v2062 = vadd.f32 %v2041, %v2053
    %v2063 = vadd.f32 %v2042, %v2053
    %v2064 = vadd.f32 %v2043, %v2053
    %v2065 = vadd.f32 %v2044, %v2053
    %v2066 = vadd.f32 %v2045, %v2053
    %v2067 = vadd.f32 %v2046, %v2053
    %v2068 = vadd.f32 %v2047, %v2053
    %v2069 = vadd.f32 %v2048, %v2053
    %v2070 = vmax.f32 %v2054, 0.0
    %v2071 = vmax.f32 %v2055, 0.0
    %v2072 = vmax.f32 %v2056, 0.0
    %v2073 = vmax.f32 %v2057, 0.0
    %v2074 = vmax.f32 %v2058, 0.0
    %v2075 = vmax.f32 %v2059, 0.0
    %v2076 = vmax.f32 %v2060, 0.0
    %v2077 = vmax.f32 %v2061, 0.0
    %v2078 = vmax.f32 %v2062, 0.0
    %v2079 = vmax.f32 %v2063, 0.0
    %v2080 = vmax.f32 %v2064, 0.0
    %v2081 = vmax.f32 %v2065, 0.0
    %v2082 = vmax.f32 %v2066, 0.0
    %v2083 = vmax.f32 %v2067, 0.0
    %v2084 = vmax.f32 %v2068, 0.0
    %v2085 = vmax.f32 %v2069, 0.0
    %v2086 = vpack.c.bf16 %v2071, %v2070
    %v2087 = vpack.c.bf16 %v2073, %v2072
    %v2088 = vpack.c.bf16 %v2075, %v2074
    %v2089 = vpack.c.bf16 %v2077, %v2076
    %v2090 = vpack.c.bf16 %v2079, %v2078
    %v2091 = vpack.c.bf16 %v2081, %v2080
    %v2092 = vpack.c.bf16 %v2083, %v2082
    %v2093 = vpack.c.bf16 %v2085, %v2084
    %v2094 = vld [vmem:[#allocation2 + $0x48] sm:$0xff]
    %v2095 = vld [vmem:[#allocation2 + $0x50] sm:$0xff]
    %v2096 = vld [vmem:[#allocation2 + $0x58] sm:$0xff]
    %v2097 = vld [vmem:[#allocation2 + $0x60] sm:$0xff]
    %v2098 = vld [vmem:[#allocation2 + $0x68] sm:$0xf]
    %v2099 = vld [vmem:[#allocation2 + $0x6c] sm:$0xff]
    %v2100 = vld [vmem:[#allocation2 + $0x74] sm:$0xff]
    %v2101 = vld [vmem:[#allocation2 + $0x7c] sm:$0xff]
    %v2102 = vld [vmem:[#allocation2 + $0x84] sm:$0xff]
    %v2103 = vld [vmem:[#allocation2 + $0x8c] sm:$0xf]
    %v2114 = vunpack.c.l.b16 %v2094
    %v2115 = vunpack.c.h.b16 %v2094
    %v2116 = vunpack.c.l.b16 %v2095
    %v2117 = vunpack.c.h.b16 %v2095
    %v2118 = vunpack.c.l.b16 %v2096
    %v2119 = vunpack.c.h.b16 %v2096
    %v2120 = vunpack.c.l.b16 %v2097
    %v2121 = vunpack.c.h.b16 %v2097
    %v2122 = vunpack.c.l.b16 %v2098
    %v2123 = vunpack.c.l.b16 %v2099
    %v2124 = vunpack.c.h.b16 %v2099
    %v2125 = vunpack.c.l.b16 %v2100
    %v2126 = vunpack.c.h.b16 %v2100
    %v2127 = vunpack.c.l.b16 %v2101
    %v2128 = vunpack.c.h.b16 %v2101
    %v2129 = vunpack.c.l.b16 %v2102
    %v2130 = vunpack.c.h.b16 %v2102
    %v2131 = vunpack.c.l.b16 %v2103
    %v2132 = vpack.c.b16 %v2123, %v2114
    %v2133 = vpack.c.b16 %v2124, %v2115
    %v2134 = vpack.c.b16 %v2125, %v2116
    %v2135 = vpack.c.b16 %v2126, %v2117
    %v2136 = vpack.c.b16 %v2127, %v2118
    %v2137 = vpack.c.b16 %v2128, %v2119
    %v2138 = vpack.c.b16 %v2129, %v2120
    %v2139 = vpack.c.b16 %v2130, %v2121
    %v2140 = vpack.c.b16 %v2131, %v2122
    %2150 = vmatprep.subr.bf16.mxu0 %v2133
    %2151 = vmatpush1.bf16.msra.mxu0 %v2132
    %2152 = vmatprep.subr.bf16.mxu0 0
    %2153 = vmatpush1.bf16.msra.mxu0 0
    %2154 = vmatprep.subr.bf16.mxu0 0
    %2155 = vmatpush1.bf16.msra.mxu0 0
    %2156 = vmatprep.subr.bf16.mxu0 0
    %2157 = vmatpush1.bf16.msra.mxu0 0
    %2158 = vmatprep.subr.bf16.mxu0 0
    %2159 = vmatpush1.bf16.msra.mxu0 0
    %2160 = vmatprep.subr.bf16.mxu0 0
    %2161 = vmatpush1.bf16.msra.mxu0 0
    %2162 = vmatprep.subr.bf16.mxu0 0
    %2163 = vmatpush1.bf16.msra.mxu0 0
    %2164 = vmatprep.subr.bf16.mxu0 0
    %2165 = vmatpush1.bf16.msra.mxu0 0
    %2166 = vmatprep.subr.bf16.mxu0 0
    %2167 = vmatpush1.bf16.msra.mxu0 0
    %2168 = vmatprep.subr.bf16.mxu0 0
    %2169 = vmatpush1.bf16.msra.mxu0 0
    %2170 = vmatprep.subr.bf16.mxu0 0
    %2171 = vmatpush1.bf16.msra.mxu0 0
    %2172 = vmatprep.subr.bf16.mxu0 0
    %2173 = vmatpush1.bf16.msra.mxu0 0
    %2174 = vmatprep.subr.bf16.mxu0 0
    %2175 = vmatpush1.bf16.msra.mxu0 0
    %2176 = vmatprep.subr.bf16.mxu0 0
    %2177 = vmatpush1.bf16.msra.mxu0 0
    %2178 = vmatprep.subr.bf16.mxu0 0
    %2179 = vmatpush1.bf16.msra.mxu0 0
    %2180 = vmatprep.subr.bf16.mxu0 0
    %2181 = vmatpush1.bf16.msra.mxu0 0
    %2182 = vmatprep.mubr.bf16.mxu0 0
    %2183 = vmatmul.mubr.bf16.gmra.mrb[0].mxu0 %v2086
    %v2184 = vpop.f32.mrb[0].mxu0
    %v2185 = vadd.f32 0.0, %v2184
    %v2186 = vpop.f32.mrb[0].mxu0
    %v2187 = vadd.f32 0.0, %v2186
    %v2188 = vpop.f32.mrb[0].mxu0
    %v2189 = vadd.f32 0.0, %v2188
    %v2190 = vpop.f32.mrb[0].mxu0
    %v2191 = vadd.f32 0.0, %v2190
    %2192 = vmatprep.mubr.bf16.mxu0 0
    %2193 = vmatmul.mubr.bf16.gmra.mrb[0].mxu0 %v2087
    %v2194 = vpop.f32.mrb[0].mxu0
    %v2195 = vadd.f32 0.0, %v2194
    %v2196 = vpop.f32.mrb[0].mxu0
    %v2197 = vadd.f32 0.0, %v2196
    %v2198 = vpop.f32.mrb[0].mxu0
    %v2199 = vadd.f32 0.0, %v2198
    %v2200 = vpop.f32.mrb[0].mxu0
    %v2201 = vadd.f32 0.0, %v2200
    %2202 = vmatprep.mubr.bf16.mxu0 0
    %2203 = vmatmul.mubr.bf16.gmra.mrb[0].mxu0 %v2088
    %v2204 = vpop.f32.mrb[0].mxu0
    %v2205 = vadd.f32 0.0, %v2204
    %v2206 = vpop.f32.mrb[0].mxu0
    %v2207 = vadd.f32 0.0, %v2206
    %v2208 = vpop.f32.mrb[0].mxu0
    %v2209 = vadd.f32 0.0, %v2208
    %v2210 = vpop.f32.mrb[0].mxu0
    %v2211 = vadd.f32 0.0, %v2210
    %2212 = vmatprep.mubr.bf16.mxu0 0
    %2213 = vmatmul.mubr.bf16.gmra.mrb[0].mxu0 %v2089
    %v2214 = vpop.f32.mrb[0].mxu0
    %v2215 = vadd.f32 0.0, %v2214
    %v2216 = vpop.f32.mrb[0].mxu0
    %v2217 = vadd.f32 0.0, %v2216
    %v2218 = vpop.f32.mrb[0].mxu0
    %v2219 = vadd.f32 0.0, %v2218
    %v2220 = vpop.f32.mrb[0].mxu0
    %v2221 = vadd.f32 0.0, %v2220
    %2222 = vmatprep.mubr.bf16.mxu0 0
    %2223 = vmatmul.mubr.bf16.gmra.mrb[0].mxu0 %v2090
    %v2224 = vpop.f32.mrb[0].mxu0
    %v2225 = vadd.f32 0.0, %v2224
    %v2226 = vpop.f32.mrb[0].mxu0
    %v2227 = vadd.f32 0.0, %v2226
    %v2228 = vpop.f32.mrb[0].mxu0
    %v2229 = vadd.f32 0.0, %v2228
    %v2230 = vpop.f32.mrb[0].mxu0
    %v2231 = vadd.f32 0.0, %v2230
    %2232 = vmatprep.mubr.bf16.mxu0 0
    %2233 = vmatmul.mubr.bf16.gmra.mrb[0].mxu0 %v2091
    %v2234 = vpop.f32.mrb[0].mxu0
    %v2235 = vadd.f32 0.0, %v2234
    %v2236 = vpop.f32.mrb[0].mxu0
    %v2237 = vadd.f32 0.0, %v2236
    %v2238 = vpop.f32.mrb[0].mxu0
    %v2239 = vadd.f32 0.0, %v2238
    %v2240 = vpop.f32.mrb[0].mxu0
    %v2241 = vadd.f32 0.0, %v2240
    %2242 = vmatprep.mubr.bf16.mxu0 0
    %2243 = vmatmul.mubr.bf16.gmra.mrb[0].mxu0 %v2092
    %v2244 = vpop.f32.mrb[0].mxu0
    %v2245 = vadd.f32 0.0, %v2244
    %v2246 = vpop.f32.mrb[0].mxu0
    %v2247 = vadd.f32 0.0, %v2246
    %v2248 = vpop.f32.mrb[0].mxu0
    %v2249 = vadd.f32 0.0, %v2248
    %v2250 = vpop.f32.mrb[0].mxu0
    %v2251 = vadd.f32 0.0, %v2250
    %2252 = vmatprep.mubr.bf16.mxu0 0
    %2253 = vmatmul.mubr.bf16.gmra.mrb[0].mxu0 %v2093
    %v2254 = vpop.f32.mrb[0].mxu0
    %v2255 = vadd.f32 0.0, %v2254
    %v2256 = vpop.f32.mrb[0].mxu0
    %v2257 = vadd.f32 0.0, %v2256
    %v2258 = vpop.f32.mrb[0].mxu0
    %v2259 = vadd.f32 0.0, %v2258
    %v2260 = vpop.f32.mrb[0].mxu0
    %v2261 = vadd.f32 0.0, %v2260
    %2262 = vdwg.mxu0
    %2263 = vmatprep.subr.bf16.mxu0 %v2135
    %2264 = vmatpush1.bf16.msra.mxu0 %v2134
    %2265 = vmatprep.subr.bf16.mxu0 0
    %2266 = vmatpush1.bf16.msra.mxu0 0
    %2267 = vmatprep.subr.bf16.mxu0 0
    %2268 = vmatpush1.bf16.msra.mxu0 0
    %2269 = vmatprep.subr.bf16.mxu0 0
    %2270 = vmatpush1.bf16.msra.mxu0 0
    %2271 = vmatprep.subr.bf16.mxu0 0
    %2272 = vmatpush1.bf16.msra.mxu0 0
    %2273 = vmatprep.subr.bf16.mxu0 0
    %2274 = vmatpush1.bf16.msra.mxu0 0
    %2275 = vmatprep.subr.bf16.mxu0 0
    %2276 = vmatpush1.bf16.msra.mxu0 0
    %2277 = vmatprep.subr.bf16.mxu0 0
    %2278 = vmatpush1.bf16.msra.mxu0 0
    %2279 = vmatprep.subr.bf16.mxu0 0
    %2280 = vmatpush1.bf16.msra.mxu0 0
    %2281 = vmatprep.subr.bf16.mxu0 0
    %2282 = vmatpush1.bf16.msra.mxu0 0
    %2283 = vmatprep.subr.bf16.mxu0 0
    %2284 = vmatpush1.bf16.msra.mxu0 0
    %2285 = vmatprep.subr.bf16.mxu0 0
    %2286 = vmatpush1.bf16.msra.mxu0 0
    %2287 = vmatprep.subr.bf16.mxu0 0
    %2288 = vmatpush1.bf16.msra.mxu0 0
    %2289 = vmatprep.subr.bf16.mxu0 0
    %2290 = vmatpush1.bf16.msra.mxu0 0
    %2291 = vmatprep.subr.bf16.mxu0 0
    %2292 = vmatpush1.bf16.msra.mxu0 0
    %2293 = vmatprep.subr.bf16.mxu0 0
    %2294 = vmatpush1.bf16.msra.mxu0 0
    %2295 = vmatprep.mubr.bf16.mxu0 0
    %2296 = vmatmul.mubr.bf16.gmra.mrb[0].mxu0 %v2086
    %v2297 = vpop.f32.mrb[0].mxu0
    %v2298 = vadd.f32 0.0, %v2297
    %v2299 = vpop.f32.mrb[0].mxu0
    %v2300 = vadd.f32 0.0, %v2299
    %v2301 = vpop.f32.mrb[0].mxu0
    %v2302 = vadd.f32 0.0, %v2301
    %v2303 = vpop.f32.mrb[0].mxu0
    %v2304 = vadd.f32 0.0, %v2303
    %2305 = vmatprep.mubr.bf16.mxu0 0
    %2306 = vmatmul.mubr.bf16.gmra.mrb[0].mxu0 %v2087
    %v2307 = vpop.f32.mrb[0].mxu0
    %v2308 = vadd.f32 0.0, %v2307
    %v2309 = vpop.f32.mrb[0].mxu0
    %v2310 = vadd.f32 0.0, %v2309
    %v2311 = vpop.f32.mrb[0].mxu0
    %v2312 = vadd.f32 0.0, %v2311
    %v2313 = vpop.f32.mrb[0].mxu0
    %v2314 = vadd.f32 0.0, %v2313
    %2315 = vmatprep.mubr.bf16.mxu0 0
    %2316 = vmatmul.mubr.bf16.gmra.mrb[0].mxu0 %v2088
    %v2317 = vpop.f32.mrb[0].mxu0
    %v2318 = vadd.f32 0.0, %v2317
    %v2319 = vpop.f32.mrb[0].mxu0
    %v2320 = vadd.f32 0.0, %v2319
    %v2321 = vpop.f32.mrb[0].mxu0
    %v2322 = vadd.f32 0.0, %v2321
    %v2323 = vpop.f32.mrb[0].mxu0
    %v2324 = vadd.f32 0.0, %v2323
    %2325 = vmatprep.mubr.bf16.mxu0 0
    %2326 = vmatmul.mubr.bf16.gmra.mrb[0].mxu0 %v2089
    %v2327 = vpop.f32.mrb[0].mxu0
    %v2328 = vadd.f32 0.0, %v2327
    %v2329 = vpop.f32.mrb[0].mxu0
    %v2330 = vadd.f32 0.0, %v2329
    %v2331 = vpop.f32.mrb[0].mxu0
    %v2332 = vadd.f32 0.0, %v2331
    %v2333 = vpop.f32.mrb[0].mxu0
    %v2334 = vadd.f32 0.0, %v2333
    %2335 = vmatprep.mubr.bf16.mxu0 0
    %2336 = vmatmul.mubr.bf16.gmra.mrb[0].mxu0 %v2090
    %v2337 = vpop.f32.mrb[0].mxu0
    %v2338 = vadd.f32 0.0, %v2337
    %v2339 = vpop.f32.mrb[0].mxu0
    %v2340 = vadd.f32 0.0, %v2339
    %v2341 = vpop.f32.mrb[0].mxu0
    %v2342 = vadd.f32 0.0, %v2341
    %v2343 = vpop.f32.mrb[0].mxu0
    %v2344 = vadd.f32 0.0, %v2343
    %2345 = vmatprep.mubr.bf16.mxu0 0
    %2346 = vmatmul.mubr.bf16.gmra.mrb[0].mxu0 %v2091
    %v2347 = vpop.f32.mrb[0].mxu0
    %v2348 = vadd.f32 0.0, %v2347
    %v2349 = vpop.f32.mrb[0].mxu0
    %v2350 = vadd.f32 0.0, %v2349
    %v2351 = vpop.f32.mrb[0].mxu0
    %v2352 = vadd.f32 0.0, %v2351
    %v2353 = vpop.f32.mrb[0].mxu0
    %v2354 = vadd.f32 0.0, %v2353
    %2355 = vmatprep.mubr.bf16.mxu0 0
    %2356 = vmatmul.mubr.bf16.gmra.mrb[0].mxu0 %v2092
    %v2357 = vpop.f32.mrb[0].mxu0
    %v2358 = vadd.f32 0.0, %v2357
    %v2359 = vpop.f32.mrb[0].mxu0
    %v2360 = vadd.f32 0.0, %v2359
    %v2361 = vpop.f32.mrb[0].mxu0
    %v2362 = vadd.f32 0.0, %v2361
    %v2363 = vpop.f32.mrb[0].mxu0
    %v2364 = vadd.f32 0.0, %v2363
    %2365 = vmatprep.mubr.bf16.mxu0 0
    %2366 = vmatmul.mubr.bf16.gmra.mrb[0].mxu0 %v2093
    %v2367 = vpop.f32.mrb[0].mxu0
    %v2368 = vadd.f32 0.0, %v2367
    %v2369 = vpop.f32.mrb[0].mxu0
    %v2370 = vadd.f32 0.0, %v2369
    %v2371 = vpop.f32.mrb[0].mxu0
    %v2372 = vadd.f32 0.0, %v2371
    %v2373 = vpop.f32.mrb[0].mxu0
    %v2374 = vadd.f32 0.0, %v2373
    %2375 = vdwg.mxu0
    %2376 = vmatprep.subr.bf16.mxu0 %v2137
    %2377 = vmatpush1.bf16.msra.mxu0 %v2136
    %2378 = vmatprep.subr.bf16.mxu0 0
    %2379 = vmatpush1.bf16.msra.mxu0 0
    %2380 = vmatprep.subr.bf16.mxu0 0
    %2381 = vmatpush1.bf16.msra.mxu0 0
    %2382 = vmatprep.subr.bf16.mxu0 0
    %2383 = vmatpush1.bf16.msra.mxu0 0
    %2384 = vmatprep.subr.bf16.mxu0 0
    %2385 = vmatpush1.bf16.msra.mxu0 0
    %2386 = vmatprep.subr.bf16.mxu0 0
    %2387 = vmatpush1.bf16.msra.mxu0 0
    %2388 = vmatprep.subr.bf16.mxu0 0
    %2389 = vmatpush1.bf16.msra.mxu0 0
    %2390 = vmatprep.subr.bf16.mxu0 0
    %2391 = vmatpush1.bf16.msra.mxu0 0
    %2392 = vmatprep.subr.bf16.mxu0 0
    %2393 = vmatpush1.bf16.msra.mxu0 0
    %2394 = vmatprep.subr.bf16.mxu0 0
    %2395 = vmatpush1.bf16.msra.mxu0 0
    %2396 = vmatprep.subr.bf16.mxu0 0
    %2397 = vmatpush1.bf16.msra.mxu0 0
    %2398 = vmatprep.subr.bf16.mxu0 0
    %2399 = vmatpush1.bf16.msra.mxu0 0
    %2400 = vmatprep.subr.bf16.mxu0 0
    %2401 = vmatpush1.bf16.msra.mxu0 0
    %2402 = vmatprep.subr.bf16.mxu0 0
    %2403 = vmatpush1.bf16.msra.mxu0 0
    %2404 = vmatprep.subr.bf16.mxu0 0
    %2405 = vmatpush1.bf16.msra.mxu0 0
    %2406 = vmatprep.subr.bf16.mxu0 0
    %2407 = vmatpush1.bf16.msra.mxu0 0
    %2408 = vmatprep.mubr.bf16.mxu0 0
    %2409 = vmatmul.mubr.bf16.gmra.mrb[0].mxu0 %v2086
    %v2410 = vpop.f32.mrb[0].mxu0
    %v2411 = vadd.f32 0.0, %v2410
    %v2412 = vpop.f32.mrb[0].mxu0
    %v2413 = vadd.f32 0.0, %v2412
    %v2414 = vpop.f32.mrb[0].mxu0
    %v2415 = vadd.f32 0.0, %v2414
    %v2416 = vpop.f32.mrb[0].mxu0
    %v2417 = vadd.f32 0.0, %v2416
    %2418 = vmatprep.mubr.bf16.mxu0 0
    %2419 = vmatmul.mubr.bf16.gmra.mrb[0].mxu0 %v2087
    %v2420 = vpop.f32.mrb[0].mxu0
    %v2421 = vadd.f32 0.0, %v2420
    %v2422 = vpop.f32.mrb[0].mxu0
    %v2423 = vadd.f32 0.0, %v2422
    %v2424 = vpop.f32.mrb[0].mxu0
    %v2425 = vadd.f32 0.0, %v2424
    %v2426 = vpop.f32.mrb[0].mxu0
    %v2427 = vadd.f32 0.0, %v2426
    %2428 = vmatprep.mubr.bf16.mxu0 0
    %2429 = vmatmul.mubr.bf16.gmra.mrb[0].mxu0 %v2088
    %v2430 = vpop.f32.mrb[0].mxu0
    %v2431 = vadd.f32 0.0, %v2430
    %v2432 = vpop.f32.mrb[0].mxu0
    %v2433 = vadd.f32 0.0, %v2432
    %v2434 = vpop.f32.mrb[0].mxu0
    %v2435 = vadd.f32 0.0, %v2434
    %v2436 = vpop.f32.mrb[0].mxu0
    %v2437 = vadd.f32 0.0, %v2436
    %2438 = vmatprep.mubr.bf16.mxu0 0
    %2439 = vmatmul.mubr.bf16.gmra.mrb[0].mxu0 %v2089
    %v2440 = vpop.f32.mrb[0].mxu0
    %v2441 = vadd.f32 0.0, %v2440
    %v2442 = vpop.f32.mrb[0].mxu0
    %v2443 = vadd.f32 0.0, %v2442
    %v2444 = vpop.f32.mrb[0].mxu0
    %v2445 = vadd.f32 0.0, %v2444
    %v2446 = vpop.f32.mrb[0].mxu0
    %v2447 = vadd.f32 0.0, %v2446
    %2448 = vmatprep.mubr.bf16.mxu0 0
    %2449 = vmatmul.mubr.bf16.gmra.mrb[0].mxu0 %v2090
    %v2450 = vpop.f32.mrb[0].mxu0
    %v2451 = vadd.f32 0.0, %v2450
    %v2452 = vpop.f32.mrb[0].mxu0
    %v2453 = vadd.f32 0.0, %v2452
    %v2454 = vpop.f32.mrb[0].mxu0
    %v2455 = vadd.f32 0.0, %v2454
    %v2456 = vpop.f32.mrb[0].mxu0
    %v2457 = vadd.f32 0.0, %v2456
    %2458 = vmatprep.mubr.bf16.mxu0 0
    %2459 = vmatmul.mubr.bf16.gmra.mrb[0].mxu0 %v2091
    %v2460 = vpop.f32.mrb[0].mxu0
    %v2461 = vadd.f32 0.0, %v2460
    %v2462 = vpop.f32.mrb[0].mxu0
    %v2463 = vadd.f32 0.0, %v2462
    %v2464 = vpop.f32.mrb[0].mxu0
    %v2465 = vadd.f32 0.0, %v2464
    %v2466 = vpop.f32.mrb[0].mxu0
    %v2467 = vadd.f32 0.0, %v2466
    %2468 = vmatprep.mubr.bf16.mxu0 0
    %2469 = vmatmul.mubr.bf16.gmra.mrb[0].mxu0 %v2092
    %v2470 = vpop.f32.mrb[0].mxu0
    %v2471 = vadd.f32 0.0, %v2470
    %v2472 = vpop.f32.mrb[0].mxu0
    %v2473 = vadd.f32 0.0, %v2472
    %v2474 = vpop.f32.mrb[0].mxu0
    %v2475 = vadd.f32 0.0, %v2474
    %v2476 = vpop.f32.mrb[0].mxu0
    %v2477 = vadd.f32 0.0, %v2476
    %2478 = vmatprep.mubr.bf16.mxu0 0
    %2479 = vmatmul.mubr.bf16.gmra.mrb[0].mxu0 %v2093
    %v2480 = vpop.f32.mrb[0].mxu0
    %v2481 = vadd.f32 0.0, %v2480
    %v2482 = vpop.f32.mrb[0].mxu0
    %v2483 = vadd.f32 0.0, %v2482
    %v2484 = vpop.f32.mrb[0].mxu0
    %v2485 = vadd.f32 0.0, %v2484
    %v2486 = vpop.f32.mrb[0].mxu0
    %v2487 = vadd.f32 0.0, %v2486
    %2488 = vdwg.mxu0
    %2489 = vmatprep.subr.bf16.mxu0 %v2139
    %2490 = vmatpush1.bf16.msra.mxu0 %v2138
    %2491 = vmatprep.subr.bf16.mxu0 0
    %2492 = vmatpush1.bf16.msra.mxu0 0
    %2493 = vmatprep.subr.bf16.mxu0 0
    %2494 = vmatpush1.bf16.msra.mxu0 0
    %2495 = vmatprep.subr.bf16.mxu0 0
    %2496 = vmatpush1.bf16.msra.mxu0 0
    %2497 = vmatprep.subr.bf16.mxu0 0
    %2498 = vmatpush1.bf16.msra.mxu0 0
    %2499 = vmatprep.subr.bf16.mxu0 0
    %2500 = vmatpush1.bf16.msra.mxu0 0
    %2501 = vmatprep.subr.bf16.mxu0 0
    %2502 = vmatpush1.bf16.msra.mxu0 0
    %2503 = vmatprep.subr.bf16.mxu0 0
    %2504 = vmatpush1.bf16.msra.mxu0 0
    %2505 = vmatprep.subr.bf16.mxu0 0
    %2506 = vmatpush1.bf16.msra.mxu0 0
    %2507 = vmatprep.subr.bf16.mxu0 0
    %2508 = vmatpush1.bf16.msra.mxu0 0
    %2509 = vmatprep.subr.bf16.mxu0 0
    %2510 = vmatpush1.bf16.msra.mxu0 0
    %2511 = vmatprep.subr.bf16.mxu0 0
    %2512 = vmatpush1.bf16.msra.mxu0 0
    %2513 = vmatprep.subr.bf16.mxu0 0
    %2514 = vmatpush1.bf16.msra.mxu0 0
    %2515 = vmatprep.subr.bf16.mxu0 0
    %2516 = vmatpush1.bf16.msra.mxu0 0
    %2517 = vmatprep.subr.bf16.mxu0 0
    %2518 = vmatpush1.bf16.msra.mxu0 0
    %2519 = vmatprep.subr.bf16.mxu0 0
    %2520 = vmatpush1.bf16.msra.mxu0 0
    %2521 = vmatprep.mubr.bf16.mxu0 0
    %2522 = vmatmul.mubr.bf16.gmra.mrb[0].mxu0 %v2086
    %v2523 = vpop.f32.mrb[0].mxu0
    %v2524 = vadd.f32 0.0, %v2523
    %v2525 = vpop.f32.mrb[0].mxu0
    %v2526 = vadd.f32 0.0, %v2525
    %v2527 = vpop.f32.mrb[0].mxu0
    %v2528 = vadd.f32 0.0, %v2527
    %v2529 = vpop.f32.mrb[0].mxu0
    %v2530 = vadd.f32 0.0, %v2529
    %2531 = vmatprep.mubr.bf16.mxu0 0
    %2532 = vmatmul.mubr.bf16.gmra.mrb[0].mxu0 %v2087
    %v2533 = vpop.f32.mrb[0].mxu0
    %v2534 = vadd.f32 0.0, %v2533
    %v2535 = vpop.f32.mrb[0].mxu0
    %v2536 = vadd.f32 0.0, %v2535
    %v2537 = vpop.f32.mrb[0].mxu0
    %v2538 = vadd.f32 0.0, %v2537
    %v2539 = vpop.f32.mrb[0].mxu0
    %v2540 = vadd.f32 0.0, %v2539
    %2541 = vmatprep.mubr.bf16.mxu0 0
    %2542 = vmatmul.mubr.bf16.gmra.mrb[0].mxu0 %v2088
    %v2543 = vpop.f32.mrb[0].mxu0
    %v2544 = vadd.f32 0.0, %v2543
    %v2545 = vpop.f32.mrb[0].mxu0
    %v2546 = vadd.f32 0.0, %v2545
    %v2547 = vpop.f32.mrb[0].mxu0
    %v2548 = vadd.f32 0.0, %v2547
    %v2549 = vpop.f32.mrb[0].mxu0
    %v2550 = vadd.f32 0.0, %v2549
    %2551 = vmatprep.mubr.bf16.mxu0 0
    %2552 = vmatmul.mubr.bf16.gmra.mrb[0].mxu0 %v2089
    %v2553 = vpop.f32.mrb[0].mxu0
    %v2554 = vadd.f32 0.0, %v2553
    %v2555 = vpop.f32.mrb[0].mxu0
    %v2556 = vadd.f32 0.0, %v2555
    %v2557 = vpop.f32.mrb[0].mxu0
    %v2558 = vadd.f32 0.0, %v2557
    %v2559 = vpop.f32.mrb[0].mxu0
    %v2560 = vadd.f32 0.0, %v2559
    %2561 = vmatprep.mubr.bf16.mxu0 0
    %2562 = vmatmul.mubr.bf16.gmra.mrb[0].mxu0 %v2090
    %v2563 = vpop.f32.mrb[0].mxu0
    %v2564 = vadd.f32 0.0, %v2563
    %v2565 = vpop.f32.mrb[0].mxu0
    %v2566 = vadd.f32 0.0, %v2565
    %v2567 = vpop.f32.mrb[0].mxu0
    %v2568 = vadd.f32 0.0, %v2567
    %v2569 = vpop.f32.mrb[0].mxu0
    %v2570 = vadd.f32 0.0, %v2569
    %2571 = vmatprep.mubr.bf16.mxu0 0
    %2572 = vmatmul.mubr.bf16.gmra.mrb[0].mxu0 %v2091
    %v2573 = vpop.f32.mrb[0].mxu0
    %v2574 = vadd.f32 0.0, %v2573
    %v2575 = vpop.f32.mrb[0].mxu0
    %v2576 = vadd.f32 0.0, %v2575
    %v2577 = vpop.f32.mrb[0].mxu0
    %v2578 = vadd.f32 0.0, %v2577
    %v2579 = vpop.f32.mrb[0].mxu0
    %v2580 = vadd.f32 0.0, %v2579
    %2581 = vmatprep.mubr.bf16.mxu0 0
    %2582 = vmatmul.mubr.bf16.gmra.mrb[0].mxu0 %v2092
    %v2583 = vpop.f32.mrb[0].mxu0
    %v2584 = vadd.f32 0.0, %v2583
    %v2585 = vpop.f32.mrb[0].mxu0
    %v2586 = vadd.f32 0.0, %v2585
    %v2587 = vpop.f32.mrb[0].mxu0
    %v2588 = vadd.f32 0.0, %v2587
    %v2589 = vpop.f32.mrb[0].mxu0
    %v2590 = vadd.f32 0.0, %v2589
    %2591 = vmatprep.mubr.bf16.mxu0 0
    %2592 = vmatmul.mubr.bf16.gmra.mrb[0].mxu0 %v2093
    %v2593 = vpop.f32.mrb[0].mxu0
    %v2594 = vadd.f32 0.0, %v2593
    %v2595 = vpop.f32.mrb[0].mxu0
    %v2596 = vadd.f32 0.0, %v2595
    %v2597 = vpop.f32.mrb[0].mxu0
    %v2598 = vadd.f32 0.0, %v2597
    %v2599 = vpop.f32.mrb[0].mxu0
    %v2600 = vadd.f32 0.0, %v2599
    %2601 = vdwg.mxu0
    %2602 = vmatprep.subr.bf16.mxu0 0
    %2603 = vmatpush1.bf16.msra.mxu0 %v2140
    %2604 = vmatprep.subr.bf16.mxu0 0
    %2605 = vmatpush1.bf16.msra.mxu0 0
    %2606 = vmatprep.subr.bf16.mxu0 0
    %2607 = vmatpush1.bf16.msra.mxu0 0
    %2608 = vmatprep.subr.bf16.mxu0 0
    %2609 = vmatpush1.bf16.msra.mxu0 0
    %2610 = vmatprep.subr.bf16.mxu0 0
    %2611 = vmatpush1.bf16.msra.mxu0 0
    %2612 = vmatprep.subr.bf16.mxu0 0
    %2613 = vmatpush1.bf16.msra.mxu0 0
    %2614 = vmatprep.subr.bf16.mxu0 0
    %2615 = vmatpush1.bf16.msra.mxu0 0
    %2616 = vmatprep.subr.bf16.mxu0 0
    %2617 = vmatpush1.bf16.msra.mxu0 0
    %2618 = vmatprep.subr.bf16.mxu0 0
    %2619 = vmatpush1.bf16.msra.mxu0 0
    %2620 = vmatprep.subr.bf16.mxu0 0
    %2621 = vmatpush1.bf16.msra.mxu0 0
    %2622 = vmatprep.subr.bf16.mxu0 0
    %2623 = vmatpush1.bf16.msra.mxu0 0
    %2624 = vmatprep.subr.bf16.mxu0 0
    %2625 = vmatpush1.bf16.msra.mxu0 0
    %2626 = vmatprep.subr.bf16.mxu0 0
    %2627 = vmatpush1.bf16.msra.mxu0 0
    %2628 = vmatprep.subr.bf16.mxu0 0
    %2629 = vmatpush1.bf16.msra.mxu0 0
    %2630 = vmatprep.subr.bf16.mxu0 0
    %2631 = vmatpush1.bf16.msra.mxu0 0
    %2632 = vmatprep.subr.bf16.mxu0 0
    %2633 = vmatpush1.bf16.msra.mxu0 0
    %2634 = vmatprep.mubr.bf16.mxu0 0
    %2635 = vmatmul.mubr.bf16.gmra.mrb[0].mxu0 %v2086
    %v2636 = vpop.f32.mrb[0].mxu0
    %v2637 = vadd.f32 0.0, %v2636
    %v2638 = vpop.f32.mrb[0].mxu0
    %v2639 = vpop.f32.mrb[0].mxu0
    %v2640 = vadd.f32 0.0, %v2639
    %v2641 = vpop.f32.mrb[0].mxu0
    %2642 = vmatprep.mubr.bf16.mxu0 0
    %2643 = vmatmul.mubr.bf16.gmra.mrb[0].mxu0 %v2087
    %v2644 = vpop.f32.mrb[0].mxu0
    %v2645 = vadd.f32 0.0, %v2644
    %v2646 = vpop.f32.mrb[0].mxu0
    %v2647 = vpop.f32.mrb[0].mxu0
    %v2648 = vadd.f32 0.0, %v2647
    %v2649 = vpop.f32.mrb[0].mxu0
    %2650 = vmatprep.mubr.bf16.mxu0 0
    %2651 = vmatmul.mubr.bf16.gmra.mrb[0].mxu0 %v2088
    %v2652 = vpop.f32.mrb[0].mxu0
    %v2653 = vadd.f32 0.0, %v2652
    %v2654 = vpop.f32.mrb[0].mxu0
    %v2655 = vpop.f32.mrb[0].mxu0
    %v2656 = vadd.f32 0.0, %v2655
    %v2657 = vpop.f32.mrb[0].mxu0
    %2658 = vmatprep.mubr.bf16.mxu0 0
    %2659 = vmatmul.mubr.bf16.gmra.mrb[0].mxu0 %v2089
    %v2660 = vpop.f32.mrb[0].mxu0
    %v2661 = vadd.f32 0.0, %v2660
    %v2662 = vpop.f32.mrb[0].mxu0
    %v2663 = vpop.f32.mrb[0].mxu0
    %v2664 = vadd.f32 0.0, %v2663
    %v2665 = vpop.f32.mrb[0].mxu0
    %2666 = vmatprep.mubr.bf16.mxu0 0
    %2667 = vmatmul.mubr.bf16.gmra.mrb[0].mxu0 %v2090
    %v2668 = vpop.f32.mrb[0].mxu0
    %v2669 = vadd.f32 0.0, %v2668
    %v2670 = vpop.f32.mrb[0].mxu0
    %v2671 = vpop.f32.mrb[0].mxu0
    %v2672 = vadd.f32 0.0, %v2671
    %v2673 = vpop.f32.mrb[0].mxu0
    %2674 = vmatprep.mubr.bf16.mxu0 0
    %2675 = vmatmul.mubr.bf16.gmra.mrb[0].mxu0 %v2091
    %v2676 = vpop.f32.mrb[0].mxu0
    %v2677 = vadd.f32 0.0, %v2676
    %v2678 = vpop.f32.mrb[0].mxu0
    %v2679 = vpop.f32.mrb[0].mxu0
    %v2680 = vadd.f32 0.0, %v2679
    %v2681 = vpop.f32.mrb[0].mxu0
    %2682 = vmatprep.mubr.bf16.mxu0 0
    %2683 = vmatmul.mubr.bf16.gmra.mrb[0].mxu0 %v2092
    %v2684 = vpop.f32.mrb[0].mxu0
    %v2685 = vadd.f32 0.0, %v2684
    %v2686 = vpop.f32.mrb[0].mxu0
    %v2687 = vpop.f32.mrb[0].mxu0
    %v2688 = vadd.f32 0.0, %v2687
    %v2689 = vpop.f32.mrb[0].mxu0
    %2690 = vmatprep.mubr.bf16.mxu0 0
    %2691 = vmatmul.mubr.bf16.gmra.mrb[0].mxu0 %v2093
    %v2692 = vpop.f32.mrb[0].mxu0
    %v2693 = vadd.f32 0.0, %v2692
    %v2694 = vpop.f32.mrb[0].mxu0
    %v2695 = vpop.f32.mrb[0].mxu0
    %v2696 = vadd.f32 0.0, %v2695
    %v2697 = vpop.f32.mrb[0].mxu0
    %2698 = vdwg.mxu0
    %v2701 = vrot.slane %v2255, 7
    %v2702 = vrot.slane %v2259, 7
    %v2703 = vsel %vm763, %v2701, %v2702
    %v2720 = vrot.slane %v2185, 7
    %v2721 = vrot.slane %v2189, 7
    %v2722 = vsel %vm763, %v2720, %v2721
    %v2723 = vrot.slane %v2195, 7
    %v2724 = vsel %vm763, %v2721, %v2723
    %v2725 = vrot.slane %v2199, 7
    %v2726 = vsel %vm763, %v2723, %v2725
    %v2727 = vrot.slane %v2205, 7
    %v2728 = vsel %vm763, %v2725, %v2727
    %v2729 = vrot.slane %v2209, 7
    %v2730 = vsel %vm763, %v2727, %v2729
    %v2731 = vrot.slane %v2215, 7
    %v2732 = vsel %vm763, %v2729, %v2731
    %v2733 = vrot.slane %v2219, 7
    %v2734 = vsel %vm763, %v2731, %v2733
    %v2735 = vrot.slane %v2225, 7
    %v2736 = vsel %vm763, %v2733, %v2735
    %v2737 = vrot.slane %v2229, 7
    %v2738 = vsel %vm763, %v2735, %v2737
    %v2739 = vrot.slane %v2235, 7
    %v2740 = vsel %vm763, %v2737, %v2739
    %v2741 = vrot.slane %v2239, 7
    %v2742 = vsel %vm763, %v2739, %v2741
    %v2743 = vrot.slane %v2245, 7
    %v2744 = vsel %vm763, %v2741, %v2743
    %v2745 = vrot.slane %v2249, 7
    %v2746 = vsel %vm763, %v2743, %v2745
    %v2747 = vsel %vm763, %v2745, %v2701
    %v2763 = vsel %vm763, %v2702, %v2720
    %2764 = vset.pattern.permute.xlu0 9
    %2765 = vperm.xlu0 %2764, %v827
    %v2766 = vpop.permute.xlu0 %2765
    %2768 = vset.pattern.permute.xlu0 9
    %2769 = vperm.xlu0 %2768, %v828
    %v2770 = vpop.permute.xlu0 %2769
    %2772 = vset.pattern.permute.xlu0 9
    %2773 = vperm.xlu0 %2772, %v829
    %v2774 = vpop.permute.xlu0 %2773
    %2776 = vset.pattern.permute.xlu0 9
    %2777 = vperm.xlu0 %2776, %v830
    %v2778 = vpop.permute.xlu0 %2777
    %2780 = vset.pattern.permute.xlu0 9
    %2781 = vperm.xlu0 %2780, %v831
    %v2782 = vpop.permute.xlu0 %2781
    %2784 = vset.pattern.permute.xlu0 9
    %2785 = vperm.xlu0 %2784, %v832
    %v2786 = vpop.permute.xlu0 %2785
    %2788 = vset.pattern.permute.xlu0 9
    %2789 = vperm.xlu0 %2788, %v833
    %v2790 = vpop.permute.xlu0 %2789
    %2792 = vset.pattern.permute.xlu0 9
    %2793 = vperm.xlu0 %2792, %v834
    %v2794 = vpop.permute.xlu0 %2793
    %2796 = vset.pattern.permute.xlu0 9
    %2797 = vperm.xlu0 %2796, %v835
    %v2798 = vpop.permute.xlu0 %2797
    %2800 = vset.pattern.permute.xlu0 9
    %2801 = vperm.xlu0 %2800, %v836
    %v2802 = vpop.permute.xlu0 %2801
    %2804 = vset.pattern.permute.xlu0 9
    %2805 = vperm.xlu0 %2804, %v837
    %v2806 = vpop.permute.xlu0 %2805
    %2808 = vset.pattern.permute.xlu0 9
    %2809 = vperm.xlu0 %2808, %v838
    %v2810 = vpop.permute.xlu0 %2809
    %2812 = vset.pattern.permute.xlu0 9
    %2813 = vperm.xlu0 %2812, %v839
    %v2814 = vpop.permute.xlu0 %2813
    %2816 = vset.pattern.permute.xlu0 9
    %2817 = vperm.xlu0 %2816, %v840
    %v2818 = vpop.permute.xlu0 %2817
    %2820 = vset.pattern.permute.xlu0 9
    %2821 = vperm.xlu0 %2820, %v841
    %v2822 = vpop.permute.xlu0 %2821
    %2824 = vset.pattern.permute.xlu0 9
    %2825 = vperm.xlu0 %2824, %v842
    %v2826 = vpop.permute.xlu0 %2825
    %v2828 = vmul.f32 %v2703, %v2766
    %v2829 = vmul.f32 %v2763, %v2770
    %v2830 = vmul.f32 %v2722, %v2774
    %v2831 = vmul.f32 %v2724, %v2778
    %v2832 = vmul.f32 %v2726, %v2782
    %v2833 = vmul.f32 %v2728, %v2786
    %v2834 = vmul.f32 %v2730, %v2790
    %v2835 = vmul.f32 %v2732, %v2794
    %v2836 = vmul.f32 %v2734, %v2798
    %v2837 = vmul.f32 %v2736, %v2802
    %v2838 = vmul.f32 %v2738, %v2806
    %v2839 = vmul.f32 %v2740, %v2810
    %v2840 = vmul.f32 %v2742, %v2814
    %v2841 = vmul.f32 %v2744, %v2818
    %v2842 = vmul.f32 %v2746, %v2822
    %v2843 = vmul.f32 %v2747, %v2826
    %v2844 = vadd.f32 %v2828, 0.0
    %v2845 = vadd.f32 %v2829, 0.0
    %v2846 = vadd.f32 %v2830, 0.0
    %v2847 = vadd.f32 %v2831, 0.0
    %v2848 = vadd.f32 %v2832, 0.0
    %v2849 = vadd.f32 %v2833, 0.0
    %v2850 = vadd.f32 %v2834, 0.0
    %v2851 = vadd.f32 %v2835, 0.0
    %v2852 = vadd.f32 %v2836, 0.0
    %v2853 = vadd.f32 %v2837, 0.0
    %v2854 = vadd.f32 %v2838, 0.0
    %v2855 = vadd.f32 %v2839, 0.0
    %v2856 = vadd.f32 %v2840, 0.0
    %v2857 = vadd.f32 %v2841, 0.0
    %v2858 = vadd.f32 %v2842, 0.0
    %v2859 = vadd.f32 %v2843, 0.0
    %2860 = vset.pattern.permute.xlu0 10
    %2861 = vperm.xlu0 %2860, %v827
    %v2862 = vpop.permute.xlu0 %2861
    %2864 = vset.pattern.permute.xlu0 10
    %2865 = vperm.xlu0 %2864, %v828
    %v2866 = vpop.permute.xlu0 %2865
    %2868 = vset.pattern.permute.xlu0 10
    %2869 = vperm.xlu0 %2868, %v829
    %v2870 = vpop.permute.xlu0 %2869
    %2872 = vset.pattern.permute.xlu0 10
    %2873 = vperm.xlu0 %2872, %v830
    %v2874 = vpop.permute.xlu0 %2873
    %2876 = vset.pattern.permute.xlu0 10
    %2877 = vperm.xlu0 %2876, %v831
    %v2878 = vpop.permute.xlu0 %2877
    %2880 = vset.pattern.permute.xlu0 10
    %2881 = vperm.xlu0 %2880, %v832
    %v2882 = vpop.permute.xlu0 %2881
    %2884 = vset.pattern.permute.xlu0 10
    %2885 = vperm.xlu0 %2884, %v833
    %v2886 = vpop.permute.xlu0 %2885
    %2888 = vset.pattern.permute.xlu0 10
    %2889 = vperm.xlu0 %2888, %v834
    %v2890 = vpop.permute.xlu0 %2889
    %2892 = vset.pattern.permute.xlu0 10
    %2893 = vperm.xlu0 %2892, %v835
    %v2894 = vpop.permute.xlu0 %2893
    %2896 = vset.pattern.permute.xlu0 10
    %2897 = vperm.xlu0 %2896, %v836
    %v2898 = vpop.permute.xlu0 %2897
    %2900 = vset.pattern.permute.xlu0 10
    %2901 = vperm.xlu0 %2900, %v837
    %v2902 = vpop.permute.xlu0 %2901
    %2904 = vset.pattern.permute.xlu0 10
    %2905 = vperm.xlu0 %2904, %v838
    %v2906 = vpop.permute.xlu0 %2905
    %2908 = vset.pattern.permute.xlu0 10
    %2909 = vperm.xlu0 %2908, %v839
    %v2910 = vpop.permute.xlu0 %2909
    %2912 = vset.pattern.permute.xlu0 10
    %2913 = vperm.xlu0 %2912, %v840
    %v2914 = vpop.permute.xlu0 %2913
    %2916 = vset.pattern.permute.xlu0 10
    %2917 = vperm.xlu0 %2916, %v841
    %v2918 = vpop.permute.xlu0 %2917
    %2920 = vset.pattern.permute.xlu0 10
    %2921 = vperm.xlu0 %2920, %v842
    %v2922 = vpop.permute.xlu0 %2921
    %v2924 = vmul.f32 %v2261, %v2862
    %v2925 = vmul.f32 %v2187, %v2866
    %v2926 = vmul.f32 %v2191, %v2870
    %v2927 = vmul.f32 %v2197, %v2874
    %v2928 = vmul.f32 %v2201, %v2878
    %v2929 = vmul.f32 %v2207, %v2882
    %v2930 = vmul.f32 %v2211, %v2886
    %v2931 = vmul.f32 %v2217, %v2890
    %v2932 = vmul.f32 %v2221, %v2894
    %v2933 = vmul.f32 %v2227, %v2898
    %v2934 = vmul.f32 %v2231, %v2902
    %v2935 = vmul.f32 %v2237, %v2906
    %v2936 = vmul.f32 %v2241, %v2910
    %v2937 = vmul.f32 %v2247, %v2914
    %v2938 = vmul.f32 %v2251, %v2918
    %v2939 = vmul.f32 %v2257, %v2922
    %v2940 = vadd.f32 %v2844, %v2924
    %v2941 = vadd.f32 %v2845, %v2925
    %v2942 = vadd.f32 %v2846, %v2926
    %v2943 = vadd.f32 %v2847, %v2927
    %v2944 = vadd.f32 %v2848, %v2928
    %v2945 = vadd.f32 %v2849, %v2929
    %v2946 = vadd.f32 %v2850, %v2930
    %v2947 = vadd.f32 %v2851, %v2931
    %v2948 = vadd.f32 %v2852, %v2932
    %v2949 = vadd.f32 %v2853, %v2933
    %v2950 = vadd.f32 %v2854, %v2934
    %v2951 = vadd.f32 %v2855, %v2935
    %v2952 = vadd.f32 %v2856, %v2936
    %v2953 = vadd.f32 %v2857, %v2937
    %v2954 = vadd.f32 %v2858, %v2938
    %v2955 = vadd.f32 %v2859, %v2939
    %v2957 = vrot.slane %v2372, 1
    %v2974 = vrot.slane %v2298, 1
    %v2975 = vrot.slane %v2302, 1
    %v2976 = vsel %vm1069, %v2974, %v2975
    %v2977 = vrot.slane %v2308, 1
    %v2978 = vsel %vm1069, %v2975, %v2977
    %v2979 = vrot.slane %v2312, 1
    %v2980 = vsel %vm1069, %v2977, %v2979
    %v2981 = vrot.slane %v2318, 1
    %v2982 = vsel %vm1069, %v2979, %v2981
    %v2983 = vrot.slane %v2322, 1
    %v2984 = vsel %vm1069, %v2981, %v2983
    %v2985 = vrot.slane %v2328, 1
    %v2986 = vsel %vm1069, %v2983, %v2985
    %v2987 = vrot.slane %v2332, 1
    %v2988 = vsel %vm1069, %v2985, %v2987
    %v2989 = vrot.slane %v2338, 1
    %v2990 = vsel %vm1069, %v2987, %v2989
    %v2991 = vrot.slane %v2342, 1
    %v2992 = vsel %vm1069, %v2989, %v2991
    %v2993 = vrot.slane %v2348, 1
    %v2994 = vsel %vm1069, %v2991, %v2993
    %v2995 = vrot.slane %v2352, 1
    %v2996 = vsel %vm1069, %v2993, %v2995
    %v2997 = vrot.slane %v2358, 1
    %v2998 = vsel %vm1069, %v2995, %v2997
    %v2999 = vrot.slane %v2362, 1
    %v3000 = vsel %vm1069, %v2997, %v2999
    %v3001 = vrot.slane %v2368, 1
    %v3002 = vsel %vm1069, %v2999, %v3001
    %v3003 = vsel %vm1069, %v3001, %v2957
    %v3020 = vsel %vm1069, %v2957, %v2974
    %3021 = vset.pattern.permute.xlu0 11
    %3022 = vperm.xlu0 %3021, %v827
    %v3023 = vpop.permute.xlu0 %3022
    %3025 = vset.pattern.permute.xlu0 11
    %3026 = vperm.xlu0 %3025, %v828
    %v3027 = vpop.permute.xlu0 %3026
    %3029 = vset.pattern.permute.xlu0 11
    %3030 = vperm.xlu0 %3029, %v829
    %v3031 = vpop.permute.xlu0 %3030
    %3033 = vset.pattern.permute.xlu0 11
    %3034 = vperm.xlu0 %3033, %v830
    %v3035 = vpop.permute.xlu0 %3034
    %3037 = vset.pattern.permute.xlu0 11
    %3038 = vperm.xlu0 %3037, %v831
    %v3039 = vpop.permute.xlu0 %3038
    %3041 = vset.pattern.permute.xlu0 11
    %3042 = vperm.xlu0 %3041, %v832
    %v3043 = vpop.permute.xlu0 %3042
    %3045 = vset.pattern.permute.xlu0 11
    %3046 = vperm.xlu0 %3045, %v833
    %v3047 = vpop.permute.xlu0 %3046
    %3049 = vset.pattern.permute.xlu0 11
    %3050 = vperm.xlu0 %3049, %v834
    %v3051 = vpop.permute.xlu0 %3050
    %3053 = vset.pattern.permute.xlu0 11
    %3054 = vperm.xlu0 %3053, %v835
    %v3055 = vpop.permute.xlu0 %3054
    %3057 = vset.pattern.permute.xlu0 11
    %3058 = vperm.xlu0 %3057, %v836
    %v3059 = vpop.permute.xlu0 %3058
    %3061 = vset.pattern.permute.xlu0 11
    %3062 = vperm.xlu0 %3061, %v837
    %v3063 = vpop.permute.xlu0 %3062
    %3065 = vset.pattern.permute.xlu0 11
    %3066 = vperm.xlu0 %3065, %v838
    %v3067 = vpop.permute.xlu0 %3066
    %3069 = vset.pattern.permute.xlu0 11
    %3070 = vperm.xlu0 %3069, %v839
    %v3071 = vpop.permute.xlu0 %3070
    %3073 = vset.pattern.permute.xlu0 11
    %3074 = vperm.xlu0 %3073, %v840
    %v3075 = vpop.permute.xlu0 %3074
    %3077 = vset.pattern.permute.xlu0 11
    %3078 = vperm.xlu0 %3077, %v841
    %v3079 = vpop.permute.xlu0 %3078
    %3081 = vset.pattern.permute.xlu0 11
    %3082 = vperm.xlu0 %3081, %v842
    %v3083 = vpop.permute.xlu0 %3082
    %v3085 = vmul.f32 %v3020, %v3023
    %v3086 = vmul.f32 %v2976, %v3027
    %v3087 = vmul.f32 %v2978, %v3031
    %v3088 = vmul.f32 %v2980, %v3035
    %v3089 = vmul.f32 %v2982, %v3039
    %v3090 = vmul.f32 %v2984, %v3043
    %v3091 = vmul.f32 %v2986, %v3047
    %v3092 = vmul.f32 %v2988, %v3051
    %v3093 = vmul.f32 %v2990, %v3055
    %v3094 = vmul.f32 %v2992, %v3059
    %v3095 = vmul.f32 %v2994, %v3063
    %v3096 = vmul.f32 %v2996, %v3067
    %v3097 = vmul.f32 %v2998, %v3071
    %v3098 = vmul.f32 %v3000, %v3075
    %v3099 = vmul.f32 %v3002, %v3079
    %v3100 = vmul.f32 %v3003, %v3083
    %v3101 = vadd.f32 %v2940, %v3085
    %v3102 = vadd.f32 %v2941, %v3086
    %v3103 = vadd.f32 %v2942, %v3087
    %v3104 = vadd.f32 %v2943, %v3088
    %v3105 = vadd.f32 %v2944, %v3089
    %v3106 = vadd.f32 %v2945, %v3090
    %v3107 = vadd.f32 %v2946, %v3091
    %v3108 = vadd.f32 %v2947, %v3092
    %v3109 = vadd.f32 %v2948, %v3093
    %v3110 = vadd.f32 %v2949, %v3094
    %v3111 = vadd.f32 %v2950, %v3095
    %v3112 = vadd.f32 %v2951, %v3096
    %v3113 = vadd.f32 %v2952, %v3097
    %v3114 = vadd.f32 %v2953, %v3098
    %v3115 = vadd.f32 %v2954, %v3099
    %v3116 = vadd.f32 %v2955, %v3100
    %v3118 = vrot.slane %v2374, 7
    %v3135 = vrot.slane %v2300, 7
    %v3136 = vrot.slane %v2304, 7
    %v3137 = vsel %vm763, %v3135, %v3136
    %v3138 = vrot.slane %v2310, 7
    %v3139 = vsel %vm763, %v3136, %v3138
    %v3140 = vrot.slane %v2314, 7
    %v3141 = vsel %vm763, %v3138, %v3140
    %v3142 = vrot.slane %v2320, 7
    %v3143 = vsel %vm763, %v3140, %v3142
    %v3144 = vrot.slane %v2324, 7
    %v3145 = vsel %vm763, %v3142, %v3144
    %v3146 = vrot.slane %v2330, 7
    %v3147 = vsel %vm763, %v3144, %v3146
    %v3148 = vrot.slane %v2334, 7
    %v3149 = vsel %vm763, %v3146, %v3148
    %v3150 = vrot.slane %v2340, 7
    %v3151 = vsel %vm763, %v3148, %v3150
    %v3152 = vrot.slane %v2344, 7
    %v3153 = vsel %vm763, %v3150, %v3152
    %v3154 = vrot.slane %v2350, 7
    %v3155 = vsel %vm763, %v3152, %v3154
    %v3156 = vrot.slane %v2354, 7
    %v3157 = vsel %vm763, %v3154, %v3156
    %v3158 = vrot.slane %v2360, 7
    %v3159 = vsel %vm763, %v3156, %v3158
    %v3160 = vrot.slane %v2364, 7
    %v3161 = vsel %vm763, %v3158, %v3160
    %v3162 = vrot.slane %v2370, 7
    %v3163 = vsel %vm763, %v3160, %v3162
    %v3164 = vsel %vm763, %v3162, %v3118
    %v3181 = vsel %vm763, %v3118, %v3135
    %3182 = vset.pattern.permute.xlu0 12
    %3183 = vperm.xlu0 %3182, %v827
    %v3184 = vpop.permute.xlu0 %3183
    %3186 = vset.pattern.permute.xlu0 12
    %3187 = vperm.xlu0 %3186, %v828
    %v3188 = vpop.permute.xlu0 %3187
    %3190 = vset.pattern.permute.xlu0 12
    %3191 = vperm.xlu0 %3190, %v829
    %v3192 = vpop.permute.xlu0 %3191
    %3194 = vset.pattern.permute.xlu0 12
    %3195 = vperm.xlu0 %3194, %v830
    %v3196 = vpop.permute.xlu0 %3195
    %3198 = vset.pattern.permute.xlu0 12
    %3199 = vperm.xlu0 %3198, %v831
    %v3200 = vpop.permute.xlu0 %3199
    %3202 = vset.pattern.permute.xlu0 12
    %3203 = vperm.xlu0 %3202, %v832
    %v3204 = vpop.permute.xlu0 %3203
    %3206 = vset.pattern.permute.xlu0 12
    %3207 = vperm.xlu0 %3206, %v833
    %v3208 = vpop.permute.xlu0 %3207
    %3210 = vset.pattern.permute.xlu0 12
    %3211 = vperm.xlu0 %3210, %v834
    %v3212 = vpop.permute.xlu0 %3211
    %3214 = vset.pattern.permute.xlu0 12
    %3215 = vperm.xlu0 %3214, %v835
    %v3216 = vpop.permute.xlu0 %3215
    %3218 = vset.pattern.permute.xlu0 12
    %3219 = vperm.xlu0 %3218, %v836
    %v3220 = vpop.permute.xlu0 %3219
    %3222 = vset.pattern.permute.xlu0 12
    %3223 = vperm.xlu0 %3222, %v837
    %v3224 = vpop.permute.xlu0 %3223
    %3226 = vset.pattern.permute.xlu0 12
    %3227 = vperm.xlu0 %3226, %v838
    %v3228 = vpop.permute.xlu0 %3227
    %3230 = vset.pattern.permute.xlu0 12
    %3231 = vperm.xlu0 %3230, %v839
    %v3232 = vpop.permute.xlu0 %3231
    %3234 = vset.pattern.permute.xlu0 12
    %3235 = vperm.xlu0 %3234, %v840
    %v3236 = vpop.permute.xlu0 %3235
    %3238 = vset.pattern.permute.xlu0 12
    %3239 = vperm.xlu0 %3238, %v841
    %v3240 = vpop.permute.xlu0 %3239
    %3242 = vset.pattern.permute.xlu0 12
    %3243 = vperm.xlu0 %3242, %v842
    %v3244 = vpop.permute.xlu0 %3243
    %v3246 = vmul.f32 %v3181, %v3184
    %v3247 = vmul.f32 %v3137, %v3188
    %v3248 = vmul.f32 %v3139, %v3192
    %v3249 = vmul.f32 %v3141, %v3196
    %v3250 = vmul.f32 %v3143, %v3200
    %v3251 = vmul.f32 %v3145, %v3204
    %v3252 = vmul.f32 %v3147, %v3208
    %v3253 = vmul.f32 %v3149, %v3212
    %v3254 = vmul.f32 %v3151, %v3216
    %v3255 = vmul.f32 %v3153, %v3220
    %v3256 = vmul.f32 %v3155, %v3224
    %v3257 = vmul.f32 %v3157, %v3228
    %v3258 = vmul.f32 %v3159, %v3232
    %v3259 = vmul.f32 %v3161, %v3236
    %v3260 = vmul.f32 %v3163, %v3240
    %v3261 = vmul.f32 %v3164, %v3244
    %v3262 = vadd.f32 %v3101, %v3246
    %v3263 = vadd.f32 %v3102, %v3247
    %v3264 = vadd.f32 %v3103, %v3248
    %v3265 = vadd.f32 %v3104, %v3249
    %v3266 = vadd.f32 %v3105, %v3250
    %v3267 = vadd.f32 %v3106, %v3251
    %v3268 = vadd.f32 %v3107, %v3252
    %v3269 = vadd.f32 %v3108, %v3253
    %v3270 = vadd.f32 %v3109, %v3254
    %v3271 = vadd.f32 %v3110, %v3255
    %v3272 = vadd.f32 %v3111, %v3256
    %v3273 = vadd.f32 %v3112, %v3257
    %v3274 = vadd.f32 %v3113, %v3258
    %v3275 = vadd.f32 %v3114, %v3259
    %v3276 = vadd.f32 %v3115, %v3260
    %v3277 = vadd.f32 %v3116, %v3261
    %3278 = vset.pattern.permute.xlu0 13
    %3279 = vperm.xlu0 %3278, %v827
    %v3280 = vpop.permute.xlu0 %3279
    %3282 = vset.pattern.permute.xlu0 13
    %3283 = vperm.xlu0 %3282, %v828
    %v3284 = vpop.permute.xlu0 %3283
    %3286 = vset.pattern.permute.xlu0 13
    %3287 = vperm.xlu0 %3286, %v829
    %v3288 = vpop.permute.xlu0 %3287
    %3290 = vset.pattern.permute.xlu0 13
    %3291 = vperm.xlu0 %3290, %v830
    %v3292 = vpop.permute.xlu0 %3291
    %3294 = vset.pattern.permute.xlu0 13
    %3295 = vperm.xlu0 %3294, %v831
    %v3296 = vpop.permute.xlu0 %3295
    %3298 = vset.pattern.permute.xlu0 13
    %3299 = vperm.xlu0 %3298, %v832
    %v3300 = vpop.permute.xlu0 %3299
    %3302 = vset.pattern.permute.xlu0 13
    %3303 = vperm.xlu0 %3302, %v833
    %v3304 = vpop.permute.xlu0 %3303
    %3306 = vset.pattern.permute.xlu0 13
    %3307 = vperm.xlu0 %3306, %v834
    %v3308 = vpop.permute.xlu0 %3307
    %3310 = vset.pattern.permute.xlu0 13
    %3311 = vperm.xlu0 %3310, %v835
    %v3312 = vpop.permute.xlu0 %3311
    %3314 = vset.pattern.permute.xlu0 13
    %3315 = vperm.xlu0 %3314, %v836
    %v3316 = vpop.permute.xlu0 %3315
    %3318 = vset.pattern.permute.xlu0 13
    %3319 = vperm.xlu0 %3318, %v837
    %v3320 = vpop.permute.xlu0 %3319
    %3322 = vset.pattern.permute.xlu0 13
    %3323 = vperm.xlu0 %3322, %v838
    %v3324 = vpop.permute.xlu0 %3323
    %3326 = vset.pattern.permute.xlu0 13
    %3327 = vperm.xlu0 %3326, %v839
    %v3328 = vpop.permute.xlu0 %3327
    %3330 = vset.pattern.permute.xlu0 13
    %3331 = vperm.xlu0 %3330, %v840
    %v3332 = vpop.permute.xlu0 %3331
    %3334 = vset.pattern.permute.xlu0 13
    %3335 = vperm.xlu0 %3334, %v841
    %v3336 = vpop.permute.xlu0 %3335
    %3338 = vset.pattern.permute.xlu0 13
    %3339 = vperm.xlu0 %3338, %v842
    %v3340 = vpop.permute.xlu0 %3339
    %v3342 = vmul.f32 %v2411, %v3280
    %v3343 = vmul.f32 %v2415, %v3284
    %v3344 = vmul.f32 %v2421, %v3288
    %v3345 = vmul.f32 %v2425, %v3292
    %v3346 = vmul.f32 %v2431, %v3296
    %v3347 = vmul.f32 %v2435, %v3300
    %v3348 = vmul.f32 %v2441, %v3304
    %v3349 = vmul.f32 %v2445, %v3308
    %v3350 = vmul.f32 %v2451, %v3312
    %v3351 = vmul.f32 %v2455, %v3316
    %v3352 = vmul.f32 %v2461, %v3320
    %v3353 = vmul.f32 %v2465, %v3324
    %v3354 = vmul.f32 %v2471, %v3328
    %v3355 = vmul.f32 %v2475, %v3332
    %v3356 = vmul.f32 %v2481, %v3336
    %v3357 = vmul.f32 %v2485, %v3340
    %v3358 = vadd.f32 %v3262, %v3342
    %v3359 = vadd.f32 %v3263, %v3343
    %v3360 = vadd.f32 %v3264, %v3344
    %v3361 = vadd.f32 %v3265, %v3345
    %v3362 = vadd.f32 %v3266, %v3346
    %v3363 = vadd.f32 %v3267, %v3347
    %v3364 = vadd.f32 %v3268, %v3348
    %v3365 = vadd.f32 %v3269, %v3349
    %v3366 = vadd.f32 %v3270, %v3350
    %v3367 = vadd.f32 %v3271, %v3351
    %v3368 = vadd.f32 %v3272, %v3352
    %v3369 = vadd.f32 %v3273, %v3353
    %v3370 = vadd.f32 %v3274, %v3354
    %v3371 = vadd.f32 %v3275, %v3355
    %v3372 = vadd.f32 %v3276, %v3356
    %v3373 = vadd.f32 %v3277, %v3357
    %v3390 = vrot.slane %v2413, 1
    %v3391 = vrot.slane %v2417, 1
    %v3392 = vsel %vm1069, %v3390, %v3391
    %v3393 = vrot.slane %v2423, 1
    %v3394 = vsel %vm1069, %v3391, %v3393
    %v3395 = vrot.slane %v2427, 1
    %v3396 = vsel %vm1069, %v3393, %v3395
    %v3397 = vrot.slane %v2433, 1
    %v3398 = vsel %vm1069, %v3395, %v3397
    %v3399 = vrot.slane %v2437, 1
    %v3400 = vsel %vm1069, %v3397, %v3399
    %v3401 = vrot.slane %v2443, 1
    %v3402 = vsel %vm1069, %v3399, %v3401
    %v3403 = vrot.slane %v2447, 1
    %v3404 = vsel %vm1069, %v3401, %v3403
    %v3405 = vrot.slane %v2453, 1
    %v3406 = vsel %vm1069, %v3403, %v3405
    %v3407 = vrot.slane %v2457, 1
    %v3408 = vsel %vm1069, %v3405, %v3407
    %v3409 = vrot.slane %v2463, 1
    %v3410 = vsel %vm1069, %v3407, %v3409
    %v3411 = vrot.slane %v2467, 1
    %v3412 = vsel %vm1069, %v3409, %v3411
    %v3413 = vrot.slane %v2473, 1
    %v3414 = vsel %vm1069, %v3411, %v3413
    %v3415 = vrot.slane %v2477, 1
    %v3416 = vsel %vm1069, %v3413, %v3415
    %v3417 = vrot.slane %v2483, 1
    %v3418 = vsel %vm1069, %v3415, %v3417
    %v3419 = vrot.slane %v2487, 1
    %v3420 = vsel %vm1069, %v3417, %v3419
    %v3438 = vsel %vm1069, %v3419, %v3390
    %3439 = vset.pattern.permute.xlu0 14
    %3440 = vperm.xlu0 %3439, %v827
    %v3441 = vpop.permute.xlu0 %3440
    %3443 = vset.pattern.permute.xlu0 14
    %3444 = vperm.xlu0 %3443, %v828
    %v3445 = vpop.permute.xlu0 %3444
    %3447 = vset.pattern.permute.xlu0 14
    %3448 = vperm.xlu0 %3447, %v829
    %v3449 = vpop.permute.xlu0 %3448
    %3451 = vset.pattern.permute.xlu0 14
    %3452 = vperm.xlu0 %3451, %v830
    %v3453 = vpop.permute.xlu0 %3452
    %3455 = vset.pattern.permute.xlu0 14
    %3456 = vperm.xlu0 %3455, %v831
    %v3457 = vpop.permute.xlu0 %3456
    %3459 = vset.pattern.permute.xlu0 14
    %3460 = vperm.xlu0 %3459, %v832
    %v3461 = vpop.permute.xlu0 %3460
    %3463 = vset.pattern.permute.xlu0 14
    %3464 = vperm.xlu0 %3463, %v833
    %v3465 = vpop.permute.xlu0 %3464
    %3467 = vset.pattern.permute.xlu0 14
    %3468 = vperm.xlu0 %3467, %v834
    %v3469 = vpop.permute.xlu0 %3468
    %3471 = vset.pattern.permute.xlu0 14
    %3472 = vperm.xlu0 %3471, %v835
    %v3473 = vpop.permute.xlu0 %3472
    %3475 = vset.pattern.permute.xlu0 14
    %3476 = vperm.xlu0 %3475, %v836
    %v3477 = vpop.permute.xlu0 %3476
    %3479 = vset.pattern.permute.xlu0 14
    %3480 = vperm.xlu0 %3479, %v837
    %v3481 = vpop.permute.xlu0 %3480
    %3483 = vset.pattern.permute.xlu0 14
    %3484 = vperm.xlu0 %3483, %v838
    %v3485 = vpop.permute.xlu0 %3484
    %3487 = vset.pattern.permute.xlu0 14
    %3488 = vperm.xlu0 %3487, %v839
    %v3489 = vpop.permute.xlu0 %3488
    %3491 = vset.pattern.permute.xlu0 14
    %3492 = vperm.xlu0 %3491, %v840
    %v3493 = vpop.permute.xlu0 %3492
    %3495 = vset.pattern.permute.xlu0 14
    %3496 = vperm.xlu0 %3495, %v841
    %v3497 = vpop.permute.xlu0 %3496
    %3499 = vset.pattern.permute.xlu0 14
    %3500 = vperm.xlu0 %3499, %v842
    %v3501 = vpop.permute.xlu0 %3500
    %v3503 = vmul.f32 %v3392, %v3441
    %v3504 = vmul.f32 %v3394, %v3445
    %v3505 = vmul.f32 %v3396, %v3449
    %v3506 = vmul.f32 %v3398, %v3453
    %v3507 = vmul.f32 %v3400, %v3457
    %v3508 = vmul.f32 %v3402, %v3461
    %v3509 = vmul.f32 %v3404, %v3465
    %v3510 = vmul.f32 %v3406, %v3469
    %v3511 = vmul.f32 %v3408, %v3473
    %v3512 = vmul.f32 %v3410, %v3477
    %v3513 = vmul.f32 %v3412, %v3481
    %v3514 = vmul.f32 %v3414, %v3485
    %v3515 = vmul.f32 %v3416, %v3489
    %v3516 = vmul.f32 %v3418, %v3493
    %v3517 = vmul.f32 %v3420, %v3497
    %v3518 = vmul.f32 %v3438, %v3501
    %v3519 = vadd.f32 %v3358, %v3503
    %v3520 = vadd.f32 %v3359, %v3504
    %v3521 = vadd.f32 %v3360, %v3505
    %v3522 = vadd.f32 %v3361, %v3506
    %v3523 = vadd.f32 %v3362, %v3507
    %v3524 = vadd.f32 %v3363, %v3508
    %v3525 = vadd.f32 %v3364, %v3509
    %v3526 = vadd.f32 %v3365, %v3510
    %v3527 = vadd.f32 %v3366, %v3511
    %v3528 = vadd.f32 %v3367, %v3512
    %v3529 = vadd.f32 %v3368, %v3513
    %v3530 = vadd.f32 %v3369, %v3514
    %v3531 = vadd.f32 %v3370, %v3515
    %v3532 = vadd.f32 %v3371, %v3516
    %v3533 = vadd.f32 %v3372, %v3517
    %v3534 = vadd.f32 %v3373, %v3518
    %v3551 = vrot.slane %v2524, 7
    %v3552 = vrot.slane %v2528, 7
    %v3553 = vsel %vm763, %v3551, %v3552
    %v3554 = vrot.slane %v2534, 7
    %v3555 = vsel %vm763, %v3552, %v3554
    %v3556 = vrot.slane %v2538, 7
    %v3557 = vsel %vm763, %v3554, %v3556
    %v3558 = vrot.slane %v2544, 7
    %v3559 = vsel %vm763, %v3556, %v3558
    %v3560 = vrot.slane %v2548, 7
    %v3561 = vsel %vm763, %v3558, %v3560
    %v3562 = vrot.slane %v2554, 7
    %v3563 = vsel %vm763, %v3560, %v3562
    %v3564 = vrot.slane %v2558, 7
    %v3565 = vsel %vm763, %v3562, %v3564
    %v3566 = vrot.slane %v2564, 7
    %v3567 = vsel %vm763, %v3564, %v3566
    %v3568 = vrot.slane %v2568, 7
    %v3569 = vsel %vm763, %v3566, %v3568
    %v3570 = vrot.slane %v2574, 7
    %v3571 = vsel %vm763, %v3568, %v3570
    %v3572 = vrot.slane %v2578, 7
    %v3573 = vsel %vm763, %v3570, %v3572
    %v3574 = vrot.slane %v2584, 7
    %v3575 = vsel %vm763, %v3572, %v3574
    %v3576 = vrot.slane %v2588, 7
    %v3577 = vsel %vm763, %v3574, %v3576
    %v3578 = vrot.slane %v2594, 7
    %v3579 = vsel %vm763, %v3576, %v3578
    %v3580 = vrot.slane %v2598, 7
    %v3581 = vsel %vm763, %v3578, %v3580
    %v3599 = vsel %vm763, %v3580, %v3551
    %3600 = vset.pattern.permute.xlu0 15
    %3601 = vperm.xlu0 %3600, %v827
    %v3602 = vpop.permute.xlu0 %3601
    %3604 = vset.pattern.permute.xlu0 15
    %3605 = vperm.xlu0 %3604, %v828
    %v3606 = vpop.permute.xlu0 %3605
    %3608 = vset.pattern.permute.xlu0 15
    %3609 = vperm.xlu0 %3608, %v829
    %v3610 = vpop.permute.xlu0 %3609
    %3612 = vset.pattern.permute.xlu0 15
    %3613 = vperm.xlu0 %3612, %v830
    %v3614 = vpop.permute.xlu0 %3613
    %3616 = vset.pattern.permute.xlu0 15
    %3617 = vperm.xlu0 %3616, %v831
    %v3618 = vpop.permute.xlu0 %3617
    %3620 = vset.pattern.permute.xlu0 15
    %3621 = vperm.xlu0 %3620, %v832
    %v3622 = vpop.permute.xlu0 %3621
    %3624 = vset.pattern.permute.xlu0 15
    %3625 = vperm.xlu0 %3624, %v833
    %v3626 = vpop.permute.xlu0 %3625
    %3628 = vset.pattern.permute.xlu0 15
    %3629 = vperm.xlu0 %3628, %v834
    %v3630 = vpop.permute.xlu0 %3629
    %3632 = vset.pattern.permute.xlu0 15
    %3633 = vperm.xlu0 %3632, %v835
    %v3634 = vpop.permute.xlu0 %3633
    %3636 = vset.pattern.permute.xlu0 15
    %3637 = vperm.xlu0 %3636, %v836
    %v3638 = vpop.permute.xlu0 %3637
    %3640 = vset.pattern.permute.xlu0 15
    %3641 = vperm.xlu0 %3640, %v837
    %v3642 = vpop.permute.xlu0 %3641
    %3644 = vset.pattern.permute.xlu0 15
    %3645 = vperm.xlu0 %3644, %v838
    %v3646 = vpop.permute.xlu0 %3645
    %3648 = vset.pattern.permute.xlu0 15
    %3649 = vperm.xlu0 %3648, %v839
    %v3650 = vpop.permute.xlu0 %3649
    %3652 = vset.pattern.permute.xlu0 15
    %3653 = vperm.xlu0 %3652, %v840
    %v3654 = vpop.permute.xlu0 %3653
    %3656 = vset.pattern.permute.xlu0 15
    %3657 = vperm.xlu0 %3656, %v841
    %v3658 = vpop.permute.xlu0 %3657
    %3660 = vset.pattern.permute.xlu0 15
    %3661 = vperm.xlu0 %3660, %v842
    %v3662 = vpop.permute.xlu0 %3661
    %v3664 = vmul.f32 %v3553, %v3602
    %v3665 = vmul.f32 %v3555, %v3606
    %v3666 = vmul.f32 %v3557, %v3610
    %v3667 = vmul.f32 %v3559, %v3614
    %v3668 = vmul.f32 %v3561, %v3618
    %v3669 = vmul.f32 %v3563, %v3622
    %v3670 = vmul.f32 %v3565, %v3626
    %v3671 = vmul.f32 %v3567, %v3630
    %v3672 = vmul.f32 %v3569, %v3634
    %v3673 = vmul.f32 %v3571, %v3638
    %v3674 = vmul.f32 %v3573, %v3642
    %v3675 = vmul.f32 %v3575, %v3646
    %v3676 = vmul.f32 %v3577, %v3650
    %v3677 = vmul.f32 %v3579, %v3654
    %v3678 = vmul.f32 %v3581, %v3658
    %v3679 = vmul.f32 %v3599, %v3662
    %v3680 = vadd.f32 %v3519, %v3664
    %v3681 = vadd.f32 %v3520, %v3665
    %v3682 = vadd.f32 %v3521, %v3666
    %v3683 = vadd.f32 %v3522, %v3667
    %v3684 = vadd.f32 %v3523, %v3668
    %v3685 = vadd.f32 %v3524, %v3669
    %v3686 = vadd.f32 %v3525, %v3670
    %v3687 = vadd.f32 %v3526, %v3671
    %v3688 = vadd.f32 %v3527, %v3672
    %v3689 = vadd.f32 %v3528, %v3673
    %v3690 = vadd.f32 %v3529, %v3674
    %v3691 = vadd.f32 %v3530, %v3675
    %v3692 = vadd.f32 %v3531, %v3676
    %v3693 = vadd.f32 %v3532, %v3677
    %v3694 = vadd.f32 %v3533, %v3678
    %v3695 = vadd.f32 %v3534, %v3679
    %3696 = vset.pattern.permute.xlu0 16
    %3697 = vperm.xlu0 %3696, %v827
    %v3698 = vpop.permute.xlu0 %3697
    %3700 = vset.pattern.permute.xlu0 16
    %3701 = vperm.xlu0 %3700, %v828
    %v3702 = vpop.permute.xlu0 %3701
    %3704 = vset.pattern.permute.xlu0 16
    %3705 = vperm.xlu0 %3704, %v829
    %v3706 = vpop.permute.xlu0 %3705
    %3708 = vset.pattern.permute.xlu0 16
    %3709 = vperm.xlu0 %3708, %v830
    %v3710 = vpop.permute.xlu0 %3709
    %3712 = vset.pattern.permute.xlu0 16
    %3713 = vperm.xlu0 %3712, %v831
    %v3714 = vpop.permute.xlu0 %3713
    %3716 = vset.pattern.permute.xlu0 16
    %3717 = vperm.xlu0 %3716, %v832
    %v3718 = vpop.permute.xlu0 %3717
    %3720 = vset.pattern.permute.xlu0 16
    %3721 = vperm.xlu0 %3720, %v833
    %v3722 = vpop.permute.xlu0 %3721
    %3724 = vset.pattern.permute.xlu0 16
    %3725 = vperm.xlu0 %3724, %v834
    %v3726 = vpop.permute.xlu0 %3725
    %3728 = vset.pattern.permute.xlu0 16
    %3729 = vperm.xlu0 %3728, %v835
    %v3730 = vpop.permute.xlu0 %3729
    %3732 = vset.pattern.permute.xlu0 16
    %3733 = vperm.xlu0 %3732, %v836
    %v3734 = vpop.permute.xlu0 %3733
    %3736 = vset.pattern.permute.xlu0 16
    %3737 = vperm.xlu0 %3736, %v837
    %v3738 = vpop.permute.xlu0 %3737
    %3740 = vset.pattern.permute.xlu0 16
    %3741 = vperm.xlu0 %3740, %v838
    %v3742 = vpop.permute.xlu0 %3741
    %3744 = vset.pattern.permute.xlu0 16
    %3745 = vperm.xlu0 %3744, %v839
    %v3746 = vpop.permute.xlu0 %3745
    %3748 = vset.pattern.permute.xlu0 16
    %3749 = vperm.xlu0 %3748, %v840
    %v3750 = vpop.permute.xlu0 %3749
    %3752 = vset.pattern.permute.xlu0 16
    %3753 = vperm.xlu0 %3752, %v841
    %v3754 = vpop.permute.xlu0 %3753
    %3756 = vset.pattern.permute.xlu0 16
    %3757 = vperm.xlu0 %3756, %v842
    %v3758 = vpop.permute.xlu0 %3757
    %v3760 = vmul.f32 %v2530, %v3698
    %v3761 = vmul.f32 %v2536, %v3702
    %v3762 = vmul.f32 %v2540, %v3706
    %v3763 = vmul.f32 %v2546, %v3710
    %v3764 = vmul.f32 %v2550, %v3714
    %v3765 = vmul.f32 %v2556, %v3718
    %v3766 = vmul.f32 %v2560, %v3722
    %v3767 = vmul.f32 %v2566, %v3726
    %v3768 = vmul.f32 %v2570, %v3730
    %v3769 = vmul.f32 %v2576, %v3734
    %v3770 = vmul.f32 %v2580, %v3738
    %v3771 = vmul.f32 %v2586, %v3742
    %v3772 = vmul.f32 %v2590, %v3746
    %v3773 = vmul.f32 %v2596, %v3750
    %v3774 = vmul.f32 %v2600, %v3754
    %v3775 = vmul.f32 %v2526, %v3758
    %v3776 = vadd.f32 %v3680, %v3760
    %v3777 = vadd.f32 %v3681, %v3761
    %v3778 = vadd.f32 %v3682, %v3762
    %v3779 = vadd.f32 %v3683, %v3763
    %v3780 = vadd.f32 %v3684, %v3764
    %v3781 = vadd.f32 %v3685, %v3765
    %v3782 = vadd.f32 %v3686, %v3766
    %v3783 = vadd.f32 %v3687, %v3767
    %v3784 = vadd.f32 %v3688, %v3768
    %v3785 = vadd.f32 %v3689, %v3769
    %v3786 = vadd.f32 %v3690, %v3770
    %v3787 = vadd.f32 %v3691, %v3771
    %v3788 = vadd.f32 %v3692, %v3772
    %v3789 = vadd.f32 %v3693, %v3773
    %v3790 = vadd.f32 %v3694, %v3774
    %v3791 = vadd.f32 %v3695, %v3775
    %v3807 = vrot.slane %v2640, 1
    %v3808 = vrot.slane %v2645, 1
    %v3809 = vsel %vm1069, %v3807, %v3808
    %v3810 = vrot.slane %v2648, 1
    %v3811 = vsel %vm1069, %v3808, %v3810
    %v3812 = vrot.slane %v2653, 1
    %v3813 = vsel %vm1069, %v3810, %v3812
    %v3814 = vrot.slane %v2656, 1
    %v3815 = vsel %vm1069, %v3812, %v3814
    %v3816 = vrot.slane %v2661, 1
    %v3817 = vsel %vm1069, %v3814, %v3816
    %v3818 = vrot.slane %v2664, 1
    %v3819 = vsel %vm1069, %v3816, %v3818
    %v3820 = vrot.slane %v2669, 1
    %v3821 = vsel %vm1069, %v3818, %v3820
    %v3822 = vrot.slane %v2672, 1
    %v3823 = vsel %vm1069, %v3820, %v3822
    %v3824 = vrot.slane %v2677, 1
    %v3825 = vsel %vm1069, %v3822, %v3824
    %v3826 = vrot.slane %v2680, 1
    %v3827 = vsel %vm1069, %v3824, %v3826
    %v3828 = vrot.slane %v2685, 1
    %v3829 = vsel %vm1069, %v3826, %v3828
    %v3830 = vrot.slane %v2688, 1
    %v3831 = vsel %vm1069, %v3828, %v3830
    %v3832 = vrot.slane %v2693, 1
    %v3833 = vsel %vm1069, %v3830, %v3832
    %v3834 = vrot.slane %v2696, 1
    %v3835 = vsel %vm1069, %v3832, %v3834
    %v3852 = vrot.slane %v2637, 1
    %v3853 = vsel %vm1069, %v3852, %v3807
    %v3856 = vsel %vm1069, %v3834, %v3852
    %3857 = vset.pattern.permute.xlu0 17
    %3858 = vperm.xlu0 %3857, %v827
    %v3859 = vpop.permute.xlu0 %3858
    %3861 = vset.pattern.permute.xlu0 17
    %3862 = vperm.xlu0 %3861, %v828
    %v3863 = vpop.permute.xlu0 %3862
    %3865 = vset.pattern.permute.xlu0 17
    %3866 = vperm.xlu0 %3865, %v829
    %v3867 = vpop.permute.xlu0 %3866
    %3869 = vset.pattern.permute.xlu0 17
    %3870 = vperm.xlu0 %3869, %v830
    %v3871 = vpop.permute.xlu0 %3870
    %3873 = vset.pattern.permute.xlu0 17
    %3874 = vperm.xlu0 %3873, %v831
    %v3875 = vpop.permute.xlu0 %3874
    %3877 = vset.pattern.permute.xlu0 17
    %3878 = vperm.xlu0 %3877, %v832
    %v3879 = vpop.permute.xlu0 %3878
    %3881 = vset.pattern.permute.xlu0 17
    %3882 = vperm.xlu0 %3881, %v833
    %v3883 = vpop.permute.xlu0 %3882
    %3885 = vset.pattern.permute.xlu0 17
    %3886 = vperm.xlu0 %3885, %v834
    %v3887 = vpop.permute.xlu0 %3886
    %3889 = vset.pattern.permute.xlu0 17
    %3890 = vperm.xlu0 %3889, %v835
    %v3891 = vpop.permute.xlu0 %3890
    %3893 = vset.pattern.permute.xlu0 17
    %3894 = vperm.xlu0 %3893, %v836
    %v3895 = vpop.permute.xlu0 %3894
    %3897 = vset.pattern.permute.xlu0 17
    %3898 = vperm.xlu0 %3897, %v837
    %v3899 = vpop.permute.xlu0 %3898
    %3901 = vset.pattern.permute.xlu0 17
    %3902 = vperm.xlu0 %3901, %v838
    %v3903 = vpop.permute.xlu0 %3902
    %3905 = vset.pattern.permute.xlu0 17
    %3906 = vperm.xlu0 %3905, %v839
    %v3907 = vpop.permute.xlu0 %3906
    %3909 = vset.pattern.permute.xlu0 17
    %3910 = vperm.xlu0 %3909, %v840
    %v3911 = vpop.permute.xlu0 %3910
    %3913 = vset.pattern.permute.xlu0 17
    %3914 = vperm.xlu0 %3913, %v841
    %v3915 = vpop.permute.xlu0 %3914
    %3917 = vset.pattern.permute.xlu0 17
    %3918 = vperm.xlu0 %3917, %v842
    %v3919 = vpop.permute.xlu0 %3918
    %v3921 = vmul.f32 %v3809, %v3859
    %v3922 = vmul.f32 %v3811, %v3863
    %v3923 = vmul.f32 %v3813, %v3867
    %v3924 = vmul.f32 %v3815, %v3871
    %v3925 = vmul.f32 %v3817, %v3875
    %v3926 = vmul.f32 %v3819, %v3879
    %v3927 = vmul.f32 %v3821, %v3883
    %v3928 = vmul.f32 %v3823, %v3887
    %v3929 = vmul.f32 %v3825, %v3891
    %v3930 = vmul.f32 %v3827, %v3895
    %v3931 = vmul.f32 %v3829, %v3899
    %v3932 = vmul.f32 %v3831, %v3903
    %v3933 = vmul.f32 %v3833, %v3907
    %v3934 = vmul.f32 %v3835, %v3911
    %v3935 = vmul.f32 %v3856, %v3915
    %v3936 = vmul.f32 %v3853, %v3919
    %v3937 = vadd.f32 %v3776, %v3921
    %v3938 = vadd.f32 %v3777, %v3922
    %v3939 = vadd.f32 %v3778, %v3923
    %v3940 = vadd.f32 %v3779, %v3924
    %v3941 = vadd.f32 %v3780, %v3925
    %v3942 = vadd.f32 %v3781, %v3926
    %v3943 = vadd.f32 %v3782, %v3927
    %v3944 = vadd.f32 %v3783, %v3928
    %v3945 = vadd.f32 %v3784, %v3929
    %v3946 = vadd.f32 %v3785, %v3930
    %v3947 = vadd.f32 %v3786, %v3931
    %v3948 = vadd.f32 %v3787, %v3932
    %v3949 = vadd.f32 %v3788, %v3933
    %v3950 = vadd.f32 %v3789, %v3934
    %v3951 = vadd.f32 %v3790, %v3935
    %v3952 = vadd.f32 %v3791, %v3936
    %v3953 = vld [vmem:[#allocation9 + $0x1] sm:$0x1]
    %v3954 = vlaneseq
    %v3955 = vshrl.u32 %v3954, 7
    %v3956 = vsub.s32 0, %v3955
    %v3957 = vrot.slane %v3953, %v3956
    %v3958 = vadd.f32 %v3937, %v3957
    %v3959 = vadd.f32 %v3938, %v3957
    %v3960 = vadd.f32 %v3939, %v3957
    %v3961 = vadd.f32 %v3940, %v3957
    %v3962 = vadd.f32 %v3941, %v3957
    %v3963 = vadd.f32 %v3942, %v3957
    %v3964 = vadd.f32 %v3943, %v3957
    %v3965 = vadd.f32 %v3944, %v3957
    %v3966 = vadd.f32 %v3945, %v3957
    %v3967 = vadd.f32 %v3946, %v3957
    %v3968 = vadd.f32 %v3947, %v3957
    %v3969 = vadd.f32 %v3948, %v3957
    %v3970 = vadd.f32 %v3949, %v3957
    %v3971 = vadd.f32 %v3950, %v3957
    %v3972 = vadd.f32 %v3951, %v3957
    %v3973 = vadd.f32 %v3952, %v3957
    %v3974 = vmax.f32 %v3958, 0.0
    %v3975 = vmax.f32 %v3959, 0.0
    %v3976 = vmax.f32 %v3960, 0.0
    %v3977 = vmax.f32 %v3961, 0.0
    %v3978 = vmax.f32 %v3962, 0.0
    %v3979 = vmax.f32 %v3963, 0.0
    %v3980 = vmax.f32 %v3964, 0.0
    %v3981 = vmax.f32 %v3965, 0.0
    %v3982 = vmax.f32 %v3966, 0.0
    %v3983 = vmax.f32 %v3967, 0.0
    %v3984 = vmax.f32 %v3968, 0.0
    %v3985 = vmax.f32 %v3969, 0.0
    %v3986 = vmax.f32 %v3970, 0.0
    %v3987 = vmax.f32 %v3971, 0.0
    %v3988 = vmax.f32 %v3972, 0.0
    %v3989 = vmax.f32 %v3973, 0.0
    %v3990 = vpack.c.bf16 %v3975, %v3974
    %v3991 = vpack.c.bf16 %v3977, %v3976
    %v3992 = vpack.c.bf16 %v3979, %v3978
    %v3993 = vpack.c.bf16 %v3981, %v3980
    %v3994 = vpack.c.bf16 %v3983, %v3982
    %v3995 = vpack.c.bf16 %v3985, %v3984
    %v3996 = vpack.c.bf16 %v3987, %v3986
    %v3997 = vpack.c.bf16 %v3989, %v3988
    %v3998 = vld [vmem:[#allocation6] sm:$0xf]
    %v3999 = vld [vmem:[#allocation6 + $0x4] sm:$0xf]
    %v4000 = vld [vmem:[#allocation6 + $0x8] sm:$0xf]
    %v4004 = vunpack.c.l.b16 %v3998
    %v4005 = vunpack.c.l.b16 %v3999
    %v4006 = vunpack.c.l.b16 %v4000
    %v4007 = vpack.c.b16 %v4005, %v4004
    %v4008 = vpack.c.b16 %v4006, %v4006
    %4011 = vmatprep.subr.bf16.mxu0 0
    %4012 = vmatpush1.bf16.msra.mxu0 %v3990
    %4013 = vmatprep.subr.bf16.mxu0 0
    %4014 = vmatpush1.bf16.msra.mxu0 %v3991
    %4015 = vmatprep.subr.bf16.mxu0 0
    %4016 = vmatpush1.bf16.msra.mxu0 %v3992
    %4017 = vmatprep.subr.bf16.mxu0 0
    %4018 = vmatpush1.bf16.msra.mxu0 %v3993
    %4019 = vmatprep.subr.bf16.mxu0 0
    %4020 = vmatpush1.bf16.msra.mxu0 %v3994
    %4021 = vmatprep.subr.bf16.mxu0 0
    %4022 = vmatpush1.bf16.msra.mxu0 %v3995
    %4023 = vmatprep.subr.bf16.mxu0 0
    %4024 = vmatpush1.bf16.msra.mxu0 %v3996
    %4025 = vmatprep.subr.bf16.mxu0 0
    %4026 = vmatpush1.bf16.msra.mxu0 %v3997
    %4027 = vmatprep.subr.bf16.mxu0 0
    %4028 = vmatpush1.bf16.msra.mxu0 0
    %4029 = vmatprep.subr.bf16.mxu0 0
    %4030 = vmatpush1.bf16.msra.mxu0 0
    %4031 = vmatprep.subr.bf16.mxu0 0
    %4032 = vmatpush1.bf16.msra.mxu0 0
    %4033 = vmatprep.subr.bf16.mxu0 0
    %4034 = vmatpush1.bf16.msra.mxu0 0
    %4035 = vmatprep.subr.bf16.mxu0 0
    %4036 = vmatpush1.bf16.msra.mxu0 0
    %4037 = vmatprep.subr.bf16.mxu0 0
    %4038 = vmatpush1.bf16.msra.mxu0 0
    %4039 = vmatprep.subr.bf16.mxu0 0
    %4040 = vmatpush1.bf16.msra.mxu0 0
    %4041 = vmatprep.subr.bf16.mxu0 0
    %4042 = vmatpush1.bf16.msra.mxu0 0
    %4043 = vmatprep.mubr.bf16.mxu0 0
    %4044 = vmatmul.mubr.bf16.gmra.mrb[0].mxu0 %v4007
    %v4045 = vpop.f32.mrb[0].mxu0
    %v4046 = vadd.f32 0.0, %v4045
    %v4047 = vpop.f32.mrb[0].mxu0
    %v4048 = vpop.f32.mrb[0].mxu0
    %v4049 = vadd.f32 0.0, %v4048
    %v4050 = vpop.f32.mrb[0].mxu0
    %4051 = vmatprep.mubr.bf16.mxu0 0
    %4052 = vmatmul.mubr.bf16.gmra.mrb[0].mxu0 %v4008
    %v4053 = vpop.f32.mrb[0].mxu0
    %v4054 = vadd.f32 0.0, %v4053
    %v4055 = vpop.f32.mrb[0].mxu0
    %v4056 = vpop.f32.mrb[0].mxu0
    %v4057 = vpop.f32.mrb[0].mxu0
    %4058 = vdwg.mxu0
    %v4059 = vld [vmem:[#allocation6 + $0xc] sm:$0xf]
    %v4060 = vld [vmem:[#allocation6 + $0x10] sm:$0xf]
    %v4061 = vld [vmem:[#allocation6 + $0x14] sm:$0xf]
    %v4065 = vunpack.c.l.b16 %v4059
    %v4066 = vunpack.c.l.b16 %v4060
    %v4067 = vunpack.c.l.b16 %v4061
    %v4068 = vpack.c.b16 %v4066, %v4065
    %v4069 = vpack.c.b16 %v4067, %v4067
    %4072 = vmatprep.subr.bf16.mxu0 0
    %4073 = vmatpush1.bf16.msra.mxu0 %v3990
    %4074 = vmatprep.subr.bf16.mxu0 0
    %4075 = vmatpush1.bf16.msra.mxu0 %v3991
    %4076 = vmatprep.subr.bf16.mxu0 0
    %4077 = vmatpush1.bf16.msra.mxu0 %v3992
    %4078 = vmatprep.subr.bf16.mxu0 0
    %4079 = vmatpush1.bf16.msra.mxu0 %v3993
    %4080 = vmatprep.subr.bf16.mxu0 0
    %4081 = vmatpush1.bf16.msra.mxu0 %v3994
    %4082 = vmatprep.subr.bf16.mxu0 0
    %4083 = vmatpush1.bf16.msra.mxu0 %v3995
    %4084 = vmatprep.subr.bf16.mxu0 0
    %4085 = vmatpush1.bf16.msra.mxu0 %v3996
    %4086 = vmatprep.subr.bf16.mxu0 0
    %4087 = vmatpush1.bf16.msra.mxu0 %v3997
    %4088 = vmatprep.subr.bf16.mxu0 0
    %4089 = vmatpush1.bf16.msra.mxu0 0
    %4090 = vmatprep.subr.bf16.mxu0 0
    %4091 = vmatpush1.bf16.msra.mxu0 0
    %4092 = vmatprep.subr.bf16.mxu0 0
    %4093 = vmatpush1.bf16.msra.mxu0 0
    %4094 = vmatprep.subr.bf16.mxu0 0
    %4095 = vmatpush1.bf16.msra.mxu0 0
    %4096 = vmatprep.subr.bf16.mxu0 0
    %4097 = vmatpush1.bf16.msra.mxu0 0
    %4098 = vmatprep.subr.bf16.mxu0 0
    %4099 = vmatpush1.bf16.msra.mxu0 0
    %4100 = vmatprep.subr.bf16.mxu0 0
    %4101 = vmatpush1.bf16.msra.mxu0 0
    %4102 = vmatprep.subr.bf16.mxu0 0
    %4103 = vmatpush1.bf16.msra.mxu0 0
    %4104 = vmatprep.mubr.bf16.mxu0 0
    %4105 = vmatmul.mubr.bf16.gmra.mrb[0].mxu0 %v4068
    %v4106 = vpop.f32.mrb[0].mxu0
    %v4107 = vadd.f32 0.0, %v4106
    %v4108 = vpop.f32.mrb[0].mxu0
    %v4109 = vpop.f32.mrb[0].mxu0
    %v4110 = vadd.f32 0.0, %v4109
    %v4111 = vpop.f32.mrb[0].mxu0
    %4112 = vmatprep.mubr.bf16.mxu0 0
    %4113 = vmatmul.mubr.bf16.gmra.mrb[0].mxu0 %v4069
    %v4114 = vpop.f32.mrb[0].mxu0
    %v4115 = vadd.f32 0.0, %v4114
    %v4116 = vpop.f32.mrb[0].mxu0
    %v4117 = vpop.f32.mrb[0].mxu0
    %v4118 = vpop.f32.mrb[0].mxu0
    %4119 = vdwg.mxu0
    %v4120 = vld [vmem:[#allocation6 + $0x18] sm:$0xf]
    %v4121 = vld [vmem:[#allocation6 + $0x1c] sm:$0xf]
    %v4122 = vld [vmem:[#allocation6 + $0x20] sm:$0xf]
    %v4126 = vunpack.c.l.b16 %v4120
    %v4127 = vunpack.c.l.b16 %v4121
    %v4128 = vunpack.c.l.b16 %v4122
    %v4129 = vpack.c.b16 %v4127, %v4126
    %v4130 = vpack.c.b16 %v4128, %v4128
    %4133 = vmatprep.subr.bf16.mxu0 0
    %4134 = vmatpush1.bf16.msra.mxu0 %v3990
    %4135 = vmatprep.subr.bf16.mxu0 0
    %4136 = vmatpush1.bf16.msra.mxu0 %v3991
    %4137 = vmatprep.subr.bf16.mxu0 0
    %4138 = vmatpush1.bf16.msra.mxu0 %v3992
    %4139 = vmatprep.subr.bf16.mxu0 0
    %4140 = vmatpush1.bf16.msra.mxu0 %v3993
    %4141 = vmatprep.subr.bf16.mxu0 0
    %4142 = vmatpush1.bf16.msra.mxu0 %v3994
    %4143 = vmatprep.subr.bf16.mxu0 0
    %4144 = vmatpush1.bf16.msra.mxu0 %v3995
    %4145 = vmatprep.subr.bf16.mxu0 0
    %4146 = vmatpush1.bf16.msra.mxu0 %v3996
    %4147 = vmatprep.subr.bf16.mxu0 0
    %4148 = vmatpush1.bf16.msra.mxu0 %v3997
    %4149 = vmatprep.subr.bf16.mxu0 0
    %4150 = vmatpush1.bf16.msra.mxu0 0
    %4151 = vmatprep.subr.bf16.mxu0 0
    %4152 = vmatpush1.bf16.msra.mxu0 0
    %4153 = vmatprep.subr.bf16.mxu0 0
    %4154 = vmatpush1.bf16.msra.mxu0 0
    %4155 = vmatprep.subr.bf16.mxu0 0
    %4156 = vmatpush1.bf16.msra.mxu0 0
    %4157 = vmatprep.subr.bf16.mxu0 0
    %4158 = vmatpush1.bf16.msra.mxu0 0
    %4159 = vmatprep.subr.bf16.mxu0 0
    %4160 = vmatpush1.bf16.msra.mxu0 0
    %4161 = vmatprep.subr.bf16.mxu0 0
    %4162 = vmatpush1.bf16.msra.mxu0 0
    %4163 = vmatprep.subr.bf16.mxu0 0
    %4164 = vmatpush1.bf16.msra.mxu0 0
    %4165 = vmatprep.mubr.bf16.mxu0 0
    %4166 = vmatmul.mubr.bf16.gmra.mrb[0].mxu0 %v4129
    %v4167 = vpop.f32.mrb[0].mxu0
    %v4168 = vadd.f32 0.0, %v4167
    %v4169 = vpop.f32.mrb[0].mxu0
    %v4170 = vpop.f32.mrb[0].mxu0
    %v4171 = vadd.f32 0.0, %v4170
    %v4172 = vpop.f32.mrb[0].mxu0
    %4173 = vmatprep.mubr.bf16.mxu0 0
    %4174 = vmatmul.mubr.bf16.gmra.mrb[0].mxu0 %v4130
    %v4175 = vpop.f32.mrb[0].mxu0
    %v4176 = vadd.f32 0.0, %v4175
    %v4177 = vpop.f32.mrb[0].mxu0
    %v4178 = vpop.f32.mrb[0].mxu0
    %v4179 = vpop.f32.mrb[0].mxu0
    %4180 = vdwg.mxu0
    %v4181 = vld [vmem:[#allocation6 + $0x24] sm:$0xf]
    %v4182 = vld [vmem:[#allocation6 + $0x28] sm:$0xf]
    %v4183 = vld [vmem:[#allocation6 + $0x2c] sm:$0xf]
    %v4187 = vunpack.c.l.b16 %v4181
    %v4188 = vunpack.c.l.b16 %v4182
    %v4189 = vunpack.c.l.b16 %v4183
    %v4190 = vpack.c.b16 %v4188, %v4187
    %v4191 = vpack.c.b16 %v4189, %v4189
    %4194 = vmatprep.subr.bf16.mxu0 0
    %4195 = vmatpush1.bf16.msra.mxu0 %v3990
    %4196 = vmatprep.subr.bf16.mxu0 0
    %4197 = vmatpush1.bf16.msra.mxu0 %v3991
    %4198 = vmatprep.subr.bf16.mxu0 0
    %4199 = vmatpush1.bf16.msra.mxu0 %v3992
    %4200 = vmatprep.subr.bf16.mxu0 0
    %4201 = vmatpush1.bf16.msra.mxu0 %v3993
    %4202 = vmatprep.subr.bf16.mxu0 0
    %4203 = vmatpush1.bf16.msra.mxu0 %v3994
    %4204 = vmatprep.subr.bf16.mxu0 0
    %4205 = vmatpush1.bf16.msra.mxu0 %v3995
    %4206 = vmatprep.subr.bf16.mxu0 0
    %4207 = vmatpush1.bf16.msra.mxu0 %v3996
    %4208 = vmatprep.subr.bf16.mxu0 0
    %4209 = vmatpush1.bf16.msra.mxu0 %v3997
    %4210 = vmatprep.subr.bf16.mxu0 0
    %4211 = vmatpush1.bf16.msra.mxu0 0
    %4212 = vmatprep.subr.bf16.mxu0 0
    %4213 = vmatpush1.bf16.msra.mxu0 0
    %4214 = vmatprep.subr.bf16.mxu0 0
    %4215 = vmatpush1.bf16.msra.mxu0 0
    %4216 = vmatprep.subr.bf16.mxu0 0
    %4217 = vmatpush1.bf16.msra.mxu0 0
    %4218 = vmatprep.subr.bf16.mxu0 0
    %4219 = vmatpush1.bf16.msra.mxu0 0
    %4220 = vmatprep.subr.bf16.mxu0 0
    %4221 = vmatpush1.bf16.msra.mxu0 0
    %4222 = vmatprep.subr.bf16.mxu0 0
    %4223 = vmatpush1.bf16.msra.mxu0 0
    %4224 = vmatprep.subr.bf16.mxu0 0
    %4225 = vmatpush1.bf16.msra.mxu0 0
    %4226 = vmatprep.mubr.bf16.mxu0 0
    %4227 = vmatmul.mubr.bf16.gmra.mrb[0].mxu0 %v4190
    %v4228 = vpop.f32.mrb[0].mxu0
    %v4229 = vadd.f32 0.0, %v4228
    %v4230 = vpop.f32.mrb[0].mxu0
    %v4231 = vpop.f32.mrb[0].mxu0
    %v4232 = vadd.f32 0.0, %v4231
    %v4233 = vpop.f32.mrb[0].mxu0
    %4234 = vmatprep.mubr.bf16.mxu0 0
    %4235 = vmatmul.mubr.bf16.gmra.mrb[0].mxu0 %v4191
    %v4236 = vpop.f32.mrb[0].mxu0
    %v4237 = vadd.f32 0.0, %v4236
    %v4238 = vpop.f32.mrb[0].mxu0
    %v4239 = vpop.f32.mrb[0].mxu0
    %v4240 = vpop.f32.mrb[0].mxu0
    %4241 = vdwg.mxu0
    %v4242 = vld [vmem:[#allocation6 + $0x30] sm:$0xf]
    %v4243 = vld [vmem:[#allocation6 + $0x34] sm:$0xf]
    %v4244 = vld [vmem:[#allocation6 + $0x38] sm:$0xf]
    %v4248 = vunpack.c.l.b16 %v4242
    %v4249 = vunpack.c.l.b16 %v4243
    %v4250 = vunpack.c.l.b16 %v4244
    %v4251 = vpack.c.b16 %v4249, %v4248
    %v4252 = vpack.c.b16 %v4250, %v4250
    %4255 = vmatprep.subr.bf16.mxu0 0
    %4256 = vmatpush1.bf16.msra.mxu0 %v3990
    %4257 = vmatprep.subr.bf16.mxu0 0
    %4258 = vmatpush1.bf16.msra.mxu0 %v3991
    %4259 = vmatprep.subr.bf16.mxu0 0
    %4260 = vmatpush1.bf16.msra.mxu0 %v3992
    %4261 = vmatprep.subr.bf16.mxu0 0
    %4262 = vmatpush1.bf16.msra.mxu0 %v3993
    %4263 = vmatprep.subr.bf16.mxu0 0
    %4264 = vmatpush1.bf16.msra.mxu0 %v3994
    %4265 = vmatprep.subr.bf16.mxu0 0
    %4266 = vmatpush1.bf16.msra.mxu0 %v3995
    %4267 = vmatprep.subr.bf16.mxu0 0
    %4268 = vmatpush1.bf16.msra.mxu0 %v3996
    %4269 = vmatprep.subr.bf16.mxu0 0
    %4270 = vmatpush1.bf16.msra.mxu0 %v3997
    %4271 = vmatprep.subr.bf16.mxu0 0
    %4272 = vmatpush1.bf16.msra.mxu0 0
    %4273 = vmatprep.subr.bf16.mxu0 0
    %4274 = vmatpush1.bf16.msra.mxu0 0
    %4275 = vmatprep.subr.bf16.mxu0 0
    %4276 = vmatpush1.bf16.msra.mxu0 0
    %4277 = vmatprep.subr.bf16.mxu0 0
    %4278 = vmatpush1.bf16.msra.mxu0 0
    %4279 = vmatprep.subr.bf16.mxu0 0
    %4280 = vmatpush1.bf16.msra.mxu0 0
    %4281 = vmatprep.subr.bf16.mxu0 0
    %4282 = vmatpush1.bf16.msra.mxu0 0
    %4283 = vmatprep.subr.bf16.mxu0 0
    %4284 = vmatpush1.bf16.msra.mxu0 0
    %4285 = vmatprep.subr.bf16.mxu0 0
    %4286 = vmatpush1.bf16.msra.mxu0 0
    %4287 = vmatprep.mubr.bf16.mxu0 0
    %4288 = vmatmul.mubr.bf16.gmra.mrb[0].mxu0 %v4251
    %v4289 = vpop.f32.mrb[0].mxu0
    %v4290 = vadd.f32 0.0, %v4289
    %v4291 = vpop.f32.mrb[0].mxu0
    %v4292 = vpop.f32.mrb[0].mxu0
    %v4293 = vadd.f32 0.0, %v4292
    %v4294 = vpop.f32.mrb[0].mxu0
    %4295 = vmatprep.mubr.bf16.mxu0 0
    %4296 = vmatmul.mubr.bf16.gmra.mrb[0].mxu0 %v4252
    %v4297 = vpop.f32.mrb[0].mxu0
    %v4298 = vadd.f32 0.0, %v4297
    %v4299 = vpop.f32.mrb[0].mxu0
    %v4300 = vpop.f32.mrb[0].mxu0
    %v4301 = vpop.f32.mrb[0].mxu0
    %4302 = vdwg.mxu0
    %v4303 = vld [vmem:[#allocation6 + $0x3c] sm:$0xf]
    %v4304 = vld [vmem:[#allocation6 + $0x40] sm:$0xf]
    %v4305 = vld [vmem:[#allocation6 + $0x44] sm:$0xf]
    %v4309 = vunpack.c.l.b16 %v4303
    %v4310 = vunpack.c.l.b16 %v4304
    %v4311 = vunpack.c.l.b16 %v4305
    %v4312 = vpack.c.b16 %v4310, %v4309
    %v4313 = vpack.c.b16 %v4311, %v4311
    %4316 = vmatprep.subr.bf16.mxu0 0
    %4317 = vmatpush1.bf16.msra.mxu0 %v3990
    %4318 = vmatprep.subr.bf16.mxu0 0
    %4319 = vmatpush1.bf16.msra.mxu0 %v3991
    %4320 = vmatprep.subr.bf16.mxu0 0
    %4321 = vmatpush1.bf16.msra.mxu0 %v3992
    %4322 = vmatprep.subr.bf16.mxu0 0
    %4323 = vmatpush1.bf16.msra.mxu0 %v3993
    %4324 = vmatprep.subr.bf16.mxu0 0
    %4325 = vmatpush1.bf16.msra.mxu0 %v3994
    %4326 = vmatprep.subr.bf16.mxu0 0
    %4327 = vmatpush1.bf16.msra.mxu0 %v3995
    %4328 = vmatprep.subr.bf16.mxu0 0
    %4329 = vmatpush1.bf16.msra.mxu0 %v3996
    %4330 = vmatprep.subr.bf16.mxu0 0
    %4331 = vmatpush1.bf16.msra.mxu0 %v3997
    %4332 = vmatprep.subr.bf16.mxu0 0
    %4333 = vmatpush1.bf16.msra.mxu0 0
    %4334 = vmatprep.subr.bf16.mxu0 0
    %4335 = vmatpush1.bf16.msra.mxu0 0
    %4336 = vmatprep.subr.bf16.mxu0 0
    %4337 = vmatpush1.bf16.msra.mxu0 0
    %4338 = vmatprep.subr.bf16.mxu0 0
    %4339 = vmatpush1.bf16.msra.mxu0 0
    %4340 = vmatprep.subr.bf16.mxu0 0
    %4341 = vmatpush1.bf16.msra.mxu0 0
    %4342 = vmatprep.subr.bf16.mxu0 0
    %4343 = vmatpush1.bf16.msra.mxu0 0
    %4344 = vmatprep.subr.bf16.mxu0 0
    %4345 = vmatpush1.bf16.msra.mxu0 0
    %4346 = vmatprep.subr.bf16.mxu0 0
    %4347 = vmatpush1.bf16.msra.mxu0 0
    %4348 = vmatprep.mubr.bf16.mxu0 0
    %4349 = vmatmul.mubr.bf16.gmra.mrb[0].mxu0 %v4312
    %v4350 = vpop.f32.mrb[0].mxu0
    %v4351 = vadd.f32 0.0, %v4350
    %v4352 = vpop.f32.mrb[0].mxu0
    %v4353 = vpop.f32.mrb[0].mxu0
    %v4354 = vadd.f32 0.0, %v4353
    %v4355 = vpop.f32.mrb[0].mxu0
    %4356 = vmatprep.mubr.bf16.mxu0 0
    %4357 = vmatmul.mubr.bf16.gmra.mrb[0].mxu0 %v4313
    %v4358 = vpop.f32.mrb[0].mxu0
    %v4359 = vadd.f32 0.0, %v4358
    %v4360 = vpop.f32.mrb[0].mxu0
    %v4361 = vpop.f32.mrb[0].mxu0
    %v4362 = vpop.f32.mrb[0].mxu0
    %4363 = vdwg.mxu0
    %v4364 = vld [vmem:[#allocation6 + $0x48] sm:$0xf]
    %v4365 = vld [vmem:[#allocation6 + $0x4c] sm:$0xf]
    %v4366 = vld [vmem:[#allocation6 + $0x50] sm:$0xf]
    %v4370 = vunpack.c.l.b16 %v4364
    %v4371 = vunpack.c.l.b16 %v4365
    %v4372 = vunpack.c.l.b16 %v4366
    %v4373 = vpack.c.b16 %v4371, %v4370
    %v4374 = vpack.c.b16 %v4372, %v4372
    %4377 = vmatprep.subr.bf16.mxu0 0
    %4378 = vmatpush1.bf16.msra.mxu0 %v3990
    %4379 = vmatprep.subr.bf16.mxu0 0
    %4380 = vmatpush1.bf16.msra.mxu0 %v3991
    %4381 = vmatprep.subr.bf16.mxu0 0
    %4382 = vmatpush1.bf16.msra.mxu0 %v3992
    %4383 = vmatprep.subr.bf16.mxu0 0
    %4384 = vmatpush1.bf16.msra.mxu0 %v3993
    %4385 = vmatprep.subr.bf16.mxu0 0
    %4386 = vmatpush1.bf16.msra.mxu0 %v3994
    %4387 = vmatprep.subr.bf16.mxu0 0
    %4388 = vmatpush1.bf16.msra.mxu0 %v3995
    %4389 = vmatprep.subr.bf16.mxu0 0
    %4390 = vmatpush1.bf16.msra.mxu0 %v3996
    %4391 = vmatprep.subr.bf16.mxu0 0
    %4392 = vmatpush1.bf16.msra.mxu0 %v3997
    %4393 = vmatprep.subr.bf16.mxu0 0
    %4394 = vmatpush1.bf16.msra.mxu0 0
    %4395 = vmatprep.subr.bf16.mxu0 0
    %4396 = vmatpush1.bf16.msra.mxu0 0
    %4397 = vmatprep.subr.bf16.mxu0 0
    %4398 = vmatpush1.bf16.msra.mxu0 0
    %4399 = vmatprep.subr.bf16.mxu0 0
    %4400 = vmatpush1.bf16.msra.mxu0 0
    %4401 = vmatprep.subr.bf16.mxu0 0
    %4402 = vmatpush1.bf16.msra.mxu0 0
    %4403 = vmatprep.subr.bf16.mxu0 0
    %4404 = vmatpush1.bf16.msra.mxu0 0
    %4405 = vmatprep.subr.bf16.mxu0 0
    %4406 = vmatpush1.bf16.msra.mxu0 0
    %4407 = vmatprep.subr.bf16.mxu0 0
    %4408 = vmatpush1.bf16.msra.mxu0 0
    %4409 = vmatprep.mubr.bf16.mxu0 0
    %4410 = vmatmul.mubr.bf16.gmra.mrb[0].mxu0 %v4373
    %v4411 = vpop.f32.mrb[0].mxu0
    %v4412 = vadd.f32 0.0, %v4411
    %v4413 = vpop.f32.mrb[0].mxu0
    %v4414 = vpop.f32.mrb[0].mxu0
    %v4415 = vadd.f32 0.0, %v4414
    %v4416 = vpop.f32.mrb[0].mxu0
    %4417 = vmatprep.mubr.bf16.mxu0 0
    %4418 = vmatmul.mubr.bf16.gmra.mrb[0].mxu0 %v4374
    %v4419 = vpop.f32.mrb[0].mxu0
    %v4420 = vadd.f32 0.0, %v4419
    %v4421 = vpop.f32.mrb[0].mxu0
    %v4422 = vpop.f32.mrb[0].mxu0
    %v4423 = vpop.f32.mrb[0].mxu0
    %4424 = vdwg.mxu0
    %v4425 = vld [vmem:[#allocation6 + $0x54] sm:$0xf]
    %v4426 = vld [vmem:[#allocation6 + $0x58] sm:$0xf]
    %v4427 = vld [vmem:[#allocation6 + $0x5c] sm:$0xf]
    %v4431 = vunpack.c.l.b16 %v4425
    %v4432 = vunpack.c.l.b16 %v4426
    %v4433 = vunpack.c.l.b16 %v4427
    %v4434 = vpack.c.b16 %v4432, %v4431
    %v4435 = vpack.c.b16 %v4433, %v4433
    %4438 = vmatprep.subr.bf16.mxu0 0
    %4439 = vmatpush1.bf16.msra.mxu0 %v3990
    %4440 = vmatprep.subr.bf16.mxu0 0
    %4441 = vmatpush1.bf16.msra.mxu0 %v3991
    %4442 = vmatprep.subr.bf16.mxu0 0
    %4443 = vmatpush1.bf16.msra.mxu0 %v3992
    %4444 = vmatprep.subr.bf16.mxu0 0
    %4445 = vmatpush1.bf16.msra.mxu0 %v3993
    %4446 = vmatprep.subr.bf16.mxu0 0
    %4447 = vmatpush1.bf16.msra.mxu0 %v3994
    %4448 = vmatprep.subr.bf16.mxu0 0
    %4449 = vmatpush1.bf16.msra.mxu0 %v3995
    %4450 = vmatprep.subr.bf16.mxu0 0
    %4451 = vmatpush1.bf16.msra.mxu0 %v3996
    %4452 = vmatprep.subr.bf16.mxu0 0
    %4453 = vmatpush1.bf16.msra.mxu0 %v3997
    %4454 = vmatprep.subr.bf16.mxu0 0
    %4455 = vmatpush1.bf16.msra.mxu0 0
    %4456 = vmatprep.subr.bf16.mxu0 0
    %4457 = vmatpush1.bf16.msra.mxu0 0
    %4458 = vmatprep.subr.bf16.mxu0 0
    %4459 = vmatpush1.bf16.msra.mxu0 0
    %4460 = vmatprep.subr.bf16.mxu0 0
    %4461 = vmatpush1.bf16.msra.mxu0 0
    %4462 = vmatprep.subr.bf16.mxu0 0
    %4463 = vmatpush1.bf16.msra.mxu0 0
    %4464 = vmatprep.subr.bf16.mxu0 0
    %4465 = vmatpush1.bf16.msra.mxu0 0
    %4466 = vmatprep.subr.bf16.mxu0 0
    %4467 = vmatpush1.bf16.msra.mxu0 0
    %4468 = vmatprep.subr.bf16.mxu0 0
    %4469 = vmatpush1.bf16.msra.mxu0 0
    %4470 = vmatprep.mubr.bf16.mxu0 0
    %4471 = vmatmul.mubr.bf16.gmra.mrb[0].mxu0 %v4434
    %v4472 = vpop.f32.mrb[0].mxu0
    %v4473 = vadd.f32 0.0, %v4472
    %v4474 = vpop.f32.mrb[0].mxu0
    %v4475 = vpop.f32.mrb[0].mxu0
    %v4476 = vadd.f32 0.0, %v4475
    %v4477 = vpop.f32.mrb[0].mxu0
    %4478 = vmatprep.mubr.bf16.mxu0 0
    %4479 = vmatmul.mubr.bf16.gmra.mrb[0].mxu0 %v4435
    %v4480 = vpop.f32.mrb[0].mxu0
    %v4481 = vadd.f32 0.0, %v4480
    %v4482 = vpop.f32.mrb[0].mxu0
    %v4483 = vpop.f32.mrb[0].mxu0
    %v4484 = vpop.f32.mrb[0].mxu0
    %4485 = vdwg.mxu0
    %v4486 = vld [vmem:[#allocation6 + $0x60] sm:$0xf]
    %v4487 = vld [vmem:[#allocation6 + $0x64] sm:$0xf]
    %v4488 = vld [vmem:[#allocation6 + $0x68] sm:$0xf]
    %v4492 = vunpack.c.l.b16 %v4486
    %v4493 = vunpack.c.l.b16 %v4487
    %v4494 = vunpack.c.l.b16 %v4488
    %v4495 = vpack.c.b16 %v4493, %v4492
    %v4496 = vpack.c.b16 %v4494, %v4494
    %4499 = vmatprep.subr.bf16.mxu0 0
    %4500 = vmatpush1.bf16.msra.mxu0 %v3990
    %4501 = vmatprep.subr.bf16.mxu0 0
    %4502 = vmatpush1.bf16.msra.mxu0 %v3991
    %4503 = vmatprep.subr.bf16.mxu0 0
    %4504 = vmatpush1.bf16.msra.mxu0 %v3992
    %4505 = vmatprep.subr.bf16.mxu0 0
    %4506 = vmatpush1.bf16.msra.mxu0 %v3993
    %4507 = vmatprep.subr.bf16.mxu0 0
    %4508 = vmatpush1.bf16.msra.mxu0 %v3994
    %4509 = vmatprep.subr.bf16.mxu0 0
    %4510 = vmatpush1.bf16.msra.mxu0 %v3995
    %4511 = vmatprep.subr.bf16.mxu0 0
    %4512 = vmatpush1.bf16.msra.mxu0 %v3996
    %4513 = vmatprep.subr.bf16.mxu0 0
    %4514 = vmatpush1.bf16.msra.mxu0 %v3997
    %4515 = vmatprep.subr.bf16.mxu0 0
    %4516 = vmatpush1.bf16.msra.mxu0 0
    %4517 = vmatprep.subr.bf16.mxu0 0
    %4518 = vmatpush1.bf16.msra.mxu0 0
    %4519 = vmatprep.subr.bf16.mxu0 0
    %4520 = vmatpush1.bf16.msra.mxu0 0
    %4521 = vmatprep.subr.bf16.mxu0 0
    %4522 = vmatpush1.bf16.msra.mxu0 0
    %4523 = vmatprep.subr.bf16.mxu0 0
    %4524 = vmatpush1.bf16.msra.mxu0 0
    %4525 = vmatprep.subr.bf16.mxu0 0
    %4526 = vmatpush1.bf16.msra.mxu0 0
    %4527 = vmatprep.subr.bf16.mxu0 0
    %4528 = vmatpush1.bf16.msra.mxu0 0
    %4529 = vmatprep.subr.bf16.mxu0 0
    %4530 = vmatpush1.bf16.msra.mxu0 0
    %4531 = vmatprep.mubr.bf16.mxu0 0
    %4532 = vmatmul.mubr.bf16.gmra.mrb[0].mxu0 %v4495
    %v4533 = vpop.f32.mrb[0].mxu0
    %v4534 = vadd.f32 0.0, %v4533
    %v4535 = vpop.f32.mrb[0].mxu0
    %v4536 = vpop.f32.mrb[0].mxu0
    %v4537 = vadd.f32 0.0, %v4536
    %v4538 = vpop.f32.mrb[0].mxu0
    %4539 = vmatprep.mubr.bf16.mxu0 0
    %4540 = vmatmul.mubr.bf16.gmra.mrb[0].mxu0 %v4496
    %v4541 = vpop.f32.mrb[0].mxu0
    %v4542 = vadd.f32 0.0, %v4541
    %v4543 = vpop.f32.mrb[0].mxu0
    %v4544 = vpop.f32.mrb[0].mxu0
    %v4545 = vpop.f32.mrb[0].mxu0
    %4546 = vdwg.mxu0
    %v4547 = vpack.c.bf16 %v4049, %v4046
    %v4548 = vpack.c.bf16 %v4110, %v4107
    %v4549 = vpack.c.bf16 %v4171, %v4168
    %v4550 = vpack.c.bf16 %v4232, %v4229
    %v4551 = vpack.c.bf16 %v4293, %v4290
    %v4552 = vpack.c.bf16 %v4354, %v4351
    %v4553 = vpack.c.bf16 %v4415, %v4412
    %v4554 = vpack.c.bf16 %v4476, %v4473
    %v4555 = vpack.c.bf16 %v4537, %v4534
    %v4556 = vpack.c.bf16 %v4054, %v4054
    %v4557 = vpack.c.bf16 %v4115, %v4115
    %v4558 = vpack.c.bf16 %v4176, %v4176
    %v4559 = vpack.c.bf16 %v4237, %v4237
    %v4560 = vpack.c.bf16 %v4298, %v4298
    %v4561 = vpack.c.bf16 %v4359, %v4359
    %v4562 = vpack.c.bf16 %v4420, %v4420
    %v4563 = vpack.c.bf16 %v4481, %v4481
    %v4564 = vpack.c.bf16 %v4542, %v4542
    %v4565 = vld [vmem:[#allocation4] sm:$0xf]
    %v4566 = vld [vmem:[#allocation4 + $0x4] sm:$0xf]
    %v4567 = vld [vmem:[#allocation4 + $0x8] sm:$0xf]
    %v4568 = vld [vmem:[#allocation4 + $0xc] sm:$0xf]
    %v4569 = vld [vmem:[#allocation4 + $0x10] sm:$0xf]
    %v4570 = vld [vmem:[#allocation4 + $0x14] sm:$0xf]
    %v4571 = vld [vmem:[#allocation4 + $0x18] sm:$0xf]
    %v4572 = vld [vmem:[#allocation4 + $0x1c] sm:$0xf]
    %v4573 = vld [vmem:[#allocation4 + $0x20] sm:$0xf]
    %v4574 = vld [vmem:[#allocation4 + $0x24] sm:$0xf]
    %v4575 = vld [vmem:[#allocation4 + $0x28] sm:$0xf]
    %v4576 = vld [vmem:[#allocation4 + $0x2c] sm:$0xf]
    %v4577 = vld [vmem:[#allocation4 + $0x30] sm:$0xf]
    %v4578 = vld [vmem:[#allocation4 + $0x34] sm:$0xf]
    %v4579 = vld [vmem:[#allocation4 + $0x38] sm:$0xf]
    %v4580 = vld [vmem:[#allocation4 + $0x3c] sm:$0xf]
    %v4581 = vld [vmem:[#allocation4 + $0x40] sm:$0xf]
    %v4582 = vld [vmem:[#allocation4 + $0x44] sm:$0xf]
    %v4583 = vld [vmem:[#allocation4 + $0x48] sm:$0xf]
    %v4584 = vld [vmem:[#allocation4 + $0x4c] sm:$0xf]
    %v4585 = vld [vmem:[#allocation4 + $0x50] sm:$0xf]
    %v4586 = vld [vmem:[#allocation4 + $0x54] sm:$0xf]
    %v4587 = vld [vmem:[#allocation4 + $0x58] sm:$0xf]
    %v4588 = vld [vmem:[#allocation4 + $0x5c] sm:$0xf]
    %v4589 = vld [vmem:[#allocation4 + $0x60] sm:$0xf]
    %v4590 = vld [vmem:[#allocation4 + $0x64] sm:$0xf]
    %v4591 = vld [vmem:[#allocation4 + $0x68] sm:$0xf]
    %v4592 = vld [vmem:[#allocation4 + $0x6c] sm:$0xf]
    %v4593 = vld [vmem:[#allocation4 + $0x70] sm:$0xf]
    %v4594 = vld [vmem:[#allocation4 + $0x74] sm:$0xf]
    %v4595 = vld [vmem:[#allocation4 + $0x78] sm:$0xf]
    %v4596 = vld [vmem:[#allocation4 + $0x7c] sm:$0xf]
    %v4597 = vld [vmem:[#allocation4 + $0x80] sm:$0xf]
    %v4598 = vld [vmem:[#allocation4 + $0x84] sm:$0xf]
    %v4599 = vld [vmem:[#allocation4 + $0x88] sm:$0xf]
    %v4600 = vld [vmem:[#allocation4 + $0x8c] sm:$0xf]
    %v4601 = vld [vmem:[#allocation4 + $0x90] sm:$0xf]
    %v4602 = vld [vmem:[#allocation4 + $0x94] sm:$0xf]
    %v4603 = vld [vmem:[#allocation4 + $0x98] sm:$0xf]
    %v4604 = vld [vmem:[#allocation4 + $0x9c] sm:$0xf]
    %v4605 = vld [vmem:[#allocation4 + $0xa0] sm:$0xf]
    %v4606 = vld [vmem:[#allocation4 + $0xa4] sm:$0xf]
    %v4607 = vld [vmem:[#allocation4 + $0xa8] sm:$0xf]
    %v4608 = vld [vmem:[#allocation4 + $0xac] sm:$0xf]
    %v4609 = vld [vmem:[#allocation4 + $0xb0] sm:$0xf]
    %v4610 = vld [vmem:[#allocation4 + $0xb4] sm:$0xf]
    %v4611 = vld [vmem:[#allocation4 + $0xb8] sm:$0xf]
    %v4612 = vld [vmem:[#allocation4 + $0xbc] sm:$0xf]
    %v4613 = vld [vmem:[#allocation4 + $0xc0] sm:$0xf]
    %v4614 = vld [vmem:[#allocation4 + $0xc4] sm:$0xf]
    %v4615 = vld [vmem:[#allocation4 + $0xc8] sm:$0xf]
    %v4616 = vld [vmem:[#allocation4 + $0xcc] sm:$0xf]
    %v4617 = vld [vmem:[#allocation4 + $0xd0] sm:$0xf]
    %v4618 = vld [vmem:[#allocation4 + $0xd4] sm:$0xf]
    %v4619 = vld [vmem:[#allocation4 + $0xd8] sm:$0xf]
    %v4620 = vld [vmem:[#allocation4 + $0xdc] sm:$0xf]
    %v4621 = vld [vmem:[#allocation4 + $0xe0] sm:$0xf]
    %v4622 = vld [vmem:[#allocation4 + $0xe4] sm:$0xf]
    %v4623 = vld [vmem:[#allocation4 + $0xe8] sm:$0xf]
    %v4624 = vld [vmem:[#allocation4 + $0xec] sm:$0xf]
    %v4625 = vld [vmem:[#allocation4 + $0xf0] sm:$0xf]
    %v4626 = vld [vmem:[#allocation4 + $0xf4] sm:$0xf]
    %v4627 = vld [vmem:[#allocation4 + $0xf8] sm:$0xf]
    %v4628 = vld [vmem:[#allocation4 + $0xfc] sm:$0xf]
    %v4629 = vld [vmem:[#allocation4 + $0x100] sm:$0xf]
    %v4630 = vld [vmem:[#allocation4 + $0x104] sm:$0xf]
    %v4631 = vld [vmem:[#allocation4 + $0x108] sm:$0xf]
    %v4632 = vld [vmem:[#allocation4 + $0x10c] sm:$0xf]
    %v4633 = vld [vmem:[#allocation4 + $0x110] sm:$0xf]
    %v4634 = vld [vmem:[#allocation4 + $0x114] sm:$0xf]
    %v4635 = vld [vmem:[#allocation4 + $0x118] sm:$0xf]
    %v4636 = vld [vmem:[#allocation4 + $0x11c] sm:$0xf]
    %v4637 = vld [vmem:[#allocation4 + $0x120] sm:$0xf]
    %v4638 = vld [vmem:[#allocation4 + $0x124] sm:$0xf]
    %v4639 = vld [vmem:[#allocation4 + $0x128] sm:$0xf]
    %v4640 = vld [vmem:[#allocation4 + $0x12c] sm:$0xf]
    %v4641 = vld [vmem:[#allocation4 + $0x130] sm:$0xf]
    %v4642 = vld [vmem:[#allocation4 + $0x134] sm:$0xf]
    %v4643 = vld [vmem:[#allocation4 + $0x138] sm:$0xf]
    %v4644 = vld [vmem:[#allocation4 + $0x13c] sm:$0xf]
    %v4645 = vld [vmem:[#allocation4 + $0x140] sm:$0xf]
    %v4646 = vld [vmem:[#allocation4 + $0x144] sm:$0xf]
    %v4647 = vld [vmem:[#allocation4 + $0x148] sm:$0xf]
    %v4648 = vld [vmem:[#allocation4 + $0x14c] sm:$0xf]
    %v4649 = vld [vmem:[#allocation4 + $0x150] sm:$0xf]
    %v4650 = vld [vmem:[#allocation4 + $0x154] sm:$0xf]
    %v4651 = vld [vmem:[#allocation4 + $0x158] sm:$0xf]
    %v4652 = vld [vmem:[#allocation4 + $0x15c] sm:$0xf]
    %v4653 = vld [vmem:[#allocation4 + $0x160] sm:$0xf]
    %v4654 = vld [vmem:[#allocation4 + $0x164] sm:$0xf]
    %v4655 = vld [vmem:[#allocation4 + $0x168] sm:$0xf]
    %v4656 = vld [vmem:[#allocation4 + $0x16c] sm:$0xf]
    %v4657 = vld [vmem:[#allocation4 + $0x170] sm:$0xf]
    %v4658 = vld [vmem:[#allocation4 + $0x174] sm:$0xf]
    %v4659 = vld [vmem:[#allocation4 + $0x178] sm:$0xf]
    %v4660 = vld [vmem:[#allocation4 + $0x17c] sm:$0xf]
    %v4661 = vld [vmem:[#allocation4 + $0x180] sm:$0xf]
    %v4662 = vld [vmem:[#allocation4 + $0x184] sm:$0xf]
    %v4663 = vld [vmem:[#allocation4 + $0x188] sm:$0xf]
    %v4664 = vld [vmem:[#allocation4 + $0x18c] sm:$0xf]
    %v4665 = vld [vmem:[#allocation4 + $0x190] sm:$0xf]
    %v4666 = vld [vmem:[#allocation4 + $0x194] sm:$0xf]
    %v4667 = vld [vmem:[#allocation4 + $0x198] sm:$0xf]
    %v4668 = vld [vmem:[#allocation4 + $0x19c] sm:$0xf]
    %v4669 = vld [vmem:[#allocation4 + $0x1a0] sm:$0xf]
    %v4670 = vld [vmem:[#allocation4 + $0x1a4] sm:$0xf]
    %v4671 = vld [vmem:[#allocation4 + $0x1a8] sm:$0xf]
    %v4672 = vld [vmem:[#allocation4 + $0x1ac] sm:$0xf]
    %v4673 = vld [vmem:[#allocation4 + $0x1b0] sm:$0xf]
    %v4674 = vld [vmem:[#allocation4 + $0x1b4] sm:$0xf]
    %v4675 = vld [vmem:[#allocation4 + $0x1b8] sm:$0xf]
    %v4676 = vld [vmem:[#allocation4 + $0x1bc] sm:$0xf]
    %v4677 = vld [vmem:[#allocation4 + $0x1c0] sm:$0xf]
    %v4678 = vld [vmem:[#allocation4 + $0x1c4] sm:$0xf]
    %v4679 = vld [vmem:[#allocation4 + $0x1c8] sm:$0xf]
    %v4680 = vld [vmem:[#allocation4 + $0x1cc] sm:$0xf]
    %v4681 = vld [vmem:[#allocation4 + $0x1d0] sm:$0xf]
    %v4682 = vld [vmem:[#allocation4 + $0x1d4] sm:$0xf]
    %v4683 = vld [vmem:[#allocation4 + $0x1d8] sm:$0xf]
    %v4684 = vld [vmem:[#allocation4 + $0x1dc] sm:$0xf]
    %v4685 = vld [vmem:[#allocation4 + $0x1e0] sm:$0xf]
    %v4686 = vld [vmem:[#allocation4 + $0x1e4] sm:$0xf]
    %v4687 = vld [vmem:[#allocation4 + $0x1e8] sm:$0xf]
    %v4688 = vld [vmem:[#allocation4 + $0x1ec] sm:$0xf]
    %v4689 = vld [vmem:[#allocation4 + $0x1f0] sm:$0xf]
    %v4690 = vld [vmem:[#allocation4 + $0x1f4] sm:$0xf]
    %v4691 = vld [vmem:[#allocation4 + $0x1f8] sm:$0xf]
    %v4692 = vld [vmem:[#allocation4 + $0x1fc] sm:$0xf]
    %v4693 = vld [vmem:[#allocation4 + $0x200] sm:$0xf]
    %v4694 = vld [vmem:[#allocation4 + $0x204] sm:$0xf]
    %v4695 = vld [vmem:[#allocation4 + $0x208] sm:$0xf]
    %v4696 = vld [vmem:[#allocation4 + $0x20c] sm:$0xf]
    %v4697 = vld [vmem:[#allocation4 + $0x210] sm:$0xf]
    %v4698 = vld [vmem:[#allocation4 + $0x214] sm:$0xf]
    %v4699 = vld [vmem:[#allocation4 + $0x218] sm:$0xf]
    %v4700 = vld [vmem:[#allocation4 + $0x21c] sm:$0xf]
    %v4701 = vld [vmem:[#allocation4 + $0x220] sm:$0xf]
    %v4702 = vld [vmem:[#allocation4 + $0x224] sm:$0xf]
    %v4703 = vld [vmem:[#allocation4 + $0x228] sm:$0xf]
    %v4704 = vld [vmem:[#allocation4 + $0x22c] sm:$0xf]
    %v4705 = vld [vmem:[#allocation4 + $0x230] sm:$0xf]
    %v4706 = vld [vmem:[#allocation4 + $0x234] sm:$0xf]
    %v4707 = vld [vmem:[#allocation4 + $0x238] sm:$0xf]
    %v4708 = vld [vmem:[#allocation4 + $0x23c] sm:$0xf]
    %v4709 = vld [vmem:[#allocation9 + $0x2] sm:$0x1]
    %v4710 = vlaneseq
    %v4711 = vshrl.u32 %v4710, 7
    %v4712 = vsub.s32 0, %v4711
    %v4713 = vrot.slane %v4709, %v4712
    %v4858 = vunpack.c.l.b16 %v4565
    %v4859 = vunpack.c.l.b16 %v4566
    %v4860 = vunpack.c.l.b16 %v4567
    %v4861 = vunpack.c.l.b16 %v4568
    %v4862 = vunpack.c.l.b16 %v4569
    %v4863 = vunpack.c.l.b16 %v4570
    %v4864 = vunpack.c.l.b16 %v4571
    %v4865 = vunpack.c.l.b16 %v4572
    %v4866 = vunpack.c.l.b16 %v4573
    %v4867 = vunpack.c.l.b16 %v4574
    %v4868 = vunpack.c.l.b16 %v4575
    %v4869 = vunpack.c.l.b16 %v4576
    %v4870 = vunpack.c.l.b16 %v4577
    %v4871 = vunpack.c.l.b16 %v4578
    %v4872 = vunpack.c.l.b16 %v4579
    %v4873 = vunpack.c.l.b16 %v4580
    %v4874 = vunpack.c.l.b16 %v4581
    %v4875 = vunpack.c.l.b16 %v4582
    %v4876 = vunpack.c.l.b16 %v4583
    %v4877 = vunpack.c.l.b16 %v4584
    %v4878 = vunpack.c.l.b16 %v4585
    %v4879 = vunpack.c.l.b16 %v4586
    %v4880 = vunpack.c.l.b16 %v4587
    %v4881 = vunpack.c.l.b16 %v4588
    %v4882 = vunpack.c.l.b16 %v4589
    %v4883 = vunpack.c.l.b16 %v4590
    %v4884 = vunpack.c.l.b16 %v4591
    %v4885 = vunpack.c.l.b16 %v4592
    %v4886 = vunpack.c.l.b16 %v4593
    %v4887 = vunpack.c.l.b16 %v4594
    %v4888 = vunpack.c.l.b16 %v4595
    %v4889 = vunpack.c.l.b16 %v4596
    %v4890 = vunpack.c.l.b16 %v4597
    %v4891 = vunpack.c.l.b16 %v4598
    %v4892 = vunpack.c.l.b16 %v4599
    %v4893 = vunpack.c.l.b16 %v4600
    %v4894 = vunpack.c.l.b16 %v4601
    %v4895 = vunpack.c.l.b16 %v4602
    %v4896 = vunpack.c.l.b16 %v4603
    %v4897 = vunpack.c.l.b16 %v4604
    %v4898 = vunpack.c.l.b16 %v4605
    %v4899 = vunpack.c.l.b16 %v4606
    %v4900 = vunpack.c.l.b16 %v4607
    %v4901 = vunpack.c.l.b16 %v4608
    %v4902 = vunpack.c.l.b16 %v4609
    %v4903 = vunpack.c.l.b16 %v4610
    %v4904 = vunpack.c.l.b16 %v4611
    %v4905 = vunpack.c.l.b16 %v4612
    %v4906 = vunpack.c.l.b16 %v4613
    %v4907 = vunpack.c.l.b16 %v4614
    %v4908 = vunpack.c.l.b16 %v4615
    %v4909 = vunpack.c.l.b16 %v4616
    %v4910 = vunpack.c.l.b16 %v4617
    %v4911 = vunpack.c.l.b16 %v4618
    %v4912 = vunpack.c.l.b16 %v4619
    %v4913 = vunpack.c.l.b16 %v4620
    %v4914 = vunpack.c.l.b16 %v4621
    %v4915 = vunpack.c.l.b16 %v4622
    %v4916 = vunpack.c.l.b16 %v4623
    %v4917 = vunpack.c.l.b16 %v4624
    %v4918 = vunpack.c.l.b16 %v4625
    %v4919 = vunpack.c.l.b16 %v4626
    %v4920 = vunpack.c.l.b16 %v4627
    %v4921 = vunpack.c.l.b16 %v4628
    %v4922 = vunpack.c.l.b16 %v4629
    %v4923 = vunpack.c.l.b16 %v4630
    %v4924 = vunpack.c.l.b16 %v4631
    %v4925 = vunpack.c.l.b16 %v4632
    %v4926 = vunpack.c.l.b16 %v4633
    %v4927 = vunpack.c.l.b16 %v4634
    %v4928 = vunpack.c.l.b16 %v4635
    %v4929 = vunpack.c.l.b16 %v4636
    %v4930 = vunpack.c.l.b16 %v4637
    %v4931 = vunpack.c.l.b16 %v4638
    %v4932 = vunpack.c.l.b16 %v4639
    %v4933 = vunpack.c.l.b16 %v4640
    %v4934 = vunpack.c.l.b16 %v4641
    %v4935 = vunpack.c.l.b16 %v4642
    %v4936 = vunpack.c.l.b16 %v4643
    %v4937 = vunpack.c.l.b16 %v4644
    %v4938 = vunpack.c.l.b16 %v4645
    %v4939 = vunpack.c.l.b16 %v4646
    %v4940 = vunpack.c.l.b16 %v4647
    %v4941 = vunpack.c.l.b16 %v4648
    %v4942 = vunpack.c.l.b16 %v4649
    %v4943 = vunpack.c.l.b16 %v4650
    %v4944 = vunpack.c.l.b16 %v4651
    %v4945 = vunpack.c.l.b16 %v4652
    %v4946 = vunpack.c.l.b16 %v4653
    %v4947 = vunpack.c.l.b16 %v4654
    %v4948 = vunpack.c.l.b16 %v4655
    %v4949 = vunpack.c.l.b16 %v4656
    %v4950 = vunpack.c.l.b16 %v4657
    %v4951 = vunpack.c.l.b16 %v4658
    %v4952 = vunpack.c.l.b16 %v4659
    %v4953 = vunpack.c.l.b16 %v4660
    %v4954 = vunpack.c.l.b16 %v4661
    %v4955 = vunpack.c.l.b16 %v4662
    %v4956 = vunpack.c.l.b16 %v4663
    %v4957 = vunpack.c.l.b16 %v4664
    %v4958 = vunpack.c.l.b16 %v4665
    %v4959 = vunpack.c.l.b16 %v4666
    %v4960 = vunpack.c.l.b16 %v4667
    %v4961 = vunpack.c.l.b16 %v4668
    %v4962 = vunpack.c.l.b16 %v4669
    %v4963 = vunpack.c.l.b16 %v4670
    %v4964 = vunpack.c.l.b16 %v4671
    %v4965 = vunpack.c.l.b16 %v4672
    %v4966 = vunpack.c.l.b16 %v4673
    %v4967 = vunpack.c.l.b16 %v4674
    %v4968 = vunpack.c.l.b16 %v4675
    %v4969 = vunpack.c.l.b16 %v4676
    %v4970 = vunpack.c.l.b16 %v4677
    %v4971 = vunpack.c.l.b16 %v4678
    %v4972 = vunpack.c.l.b16 %v4679
    %v4973 = vunpack.c.l.b16 %v4680
    %v4974 = vunpack.c.l.b16 %v4681
    %v4975 = vunpack.c.l.b16 %v4682
    %v4976 = vunpack.c.l.b16 %v4683
    %v4977 = vunpack.c.l.b16 %v4684
    %v4978 = vunpack.c.l.b16 %v4685
    %v4979 = vunpack.c.l.b16 %v4686
    %v4980 = vunpack.c.l.b16 %v4687
    %v4981 = vunpack.c.l.b16 %v4688
    %v4982 = vunpack.c.l.b16 %v4689
    %v4983 = vunpack.c.l.b16 %v4690
    %v4984 = vunpack.c.l.b16 %v4691
    %v4985 = vunpack.c.l.b16 %v4692
    %v4986 = vunpack.c.l.b16 %v4693
    %v4987 = vunpack.c.l.b16 %v4694
    %v4988 = vunpack.c.l.b16 %v4695
    %v4989 = vunpack.c.l.b16 %v4696
    %v4990 = vunpack.c.l.b16 %v4697
    %v4991 = vunpack.c.l.b16 %v4698
    %v4992 = vunpack.c.l.b16 %v4699
    %v4993 = vunpack.c.l.b16 %v4700
    %v4994 = vunpack.c.l.b16 %v4701
    %v4995 = vunpack.c.l.b16 %v4702
    %v4996 = vunpack.c.l.b16 %v4703
    %v4997 = vunpack.c.l.b16 %v4704
    %v4998 = vunpack.c.l.b16 %v4705
    %v4999 = vunpack.c.l.b16 %v4706
    %v5000 = vunpack.c.l.b16 %v4707
    %v5001 = vunpack.c.l.b16 %v4708
    %v5002 = vpack.c.b16 %v4859, %v4858
    %v5003 = vpack.c.b16 %v4861, %v4860
    %v5004 = vpack.c.b16 %v4863, %v4862
    %v5005 = vpack.c.b16 %v4865, %v4864
    %v5006 = vpack.c.b16 %v4867, %v4866
    %v5007 = vpack.c.b16 %v4869, %v4868
    %v5008 = vpack.c.b16 %v4871, %v4870
    %v5009 = vpack.c.b16 %v4873, %v4872
    %v5010 = vpack.c.b16 %v4875, %v4874
    %v5011 = vpack.c.b16 %v4877, %v4876
    %v5012 = vpack.c.b16 %v4879, %v4878
    %v5013 = vpack.c.b16 %v4881, %v4880
    %v5014 = vpack.c.b16 %v4883, %v4882
    %v5015 = vpack.c.b16 %v4885, %v4884
    %v5016 = vpack.c.b16 %v4887, %v4886
    %v5017 = vpack.c.b16 %v4889, %v4888
    %v5018 = vpack.c.b16 %v4891, %v4890
    %v5019 = vpack.c.b16 %v4893, %v4892
    %v5020 = vpack.c.b16 %v4895, %v4894
    %v5021 = vpack.c.b16 %v4897, %v4896
    %v5022 = vpack.c.b16 %v4899, %v4898
    %v5023 = vpack.c.b16 %v4901, %v4900
    %v5024 = vpack.c.b16 %v4903, %v4902
    %v5025 = vpack.c.b16 %v4905, %v4904
    %v5026 = vpack.c.b16 %v4907, %v4906
    %v5027 = vpack.c.b16 %v4909, %v4908
    %v5028 = vpack.c.b16 %v4911, %v4910
    %v5029 = vpack.c.b16 %v4913, %v4912
    %v5030 = vpack.c.b16 %v4915, %v4914
    %v5031 = vpack.c.b16 %v4917, %v4916
    %v5032 = vpack.c.b16 %v4919, %v4918
    %v5033 = vpack.c.b16 %v4921, %v4920
    %v5034 = vpack.c.b16 %v4923, %v4922
    %v5035 = vpack.c.b16 %v4925, %v4924
    %v5036 = vpack.c.b16 %v4927, %v4926
    %v5037 = vpack.c.b16 %v4929, %v4928
    %v5038 = vpack.c.b16 %v4931, %v4930
    %v5039 = vpack.c.b16 %v4933, %v4932
    %v5040 = vpack.c.b16 %v4935, %v4934
    %v5041 = vpack.c.b16 %v4937, %v4936
    %v5042 = vpack.c.b16 %v4939, %v4938
    %v5043 = vpack.c.b16 %v4941, %v4940
    %v5044 = vpack.c.b16 %v4943, %v4942
    %v5045 = vpack.c.b16 %v4945, %v4944
    %v5046 = vpack.c.b16 %v4947, %v4946
    %v5047 = vpack.c.b16 %v4949, %v4948
    %v5048 = vpack.c.b16 %v4951, %v4950
    %v5049 = vpack.c.b16 %v4953, %v4952
    %v5050 = vpack.c.b16 %v4955, %v4954
    %v5051 = vpack.c.b16 %v4957, %v4956
    %v5052 = vpack.c.b16 %v4959, %v4958
    %v5053 = vpack.c.b16 %v4961, %v4960
    %v5054 = vpack.c.b16 %v4963, %v4962
    %v5055 = vpack.c.b16 %v4965, %v4964
    %v5056 = vpack.c.b16 %v4967, %v4966
    %v5057 = vpack.c.b16 %v4969, %v4968
    %v5058 = vpack.c.b16 %v4971, %v4970
    %v5059 = vpack.c.b16 %v4973, %v4972
    %v5060 = vpack.c.b16 %v4975, %v4974
    %v5061 = vpack.c.b16 %v4977, %v4976
    %v5062 = vpack.c.b16 %v4979, %v4978
    %v5063 = vpack.c.b16 %v4981, %v4980
    %v5064 = vpack.c.b16 %v4983, %v4982
    %v5065 = vpack.c.b16 %v4985, %v4984
    %v5066 = vpack.c.b16 %v4987, %v4986
    %v5067 = vpack.c.b16 %v4989, %v4988
    %v5068 = vpack.c.b16 %v4991, %v4990
    %v5069 = vpack.c.b16 %v4993, %v4992
    %v5070 = vpack.c.b16 %v4995, %v4994
    %v5071 = vpack.c.b16 %v4997, %v4996
    %v5072 = vpack.c.b16 %v4999, %v4998
    %v5073 = vpack.c.b16 %v5001, %v5000
    %5146 = vmatprep.subr.bf16.mxu0 0
    %5147 = vmatpush1.bf16.msra.mxu0 %v5002
    %5148 = vmatprep.subr.bf16.mxu0 0
    %5149 = vmatpush1.bf16.msra.mxu0 %v5003
    %5150 = vmatprep.subr.bf16.mxu0 0
    %5151 = vmatpush1.bf16.msra.mxu0 %v5004
    %5152 = vmatprep.subr.bf16.mxu0 0
    %5153 = vmatpush1.bf16.msra.mxu0 %v5005
    %5154 = vmatprep.subr.bf16.mxu0 0
    %5155 = vmatpush1.bf16.msra.mxu0 %v5006
    %5156 = vmatprep.subr.bf16.mxu0 0
    %5157 = vmatpush1.bf16.msra.mxu0 %v5007
    %5158 = vmatprep.subr.bf16.mxu0 0
    %5159 = vmatpush1.bf16.msra.mxu0 %v5008
    %5160 = vmatprep.subr.bf16.mxu0 0
    %5161 = vmatpush1.bf16.msra.mxu0 %v5009
    %5162 = vmatprep.subr.bf16.mxu0 0
    %5163 = vmatpush1.bf16.msra.mxu0 %v5010
    %5164 = vmatprep.subr.bf16.mxu0 0
    %5165 = vmatpush1.bf16.msra.mxu0 %v5011
    %5166 = vmatprep.subr.bf16.mxu0 0
    %5167 = vmatpush1.bf16.msra.mxu0 %v5012
    %5168 = vmatprep.subr.bf16.mxu0 0
    %5169 = vmatpush1.bf16.msra.mxu0 %v5013
    %5170 = vmatprep.subr.bf16.mxu0 0
    %5171 = vmatpush1.bf16.msra.mxu0 %v5014
    %5172 = vmatprep.subr.bf16.mxu0 0
    %5173 = vmatpush1.bf16.msra.mxu0 %v5015
    %5174 = vmatprep.subr.bf16.mxu0 0
    %5175 = vmatpush1.bf16.msra.mxu0 %v5016
    %5176 = vmatprep.subr.bf16.mxu0 0
    %5177 = vmatpush1.bf16.msra.mxu0 %v5017
    %5178 = vmatprep.mubr.bf16.mxu0 %v4548
    %5179 = vmatmul.mubr.bf16.gmra.mrb[0].mxu0 %v4547
    %v5180 = vpop.f32.mrb[0].mxu0
    %v5181 = vadd.f32 %v4713, %v5180
    %v5182 = vpop.f32.mrb[0].mxu0
    %v5183 = vpop.f32.mrb[0].mxu0
    %v5184 = vadd.f32 %v4713, %v5183
    %v5185 = vpop.f32.mrb[0].mxu0
    %5186 = vmatprep.mubr.bf16.mxu0 %v4557
    %5187 = vmatmul.mubr.bf16.gmra.mrb[0].mxu0 %v4556
    %v5188 = vpop.f32.mrb[0].mxu0
    %v5189 = vadd.f32 %v4713, %v5188
    %v5190 = vpop.f32.mrb[0].mxu0
    %v5191 = vpop.f32.mrb[0].mxu0
    %v5192 = vpop.f32.mrb[0].mxu0
    %5193 = vdwg.mxu0
    %5194 = vmatprep.subr.bf16.mxu0 0
    %5195 = vmatpush1.bf16.msra.mxu0 %v5018
    %5196 = vmatprep.subr.bf16.mxu0 0
    %5197 = vmatpush1.bf16.msra.mxu0 %v5019
    %5198 = vmatprep.subr.bf16.mxu0 0
    %5199 = vmatpush1.bf16.msra.mxu0 %v5020
    %5200 = vmatprep.subr.bf16.mxu0 0
    %5201 = vmatpush1.bf16.msra.mxu0 %v5021
    %5202 = vmatprep.subr.bf16.mxu0 0
    %5203 = vmatpush1.bf16.msra.mxu0 %v5022
    %5204 = vmatprep.subr.bf16.mxu0 0
    %5205 = vmatpush1.bf16.msra.mxu0 %v5023
    %5206 = vmatprep.subr.bf16.mxu0 0
    %5207 = vmatpush1.bf16.msra.mxu0 %v5024
    %5208 = vmatprep.subr.bf16.mxu0 0
    %5209 = vmatpush1.bf16.msra.mxu0 %v5025
    %5210 = vmatprep.subr.bf16.mxu0 0
    %5211 = vmatpush1.bf16.msra.mxu0 %v5026
    %5212 = vmatprep.subr.bf16.mxu0 0
    %5213 = vmatpush1.bf16.msra.mxu0 %v5027
    %5214 = vmatprep.subr.bf16.mxu0 0
    %5215 = vmatpush1.bf16.msra.mxu0 %v5028
    %5216 = vmatprep.subr.bf16.mxu0 0
    %5217 = vmatpush1.bf16.msra.mxu0 %v5029
    %5218 = vmatprep.subr.bf16.mxu0 0
    %5219 = vmatpush1.bf16.msra.mxu0 %v5030
    %5220 = vmatprep.subr.bf16.mxu0 0
    %5221 = vmatpush1.bf16.msra.mxu0 %v5031
    %5222 = vmatprep.subr.bf16.mxu0 0
    %5223 = vmatpush1.bf16.msra.mxu0 %v5032
    %5224 = vmatprep.subr.bf16.mxu0 0
    %5225 = vmatpush1.bf16.msra.mxu0 %v5033
    %5226 = vmatprep.mubr.bf16.mxu0 %v4550
    %5227 = vmatmul.mubr.bf16.gmra.mrb[0].mxu0 %v4549
    %v5228 = vpop.f32.mrb[0].mxu0
    %v5229 = vadd.f32 %v5181, %v5228
    %v5230 = vpop.f32.mrb[0].mxu0
    %v5231 = vpop.f32.mrb[0].mxu0
    %v5232 = vadd.f32 %v5184, %v5231
    %v5233 = vpop.f32.mrb[0].mxu0
    %5234 = vmatprep.mubr.bf16.mxu0 %v4559
    %5235 = vmatmul.mubr.bf16.gmra.mrb[0].mxu0 %v4558
    %v5236 = vpop.f32.mrb[0].mxu0
    %v5237 = vadd.f32 %v5189, %v5236
    %v5238 = vpop.f32.mrb[0].mxu0
    %v5239 = vpop.f32.mrb[0].mxu0
    %v5240 = vpop.f32.mrb[0].mxu0
    %5241 = vdwg.mxu0
    %5242 = vmatprep.subr.bf16.mxu0 0
    %5243 = vmatpush1.bf16.msra.mxu0 %v5034
    %5244 = vmatprep.subr.bf16.mxu0 0
    %5245 = vmatpush1.bf16.msra.mxu0 %v5035
    %5246 = vmatprep.subr.bf16.mxu0 0
    %5247 = vmatpush1.bf16.msra.mxu0 %v5036
    %5248 = vmatprep.subr.bf16.mxu0 0
    %5249 = vmatpush1.bf16.msra.mxu0 %v5037
    %5250 = vmatprep.subr.bf16.mxu0 0
    %5251 = vmatpush1.bf16.msra.mxu0 %v5038
    %5252 = vmatprep.subr.bf16.mxu0 0
    %5253 = vmatpush1.bf16.msra.mxu0 %v5039
    %5254 = vmatprep.subr.bf16.mxu0 0
    %5255 = vmatpush1.bf16.msra.mxu0 %v5040
    %5256 = vmatprep.subr.bf16.mxu0 0
    %5257 = vmatpush1.bf16.msra.mxu0 %v5041
    %5258 = vmatprep.subr.bf16.mxu0 0
    %5259 = vmatpush1.bf16.msra.mxu0 %v5042
    %5260 = vmatprep.subr.bf16.mxu0 0
    %5261 = vmatpush1.bf16.msra.mxu0 %v5043
    %5262 = vmatprep.subr.bf16.mxu0 0
    %5263 = vmatpush1.bf16.msra.mxu0 %v5044
    %5264 = vmatprep.subr.bf16.mxu0 0
    %5265 = vmatpush1.bf16.msra.mxu0 %v5045
    %5266 = vmatprep.subr.bf16.mxu0 0
    %5267 = vmatpush1.bf16.msra.mxu0 %v5046
    %5268 = vmatprep.subr.bf16.mxu0 0
    %5269 = vmatpush1.bf16.msra.mxu0 %v5047
    %5270 = vmatprep.subr.bf16.mxu0 0
    %5271 = vmatpush1.bf16.msra.mxu0 %v5048
    %5272 = vmatprep.subr.bf16.mxu0 0
    %5273 = vmatpush1.bf16.msra.mxu0 %v5049
    %5274 = vmatprep.mubr.bf16.mxu0 %v4552
    %5275 = vmatmul.mubr.bf16.gmra.mrb[0].mxu0 %v4551
    %v5276 = vpop.f32.mrb[0].mxu0
    %v5277 = vadd.f32 %v5229, %v5276
    %v5278 = vpop.f32.mrb[0].mxu0
    %v5279 = vpop.f32.mrb[0].mxu0
    %v5280 = vadd.f32 %v5232, %v5279
    %v5281 = vpop.f32.mrb[0].mxu0
    %5282 = vmatprep.mubr.bf16.mxu0 %v4561
    %5283 = vmatmul.mubr.bf16.gmra.mrb[0].mxu0 %v4560
    %v5284 = vpop.f32.mrb[0].mxu0
    %v5285 = vadd.f32 %v5237, %v5284
    %v5286 = vpop.f32.mrb[0].mxu0
    %v5287 = vpop.f32.mrb[0].mxu0
    %v5288 = vpop.f32.mrb[0].mxu0
    %5289 = vdwg.mxu0
    %5290 = vmatprep.subr.bf16.mxu0 0
    %5291 = vmatpush1.bf16.msra.mxu0 %v5050
    %5292 = vmatprep.subr.bf16.mxu0 0
    %5293 = vmatpush1.bf16.msra.mxu0 %v5051
    %5294 = vmatprep.subr.bf16.mxu0 0
    %5295 = vmatpush1.bf16.msra.mxu0 %v5052
    %5296 = vmatprep.subr.bf16.mxu0 0
    %5297 = vmatpush1.bf16.msra.mxu0 %v5053
    %5298 = vmatprep.subr.bf16.mxu0 0
    %5299 = vmatpush1.bf16.msra.mxu0 %v5054
    %5300 = vmatprep.subr.bf16.mxu0 0
    %5301 = vmatpush1.bf16.msra.mxu0 %v5055
    %5302 = vmatprep.subr.bf16.mxu0 0
    %5303 = vmatpush1.bf16.msra.mxu0 %v5056
    %5304 = vmatprep.subr.bf16.mxu0 0
    %5305 = vmatpush1.bf16.msra.mxu0 %v5057
    %5306 = vmatprep.subr.bf16.mxu0 0
    %5307 = vmatpush1.bf16.msra.mxu0 %v5058
    %5308 = vmatprep.subr.bf16.mxu0 0
    %5309 = vmatpush1.bf16.msra.mxu0 %v5059
    %5310 = vmatprep.subr.bf16.mxu0 0
    %5311 = vmatpush1.bf16.msra.mxu0 %v5060
    %5312 = vmatprep.subr.bf16.mxu0 0
    %5313 = vmatpush1.bf16.msra.mxu0 %v5061
    %5314 = vmatprep.subr.bf16.mxu0 0
    %5315 = vmatpush1.bf16.msra.mxu0 %v5062
    %5316 = vmatprep.subr.bf16.mxu0 0
    %5317 = vmatpush1.bf16.msra.mxu0 %v5063
    %5318 = vmatprep.subr.bf16.mxu0 0
    %5319 = vmatpush1.bf16.msra.mxu0 %v5064
    %5320 = vmatprep.subr.bf16.mxu0 0
    %5321 = vmatpush1.bf16.msra.mxu0 %v5065
    %5322 = vmatprep.mubr.bf16.mxu0 %v4554
    %5323 = vmatmul.mubr.bf16.gmra.mrb[0].mxu0 %v4553
    %v5324 = vpop.f32.mrb[0].mxu0
    %v5325 = vadd.f32 %v5277, %v5324
    %v5326 = vpop.f32.mrb[0].mxu0
    %v5327 = vpop.f32.mrb[0].mxu0
    %v5328 = vadd.f32 %v5280, %v5327
    %v5329 = vpop.f32.mrb[0].mxu0
    %5330 = vmatprep.mubr.bf16.mxu0 %v4563
    %5331 = vmatmul.mubr.bf16.gmra.mrb[0].mxu0 %v4562
    %v5332 = vpop.f32.mrb[0].mxu0
    %v5333 = vadd.f32 %v5285, %v5332
    %v5334 = vpop.f32.mrb[0].mxu0
    %v5335 = vpop.f32.mrb[0].mxu0
    %v5336 = vpop.f32.mrb[0].mxu0
    %5337 = vdwg.mxu0
    %5338 = vmatprep.subr.bf16.mxu0 0
    %5339 = vmatpush1.bf16.msra.mxu0 %v5066
    %5340 = vmatprep.subr.bf16.mxu0 0
    %5341 = vmatpush1.bf16.msra.mxu0 %v5067
    %5342 = vmatprep.subr.bf16.mxu0 0
    %5343 = vmatpush1.bf16.msra.mxu0 %v5068
    %5344 = vmatprep.subr.bf16.mxu0 0
    %5345 = vmatpush1.bf16.msra.mxu0 %v5069
    %5346 = vmatprep.subr.bf16.mxu0 0
    %5347 = vmatpush1.bf16.msra.mxu0 %v5070
    %5348 = vmatprep.subr.bf16.mxu0 0
    %5349 = vmatpush1.bf16.msra.mxu0 %v5071
    %5350 = vmatprep.subr.bf16.mxu0 0
    %5351 = vmatpush1.bf16.msra.mxu0 %v5072
    %5352 = vmatprep.subr.bf16.mxu0 0
    %5353 = vmatpush1.bf16.msra.mxu0 %v5073
    %5354 = vmatprep.subr.bf16.mxu0 0
    %5355 = vmatpush1.bf16.msra.mxu0 0
    %5356 = vmatprep.subr.bf16.mxu0 0
    %5357 = vmatpush1.bf16.msra.mxu0 0
    %5358 = vmatprep.subr.bf16.mxu0 0
    %5359 = vmatpush1.bf16.msra.mxu0 0
    %5360 = vmatprep.subr.bf16.mxu0 0
    %5361 = vmatpush1.bf16.msra.mxu0 0
    %5362 = vmatprep.subr.bf16.mxu0 0
    %5363 = vmatpush1.bf16.msra.mxu0 0
    %5364 = vmatprep.subr.bf16.mxu0 0
    %5365 = vmatpush1.bf16.msra.mxu0 0
    %5366 = vmatprep.subr.bf16.mxu0 0
    %5367 = vmatpush1.bf16.msra.mxu0 0
    %5368 = vmatprep.subr.bf16.mxu0 0
    %5369 = vmatpush1.bf16.msra.mxu0 0
    %5370 = vmatprep.mubr.bf16.mxu0 0
    %5371 = vmatmul.mubr.bf16.gmra.mrb[0].mxu0 %v4555
    %v5372 = vpop.f32.mrb[0].mxu0
    %v5373 = vadd.f32 %v5325, %v5372
    %v5374 = vpop.f32.mrb[0].mxu0
    %v5375 = vpop.f32.mrb[0].mxu0
    %v5376 = vadd.f32 %v5328, %v5375
    %v5377 = vpop.f32.mrb[0].mxu0
    %5378 = vmatprep.mubr.bf16.mxu0 0
    %5379 = vmatmul.mubr.bf16.gmra.mrb[0].mxu0 %v4564
    %v5380 = vpop.f32.mrb[0].mxu0
    %v5381 = vadd.f32 %v5333, %v5380
    %v5382 = vpop.f32.mrb[0].mxu0
    %v5383 = vpop.f32.mrb[0].mxu0
    %v5384 = vpop.f32.mrb[0].mxu0
    %5385 = vdwg.mxu0
    %v5386 = vmax.f32 %v5373, 0.0
    %v5387 = vmax.f32 %v5376, 0.0
    %v5388 = vmax.f32 %v5381, 0.0
    %v5389 = vld [vmem:[#allocation7] sm:$0xff]
    %v5390 = vld [vmem:[#allocation7 + $0x8] sm:$0xff]
    %v5391 = vld [vmem:[#allocation7 + $0x10] sm:$0xff]
    %5393 = vset.pattern.permute.xlu0 36
    %5394 = vperm.xlu0 %5393, %v5389
    %v5395 = vpop.permute.xlu0 %5394
    %5398 = vset.pattern.permute.xlu0 36
    %5399 = vperm.xlu0 %5398, %v5390
    %v5400 = vpop.permute.xlu0 %5399
    %5403 = vset.pattern.permute.xlu0 36
    %5404 = vperm.xlu0 %5403, %v5391
    %v5405 = vpop.permute.xlu0 %5404
    %v5407 = vmul.f32 %v5386, %v5395
    %v5408 = vmul.f32 %v5387, %v5400
    %v5409 = vmul.f32 %v5388, %v5405
    %v5410 = vpack.c.bf16 %v5408, %v5407
    %v5411 = vpack.c.bf16 %v5409, %v5409
    %v5412 = vld [vmem:[#allocation2 + $0x90] sm:$0xff]
    %v5413 = vld [vmem:[#allocation2 + $0x98] sm:$0xff]
    %v5414 = vld [vmem:[#allocation2 + $0xa0] sm:$0xff]
    %v5415 = vld [vmem:[#allocation2 + $0xa8] sm:$0xff]
    %v5416 = vld [vmem:[#allocation2 + $0xb0] sm:$0xf]
    %v5417 = vld [vmem:[#allocation2 + $0xb4] sm:$0xff]
    %v5418 = vld [vmem:[#allocation2 + $0xbc] sm:$0xff]
    %v5419 = vld [vmem:[#allocation2 + $0xc4] sm:$0xff]
    %v5420 = vld [vmem:[#allocation2 + $0xcc] sm:$0xff]
    %v5421 = vld [vmem:[#allocation2 + $0xd4] sm:$0xf]
    %v5422 = vld [vmem:[#allocation2 + $0xd8] sm:$0xff]
    %v5423 = vld [vmem:[#allocation2 + $0xe0] sm:$0xff]
    %v5424 = vld [vmem:[#allocation2 + $0xe8] sm:$0xff]
    %v5425 = vld [vmem:[#allocation2 + $0xf0] sm:$0xff]
    %v5426 = vld [vmem:[#allocation2 + $0xf8] sm:$0xf]
    %v5427 = vld [vmem:[#allocation2 + $0xfc] sm:$0xff]
    %v5428 = vld [vmem:[#allocation2 + $0x104] sm:$0xff]
    %v5429 = vld [vmem:[#allocation2 + $0x10c] sm:$0xff]
    %v5430 = vld [vmem:[#allocation2 + $0x114] sm:$0xff]
    %v5431 = vld [vmem:[#allocation2 + $0x11c] sm:$0xf]
    %v5452 = vunpack.c.l.b16 %v5412
    %v5453 = vunpack.c.h.b16 %v5412
    %v5454 = vunpack.c.l.b16 %v5413
    %v5455 = vunpack.c.h.b16 %v5413
    %v5456 = vunpack.c.l.b16 %v5414
    %v5457 = vunpack.c.h.b16 %v5414
    %v5458 = vunpack.c.l.b16 %v5415
    %v5459 = vunpack.c.h.b16 %v5415
    %v5460 = vunpack.c.l.b16 %v5416
    %v5461 = vunpack.c.l.b16 %v5417
    %v5462 = vunpack.c.h.b16 %v5417
    %v5463 = vunpack.c.l.b16 %v5418
    %v5464 = vunpack.c.h.b16 %v5418
    %v5465 = vunpack.c.l.b16 %v5419
    %v5466 = vunpack.c.h.b16 %v5419
    %v5467 = vunpack.c.l.b16 %v5420
    %v5468 = vunpack.c.h.b16 %v5420
    %v5469 = vunpack.c.l.b16 %v5421
    %v5470 = vunpack.c.l.b16 %v5422
    %v5471 = vunpack.c.h.b16 %v5422
    %v5472 = vunpack.c.l.b16 %v5423
    %v5473 = vunpack.c.h.b16 %v5423
    %v5474 = vunpack.c.l.b16 %v5424
    %v5475 = vunpack.c.h.b16 %v5424
    %v5476 = vunpack.c.l.b16 %v5425
    %v5477 = vunpack.c.h.b16 %v5425
    %v5478 = vunpack.c.l.b16 %v5426
    %v5479 = vunpack.c.l.b16 %v5427
    %v5480 = vunpack.c.h.b16 %v5427
    %v5481 = vunpack.c.l.b16 %v5428
    %v5482 = vunpack.c.h.b16 %v5428
    %v5483 = vunpack.c.l.b16 %v5429
    %v5484 = vunpack.c.h.b16 %v5429
    %v5485 = vunpack.c.l.b16 %v5430
    %v5486 = vunpack.c.h.b16 %v5430
    %v5487 = vunpack.c.l.b16 %v5431
    %v5488 = vpack.c.b16 %v5461, %v5452
    %v5489 = vpack.c.b16 %v5462, %v5453
    %v5490 = vpack.c.b16 %v5463, %v5454
    %v5491 = vpack.c.b16 %v5464, %v5455
    %v5492 = vpack.c.b16 %v5465, %v5456
    %v5493 = vpack.c.b16 %v5466, %v5457
    %v5494 = vpack.c.b16 %v5467, %v5458
    %v5495 = vpack.c.b16 %v5468, %v5459
    %v5496 = vpack.c.b16 %v5469, %v5460
    %v5497 = vpack.c.b16 %v5479, %v5470
    %v5498 = vpack.c.b16 %v5480, %v5471
    %v5499 = vpack.c.b16 %v5481, %v5472
    %v5500 = vpack.c.b16 %v5482, %v5473
    %v5501 = vpack.c.b16 %v5483, %v5474
    %v5502 = vpack.c.b16 %v5484, %v5475
    %v5503 = vpack.c.b16 %v5485, %v5476
    %v5504 = vpack.c.b16 %v5486, %v5477
    %v5505 = vpack.c.b16 %v5487, %v5478
    %5524 = vmatprep.subr.bf16.mxu0 %v5489
    %5525 = vmatpush1.bf16.msra.mxu0 %v5488
    %5526 = vmatprep.subr.bf16.mxu0 %v5498
    %5527 = vmatpush1.bf16.msra.mxu0 %v5497
    %5528 = vmatprep.subr.bf16.mxu0 0
    %5529 = vmatpush1.bf16.msra.mxu0 0
    %5530 = vmatprep.subr.bf16.mxu0 0
    %5531 = vmatpush1.bf16.msra.mxu0 0
    %5532 = vmatprep.subr.bf16.mxu0 0
    %5533 = vmatpush1.bf16.msra.mxu0 0
    %5534 = vmatprep.subr.bf16.mxu0 0
    %5535 = vmatpush1.bf16.msra.mxu0 0
    %5536 = vmatprep.subr.bf16.mxu0 0
    %5537 = vmatpush1.bf16.msra.mxu0 0
    %5538 = vmatprep.subr.bf16.mxu0 0
    %5539 = vmatpush1.bf16.msra.mxu0 0
    %5540 = vmatprep.subr.bf16.mxu0 0
    %5541 = vmatpush1.bf16.msra.mxu0 0
    %5542 = vmatprep.subr.bf16.mxu0 0
    %5543 = vmatpush1.bf16.msra.mxu0 0
    %5544 = vmatprep.subr.bf16.mxu0 0
    %5545 = vmatpush1.bf16.msra.mxu0 0
    %5546 = vmatprep.subr.bf16.mxu0 0
    %5547 = vmatpush1.bf16.msra.mxu0 0
    %5548 = vmatprep.subr.bf16.mxu0 0
    %5549 = vmatpush1.bf16.msra.mxu0 0
    %5550 = vmatprep.subr.bf16.mxu0 0
    %5551 = vmatpush1.bf16.msra.mxu0 0
    %5552 = vmatprep.subr.bf16.mxu0 0
    %5553 = vmatpush1.bf16.msra.mxu0 0
    %5554 = vmatprep.subr.bf16.mxu0 0
    %5555 = vmatpush1.bf16.msra.mxu0 0
    %5556 = vmatprep.mubr.bf16.mxu0 0
    %5557 = vmatmul.mubr.bf16.gmra.mrb[0].mxu0 %v5410
    %v5558 = vpop.f32.mrb[0].mxu0
    %v5559 = vadd.f32 0.0, %v5558
    %v5560 = vpop.f32.mrb[0].mxu0
    %v5561 = vadd.f32 0.0, %v5560
    %v5562 = vpop.f32.mrb[0].mxu0
    %v5563 = vadd.f32 0.0, %v5562
    %v5564 = vpop.f32.mrb[0].mxu0
    %v5565 = vadd.f32 0.0, %v5564
    %5566 = vmatprep.mubr.bf16.mxu0 0
    %5567 = vmatmul.mubr.bf16.gmra.mrb[0].mxu0 %v5411
    %v5568 = vpop.f32.mrb[0].mxu0
    %v5569 = vadd.f32 0.0, %v5568
    %v5570 = vpop.f32.mrb[0].mxu0
    %v5571 = vadd.f32 0.0, %v5570
    %v5572 = vpop.f32.mrb[0].mxu0
    %v5573 = vpop.f32.mrb[0].mxu0
    %5574 = vdwg.mxu0
    %5575 = vmatprep.subr.bf16.mxu0 %v5491
    %5576 = vmatpush1.bf16.msra.mxu0 %v5490
    %5577 = vmatprep.subr.bf16.mxu0 %v5500
    %5578 = vmatpush1.bf16.msra.mxu0 %v5499
    %5579 = vmatprep.subr.bf16.mxu0 0
    %5580 = vmatpush1.bf16.msra.mxu0 0
    %5581 = vmatprep.subr.bf16.mxu0 0
    %5582 = vmatpush1.bf16.msra.mxu0 0
    %5583 = vmatprep.subr.bf16.mxu0 0
    %5584 = vmatpush1.bf16.msra.mxu0 0
    %5585 = vmatprep.subr.bf16.mxu0 0
    %5586 = vmatpush1.bf16.msra.mxu0 0
    %5587 = vmatprep.subr.bf16.mxu0 0
    %5588 = vmatpush1.bf16.msra.mxu0 0
    %5589 = vmatprep.subr.bf16.mxu0 0
    %5590 = vmatpush1.bf16.msra.mxu0 0
    %5591 = vmatprep.subr.bf16.mxu0 0
    %5592 = vmatpush1.bf16.msra.mxu0 0
    %5593 = vmatprep.subr.bf16.mxu0 0
    %5594 = vmatpush1.bf16.msra.mxu0 0
    %5595 = vmatprep.subr.bf16.mxu0 0
    %5596 = vmatpush1.bf16.msra.mxu0 0
    %5597 = vmatprep.subr.bf16.mxu0 0
    %5598 = vmatpush1.bf16.msra.mxu0 0
    %5599 = vmatprep.subr.bf16.mxu0 0
    %5600 = vmatpush1.bf16.msra.mxu0 0
    %5601 = vmatprep.subr.bf16.mxu0 0
    %5602 = vmatpush1.bf16.msra.mxu0 0
    %5603 = vmatprep.subr.bf16.mxu0 0
    %5604 = vmatpush1.bf16.msra.mxu0 0
    %5605 = vmatprep.subr.bf16.mxu0 0
    %5606 = vmatpush1.bf16.msra.mxu0 0
    %5607 = vmatprep.mubr.bf16.mxu0 0
    %5608 = vmatmul.mubr.bf16.gmra.mrb[0].mxu0 %v5410
    %v5609 = vpop.f32.mrb[0].mxu0
    %v5610 = vadd.f32 0.0, %v5609
    %v5611 = vpop.f32.mrb[0].mxu0
    %v5612 = vadd.f32 0.0, %v5611
    %v5613 = vpop.f32.mrb[0].mxu0
    %v5614 = vadd.f32 0.0, %v5613
    %v5615 = vpop.f32.mrb[0].mxu0
    %v5616 = vadd.f32 0.0, %v5615
    %5617 = vmatprep.mubr.bf16.mxu0 0
    %5618 = vmatmul.mubr.bf16.gmra.mrb[0].mxu0 %v5411
    %v5619 = vpop.f32.mrb[0].mxu0
    %v5620 = vadd.f32 0.0, %v5619
    %v5621 = vpop.f32.mrb[0].mxu0
    %v5622 = vadd.f32 0.0, %v5621
    %v5623 = vpop.f32.mrb[0].mxu0
    %v5624 = vpop.f32.mrb[0].mxu0
    %5625 = vdwg.mxu0
    %5626 = vmatprep.subr.bf16.mxu0 %v5493
    %5627 = vmatpush1.bf16.msra.mxu0 %v5492
    %5628 = vmatprep.subr.bf16.mxu0 %v5502
    %5629 = vmatpush1.bf16.msra.mxu0 %v5501
    %5630 = vmatprep.subr.bf16.mxu0 0
    %5631 = vmatpush1.bf16.msra.mxu0 0
    %5632 = vmatprep.subr.bf16.mxu0 0
    %5633 = vmatpush1.bf16.msra.mxu0 0
    %5634 = vmatprep.subr.bf16.mxu0 0
    %5635 = vmatpush1.bf16.msra.mxu0 0
    %5636 = vmatprep.subr.bf16.mxu0 0
    %5637 = vmatpush1.bf16.msra.mxu0 0
    %5638 = vmatprep.subr.bf16.mxu0 0
    %5639 = vmatpush1.bf16.msra.mxu0 0
    %5640 = vmatprep.subr.bf16.mxu0 0
    %5641 = vmatpush1.bf16.msra.mxu0 0
    %5642 = vmatprep.subr.bf16.mxu0 0
    %5643 = vmatpush1.bf16.msra.mxu0 0
    %5644 = vmatprep.subr.bf16.mxu0 0
    %5645 = vmatpush1.bf16.msra.mxu0 0
    %5646 = vmatprep.subr.bf16.mxu0 0
    %5647 = vmatpush1.bf16.msra.mxu0 0
    %5648 = vmatprep.subr.bf16.mxu0 0
    %5649 = vmatpush1.bf16.msra.mxu0 0
    %5650 = vmatprep.subr.bf16.mxu0 0
    %5651 = vmatpush1.bf16.msra.mxu0 0
    %5652 = vmatprep.subr.bf16.mxu0 0
    %5653 = vmatpush1.bf16.msra.mxu0 0
    %5654 = vmatprep.subr.bf16.mxu0 0
    %5655 = vmatpush1.bf16.msra.mxu0 0
    %5656 = vmatprep.subr.bf16.mxu0 0
    %5657 = vmatpush1.bf16.msra.mxu0 0
    %5658 = vmatprep.mubr.bf16.mxu0 0
    %5659 = vmatmul.mubr.bf16.gmra.mrb[0].mxu0 %v5410
    %v5660 = vpop.f32.mrb[0].mxu0
    %v5661 = vadd.f32 0.0, %v5660
    %v5662 = vpop.f32.mrb[0].mxu0
    %v5663 = vadd.f32 0.0, %v5662
    %v5664 = vpop.f32.mrb[0].mxu0
    %v5665 = vadd.f32 0.0, %v5664
    %v5666 = vpop.f32.mrb[0].mxu0
    %v5667 = vadd.f32 0.0, %v5666
    %5668 = vmatprep.mubr.bf16.mxu0 0
    %5669 = vmatmul.mubr.bf16.gmra.mrb[0].mxu0 %v5411
    %v5670 = vpop.f32.mrb[0].mxu0
    %v5671 = vadd.f32 0.0, %v5670
    %v5672 = vpop.f32.mrb[0].mxu0
    %v5673 = vadd.f32 0.0, %v5672
    %v5674 = vpop.f32.mrb[0].mxu0
    %v5675 = vpop.f32.mrb[0].mxu0
    %5676 = vdwg.mxu0
    %5677 = vmatprep.subr.bf16.mxu0 %v5495
    %5678 = vmatpush1.bf16.msra.mxu0 %v5494
    %5679 = vmatprep.subr.bf16.mxu0 %v5504
    %5680 = vmatpush1.bf16.msra.mxu0 %v5503
    %5681 = vmatprep.subr.bf16.mxu0 0
    %5682 = vmatpush1.bf16.msra.mxu0 0
    %5683 = vmatprep.subr.bf16.mxu0 0
    %5684 = vmatpush1.bf16.msra.mxu0 0
    %5685 = vmatprep.subr.bf16.mxu0 0
    %5686 = vmatpush1.bf16.msra.mxu0 0
    %5687 = vmatprep.subr.bf16.mxu0 0
    %5688 = vmatpush1.bf16.msra.mxu0 0
    %5689 = vmatprep.subr.bf16.mxu0 0
    %5690 = vmatpush1.bf16.msra.mxu0 0
    %5691 = vmatprep.subr.bf16.mxu0 0
    %5692 = vmatpush1.bf16.msra.mxu0 0
    %5693 = vmatprep.subr.bf16.mxu0 0
    %5694 = vmatpush1.bf16.msra.mxu0 0
    %5695 = vmatprep.subr.bf16.mxu0 0
    %5696 = vmatpush1.bf16.msra.mxu0 0
    %5697 = vmatprep.subr.bf16.mxu0 0
    %5698 = vmatpush1.bf16.msra.mxu0 0
    %5699 = vmatprep.subr.bf16.mxu0 0
    %5700 = vmatpush1.bf16.msra.mxu0 0
    %5701 = vmatprep.subr.bf16.mxu0 0
    %5702 = vmatpush1.bf16.msra.mxu0 0
    %5703 = vmatprep.subr.bf16.mxu0 0
    %5704 = vmatpush1.bf16.msra.mxu0 0
    %5705 = vmatprep.subr.bf16.mxu0 0
    %5706 = vmatpush1.bf16.msra.mxu0 0
    %5707 = vmatprep.subr.bf16.mxu0 0
    %5708 = vmatpush1.bf16.msra.mxu0 0
    %5709 = vmatprep.mubr.bf16.mxu0 0
    %5710 = vmatmul.mubr.bf16.gmra.mrb[0].mxu0 %v5410
    %v5711 = vpop.f32.mrb[0].mxu0
    %v5712 = vadd.f32 0.0, %v5711
    %v5713 = vpop.f32.mrb[0].mxu0
    %v5714 = vadd.f32 0.0, %v5713
    %v5715 = vpop.f32.mrb[0].mxu0
    %v5716 = vadd.f32 0.0, %v5715
    %v5717 = vpop.f32.mrb[0].mxu0
    %v5718 = vadd.f32 0.0, %v5717
    %5719 = vmatprep.mubr.bf16.mxu0 0
    %5720 = vmatmul.mubr.bf16.gmra.mrb[0].mxu0 %v5411
    %v5721 = vpop.f32.mrb[0].mxu0
    %v5722 = vadd.f32 0.0, %v5721
    %v5723 = vpop.f32.mrb[0].mxu0
    %v5724 = vadd.f32 0.0, %v5723
    %v5725 = vpop.f32.mrb[0].mxu0
    %v5726 = vpop.f32.mrb[0].mxu0
    %5727 = vdwg.mxu0
    %5728 = vmatprep.subr.bf16.mxu0 0
    %5729 = vmatpush1.bf16.msra.mxu0 %v5496
    %5730 = vmatprep.subr.bf16.mxu0 0
    %5731 = vmatpush1.bf16.msra.mxu0 %v5505
    %5732 = vmatprep.subr.bf16.mxu0 0
    %5733 = vmatpush1.bf16.msra.mxu0 0
    %5734 = vmatprep.subr.bf16.mxu0 0
    %5735 = vmatpush1.bf16.msra.mxu0 0
    %5736 = vmatprep.subr.bf16.mxu0 0
    %5737 = vmatpush1.bf16.msra.mxu0 0
    %5738 = vmatprep.subr.bf16.mxu0 0
    %5739 = vmatpush1.bf16.msra.mxu0 0
    %5740 = vmatprep.subr.bf16.mxu0 0
    %5741 = vmatpush1.bf16.msra.mxu0 0
    %5742 = vmatprep.subr.bf16.mxu0 0
    %5743 = vmatpush1.bf16.msra.mxu0 0
    %5744 = vmatprep.subr.bf16.mxu0 0
    %5745 = vmatpush1.bf16.msra.mxu0 0
    %5746 = vmatprep.subr.bf16.mxu0 0
    %5747 = vmatpush1.bf16.msra.mxu0 0
    %5748 = vmatprep.subr.bf16.mxu0 0
    %5749 = vmatpush1.bf16.msra.mxu0 0
    %5750 = vmatprep.subr.bf16.mxu0 0
    %5751 = vmatpush1.bf16.msra.mxu0 0
    %5752 = vmatprep.subr.bf16.mxu0 0
    %5753 = vmatpush1.bf16.msra.mxu0 0
    %5754 = vmatprep.subr.bf16.mxu0 0
    %5755 = vmatpush1.bf16.msra.mxu0 0
    %5756 = vmatprep.subr.bf16.mxu0 0
    %5757 = vmatpush1.bf16.msra.mxu0 0
    %5758 = vmatprep.subr.bf16.mxu0 0
    %5759 = vmatpush1.bf16.msra.mxu0 0
    %5760 = vmatprep.mubr.bf16.mxu0 0
    %5761 = vmatmul.mubr.bf16.gmra.mrb[0].mxu0 %v5410
    %v5762 = vpop.f32.mrb[0].mxu0
    %v5763 = vadd.f32 0.0, %v5762
    %v5764 = vpop.f32.mrb[0].mxu0
    %v5765 = vpop.f32.mrb[0].mxu0
    %v5766 = vadd.f32 0.0, %v5765
    %v5767 = vpop.f32.mrb[0].mxu0
    %5768 = vmatprep.mubr.bf16.mxu0 0
    %5769 = vmatmul.mubr.bf16.gmra.mrb[0].mxu0 %v5411
    %v5770 = vpop.f32.mrb[0].mxu0
    %v5771 = vadd.f32 0.0, %v5770
    %v5772 = vpop.f32.mrb[0].mxu0
    %v5773 = vpop.f32.mrb[0].mxu0
    %v5774 = vpop.f32.mrb[0].mxu0
    %5775 = vdwg.mxu0
    %v5777 = vrot.slane %v5569, 4
    %vm5781 = vcmask 1043456
    %v5782 = vrot.slane %v5559, 4
    %v5783 = vrot.slane %v5563, 4
    %v5784 = vsel %vm5781, %v5782, %v5783
    %v5785 = vsel %vm5781, %v5783, %v5777
    %v5789 = vsel %vm5781, %v5777, %v5782
    %5790 = vset.pattern.permute.xlu0 18
    %5791 = vperm.xlu0 %5790, %v5389
    %v5792 = vpop.permute.xlu0 %5791
    %5794 = vset.pattern.permute.xlu0 18
    %5795 = vperm.xlu0 %5794, %v5390
    %v5796 = vpop.permute.xlu0 %5795
    %5798 = vset.pattern.permute.xlu0 18
    %5799 = vperm.xlu0 %5798, %v5391
    %v5800 = vpop.permute.xlu0 %5799
    %v5802 = vmul.f32 %v5789, %v5792
    %v5803 = vmul.f32 %v5784, %v5796
    %v5804 = vmul.f32 %v5785, %v5800
    %v5805 = vadd.f32 %v5802, 0.0
    %v5806 = vadd.f32 %v5803, 0.0
    %v5807 = vadd.f32 %v5804, 0.0
    %v5809 = vrot.slane %v5571, 5
    %vm5813 = vcmask 1042432
    %v5814 = vrot.slane %v5561, 5
    %v5815 = vrot.slane %v5565, 5
    %v5816 = vsel %vm5813, %v5814, %v5815
    %v5817 = vsel %vm5813, %v5815, %v5809
    %v5821 = vsel %vm5813, %v5809, %v5814
    %5822 = vset.pattern.permute.xlu0 19
    %5823 = vperm.xlu0 %5822, %v5389
    %v5824 = vpop.permute.xlu0 %5823
    %5826 = vset.pattern.permute.xlu0 19
    %5827 = vperm.xlu0 %5826, %v5390
    %v5828 = vpop.permute.xlu0 %5827
    %5830 = vset.pattern.permute.xlu0 19
    %5831 = vperm.xlu0 %5830, %v5391
    %v5832 = vpop.permute.xlu0 %5831
    %v5834 = vmul.f32 %v5821, %v5824
    %v5835 = vmul.f32 %v5816, %v5828
    %v5836 = vmul.f32 %v5817, %v5832
    %v5837 = vadd.f32 %v5805, %v5834
    %v5838 = vadd.f32 %v5806, %v5835
    %v5839 = vadd.f32 %v5807, %v5836
    %v5841 = vrot.slane %v5620, 6
    %vm5845 = vcmask 1041408
    %v5846 = vrot.slane %v5610, 6
    %v5847 = vrot.slane %v5614, 6
    %v5848 = vsel %vm5845, %v5846, %v5847
    %v5849 = vsel %vm5845, %v5847, %v5841
    %v5853 = vsel %vm5845, %v5841, %v5846
    %5854 = vset.pattern.permute.xlu0 20
    %5855 = vperm.xlu0 %5854, %v5389
    %v5856 = vpop.permute.xlu0 %5855
    %5858 = vset.pattern.permute.xlu0 20
    %5859 = vperm.xlu0 %5858, %v5390
    %v5860 = vpop.permute.xlu0 %5859
    %5862 = vset.pattern.permute.xlu0 20
    %5863 = vperm.xlu0 %5862, %v5391
    %v5864 = vpop.permute.xlu0 %5863
    %v5866 = vmul.f32 %v5853, %v5856
    %v5867 = vmul.f32 %v5848, %v5860
    %v5868 = vmul.f32 %v5849, %v5864
    %v5869 = vadd.f32 %v5837, %v5866
    %v5870 = vadd.f32 %v5838, %v5867
    %v5871 = vadd.f32 %v5839, %v5868
    %v5873 = vrot.slane %v5622, 7
    %v5877 = vrot.slane %v5612, 7
    %v5878 = vrot.slane %v5616, 7
    %v5879 = vsel %vm763, %v5877, %v5878
    %v5880 = vsel %vm763, %v5878, %v5873
    %v5884 = vsel %vm763, %v5873, %v5877
    %5885 = vset.pattern.permute.xlu0 21
    %5886 = vperm.xlu0 %5885, %v5389
    %v5887 = vpop.permute.xlu0 %5886
    %5889 = vset.pattern.permute.xlu0 21
    %5890 = vperm.xlu0 %5889, %v5390
    %v5891 = vpop.permute.xlu0 %5890
    %5893 = vset.pattern.permute.xlu0 21
    %5894 = vperm.xlu0 %5893, %v5391
    %v5895 = vpop.permute.xlu0 %5894
    %v5897 = vmul.f32 %v5884, %v5887
    %v5898 = vmul.f32 %v5879, %v5891
    %v5899 = vmul.f32 %v5880, %v5895
    %v5900 = vadd.f32 %v5869, %v5897
    %v5901 = vadd.f32 %v5870, %v5898
    %v5902 = vadd.f32 %v5871, %v5899
    %5903 = vset.pattern.permute.xlu0 22
    %5904 = vperm.xlu0 %5903, %v5389
    %v5905 = vpop.permute.xlu0 %5904
    %5907 = vset.pattern.permute.xlu0 22
    %5908 = vperm.xlu0 %5907, %v5390
    %v5909 = vpop.permute.xlu0 %5908
    %5911 = vset.pattern.permute.xlu0 22
    %5912 = vperm.xlu0 %5911, %v5391
    %v5913 = vpop.permute.xlu0 %5912
    %v5915 = vmul.f32 %v5661, %v5905
    %v5916 = vmul.f32 %v5665, %v5909
    %v5917 = vmul.f32 %v5671, %v5913
    %v5918 = vadd.f32 %v5900, %v5915
    %v5919 = vadd.f32 %v5901, %v5916
    %v5920 = vadd.f32 %v5902, %v5917
    %v5924 = vrot.slane %v5663, 1
    %v5925 = vrot.slane %v5667, 1
    %v5926 = vsel %vm1069, %v5924, %v5925
    %v5927 = vrot.slane %v5673, 1
    %v5928 = vsel %vm1069, %v5925, %v5927
    %v5933 = vsel %vm1069, %v5927, %v5924
    %5934 = vset.pattern.permute.xlu0 23
    %5935 = vperm.xlu0 %5934, %v5389
    %v5936 = vpop.permute.xlu0 %5935
    %5938 = vset.pattern.permute.xlu0 23
    %5939 = vperm.xlu0 %5938, %v5390
    %v5940 = vpop.permute.xlu0 %5939
    %5942 = vset.pattern.permute.xlu0 23
    %5943 = vperm.xlu0 %5942, %v5391
    %v5944 = vpop.permute.xlu0 %5943
    %v5946 = vmul.f32 %v5926, %v5936
    %v5947 = vmul.f32 %v5928, %v5940
    %v5948 = vmul.f32 %v5933, %v5944
    %v5949 = vadd.f32 %v5918, %v5946
    %v5950 = vadd.f32 %v5919, %v5947
    %v5951 = vadd.f32 %v5920, %v5948
    %vm5955 = vcmask 1045504
    %v5956 = vrot.slane %v5712, 2
    %v5957 = vrot.slane %v5716, 2
    %v5958 = vsel %vm5955, %v5956, %v5957
    %v5959 = vrot.slane %v5722, 2
    %v5960 = vsel %vm5955, %v5957, %v5959
    %v5965 = vsel %vm5955, %v5959, %v5956
    %5966 = vset.pattern.permute.xlu0 24
    %5967 = vperm.xlu0 %5966, %v5389
    %v5968 = vpop.permute.xlu0 %5967
    %5970 = vset.pattern.permute.xlu0 24
    %5971 = vperm.xlu0 %5970, %v5390
    %v5972 = vpop.permute.xlu0 %5971
    %5974 = vset.pattern.permute.xlu0 24
    %5975 = vperm.xlu0 %5974, %v5391
    %v5976 = vpop.permute.xlu0 %5975
    %v5978 = vmul.f32 %v5958, %v5968
    %v5979 = vmul.f32 %v5960, %v5972
    %v5980 = vmul.f32 %v5965, %v5976
    %v5981 = vadd.f32 %v5949, %v5978
    %v5982 = vadd.f32 %v5950, %v5979
    %v5983 = vadd.f32 %v5951, %v5980
    %vm5987 = vcmask 1044480
    %v5988 = vrot.slane %v5714, 3
    %v5989 = vrot.slane %v5718, 3
    %v5990 = vsel %vm5987, %v5988, %v5989
    %v5991 = vrot.slane %v5724, 3
    %v5992 = vsel %vm5987, %v5989, %v5991
    %v5997 = vsel %vm5987, %v5991, %v5988
    %5998 = vset.pattern.permute.xlu0 25
    %5999 = vperm.xlu0 %5998, %v5389
    %v6000 = vpop.permute.xlu0 %5999
    %6002 = vset.pattern.permute.xlu0 25
    %6003 = vperm.xlu0 %6002, %v5390
    %v6004 = vpop.permute.xlu0 %6003
    %6006 = vset.pattern.permute.xlu0 25
    %6007 = vperm.xlu0 %6006, %v5391
    %v6008 = vpop.permute.xlu0 %6007
    %v6010 = vmul.f32 %v5990, %v6000
    %v6011 = vmul.f32 %v5992, %v6004
    %v6012 = vmul.f32 %v5997, %v6008
    %v6013 = vadd.f32 %v5981, %v6010
    %v6014 = vadd.f32 %v5982, %v6011
    %v6015 = vadd.f32 %v5983, %v6012
    %v6019 = vrot.slane %v5763, 4
    %v6020 = vrot.slane %v5766, 4
    %v6021 = vsel %vm5781, %v6019, %v6020
    %v6022 = vrot.slane %v5771, 4
    %v6023 = vsel %vm5781, %v6020, %v6022
    %v6028 = vsel %vm5781, %v6022, %v6019
    %6029 = vset.pattern.permute.xlu0 26
    %6030 = vperm.xlu0 %6029, %v5389
    %v6031 = vpop.permute.xlu0 %6030
    %6033 = vset.pattern.permute.xlu0 26
    %6034 = vperm.xlu0 %6033, %v5390
    %v6035 = vpop.permute.xlu0 %6034
    %6037 = vset.pattern.permute.xlu0 26
    %6038 = vperm.xlu0 %6037, %v5391
    %v6039 = vpop.permute.xlu0 %6038
    %v6041 = vmul.f32 %v6021, %v6031
    %v6042 = vmul.f32 %v6023, %v6035
    %v6043 = vmul.f32 %v6028, %v6039
    %v6044 = vadd.f32 %v6013, %v6041
    %v6045 = vadd.f32 %v6014, %v6042
    %v6046 = vadd.f32 %v6015, %v6043
    %v6047 = vld [vmem:[#allocation9 + $0x3] sm:$0x1]
    %v6048 = vlaneseq
    %v6049 = vshrl.u32 %v6048, 7
    %v6050 = vsub.s32 0, %v6049
    %v6051 = vrot.slane %v6047, %v6050
    %v6052 = vadd.f32 %v6044, %v6051
    %v6053 = vadd.f32 %v6045, %v6051
    %v6054 = vadd.f32 %v6046, %v6051
    %v6055 = vmax.f32 %v6052, 0.0
    %v6056 = vmax.f32 %v6053, 0.0
    %v6057 = vmax.f32 %v6054, 0.0
    %6058 = vset.pattern.permute.xlu0 37
    %6059 = vperm.xlu0 %6058, %v5389
    %v6060 = vpop.permute.xlu0 %6059
    %6062 = vset.pattern.permute.xlu0 37
    %6063 = vperm.xlu0 %6062, %v5390
    %v6064 = vpop.permute.xlu0 %6063
    %6066 = vset.pattern.permute.xlu0 37
    %6067 = vperm.xlu0 %6066, %v5391
    %v6068 = vpop.permute.xlu0 %6067
    %v6070 = vmul.f32 %v6055, %v6060
    %v6071 = vmul.f32 %v6056, %v6064
    %v6072 = vmul.f32 %v6057, %v6068
    %v6073 = vpack.c.bf16 %v6071, %v6070
    %v6074 = vpack.c.bf16 %v6072, %v6072
    %v6075 = vld [vmem:[#allocation2 + $0x120] sm:$0xff]
    %v6076 = vld [vmem:[#allocation2 + $0x128] sm:$0xff]
    %v6077 = vld [vmem:[#allocation2 + $0x130] sm:$0xff]
    %v6078 = vld [vmem:[#allocation2 + $0x138] sm:$0xff]
    %v6079 = vld [vmem:[#allocation2 + $0x140] sm:$0xf]
    %v6080 = vld [vmem:[#allocation2 + $0x144] sm:$0xff]
    %v6081 = vld [vmem:[#allocation2 + $0x14c] sm:$0xff]
    %v6082 = vld [vmem:[#allocation2 + $0x154] sm:$0xff]
    %v6083 = vld [vmem:[#allocation2 + $0x15c] sm:$0xff]
    %v6084 = vld [vmem:[#allocation2 + $0x164] sm:$0xf]
    %v6085 = vld [vmem:[#allocation2 + $0x168] sm:$0xff]
    %v6086 = vld [vmem:[#allocation2 + $0x170] sm:$0xff]
    %v6087 = vld [vmem:[#allocation2 + $0x178] sm:$0xff]
    %v6088 = vld [vmem:[#allocation2 + $0x180] sm:$0xff]
    %v6089 = vld [vmem:[#allocation2 + $0x188] sm:$0xf]
    %v6090 = vld [vmem:[#allocation2 + $0x18c] sm:$0xff]
    %v6091 = vld [vmem:[#allocation2 + $0x194] sm:$0xff]
    %v6092 = vld [vmem:[#allocation2 + $0x19c] sm:$0xff]
    %v6093 = vld [vmem:[#allocation2 + $0x1a4] sm:$0xff]
    %v6094 = vld [vmem:[#allocation2 + $0x1ac] sm:$0xf]
    %v6115 = vunpack.c.l.b16 %v6075
    %v6116 = vunpack.c.h.b16 %v6075
    %v6117 = vunpack.c.l.b16 %v6076
    %v6118 = vunpack.c.h.b16 %v6076
    %v6119 = vunpack.c.l.b16 %v6077
    %v6120 = vunpack.c.h.b16 %v6077
    %v6121 = vunpack.c.l.b16 %v6078
    %v6122 = vunpack.c.h.b16 %v6078
    %v6123 = vunpack.c.l.b16 %v6079
    %v6124 = vunpack.c.l.b16 %v6080
    %v6125 = vunpack.c.h.b16 %v6080
    %v6126 = vunpack.c.l.b16 %v6081
    %v6127 = vunpack.c.h.b16 %v6081
    %v6128 = vunpack.c.l.b16 %v6082
    %v6129 = vunpack.c.h.b16 %v6082
    %v6130 = vunpack.c.l.b16 %v6083
    %v6131 = vunpack.c.h.b16 %v6083
    %v6132 = vunpack.c.l.b16 %v6084
    %v6133 = vunpack.c.l.b16 %v6085
    %v6134 = vunpack.c.h.b16 %v6085
    %v6135 = vunpack.c.l.b16 %v6086
    %v6136 = vunpack.c.h.b16 %v6086
    %v6137 = vunpack.c.l.b16 %v6087
    %v6138 = vunpack.c.h.b16 %v6087
    %v6139 = vunpack.c.l.b16 %v6088
    %v6140 = vunpack.c.h.b16 %v6088
    %v6141 = vunpack.c.l.b16 %v6089
    %v6142 = vunpack.c.l.b16 %v6090
    %v6143 = vunpack.c.h.b16 %v6090
    %v6144 = vunpack.c.l.b16 %v6091
    %v6145 = vunpack.c.h.b16 %v6091
    %v6146 = vunpack.c.l.b16 %v6092
    %v6147 = vunpack.c.h.b16 %v6092
    %v6148 = vunpack.c.l.b16 %v6093
    %v6149 = vunpack.c.h.b16 %v6093
    %v6150 = vunpack.c.l.b16 %v6094
    %v6151 = vpack.c.b16 %v6124, %v6115
    %v6152 = vpack.c.b16 %v6125, %v6116
    %v6153 = vpack.c.b16 %v6126, %v6117
    %v6154 = vpack.c.b16 %v6127, %v6118
    %v6155 = vpack.c.b16 %v6128, %v6119
    %v6156 = vpack.c.b16 %v6129, %v6120
    %v6157 = vpack.c.b16 %v6130, %v6121
    %v6158 = vpack.c.b16 %v6131, %v6122
    %v6159 = vpack.c.b16 %v6132, %v6123
    %v6160 = vpack.c.b16 %v6142, %v6133
    %v6161 = vpack.c.b16 %v6143, %v6134
    %v6162 = vpack.c.b16 %v6144, %v6135
    %v6163 = vpack.c.b16 %v6145, %v6136
    %v6164 = vpack.c.b16 %v6146, %v6137
    %v6165 = vpack.c.b16 %v6147, %v6138
    %v6166 = vpack.c.b16 %v6148, %v6139
    %v6167 = vpack.c.b16 %v6149, %v6140
    %v6168 = vpack.c.b16 %v6150, %v6141
    %6187 = vmatprep.subr.bf16.mxu0 %v6152
    %6188 = vmatpush1.bf16.msra.mxu0 %v6151
    %6189 = vmatprep.subr.bf16.mxu0 %v6161
    %6190 = vmatpush1.bf16.msra.mxu0 %v6160
    %6191 = vmatprep.subr.bf16.mxu0 0
    %6192 = vmatpush1.bf16.msra.mxu0 0
    %6193 = vmatprep.subr.bf16.mxu0 0
    %6194 = vmatpush1.bf16.msra.mxu0 0
    %6195 = vmatprep.subr.bf16.mxu0 0
    %6196 = vmatpush1.bf16.msra.mxu0 0
    %6197 = vmatprep.subr.bf16.mxu0 0
    %6198 = vmatpush1.bf16.msra.mxu0 0
    %6199 = vmatprep.subr.bf16.mxu0 0
    %6200 = vmatpush1.bf16.msra.mxu0 0
    %6201 = vmatprep.subr.bf16.mxu0 0
    %6202 = vmatpush1.bf16.msra.mxu0 0
    %6203 = vmatprep.subr.bf16.mxu0 0
    %6204 = vmatpush1.bf16.msra.mxu0 0
    %6205 = vmatprep.subr.bf16.mxu0 0
    %6206 = vmatpush1.bf16.msra.mxu0 0
    %6207 = vmatprep.subr.bf16.mxu0 0
    %6208 = vmatpush1.bf16.msra.mxu0 0
    %6209 = vmatprep.subr.bf16.mxu0 0
    %6210 = vmatpush1.bf16.msra.mxu0 0
    %6211 = vmatprep.subr.bf16.mxu0 0
    %6212 = vmatpush1.bf16.msra.mxu0 0
    %6213 = vmatprep.subr.bf16.mxu0 0
    %6214 = vmatpush1.bf16.msra.mxu0 0
    %6215 = vmatprep.subr.bf16.mxu0 0
    %6216 = vmatpush1.bf16.msra.mxu0 0
    %6217 = vmatprep.subr.bf16.mxu0 0
    %6218 = vmatpush1.bf16.msra.mxu0 0
    %6219 = vmatprep.mubr.bf16.mxu0 0
    %6220 = vmatmul.mubr.bf16.gmra.mrb[0].mxu0 %v6073
    %v6221 = vpop.f32.mrb[0].mxu0
    %v6222 = vadd.f32 0.0, %v6221
    %v6223 = vpop.f32.mrb[0].mxu0
    %v6224 = vadd.f32 0.0, %v6223
    %v6225 = vpop.f32.mrb[0].mxu0
    %v6226 = vadd.f32 0.0, %v6225
    %v6227 = vpop.f32.mrb[0].mxu0
    %v6228 = vadd.f32 0.0, %v6227
    %6229 = vmatprep.mubr.bf16.mxu0 0
    %6230 = vmatmul.mubr.bf16.gmra.mrb[0].mxu0 %v6074
    %v6231 = vpop.f32.mrb[0].mxu0
    %v6232 = vadd.f32 0.0, %v6231
    %v6233 = vpop.f32.mrb[0].mxu0
    %v6234 = vadd.f32 0.0, %v6233
    %v6235 = vpop.f32.mrb[0].mxu0
    %v6236 = vpop.f32.mrb[0].mxu0
    %6237 = vdwg.mxu0
    %6238 = vmatprep.subr.bf16.mxu0 %v6154
    %6239 = vmatpush1.bf16.msra.mxu0 %v6153
    %6240 = vmatprep.subr.bf16.mxu0 %v6163
    %6241 = vmatpush1.bf16.msra.mxu0 %v6162
    %6242 = vmatprep.subr.bf16.mxu0 0
    %6243 = vmatpush1.bf16.msra.mxu0 0
    %6244 = vmatprep.subr.bf16.mxu0 0
    %6245 = vmatpush1.bf16.msra.mxu0 0
    %6246 = vmatprep.subr.bf16.mxu0 0
    %6247 = vmatpush1.bf16.msra.mxu0 0
    %6248 = vmatprep.subr.bf16.mxu0 0
    %6249 = vmatpush1.bf16.msra.mxu0 0
    %6250 = vmatprep.subr.bf16.mxu0 0
    %6251 = vmatpush1.bf16.msra.mxu0 0
    %6252 = vmatprep.subr.bf16.mxu0 0
    %6253 = vmatpush1.bf16.msra.mxu0 0
    %6254 = vmatprep.subr.bf16.mxu0 0
    %6255 = vmatpush1.bf16.msra.mxu0 0
    %6256 = vmatprep.subr.bf16.mxu0 0
    %6257 = vmatpush1.bf16.msra.mxu0 0
    %6258 = vmatprep.subr.bf16.mxu0 0
    %6259 = vmatpush1.bf16.msra.mxu0 0
    %6260 = vmatprep.subr.bf16.mxu0 0
    %6261 = vmatpush1.bf16.msra.mxu0 0
    %6262 = vmatprep.subr.bf16.mxu0 0
    %6263 = vmatpush1.bf16.msra.mxu0 0
    %6264 = vmatprep.subr.bf16.mxu0 0
    %6265 = vmatpush1.bf16.msra.mxu0 0
    %6266 = vmatprep.subr.bf16.mxu0 0
    %6267 = vmatpush1.bf16.msra.mxu0 0
    %6268 = vmatprep.subr.bf16.mxu0 0
    %6269 = vmatpush1.bf16.msra.mxu0 0
    %6270 = vmatprep.mubr.bf16.mxu0 0
    %6271 = vmatmul.mubr.bf16.gmra.mrb[0].mxu0 %v6073
    %v6272 = vpop.f32.mrb[0].mxu0
    %v6273 = vadd.f32 0.0, %v6272
    %v6274 = vpop.f32.mrb[0].mxu0
    %v6275 = vadd.f32 0.0, %v6274
    %v6276 = vpop.f32.mrb[0].mxu0
    %v6277 = vadd.f32 0.0, %v6276
    %v6278 = vpop.f32.mrb[0].mxu0
    %v6279 = vadd.f32 0.0, %v6278
    %6280 = vmatprep.mubr.bf16.mxu0 0
    %6281 = vmatmul.mubr.bf16.gmra.mrb[0].mxu0 %v6074
    %v6282 = vpop.f32.mrb[0].mxu0
    %v6283 = vadd.f32 0.0, %v6282
    %v6284 = vpop.f32.mrb[0].mxu0
    %v6285 = vadd.f32 0.0, %v6284
    %v6286 = vpop.f32.mrb[0].mxu0
    %v6287 = vpop.f32.mrb[0].mxu0
    %6288 = vdwg.mxu0
    %6289 = vmatprep.subr.bf16.mxu0 %v6156
    %6290 = vmatpush1.bf16.msra.mxu0 %v6155
    %6291 = vmatprep.subr.bf16.mxu0 %v6165
    %6292 = vmatpush1.bf16.msra.mxu0 %v6164
    %6293 = vmatprep.subr.bf16.mxu0 0
    %6294 = vmatpush1.bf16.msra.mxu0 0
    %6295 = vmatprep.subr.bf16.mxu0 0
    %6296 = vmatpush1.bf16.msra.mxu0 0
    %6297 = vmatprep.subr.bf16.mxu0 0
    %6298 = vmatpush1.bf16.msra.mxu0 0
    %6299 = vmatprep.subr.bf16.mxu0 0
    %6300 = vmatpush1.bf16.msra.mxu0 0
    %6301 = vmatprep.subr.bf16.mxu0 0
    %6302 = vmatpush1.bf16.msra.mxu0 0
    %6303 = vmatprep.subr.bf16.mxu0 0
    %6304 = vmatpush1.bf16.msra.mxu0 0
    %6305 = vmatprep.subr.bf16.mxu0 0
    %6306 = vmatpush1.bf16.msra.mxu0 0
    %6307 = vmatprep.subr.bf16.mxu0 0
    %6308 = vmatpush1.bf16.msra.mxu0 0
    %6309 = vmatprep.subr.bf16.mxu0 0
    %6310 = vmatpush1.bf16.msra.mxu0 0
    %6311 = vmatprep.subr.bf16.mxu0 0
    %6312 = vmatpush1.bf16.msra.mxu0 0
    %6313 = vmatprep.subr.bf16.mxu0 0
    %6314 = vmatpush1.bf16.msra.mxu0 0
    %6315 = vmatprep.subr.bf16.mxu0 0
    %6316 = vmatpush1.bf16.msra.mxu0 0
    %6317 = vmatprep.subr.bf16.mxu0 0
    %6318 = vmatpush1.bf16.msra.mxu0 0
    %6319 = vmatprep.subr.bf16.mxu0 0
    %6320 = vmatpush1.bf16.msra.mxu0 0
    %6321 = vmatprep.mubr.bf16.mxu0 0
    %6322 = vmatmul.mubr.bf16.gmra.mrb[0].mxu0 %v6073
    %v6323 = vpop.f32.mrb[0].mxu0
    %v6324 = vadd.f32 0.0, %v6323
    %v6325 = vpop.f32.mrb[0].mxu0
    %v6326 = vadd.f32 0.0, %v6325
    %v6327 = vpop.f32.mrb[0].mxu0
    %v6328 = vadd.f32 0.0, %v6327
    %v6329 = vpop.f32.mrb[0].mxu0
    %v6330 = vadd.f32 0.0, %v6329
    %6331 = vmatprep.mubr.bf16.mxu0 0
    %6332 = vmatmul.mubr.bf16.gmra.mrb[0].mxu0 %v6074
    %v6333 = vpop.f32.mrb[0].mxu0
    %v6334 = vadd.f32 0.0, %v6333
    %v6335 = vpop.f32.mrb[0].mxu0
    %v6336 = vadd.f32 0.0, %v6335
    %v6337 = vpop.f32.mrb[0].mxu0
    %v6338 = vpop.f32.mrb[0].mxu0
    %6339 = vdwg.mxu0
    %6340 = vmatprep.subr.bf16.mxu0 %v6158
    %6341 = vmatpush1.bf16.msra.mxu0 %v6157
    %6342 = vmatprep.subr.bf16.mxu0 %v6167
    %6343 = vmatpush1.bf16.msra.mxu0 %v6166
    %6344 = vmatprep.subr.bf16.mxu0 0
    %6345 = vmatpush1.bf16.msra.mxu0 0
    %6346 = vmatprep.subr.bf16.mxu0 0
    %6347 = vmatpush1.bf16.msra.mxu0 0
    %6348 = vmatprep.subr.bf16.mxu0 0
    %6349 = vmatpush1.bf16.msra.mxu0 0
    %6350 = vmatprep.subr.bf16.mxu0 0
    %6351 = vmatpush1.bf16.msra.mxu0 0
    %6352 = vmatprep.subr.bf16.mxu0 0
    %6353 = vmatpush1.bf16.msra.mxu0 0
    %6354 = vmatprep.subr.bf16.mxu0 0
    %6355 = vmatpush1.bf16.msra.mxu0 0
    %6356 = vmatprep.subr.bf16.mxu0 0
    %6357 = vmatpush1.bf16.msra.mxu0 0
    %6358 = vmatprep.subr.bf16.mxu0 0
    %6359 = vmatpush1.bf16.msra.mxu0 0
    %6360 = vmatprep.subr.bf16.mxu0 0
    %6361 = vmatpush1.bf16.msra.mxu0 0
    %6362 = vmatprep.subr.bf16.mxu0 0
    %6363 = vmatpush1.bf16.msra.mxu0 0
    %6364 = vmatprep.subr.bf16.mxu0 0
    %6365 = vmatpush1.bf16.msra.mxu0 0
    %6366 = vmatprep.subr.bf16.mxu0 0
    %6367 = vmatpush1.bf16.msra.mxu0 0
    %6368 = vmatprep.subr.bf16.mxu0 0
    %6369 = vmatpush1.bf16.msra.mxu0 0
    %6370 = vmatprep.subr.bf16.mxu0 0
    %6371 = vmatpush1.bf16.msra.mxu0 0
    %6372 = vmatprep.mubr.bf16.mxu0 0
    %6373 = vmatmul.mubr.bf16.gmra.mrb[0].mxu0 %v6073
    %v6374 = vpop.f32.mrb[0].mxu0
    %v6375 = vadd.f32 0.0, %v6374
    %v6376 = vpop.f32.mrb[0].mxu0
    %v6377 = vadd.f32 0.0, %v6376
    %v6378 = vpop.f32.mrb[0].mxu0
    %v6379 = vadd.f32 0.0, %v6378
    %v6380 = vpop.f32.mrb[0].mxu0
    %v6381 = vadd.f32 0.0, %v6380
    %6382 = vmatprep.mubr.bf16.mxu0 0
    %6383 = vmatmul.mubr.bf16.gmra.mrb[0].mxu0 %v6074
    %v6384 = vpop.f32.mrb[0].mxu0
    %v6385 = vadd.f32 0.0, %v6384
    %v6386 = vpop.f32.mrb[0].mxu0
    %v6387 = vadd.f32 0.0, %v6386
    %v6388 = vpop.f32.mrb[0].mxu0
    %v6389 = vpop.f32.mrb[0].mxu0
    %6390 = vdwg.mxu0
    %6391 = vmatprep.subr.bf16.mxu0 0
    %6392 = vmatpush1.bf16.msra.mxu0 %v6159
    %6393 = vmatprep.subr.bf16.mxu0 0
    %6394 = vmatpush1.bf16.msra.mxu0 %v6168
    %6395 = vmatprep.subr.bf16.mxu0 0
    %6396 = vmatpush1.bf16.msra.mxu0 0
    %6397 = vmatprep.subr.bf16.mxu0 0
    %6398 = vmatpush1.bf16.msra.mxu0 0
    %6399 = vmatprep.subr.bf16.mxu0 0
    %6400 = vmatpush1.bf16.msra.mxu0 0
    %6401 = vmatprep.subr.bf16.mxu0 0
    %6402 = vmatpush1.bf16.msra.mxu0 0
    %6403 = vmatprep.subr.bf16.mxu0 0
    %6404 = vmatpush1.bf16.msra.mxu0 0
    %6405 = vmatprep.subr.bf16.mxu0 0
    %6406 = vmatpush1.bf16.msra.mxu0 0
    %6407 = vmatprep.subr.bf16.mxu0 0
    %6408 = vmatpush1.bf16.msra.mxu0 0
    %6409 = vmatprep.subr.bf16.mxu0 0
    %6410 = vmatpush1.bf16.msra.mxu0 0
    %6411 = vmatprep.subr.bf16.mxu0 0
    %6412 = vmatpush1.bf16.msra.mxu0 0
    %6413 = vmatprep.subr.bf16.mxu0 0
    %6414 = vmatpush1.bf16.msra.mxu0 0
    %6415 = vmatprep.subr.bf16.mxu0 0
    %6416 = vmatpush1.bf16.msra.mxu0 0
    %6417 = vmatprep.subr.bf16.mxu0 0
    %6418 = vmatpush1.bf16.msra.mxu0 0
    %6419 = vmatprep.subr.bf16.mxu0 0
    %6420 = vmatpush1.bf16.msra.mxu0 0
    %6421 = vmatprep.subr.bf16.mxu0 0
    %6422 = vmatpush1.bf16.msra.mxu0 0
    %6423 = vmatprep.mubr.bf16.mxu0 0
    %6424 = vmatmul.mubr.bf16.gmra.mrb[0].mxu0 %v6073
    %v6425 = vpop.f32.mrb[0].mxu0
    %v6426 = vadd.f32 0.0, %v6425
    %v6427 = vpop.f32.mrb[0].mxu0
    %v6428 = vpop.f32.mrb[0].mxu0
    %v6429 = vadd.f32 0.0, %v6428
    %v6430 = vpop.f32.mrb[0].mxu0
    %6431 = vmatprep.mubr.bf16.mxu0 0
    %6432 = vmatmul.mubr.bf16.gmra.mrb[0].mxu0 %v6074
    %v6433 = vpop.f32.mrb[0].mxu0
    %v6434 = vadd.f32 0.0, %v6433
    %v6435 = vpop.f32.mrb[0].mxu0
    %v6436 = vpop.f32.mrb[0].mxu0
    %v6437 = vpop.f32.mrb[0].mxu0
    %6438 = vdwg.mxu0
    %v6440 = vrot.slane %v6232, 4
    %v6444 = vrot.slane %v6222, 4
    %v6445 = vrot.slane %v6226, 4
    %v6446 = vsel %vm5781, %v6444, %v6445
    %v6447 = vsel %vm5781, %v6445, %v6440
    %v6451 = vsel %vm5781, %v6440, %v6444
    %6452 = vset.pattern.permute.xlu0 27
    %6453 = vperm.xlu0 %6452, %v5389
    %v6454 = vpop.permute.xlu0 %6453
    %6456 = vset.pattern.permute.xlu0 27
    %6457 = vperm.xlu0 %6456, %v5390
    %v6458 = vpop.permute.xlu0 %6457
    %6460 = vset.pattern.permute.xlu0 27
    %6461 = vperm.xlu0 %6460, %v5391
    %v6462 = vpop.permute.xlu0 %6461
    %v6464 = vmul.f32 %v6451, %v6454
    %v6465 = vmul.f32 %v6446, %v6458
    %v6466 = vmul.f32 %v6447, %v6462
    %v6467 = vadd.f32 %v6464, 0.0
    %v6468 = vadd.f32 %v6465, 0.0
    %v6469 = vadd.f32 %v6466, 0.0
    %v6471 = vrot.slane %v6234, 5
    %v6475 = vrot.slane %v6224, 5
    %v6476 = vrot.slane %v6228, 5
    %v6477 = vsel %vm5813, %v6475, %v6476
    %v6478 = vsel %vm5813, %v6476, %v6471
    %v6482 = vsel %vm5813, %v6471, %v6475
    %6483 = vset.pattern.permute.xlu0 28
    %6484 = vperm.xlu0 %6483, %v5389
    %v6485 = vpop.permute.xlu0 %6484
    %6487 = vset.pattern.permute.xlu0 28
    %6488 = vperm.xlu0 %6487, %v5390
    %v6489 = vpop.permute.xlu0 %6488
    %6491 = vset.pattern.permute.xlu0 28
    %6492 = vperm.xlu0 %6491, %v5391
    %v6493 = vpop.permute.xlu0 %6492
    %v6495 = vmul.f32 %v6482, %v6485
    %v6496 = vmul.f32 %v6477, %v6489
    %v6497 = vmul.f32 %v6478, %v6493
    %v6498 = vadd.f32 %v6467, %v6495
    %v6499 = vadd.f32 %v6468, %v6496
    %v6500 = vadd.f32 %v6469, %v6497
    %v6502 = vrot.slane %v6283, 6
    %v6506 = vrot.slane %v6273, 6
    %v6507 = vrot.slane %v6277, 6
    %v6508 = vsel %vm5845, %v6506, %v6507
    %v6509 = vsel %vm5845, %v6507, %v6502
    %v6513 = vsel %vm5845, %v6502, %v6506
    %6514 = vset.pattern.permute.xlu0 29
    %6515 = vperm.xlu0 %6514, %v5389
    %v6516 = vpop.permute.xlu0 %6515
    %6518 = vset.pattern.permute.xlu0 29
    %6519 = vperm.xlu0 %6518, %v5390
    %v6520 = vpop.permute.xlu0 %6519
    %6522 = vset.pattern.permute.xlu0 29
    %6523 = vperm.xlu0 %6522, %v5391
    %v6524 = vpop.permute.xlu0 %6523
    %v6526 = vmul.f32 %v6513, %v6516
    %v6527 = vmul.f32 %v6508, %v6520
    %v6528 = vmul.f32 %v6509, %v6524
    %v6529 = vadd.f32 %v6498, %v6526
    %v6530 = vadd.f32 %v6499, %v6527
    %v6531 = vadd.f32 %v6500, %v6528
    %v6533 = vrot.slane %v6285, 7
    %v6537 = vrot.slane %v6275, 7
    %v6538 = vrot.slane %v6279, 7
    %v6539 = vsel %vm763, %v6537, %v6538
    %v6540 = vsel %vm763, %v6538, %v6533
    %v6544 = vsel %vm763, %v6533, %v6537
    %6545 = vset.pattern.permute.xlu0 30
    %6546 = vperm.xlu0 %6545, %v5389
    %v6547 = vpop.permute.xlu0 %6546
    %6549 = vset.pattern.permute.xlu0 30
    %6550 = vperm.xlu0 %6549, %v5390
    %v6551 = vpop.permute.xlu0 %6550
    %6553 = vset.pattern.permute.xlu0 30
    %6554 = vperm.xlu0 %6553, %v5391
    %v6555 = vpop.permute.xlu0 %6554
    %v6557 = vmul.f32 %v6544, %v6547
    %v6558 = vmul.f32 %v6539, %v6551
    %v6559 = vmul.f32 %v6540, %v6555
    %v6560 = vadd.f32 %v6529, %v6557
    %v6561 = vadd.f32 %v6530, %v6558
    %v6562 = vadd.f32 %v6531, %v6559
    %6563 = vset.pattern.permute.xlu0 31
    %6564 = vperm.xlu0 %6563, %v5389
    %v6565 = vpop.permute.xlu0 %6564
    %6567 = vset.pattern.permute.xlu0 31
    %6568 = vperm.xlu0 %6567, %v5390
    %v6569 = vpop.permute.xlu0 %6568
    %6571 = vset.pattern.permute.xlu0 31
    %6572 = vperm.xlu0 %6571, %v5391
    %v6573 = vpop.permute.xlu0 %6572
    %v6575 = vmul.f32 %v6324, %v6565
    %v6576 = vmul.f32 %v6328, %v6569
    %v6577 = vmul.f32 %v6334, %v6573
    %v6578 = vadd.f32 %v6560, %v6575
    %v6579 = vadd.f32 %v6561, %v6576
    %v6580 = vadd.f32 %v6562, %v6577
    %v6584 = vrot.slane %v6326, 1
    %v6585 = vrot.slane %v6330, 1
    %v6586 = vsel %vm1069, %v6584, %v6585
    %v6587 = vrot.slane %v6336, 1
    %v6588 = vsel %vm1069, %v6585, %v6587
    %v6593 = vsel %vm1069, %v6587, %v6584
    %6594 = vset.pattern.permute.xlu0 32
    %6595 = vperm.xlu0 %6594, %v5389
    %v6596 = vpop.permute.xlu0 %6595
    %6598 = vset.pattern.permute.xlu0 32
    %6599 = vperm.xlu0 %6598, %v5390
    %v6600 = vpop.permute.xlu0 %6599
    %6602 = vset.pattern.permute.xlu0 32
    %6603 = vperm.xlu0 %6602, %v5391
    %v6604 = vpop.permute.xlu0 %6603
    %v6606 = vmul.f32 %v6586, %v6596
    %v6607 = vmul.f32 %v6588, %v6600
    %v6608 = vmul.f32 %v6593, %v6604
    %v6609 = vadd.f32 %v6578, %v6606
    %v6610 = vadd.f32 %v6579, %v6607
    %v6611 = vadd.f32 %v6580, %v6608
    %v6615 = vrot.slane %v6375, 2
    %v6616 = vrot.slane %v6379, 2
    %v6617 = vsel %vm5955, %v6615, %v6616
    %v6618 = vrot.slane %v6385, 2
    %v6619 = vsel %vm5955, %v6616, %v6618
    %v6624 = vsel %vm5955, %v6618, %v6615
    %6625 = vset.pattern.permute.xlu0 33
    %6626 = vperm.xlu0 %6625, %v5389
    %v6627 = vpop.permute.xlu0 %6626
    %6629 = vset.pattern.permute.xlu0 33
    %6630 = vperm.xlu0 %6629, %v5390
    %v6631 = vpop.permute.xlu0 %6630
    %6633 = vset.pattern.permute.xlu0 33
    %6634 = vperm.xlu0 %6633, %v5391
    %v6635 = vpop.permute.xlu0 %6634
    %v6637 = vmul.f32 %v6617, %v6627
    %v6638 = vmul.f32 %v6619, %v6631
    %v6639 = vmul.f32 %v6624, %v6635
    %v6640 = vadd.f32 %v6609, %v6637
    %v6641 = vadd.f32 %v6610, %v6638
    %v6642 = vadd.f32 %v6611, %v6639
    %v6646 = vrot.slane %v6377, 3
    %v6647 = vrot.slane %v6381, 3
    %v6648 = vsel %vm5987, %v6646, %v6647
    %v6649 = vrot.slane %v6387, 3
    %v6650 = vsel %vm5987, %v6647, %v6649
    %v6655 = vsel %vm5987, %v6649, %v6646
    %6656 = vset.pattern.permute.xlu0 34
    %6657 = vperm.xlu0 %6656, %v5389
    %v6658 = vpop.permute.xlu0 %6657
    %6660 = vset.pattern.permute.xlu0 34
    %6661 = vperm.xlu0 %6660, %v5390
    %v6662 = vpop.permute.xlu0 %6661
    %6664 = vset.pattern.permute.xlu0 34
    %6665 = vperm.xlu0 %6664, %v5391
    %v6666 = vpop.permute.xlu0 %6665
    %v6668 = vmul.f32 %v6648, %v6658
    %v6669 = vmul.f32 %v6650, %v6662
    %v6670 = vmul.f32 %v6655, %v6666
    %v6671 = vadd.f32 %v6640, %v6668
    %v6672 = vadd.f32 %v6641, %v6669
    %v6673 = vadd.f32 %v6642, %v6670
    %v6677 = vrot.slane %v6426, 4
    %v6678 = vrot.slane %v6429, 4
    %v6679 = vsel %vm5781, %v6677, %v6678
    %v6680 = vrot.slane %v6434, 4
    %v6681 = vsel %vm5781, %v6678, %v6680
    %v6686 = vsel %vm5781, %v6680, %v6677
    %6687 = vset.pattern.permute.xlu0 35
    %6688 = vperm.xlu0 %6687, %v5389
    %v6689 = vpop.permute.xlu0 %6688
    %6691 = vset.pattern.permute.xlu0 35
    %6692 = vperm.xlu0 %6691, %v5390
    %v6693 = vpop.permute.xlu0 %6692
    %6695 = vset.pattern.permute.xlu0 35
    %6696 = vperm.xlu0 %6695, %v5391
    %v6697 = vpop.permute.xlu0 %6696
    %v6699 = vmul.f32 %v6679, %v6689
    %v6700 = vmul.f32 %v6681, %v6693
    %v6701 = vmul.f32 %v6686, %v6697
    %v6702 = vadd.f32 %v6671, %v6699
    %v6703 = vadd.f32 %v6672, %v6700
    %v6704 = vadd.f32 %v6673, %v6701
    %v6705 = vld [vmem:[#allocation9 + $0x4] sm:$0x1]
    %v6706 = vlaneseq
    %v6707 = vshrl.u32 %v6706, 7
    %v6708 = vsub.s32 0, %v6707
    %v6709 = vrot.slane %v6705, %v6708
    %v6710 = vadd.f32 %v6702, %v6709
    %v6711 = vadd.f32 %v6703, %v6709
    %v6712 = vadd.f32 %v6704, %v6709
    %v6713 = vmax.f32 %v6710, 0.0
    %v6714 = vmax.f32 %v6711, 0.0
    %v6715 = vmax.f32 %v6712, 0.0
    %6716 = vset.pattern.permute.xlu0 38
    %6717 = vperm.xlu0 %6716, %v5389
    %v6718 = vpop.permute.xlu0 %6717
    %6720 = vset.pattern.permute.xlu0 38
    %6721 = vperm.xlu0 %6720, %v5390
    %v6722 = vpop.permute.xlu0 %6721
    %6724 = vset.pattern.permute.xlu0 38
    %6725 = vperm.xlu0 %6724, %v5391
    %v6726 = vpop.permute.xlu0 %6725
    %v6728 = vmul.f32 %v6713, %v6718
    %v6729 = vmul.f32 %v6714, %v6722
    %v6730 = vmul.f32 %v6715, %v6726
    %v6731 = vpack.c.bf16 %v6729, %v6728
    %v6732 = vpack.c.bf16 %v6730, %v6730
    %v6733 = vld [vmem:[#allocation6 + $0x6c] sm:$0xf]
    %vm6734 = vcmask 195584
    %v6736 = vsel %vm6734, %v6733, 0
    %v6739 = vsel %vm5781, %v6732, 0
    %6741 = vmatprep.subr.bf16.mxu0 0
    %6742 = vmatpush1.bf16.msra.mxu0 %v6731
    %6743 = vmatprep.subr.bf16.mxu0 0
    %6744 = vmatpush1.bf16.msra.mxu0 %v6739
    %6745 = vmatprep.subr.bf16.mxu0 0
    %6746 = vmatpush1.bf16.msra.mxu0 0
    %6747 = vmatprep.subr.bf16.mxu0 0
    %6748 = vmatpush1.bf16.msra.mxu0 0
    %6749 = vmatprep.subr.bf16.mxu0 0
    %6750 = vmatpush1.bf16.msra.mxu0 0
    %6751 = vmatprep.subr.bf16.mxu0 0
    %6752 = vmatpush1.bf16.msra.mxu0 0
    %6753 = vmatprep.subr.bf16.mxu0 0
    %6754 = vmatpush1.bf16.msra.mxu0 0
    %6755 = vmatprep.subr.bf16.mxu0 0
    %6756 = vmatpush1.bf16.msra.mxu0 0
    %6757 = vmatprep.subr.bf16.mxu0 0
    %6758 = vmatpush1.bf16.msra.mxu0 0
    %6759 = vmatprep.subr.bf16.mxu0 0
    %6760 = vmatpush1.bf16.msra.mxu0 0
    %6761 = vmatprep.subr.bf16.mxu0 0
    %6762 = vmatpush1.bf16.msra.mxu0 0
    %6763 = vmatprep.subr.bf16.mxu0 0
    %6764 = vmatpush1.bf16.msra.mxu0 0
    %6765 = vmatprep.subr.bf16.mxu0 0
    %6766 = vmatpush1.bf16.msra.mxu0 0
    %6767 = vmatprep.subr.bf16.mxu0 0
    %6768 = vmatpush1.bf16.msra.mxu0 0
    %6769 = vmatprep.subr.bf16.mxu0 0
    %6770 = vmatpush1.bf16.msra.mxu0 0
    %6771 = vmatprep.subr.bf16.mxu0 0
    %6772 = vmatpush1.bf16.msra.mxu0 0
    %6773 = vmatprep.mubr.bf16.mxu0 0
    %6774 = vmatmul.mubr.bf16.gmra.mrb[0].mxu0 %v6736
    %v6775 = vpop.f32.mrb[0].mxu0
    %v6776 = vadd.f32 0.0, %v6775
    %v6777 = vpop.f32.mrb[0].mxu0
    %v6778 = vpop.f32.mrb[0].mxu0
    %v6779 = vpop.f32.mrb[0].mxu0
    %6780 = vdwg.mxu0
    %v6781 = vld [vmem:[#allocation6 + $0x70] sm:$0xf]
    %v6783 = vsel %vm6734, %v6781, 0
    %6785 = vmatprep.subr.bf16.mxu0 0
    %6786 = vmatpush1.bf16.msra.mxu0 %v6731
    %6787 = vmatprep.subr.bf16.mxu0 0
    %6788 = vmatpush1.bf16.msra.mxu0 %v6739
    %6789 = vmatprep.subr.bf16.mxu0 0
    %6790 = vmatpush1.bf16.msra.mxu0 0
    %6791 = vmatprep.subr.bf16.mxu0 0
    %6792 = vmatpush1.bf16.msra.mxu0 0
    %6793 = vmatprep.subr.bf16.mxu0 0
    %6794 = vmatpush1.bf16.msra.mxu0 0
    %6795 = vmatprep.subr.bf16.mxu0 0
    %6796 = vmatpush1.bf16.msra.mxu0 0
    %6797 = vmatprep.subr.bf16.mxu0 0
    %6798 = vmatpush1.bf16.msra.mxu0 0
    %6799 = vmatprep.subr.bf16.mxu0 0
    %6800 = vmatpush1.bf16.msra.mxu0 0
    %6801 = vmatprep.subr.bf16.mxu0 0
    %6802 = vmatpush1.bf16.msra.mxu0 0
    %6803 = vmatprep.subr.bf16.mxu0 0
    %6804 = vmatpush1.bf16.msra.mxu0 0
    %6805 = vmatprep.subr.bf16.mxu0 0
    %6806 = vmatpush1.bf16.msra.mxu0 0
    %6807 = vmatprep.subr.bf16.mxu0 0
    %6808 = vmatpush1.bf16.msra.mxu0 0
    %6809 = vmatprep.subr.bf16.mxu0 0
    %6810 = vmatpush1.bf16.msra.mxu0 0
    %6811 = vmatprep.subr.bf16.mxu0 0
    %6812 = vmatpush1.bf16.msra.mxu0 0
    %6813 = vmatprep.subr.bf16.mxu0 0
    %6814 = vmatpush1.bf16.msra.mxu0 0
    %6815 = vmatprep.subr.bf16.mxu0 0
    %6816 = vmatpush1.bf16.msra.mxu0 0
    %6817 = vmatprep.mubr.bf16.mxu0 0
    %6818 = vmatmul.mubr.bf16.gmra.mrb[0].mxu0 %v6783
    %v6819 = vpop.f32.mrb[0].mxu0
    %v6820 = vadd.f32 0.0, %v6819
    %v6821 = vpop.f32.mrb[0].mxu0
    %v6822 = vpop.f32.mrb[0].mxu0
    %v6823 = vpop.f32.mrb[0].mxu0
    %6824 = vdwg.mxu0
    %v6825 = vld [vmem:[#allocation6 + $0x74] sm:$0xf]
    %v6827 = vsel %vm6734, %v6825, 0
    %6829 = vmatprep.subr.bf16.mxu0 0
    %6830 = vmatpush1.bf16.msra.mxu0 %v6731
    %6831 = vmatprep.subr.bf16.mxu0 0
    %6832 = vmatpush1.bf16.msra.mxu0 %v6739
    %6833 = vmatprep.subr.bf16.mxu0 0
    %6834 = vmatpush1.bf16.msra.mxu0 0
    %6835 = vmatprep.subr.bf16.mxu0 0
    %6836 = vmatpush1.bf16.msra.mxu0 0
    %6837 = vmatprep.subr.bf16.mxu0 0
    %6838 = vmatpush1.bf16.msra.mxu0 0
    %6839 = vmatprep.subr.bf16.mxu0 0
    %6840 = vmatpush1.bf16.msra.mxu0 0
    %6841 = vmatprep.subr.bf16.mxu0 0
    %6842 = vmatpush1.bf16.msra.mxu0 0
    %6843 = vmatprep.subr.bf16.mxu0 0
    %6844 = vmatpush1.bf16.msra.mxu0 0
    %6845 = vmatprep.subr.bf16.mxu0 0
    %6846 = vmatpush1.bf16.msra.mxu0 0
    %6847 = vmatprep.subr.bf16.mxu0 0
    %6848 = vmatpush1.bf16.msra.mxu0 0
    %6849 = vmatprep.subr.bf16.mxu0 0
    %6850 = vmatpush1.bf16.msra.mxu0 0
    %6851 = vmatprep.subr.bf16.mxu0 0
    %6852 = vmatpush1.bf16.msra.mxu0 0
    %6853 = vmatprep.subr.bf16.mxu0 0
    %6854 = vmatpush1.bf16.msra.mxu0 0
    %6855 = vmatprep.subr.bf16.mxu0 0
    %6856 = vmatpush1.bf16.msra.mxu0 0
    %6857 = vmatprep.subr.bf16.mxu0 0
    %6858 = vmatpush1.bf16.msra.mxu0 0
    %6859 = vmatprep.subr.bf16.mxu0 0
    %6860 = vmatpush1.bf16.msra.mxu0 0
    %6861 = vmatprep.mubr.bf16.mxu0 0
    %6862 = vmatmul.mubr.bf16.gmra.mrb[0].mxu0 %v6827
    %v6863 = vpop.f32.mrb[0].mxu0
    %v6864 = vadd.f32 0.0, %v6863
    %v6865 = vpop.f32.mrb[0].mxu0
    %v6866 = vpop.f32.mrb[0].mxu0
    %v6867 = vpop.f32.mrb[0].mxu0
    %6868 = vdwg.mxu0
    %v6869 = vld [vmem:[#allocation6 + $0x78] sm:$0xf]
    %v6871 = vsel %vm6734, %v6869, 0
    %6873 = vmatprep.subr.bf16.mxu0 0
    %6874 = vmatpush1.bf16.msra.mxu0 %v6731
    %6875 = vmatprep.subr.bf16.mxu0 0
    %6876 = vmatpush1.bf16.msra.mxu0 %v6739
    %6877 = vmatprep.subr.bf16.mxu0 0
    %6878 = vmatpush1.bf16.msra.mxu0 0
    %6879 = vmatprep.subr.bf16.mxu0 0
    %6880 = vmatpush1.bf16.msra.mxu0 0
    %6881 = vmatprep.subr.bf16.mxu0 0
    %6882 = vmatpush1.bf16.msra.mxu0 0
    %6883 = vmatprep.subr.bf16.mxu0 0
    %6884 = vmatpush1.bf16.msra.mxu0 0
    %6885 = vmatprep.subr.bf16.mxu0 0
    %6886 = vmatpush1.bf16.msra.mxu0 0
    %6887 = vmatprep.subr.bf16.mxu0 0
    %6888 = vmatpush1.bf16.msra.mxu0 0
    %6889 = vmatprep.subr.bf16.mxu0 0
    %6890 = vmatpush1.bf16.msra.mxu0 0
    %6891 = vmatprep.subr.bf16.mxu0 0
    %6892 = vmatpush1.bf16.msra.mxu0 0
    %6893 = vmatprep.subr.bf16.mxu0 0
    %6894 = vmatpush1.bf16.msra.mxu0 0
    %6895 = vmatprep.subr.bf16.mxu0 0
    %6896 = vmatpush1.bf16.msra.mxu0 0
    %6897 = vmatprep.subr.bf16.mxu0 0
    %6898 = vmatpush1.bf16.msra.mxu0 0
    %6899 = vmatprep.subr.bf16.mxu0 0
    %6900 = vmatpush1.bf16.msra.mxu0 0
    %6901 = vmatprep.subr.bf16.mxu0 0
    %6902 = vmatpush1.bf16.msra.mxu0 0
    %6903 = vmatprep.subr.bf16.mxu0 0
    %6904 = vmatpush1.bf16.msra.mxu0 0
    %6905 = vmatprep.mubr.bf16.mxu0 0
    %6906 = vmatmul.mubr.bf16.gmra.mrb[0].mxu0 %v6871
    %v6907 = vpop.f32.mrb[0].mxu0
    %v6908 = vadd.f32 0.0, %v6907
    %v6909 = vpop.f32.mrb[0].mxu0
    %v6910 = vpop.f32.mrb[0].mxu0
    %v6911 = vpop.f32.mrb[0].mxu0
    %6912 = vdwg.mxu0
    %v6913 = vld [vmem:[#allocation6 + $0x7c] sm:$0xf]
    %v6915 = vsel %vm6734, %v6913, 0
    %6917 = vmatprep.subr.bf16.mxu0 0
    %6918 = vmatpush1.bf16.msra.mxu0 %v6731
    %6919 = vmatprep.subr.bf16.mxu0 0
    %6920 = vmatpush1.bf16.msra.mxu0 %v6739
    %6921 = vmatprep.subr.bf16.mxu0 0
    %6922 = vmatpush1.bf16.msra.mxu0 0
    %6923 = vmatprep.subr.bf16.mxu0 0
    %6924 = vmatpush1.bf16.msra.mxu0 0
    %6925 = vmatprep.subr.bf16.mxu0 0
    %6926 = vmatpush1.bf16.msra.mxu0 0
    %6927 = vmatprep.subr.bf16.mxu0 0
    %6928 = vmatpush1.bf16.msra.mxu0 0
    %6929 = vmatprep.subr.bf16.mxu0 0
    %6930 = vmatpush1.bf16.msra.mxu0 0
    %6931 = vmatprep.subr.bf16.mxu0 0
    %6932 = vmatpush1.bf16.msra.mxu0 0
    %6933 = vmatprep.subr.bf16.mxu0 0
    %6934 = vmatpush1.bf16.msra.mxu0 0
    %6935 = vmatprep.subr.bf16.mxu0 0
    %6936 = vmatpush1.bf16.msra.mxu0 0
    %6937 = vmatprep.subr.bf16.mxu0 0
    %6938 = vmatpush1.bf16.msra.mxu0 0
    %6939 = vmatprep.subr.bf16.mxu0 0
    %6940 = vmatpush1.bf16.msra.mxu0 0
    %6941 = vmatprep.subr.bf16.mxu0 0
    %6942 = vmatpush1.bf16.msra.mxu0 0
    %6943 = vmatprep.subr.bf16.mxu0 0
    %6944 = vmatpush1.bf16.msra.mxu0 0
    %6945 = vmatprep.subr.bf16.mxu0 0
    %6946 = vmatpush1.bf16.msra.mxu0 0
    %6947 = vmatprep.subr.bf16.mxu0 0
    %6948 = vmatpush1.bf16.msra.mxu0 0
    %6949 = vmatprep.mubr.bf16.mxu0 0
    %6950 = vmatmul.mubr.bf16.gmra.mrb[0].mxu0 %v6915
    %v6951 = vpop.f32.mrb[0].mxu0
    %v6952 = vadd.f32 0.0, %v6951
    %v6953 = vpop.f32.mrb[0].mxu0
    %v6954 = vpop.f32.mrb[0].mxu0
    %v6955 = vpop.f32.mrb[0].mxu0
    %6956 = vdwg.mxu0
    %v6957 = vld [vmem:[#allocation6 + $0x80] sm:$0xf]
    %v6959 = vsel %vm6734, %v6957, 0
    %6961 = vmatprep.subr.bf16.mxu0 0
    %6962 = vmatpush1.bf16.msra.mxu0 %v6731
    %6963 = vmatprep.subr.bf16.mxu0 0
    %6964 = vmatpush1.bf16.msra.mxu0 %v6739
    %6965 = vmatprep.subr.bf16.mxu0 0
    %6966 = vmatpush1.bf16.msra.mxu0 0
    %6967 = vmatprep.subr.bf16.mxu0 0
    %6968 = vmatpush1.bf16.msra.mxu0 0
    %6969 = vmatprep.subr.bf16.mxu0 0
    %6970 = vmatpush1.bf16.msra.mxu0 0
    %6971 = vmatprep.subr.bf16.mxu0 0
    %6972 = vmatpush1.bf16.msra.mxu0 0
    %6973 = vmatprep.subr.bf16.mxu0 0
    %6974 = vmatpush1.bf16.msra.mxu0 0
    %6975 = vmatprep.subr.bf16.mxu0 0
    %6976 = vmatpush1.bf16.msra.mxu0 0
    %6977 = vmatprep.subr.bf16.mxu0 0
    %6978 = vmatpush1.bf16.msra.mxu0 0
    %6979 = vmatprep.subr.bf16.mxu0 0
    %6980 = vmatpush1.bf16.msra.mxu0 0
    %6981 = vmatprep.subr.bf16.mxu0 0
    %6982 = vmatpush1.bf16.msra.mxu0 0
    %6983 = vmatprep.subr.bf16.mxu0 0
    %6984 = vmatpush1.bf16.msra.mxu0 0
    %6985 = vmatprep.subr.bf16.mxu0 0
    %6986 = vmatpush1.bf16.msra.mxu0 0
    %6987 = vmatprep.subr.bf16.mxu0 0
    %6988 = vmatpush1.bf16.msra.mxu0 0
    %6989 = vmatprep.subr.bf16.mxu0 0
    %6990 = vmatpush1.bf16.msra.mxu0 0
    %6991 = vmatprep.subr.bf16.mxu0 0
    %6992 = vmatpush1.bf16.msra.mxu0 0
    %6993 = vmatprep.mubr.bf16.mxu0 0
    %6994 = vmatmul.mubr.bf16.gmra.mrb[0].mxu0 %v6959
    %v6995 = vpop.f32.mrb[0].mxu0
    %v6996 = vadd.f32 0.0, %v6995
    %v6997 = vpop.f32.mrb[0].mxu0
    %v6998 = vpop.f32.mrb[0].mxu0
    %v6999 = vpop.f32.mrb[0].mxu0
    %7000 = vdwg.mxu0
    %v7001 = vld [vmem:[#allocation6 + $0x84] sm:$0xf]
    %v7003 = vsel %vm6734, %v7001, 0
    %7005 = vmatprep.subr.bf16.mxu0 0
    %7006 = vmatpush1.bf16.msra.mxu0 %v6731
    %7007 = vmatprep.subr.bf16.mxu0 0
    %7008 = vmatpush1.bf16.msra.mxu0 %v6739
    %7009 = vmatprep.subr.bf16.mxu0 0
    %7010 = vmatpush1.bf16.msra.mxu0 0
    %7011 = vmatprep.subr.bf16.mxu0 0
    %7012 = vmatpush1.bf16.msra.mxu0 0
    %7013 = vmatprep.subr.bf16.mxu0 0
    %7014 = vmatpush1.bf16.msra.mxu0 0
    %7015 = vmatprep.subr.bf16.mxu0 0
    %7016 = vmatpush1.bf16.msra.mxu0 0
    %7017 = vmatprep.subr.bf16.mxu0 0
    %7018 = vmatpush1.bf16.msra.mxu0 0
    %7019 = vmatprep.subr.bf16.mxu0 0
    %7020 = vmatpush1.bf16.msra.mxu0 0
    %7021 = vmatprep.subr.bf16.mxu0 0
    %7022 = vmatpush1.bf16.msra.mxu0 0
    %7023 = vmatprep.subr.bf16.mxu0 0
    %7024 = vmatpush1.bf16.msra.mxu0 0
    %7025 = vmatprep.subr.bf16.mxu0 0
    %7026 = vmatpush1.bf16.msra.mxu0 0
    %7027 = vmatprep.subr.bf16.mxu0 0
    %7028 = vmatpush1.bf16.msra.mxu0 0
    %7029 = vmatprep.subr.bf16.mxu0 0
    %7030 = vmatpush1.bf16.msra.mxu0 0
    %7031 = vmatprep.subr.bf16.mxu0 0
    %7032 = vmatpush1.bf16.msra.mxu0 0
    %7033 = vmatprep.subr.bf16.mxu0 0
    %7034 = vmatpush1.bf16.msra.mxu0 0
    %7035 = vmatprep.subr.bf16.mxu0 0
    %7036 = vmatpush1.bf16.msra.mxu0 0
    %7037 = vmatprep.mubr.bf16.mxu0 0
    %7038 = vmatmul.mubr.bf16.gmra.mrb[0].mxu0 %v7003
    %v7039 = vpop.f32.mrb[0].mxu0
    %v7040 = vadd.f32 0.0, %v7039
    %v7041 = vpop.f32.mrb[0].mxu0
    %v7042 = vpop.f32.mrb[0].mxu0
    %v7043 = vpop.f32.mrb[0].mxu0
    %7044 = vdwg.mxu0
    %v7045 = vld [vmem:[#allocation6 + $0x88] sm:$0xf]
    %v7047 = vsel %vm6734, %v7045, 0
    %7049 = vmatprep.subr.bf16.mxu0 0
    %7050 = vmatpush1.bf16.msra.mxu0 %v6731
    %7051 = vmatprep.subr.bf16.mxu0 0
    %7052 = vmatpush1.bf16.msra.mxu0 %v6739
    %7053 = vmatprep.subr.bf16.mxu0 0
    %7054 = vmatpush1.bf16.msra.mxu0 0
    %7055 = vmatprep.subr.bf16.mxu0 0
    %7056 = vmatpush1.bf16.msra.mxu0 0
    %7057 = vmatprep.subr.bf16.mxu0 0
    %7058 = vmatpush1.bf16.msra.mxu0 0
    %7059 = vmatprep.subr.bf16.mxu0 0
    %7060 = vmatpush1.bf16.msra.mxu0 0
    %7061 = vmatprep.subr.bf16.mxu0 0
    %7062 = vmatpush1.bf16.msra.mxu0 0
    %7063 = vmatprep.subr.bf16.mxu0 0
    %7064 = vmatpush1.bf16.msra.mxu0 0
    %7065 = vmatprep.subr.bf16.mxu0 0
    %7066 = vmatpush1.bf16.msra.mxu0 0
    %7067 = vmatprep.subr.bf16.mxu0 0
    %7068 = vmatpush1.bf16.msra.mxu0 0
    %7069 = vmatprep.subr.bf16.mxu0 0
    %7070 = vmatpush1.bf16.msra.mxu0 0
    %7071 = vmatprep.subr.bf16.mxu0 0
    %7072 = vmatpush1.bf16.msra.mxu0 0
    %7073 = vmatprep.subr.bf16.mxu0 0
    %7074 = vmatpush1.bf16.msra.mxu0 0
    %7075 = vmatprep.subr.bf16.mxu0 0
    %7076 = vmatpush1.bf16.msra.mxu0 0
    %7077 = vmatprep.subr.bf16.mxu0 0
    %7078 = vmatpush1.bf16.msra.mxu0 0
    %7079 = vmatprep.subr.bf16.mxu0 0
    %7080 = vmatpush1.bf16.msra.mxu0 0
    %7081 = vmatprep.mubr.bf16.mxu0 0
    %7082 = vmatmul.mubr.bf16.gmra.mrb[0].mxu0 %v7047
    %v7083 = vpop.f32.mrb[0].mxu0
    %v7084 = vadd.f32 0.0, %v7083
    %v7085 = vpop.f32.mrb[0].mxu0
    %v7086 = vpop.f32.mrb[0].mxu0
    %v7087 = vpop.f32.mrb[0].mxu0
    %7088 = vdwg.mxu0
    %v7089 = vld [vmem:[#allocation6 + $0x8c] sm:$0xf]
    %v7091 = vsel %vm6734, %v7089, 0
    %7093 = vmatprep.subr.bf16.mxu0 0
    %7094 = vmatpush1.bf16.msra.mxu0 %v6731
    %7095 = vmatprep.subr.bf16.mxu0 0
    %7096 = vmatpush1.bf16.msra.mxu0 %v6739
    %7097 = vmatprep.subr.bf16.mxu0 0
    %7098 = vmatpush1.bf16.msra.mxu0 0
    %7099 = vmatprep.subr.bf16.mxu0 0
    %7100 = vmatpush1.bf16.msra.mxu0 0
    %7101 = vmatprep.subr.bf16.mxu0 0
    %7102 = vmatpush1.bf16.msra.mxu0 0
    %7103 = vmatprep.subr.bf16.mxu0 0
    %7104 = vmatpush1.bf16.msra.mxu0 0
    %7105 = vmatprep.subr.bf16.mxu0 0
    %7106 = vmatpush1.bf16.msra.mxu0 0
    %7107 = vmatprep.subr.bf16.mxu0 0
    %7108 = vmatpush1.bf16.msra.mxu0 0
    %7109 = vmatprep.subr.bf16.mxu0 0
    %7110 = vmatpush1.bf16.msra.mxu0 0
    %7111 = vmatprep.subr.bf16.mxu0 0
    %7112 = vmatpush1.bf16.msra.mxu0 0
    %7113 = vmatprep.subr.bf16.mxu0 0
    %7114 = vmatpush1.bf16.msra.mxu0 0
    %7115 = vmatprep.subr.bf16.mxu0 0
    %7116 = vmatpush1.bf16.msra.mxu0 0
    %7117 = vmatprep.subr.bf16.mxu0 0
    %7118 = vmatpush1.bf16.msra.mxu0 0
    %7119 = vmatprep.subr.bf16.mxu0 0
    %7120 = vmatpush1.bf16.msra.mxu0 0
    %7121 = vmatprep.subr.bf16.mxu0 0
    %7122 = vmatpush1.bf16.msra.mxu0 0
    %7123 = vmatprep.subr.bf16.mxu0 0
    %7124 = vmatpush1.bf16.msra.mxu0 0
    %7125 = vmatprep.mubr.bf16.mxu0 0
    %7126 = vmatmul.mubr.bf16.gmra.mrb[0].mxu0 %v7091
    %v7127 = vpop.f32.mrb[0].mxu0
    %v7128 = vadd.f32 0.0, %v7127
    %v7129 = vpop.f32.mrb[0].mxu0
    %v7130 = vpop.f32.mrb[0].mxu0
    %v7131 = vpop.f32.mrb[0].mxu0
    %7132 = vdwg.mxu0
    %v7133 = vpack.c.bf16 %v6776, %v6776
    %v7134 = vpack.c.bf16 %v6820, %v6820
    %v7135 = vpack.c.bf16 %v6864, %v6864
    %v7136 = vpack.c.bf16 %v6908, %v6908
    %v7137 = vpack.c.bf16 %v6952, %v6952
    %v7138 = vpack.c.bf16 %v6996, %v6996
    %v7139 = vpack.c.bf16 %v7040, %v7040
    %v7140 = vpack.c.bf16 %v7084, %v7084
    %v7141 = vpack.c.bf16 %v7128, %v7128
    %v7142 = vld [vmem:[#allocation4 + $0x240] sm:$0xf]
    %v7143 = vld [vmem:[#allocation4 + $0x244] sm:$0xf]
    %v7144 = vld [vmem:[#allocation4 + $0x248] sm:$0xf]
    %v7145 = vld [vmem:[#allocation4 + $0x24c] sm:$0xf]
    %v7146 = vld [vmem:[#allocation4 + $0x250] sm:$0xf]
    %v7147 = vld [vmem:[#allocation4 + $0x254] sm:$0xf]
    %v7148 = vld [vmem:[#allocation4 + $0x258] sm:$0xf]
    %v7149 = vld [vmem:[#allocation4 + $0x25c] sm:$0xf]
    %v7150 = vld [vmem:[#allocation4 + $0x260] sm:$0xf]
    %v7151 = vld [vmem:[#allocation4 + $0x264] sm:$0xf]
    %v7152 = vld [vmem:[#allocation4 + $0x268] sm:$0xf]
    %v7153 = vld [vmem:[#allocation4 + $0x26c] sm:$0xf]
    %v7154 = vld [vmem:[#allocation4 + $0x270] sm:$0xf]
    %v7155 = vld [vmem:[#allocation4 + $0x274] sm:$0xf]
    %v7156 = vld [vmem:[#allocation4 + $0x278] sm:$0xf]
    %v7157 = vld [vmem:[#allocation4 + $0x27c] sm:$0xf]
    %v7158 = vld [vmem:[#allocation4 + $0x280] sm:$0xf]
    %v7159 = vld [vmem:[#allocation4 + $0x284] sm:$0xf]
    %v7160 = vld [vmem:[#allocation4 + $0x288] sm:$0xf]
    %v7161 = vld [vmem:[#allocation4 + $0x28c] sm:$0xf]
    %v7162 = vld [vmem:[#allocation4 + $0x290] sm:$0xf]
    %v7163 = vld [vmem:[#allocation4 + $0x294] sm:$0xf]
    %v7164 = vld [vmem:[#allocation4 + $0x298] sm:$0xf]
    %v7165 = vld [vmem:[#allocation4 + $0x29c] sm:$0xf]
    %v7166 = vld [vmem:[#allocation4 + $0x2a0] sm:$0xf]
    %v7167 = vld [vmem:[#allocation4 + $0x2a4] sm:$0xf]
    %v7168 = vld [vmem:[#allocation4 + $0x2a8] sm:$0xf]
    %v7169 = vld [vmem:[#allocation4 + $0x2ac] sm:$0xf]
    %v7170 = vld [vmem:[#allocation4 + $0x2b0] sm:$0xf]
    %v7171 = vld [vmem:[#allocation4 + $0x2b4] sm:$0xf]
    %v7172 = vld [vmem:[#allocation4 + $0x2b8] sm:$0xf]
    %v7173 = vld [vmem:[#allocation4 + $0x2bc] sm:$0xf]
    %v7174 = vld [vmem:[#allocation4 + $0x2c0] sm:$0xf]
    %v7175 = vld [vmem:[#allocation4 + $0x2c4] sm:$0xf]
    %v7176 = vld [vmem:[#allocation4 + $0x2c8] sm:$0xf]
    %v7177 = vld [vmem:[#allocation4 + $0x2cc] sm:$0xf]
    %v7178 = vld [vmem:[#allocation4 + $0x2d0] sm:$0xf]
    %v7179 = vld [vmem:[#allocation4 + $0x2d4] sm:$0xf]
    %v7180 = vld [vmem:[#allocation4 + $0x2d8] sm:$0xf]
    %v7181 = vld [vmem:[#allocation4 + $0x2dc] sm:$0xf]
    %v7182 = vld [vmem:[#allocation4 + $0x2e0] sm:$0xf]
    %v7183 = vld [vmem:[#allocation4 + $0x2e4] sm:$0xf]
    %v7184 = vld [vmem:[#allocation4 + $0x2e8] sm:$0xf]
    %v7185 = vld [vmem:[#allocation4 + $0x2ec] sm:$0xf]
    %v7186 = vld [vmem:[#allocation4 + $0x2f0] sm:$0xf]
    %v7187 = vld [vmem:[#allocation4 + $0x2f4] sm:$0xf]
    %v7188 = vld [vmem:[#allocation4 + $0x2f8] sm:$0xf]
    %v7189 = vld [vmem:[#allocation4 + $0x2fc] sm:$0xf]
    %v7190 = vld [vmem:[#allocation4 + $0x300] sm:$0xf]
    %v7191 = vld [vmem:[#allocation4 + $0x304] sm:$0xf]
    %v7192 = vld [vmem:[#allocation4 + $0x308] sm:$0xf]
    %v7193 = vld [vmem:[#allocation4 + $0x30c] sm:$0xf]
    %v7194 = vld [vmem:[#allocation4 + $0x310] sm:$0xf]
    %v7195 = vld [vmem:[#allocation4 + $0x314] sm:$0xf]
    %v7196 = vld [vmem:[#allocation4 + $0x318] sm:$0xf]
    %v7197 = vld [vmem:[#allocation4 + $0x31c] sm:$0xf]
    %v7198 = vld [vmem:[#allocation4 + $0x320] sm:$0xf]
    %v7199 = vld [vmem:[#allocation4 + $0x324] sm:$0xf]
    %v7200 = vld [vmem:[#allocation4 + $0x328] sm:$0xf]
    %v7201 = vld [vmem:[#allocation4 + $0x32c] sm:$0xf]
    %v7202 = vld [vmem:[#allocation4 + $0x330] sm:$0xf]
    %v7203 = vld [vmem:[#allocation4 + $0x334] sm:$0xf]
    %v7204 = vld [vmem:[#allocation4 + $0x338] sm:$0xf]
    %v7205 = vld [vmem:[#allocation4 + $0x33c] sm:$0xf]
    %v7206 = vld [vmem:[#allocation4 + $0x340] sm:$0xf]
    %v7207 = vld [vmem:[#allocation4 + $0x344] sm:$0xf]
    %v7208 = vld [vmem:[#allocation4 + $0x348] sm:$0xf]
    %v7209 = vld [vmem:[#allocation4 + $0x34c] sm:$0xf]
    %v7210 = vld [vmem:[#allocation4 + $0x350] sm:$0xf]
    %v7211 = vld [vmem:[#allocation4 + $0x354] sm:$0xf]
    %v7212 = vld [vmem:[#allocation4 + $0x358] sm:$0xf]
    %v7213 = vld [vmem:[#allocation4 + $0x35c] sm:$0xf]
    %v7214 = vld [vmem:[#allocation4 + $0x360] sm:$0xf]
    %v7215 = vld [vmem:[#allocation4 + $0x364] sm:$0xf]
    %v7216 = vld [vmem:[#allocation4 + $0x368] sm:$0xf]
    %v7217 = vld [vmem:[#allocation4 + $0x36c] sm:$0xf]
    %v7218 = vld [vmem:[#allocation4 + $0x370] sm:$0xf]
    %v7219 = vld [vmem:[#allocation4 + $0x374] sm:$0xf]
    %v7220 = vld [vmem:[#allocation4 + $0x378] sm:$0xf]
    %v7221 = vld [vmem:[#allocation4 + $0x37c] sm:$0xf]
    %v7222 = vld [vmem:[#allocation4 + $0x380] sm:$0xf]
    %v7223 = vld [vmem:[#allocation4 + $0x384] sm:$0xf]
    %v7224 = vld [vmem:[#allocation4 + $0x388] sm:$0xf]
    %v7225 = vld [vmem:[#allocation4 + $0x38c] sm:$0xf]
    %v7226 = vld [vmem:[#allocation4 + $0x390] sm:$0xf]
    %v7227 = vld [vmem:[#allocation4 + $0x394] sm:$0xf]
    %v7228 = vld [vmem:[#allocation4 + $0x398] sm:$0xf]
    %v7229 = vld [vmem:[#allocation4 + $0x39c] sm:$0xf]
    %v7230 = vld [vmem:[#allocation4 + $0x3a0] sm:$0xf]
    %v7231 = vld [vmem:[#allocation4 + $0x3a4] sm:$0xf]
    %v7232 = vld [vmem:[#allocation4 + $0x3a8] sm:$0xf]
    %v7233 = vld [vmem:[#allocation4 + $0x3ac] sm:$0xf]
    %v7234 = vld [vmem:[#allocation4 + $0x3b0] sm:$0xf]
    %v7235 = vld [vmem:[#allocation4 + $0x3b4] sm:$0xf]
    %v7236 = vld [vmem:[#allocation4 + $0x3b8] sm:$0xf]
    %v7237 = vld [vmem:[#allocation4 + $0x3bc] sm:$0xf]
    %v7238 = vld [vmem:[#allocation4 + $0x3c0] sm:$0xf]
    %v7239 = vld [vmem:[#allocation4 + $0x3c4] sm:$0xf]
    %v7240 = vld [vmem:[#allocation4 + $0x3c8] sm:$0xf]
    %v7241 = vld [vmem:[#allocation4 + $0x3cc] sm:$0xf]
    %v7242 = vld [vmem:[#allocation4 + $0x3d0] sm:$0xf]
    %v7243 = vld [vmem:[#allocation4 + $0x3d4] sm:$0xf]
    %v7244 = vld [vmem:[#allocation4 + $0x3d8] sm:$0xf]
    %v7245 = vld [vmem:[#allocation4 + $0x3dc] sm:$0xf]
    %v7246 = vld [vmem:[#allocation4 + $0x3e0] sm:$0xf]
    %v7247 = vld [vmem:[#allocation4 + $0x3e4] sm:$0xf]
    %v7248 = vld [vmem:[#allocation4 + $0x3e8] sm:$0xf]
    %v7249 = vld [vmem:[#allocation4 + $0x3ec] sm:$0xf]
    %v7250 = vld [vmem:[#allocation4 + $0x3f0] sm:$0xf]
    %v7251 = vld [vmem:[#allocation4 + $0x3f4] sm:$0xf]
    %v7252 = vld [vmem:[#allocation4 + $0x3f8] sm:$0xf]
    %v7253 = vld [vmem:[#allocation4 + $0x3fc] sm:$0xf]
    %v7254 = vld [vmem:[#allocation4 + $0x400] sm:$0xf]
    %v7255 = vld [vmem:[#allocation4 + $0x404] sm:$0xf]
    %v7256 = vld [vmem:[#allocation4 + $0x408] sm:$0xf]
    %v7257 = vld [vmem:[#allocation4 + $0x40c] sm:$0xf]
    %v7258 = vld [vmem:[#allocation4 + $0x410] sm:$0xf]
    %v7259 = vld [vmem:[#allocation4 + $0x414] sm:$0xf]
    %v7260 = vld [vmem:[#allocation4 + $0x418] sm:$0xf]
    %v7261 = vld [vmem:[#allocation4 + $0x41c] sm:$0xf]
    %v7262 = vld [vmem:[#allocation4 + $0x420] sm:$0xf]
    %v7263 = vld [vmem:[#allocation4 + $0x424] sm:$0xf]
    %v7264 = vld [vmem:[#allocation4 + $0x428] sm:$0xf]
    %v7265 = vld [vmem:[#allocation4 + $0x42c] sm:$0xf]
    %v7266 = vld [vmem:[#allocation4 + $0x430] sm:$0xf]
    %v7267 = vld [vmem:[#allocation4 + $0x434] sm:$0xf]
    %v7268 = vld [vmem:[#allocation4 + $0x438] sm:$0xf]
    %v7269 = vld [vmem:[#allocation4 + $0x43c] sm:$0xf]
    %v7270 = vld [vmem:[#allocation4 + $0x440] sm:$0xf]
    %v7271 = vld [vmem:[#allocation4 + $0x444] sm:$0xf]
    %v7272 = vld [vmem:[#allocation4 + $0x448] sm:$0xf]
    %v7273 = vld [vmem:[#allocation4 + $0x44c] sm:$0xf]
    %v7274 = vld [vmem:[#allocation4 + $0x450] sm:$0xf]
    %v7275 = vld [vmem:[#allocation4 + $0x454] sm:$0xf]
    %v7276 = vld [vmem:[#allocation4 + $0x458] sm:$0xf]
    %v7277 = vld [vmem:[#allocation4 + $0x45c] sm:$0xf]
    %v7278 = vld [vmem:[#allocation4 + $0x460] sm:$0xf]
    %v7279 = vld [vmem:[#allocation4 + $0x464] sm:$0xf]
    %v7280 = vld [vmem:[#allocation4 + $0x468] sm:$0xf]
    %v7281 = vld [vmem:[#allocation4 + $0x46c] sm:$0xf]
    %v7282 = vld [vmem:[#allocation4 + $0x470] sm:$0xf]
    %v7283 = vld [vmem:[#allocation4 + $0x474] sm:$0xf]
    %v7284 = vld [vmem:[#allocation4 + $0x478] sm:$0xf]
    %v7285 = vld [vmem:[#allocation4 + $0x47c] sm:$0xf]
    %v7286 = vld [vmem:[#allocation9 + $0x5] sm:$0x1]
    %v7287 = vlaneseq
    %v7288 = vshrl.u32 %v7287, 7
    %v7289 = vsub.s32 0, %v7288
    %v7290 = vrot.slane %v7286, %v7289
    %v7435 = vunpack.c.l.b16 %v7142
    %v7436 = vunpack.c.l.b16 %v7143
    %v7437 = vunpack.c.l.b16 %v7144
    %v7438 = vunpack.c.l.b16 %v7145
    %v7439 = vunpack.c.l.b16 %v7146
    %v7440 = vunpack.c.l.b16 %v7147
    %v7441 = vunpack.c.l.b16 %v7148
    %v7442 = vunpack.c.l.b16 %v7149
    %v7443 = vunpack.c.l.b16 %v7150
    %v7444 = vunpack.c.l.b16 %v7151
    %v7445 = vunpack.c.l.b16 %v7152
    %v7446 = vunpack.c.l.b16 %v7153
    %v7447 = vunpack.c.l.b16 %v7154
    %v7448 = vunpack.c.l.b16 %v7155
    %v7449 = vunpack.c.l.b16 %v7156
    %v7450 = vunpack.c.l.b16 %v7157
    %v7451 = vunpack.c.l.b16 %v7158
    %v7452 = vunpack.c.l.b16 %v7159
    %v7453 = vunpack.c.l.b16 %v7160
    %v7454 = vunpack.c.l.b16 %v7161
    %v7455 = vunpack.c.l.b16 %v7162
    %v7456 = vunpack.c.l.b16 %v7163
    %v7457 = vunpack.c.l.b16 %v7164
    %v7458 = vunpack.c.l.b16 %v7165
    %v7459 = vunpack.c.l.b16 %v7166
    %v7460 = vunpack.c.l.b16 %v7167
    %v7461 = vunpack.c.l.b16 %v7168
    %v7462 = vunpack.c.l.b16 %v7169
    %v7463 = vunpack.c.l.b16 %v7170
    %v7464 = vunpack.c.l.b16 %v7171
    %v7465 = vunpack.c.l.b16 %v7172
    %v7466 = vunpack.c.l.b16 %v7173
    %v7467 = vunpack.c.l.b16 %v7174
    %v7468 = vunpack.c.l.b16 %v7175
    %v7469 = vunpack.c.l.b16 %v7176
    %v7470 = vunpack.c.l.b16 %v7177
    %v7471 = vunpack.c.l.b16 %v7178
    %v7472 = vunpack.c.l.b16 %v7179
    %v7473 = vunpack.c.l.b16 %v7180
    %v7474 = vunpack.c.l.b16 %v7181
    %v7475 = vunpack.c.l.b16 %v7182
    %v7476 = vunpack.c.l.b16 %v7183
    %v7477 = vunpack.c.l.b16 %v7184
    %v7478 = vunpack.c.l.b16 %v7185
    %v7479 = vunpack.c.l.b16 %v7186
    %v7480 = vunpack.c.l.b16 %v7187
    %v7481 = vunpack.c.l.b16 %v7188
    %v7482 = vunpack.c.l.b16 %v7189
    %v7483 = vunpack.c.l.b16 %v7190
    %v7484 = vunpack.c.l.b16 %v7191
    %v7485 = vunpack.c.l.b16 %v7192
    %v7486 = vunpack.c.l.b16 %v7193
    %v7487 = vunpack.c.l.b16 %v7194
    %v7488 = vunpack.c.l.b16 %v7195
    %v7489 = vunpack.c.l.b16 %v7196
    %v7490 = vunpack.c.l.b16 %v7197
    %v7491 = vunpack.c.l.b16 %v7198
    %v7492 = vunpack.c.l.b16 %v7199
    %v7493 = vunpack.c.l.b16 %v7200
    %v7494 = vunpack.c.l.b16 %v7201
    %v7495 = vunpack.c.l.b16 %v7202
    %v7496 = vunpack.c.l.b16 %v7203
    %v7497 = vunpack.c.l.b16 %v7204
    %v7498 = vunpack.c.l.b16 %v7205
    %v7499 = vunpack.c.l.b16 %v7206
    %v7500 = vunpack.c.l.b16 %v7207
    %v7501 = vunpack.c.l.b16 %v7208
    %v7502 = vunpack.c.l.b16 %v7209
    %v7503 = vunpack.c.l.b16 %v7210
    %v7504 = vunpack.c.l.b16 %v7211
    %v7505 = vunpack.c.l.b16 %v7212
    %v7506 = vunpack.c.l.b16 %v7213
    %v7507 = vunpack.c.l.b16 %v7214
    %v7508 = vunpack.c.l.b16 %v7215
    %v7509 = vunpack.c.l.b16 %v7216
    %v7510 = vunpack.c.l.b16 %v7217
    %v7511 = vunpack.c.l.b16 %v7218
    %v7512 = vunpack.c.l.b16 %v7219
    %v7513 = vunpack.c.l.b16 %v7220
    %v7514 = vunpack.c.l.b16 %v7221
    %v7515 = vunpack.c.l.b16 %v7222
    %v7516 = vunpack.c.l.b16 %v7223
    %v7517 = vunpack.c.l.b16 %v7224
    %v7518 = vunpack.c.l.b16 %v7225
    %v7519 = vunpack.c.l.b16 %v7226
    %v7520 = vunpack.c.l.b16 %v7227
    %v7521 = vunpack.c.l.b16 %v7228
    %v7522 = vunpack.c.l.b16 %v7229
    %v7523 = vunpack.c.l.b16 %v7230
    %v7524 = vunpack.c.l.b16 %v7231
    %v7525 = vunpack.c.l.b16 %v7232
    %v7526 = vunpack.c.l.b16 %v7233
    %v7527 = vunpack.c.l.b16 %v7234
    %v7528 = vunpack.c.l.b16 %v7235
    %v7529 = vunpack.c.l.b16 %v7236
    %v7530 = vunpack.c.l.b16 %v7237
    %v7531 = vunpack.c.l.b16 %v7238
    %v7532 = vunpack.c.l.b16 %v7239
    %v7533 = vunpack.c.l.b16 %v7240
    %v7534 = vunpack.c.l.b16 %v7241
    %v7535 = vunpack.c.l.b16 %v7242
    %v7536 = vunpack.c.l.b16 %v7243
    %v7537 = vunpack.c.l.b16 %v7244
    %v7538 = vunpack.c.l.b16 %v7245
    %v7539 = vunpack.c.l.b16 %v7246
    %v7540 = vunpack.c.l.b16 %v7247
    %v7541 = vunpack.c.l.b16 %v7248
    %v7542 = vunpack.c.l.b16 %v7249
    %v7543 = vunpack.c.l.b16 %v7250
    %v7544 = vunpack.c.l.b16 %v7251
    %v7545 = vunpack.c.l.b16 %v7252
    %v7546 = vunpack.c.l.b16 %v7253
    %v7547 = vunpack.c.l.b16 %v7254
    %v7548 = vunpack.c.l.b16 %v7255
    %v7549 = vunpack.c.l.b16 %v7256
    %v7550 = vunpack.c.l.b16 %v7257
    %v7551 = vunpack.c.l.b16 %v7258
    %v7552 = vunpack.c.l.b16 %v7259
    %v7553 = vunpack.c.l.b16 %v7260
    %v7554 = vunpack.c.l.b16 %v7261
    %v7555 = vunpack.c.l.b16 %v7262
    %v7556 = vunpack.c.l.b16 %v7263
    %v7557 = vunpack.c.l.b16 %v7264
    %v7558 = vunpack.c.l.b16 %v7265
    %v7559 = vunpack.c.l.b16 %v7266
    %v7560 = vunpack.c.l.b16 %v7267
    %v7561 = vunpack.c.l.b16 %v7268
    %v7562 = vunpack.c.l.b16 %v7269
    %v7563 = vunpack.c.l.b16 %v7270
    %v7564 = vunpack.c.l.b16 %v7271
    %v7565 = vunpack.c.l.b16 %v7272
    %v7566 = vunpack.c.l.b16 %v7273
    %v7567 = vunpack.c.l.b16 %v7274
    %v7568 = vunpack.c.l.b16 %v7275
    %v7569 = vunpack.c.l.b16 %v7276
    %v7570 = vunpack.c.l.b16 %v7277
    %v7571 = vunpack.c.l.b16 %v7278
    %v7572 = vunpack.c.l.b16 %v7279
    %v7573 = vunpack.c.l.b16 %v7280
    %v7574 = vunpack.c.l.b16 %v7281
    %v7575 = vunpack.c.l.b16 %v7282
    %v7576 = vunpack.c.l.b16 %v7283
    %v7577 = vunpack.c.l.b16 %v7284
    %v7578 = vunpack.c.l.b16 %v7285
    %v7579 = vpack.c.b16 %v7436, %v7435
    %v7580 = vpack.c.b16 %v7438, %v7437
    %v7581 = vpack.c.b16 %v7440, %v7439
    %v7582 = vpack.c.b16 %v7442, %v7441
    %v7583 = vpack.c.b16 %v7444, %v7443
    %v7584 = vpack.c.b16 %v7446, %v7445
    %v7585 = vpack.c.b16 %v7448, %v7447
    %v7586 = vpack.c.b16 %v7450, %v7449
    %v7587 = vpack.c.b16 %v7452, %v7451
    %v7588 = vpack.c.b16 %v7454, %v7453
    %v7589 = vpack.c.b16 %v7456, %v7455
    %v7590 = vpack.c.b16 %v7458, %v7457
    %v7591 = vpack.c.b16 %v7460, %v7459
    %v7592 = vpack.c.b16 %v7462, %v7461
    %v7593 = vpack.c.b16 %v7464, %v7463
    %v7594 = vpack.c.b16 %v7466, %v7465
    %v7595 = vpack.c.b16 %v7468, %v7467
    %v7596 = vpack.c.b16 %v7470, %v7469
    %v7597 = vpack.c.b16 %v7472, %v7471
    %v7598 = vpack.c.b16 %v7474, %v7473
    %v7599 = vpack.c.b16 %v7476, %v7475
    %v7600 = vpack.c.b16 %v7478, %v7477
    %v7601 = vpack.c.b16 %v7480, %v7479
    %v7602 = vpack.c.b16 %v7482, %v7481
    %v7603 = vpack.c.b16 %v7484, %v7483
    %v7604 = vpack.c.b16 %v7486, %v7485
    %v7605 = vpack.c.b16 %v7488, %v7487
    %v7606 = vpack.c.b16 %v7490, %v7489
    %v7607 = vpack.c.b16 %v7492, %v7491
    %v7608 = vpack.c.b16 %v7494, %v7493
    %v7609 = vpack.c.b16 %v7496, %v7495
    %v7610 = vpack.c.b16 %v7498, %v7497
    %v7611 = vpack.c.b16 %v7500, %v7499
    %v7612 = vpack.c.b16 %v7502, %v7501
    %v7613 = vpack.c.b16 %v7504, %v7503
    %v7614 = vpack.c.b16 %v7506, %v7505
    %v7615 = vpack.c.b16 %v7508, %v7507
    %v7616 = vpack.c.b16 %v7510, %v7509
    %v7617 = vpack.c.b16 %v7512, %v7511
    %v7618 = vpack.c.b16 %v7514, %v7513
    %v7619 = vpack.c.b16 %v7516, %v7515
    %v7620 = vpack.c.b16 %v7518, %v7517
    %v7621 = vpack.c.b16 %v7520, %v7519
    %v7622 = vpack.c.b16 %v7522, %v7521
    %v7623 = vpack.c.b16 %v7524, %v7523
    %v7624 = vpack.c.b16 %v7526, %v7525
    %v7625 = vpack.c.b16 %v7528, %v7527
    %v7626 = vpack.c.b16 %v7530, %v7529
    %v7627 = vpack.c.b16 %v7532, %v7531
    %v7628 = vpack.c.b16 %v7534, %v7533
    %v7629 = vpack.c.b16 %v7536, %v7535
    %v7630 = vpack.c.b16 %v7538, %v7537
    %v7631 = vpack.c.b16 %v7540, %v7539
    %v7632 = vpack.c.b16 %v7542, %v7541
    %v7633 = vpack.c.b16 %v7544, %v7543
    %v7634 = vpack.c.b16 %v7546, %v7545
    %v7635 = vpack.c.b16 %v7548, %v7547
    %v7636 = vpack.c.b16 %v7550, %v7549
    %v7637 = vpack.c.b16 %v7552, %v7551
    %v7638 = vpack.c.b16 %v7554, %v7553
    %v7639 = vpack.c.b16 %v7556, %v7555
    %v7640 = vpack.c.b16 %v7558, %v7557
    %v7641 = vpack.c.b16 %v7560, %v7559
    %v7642 = vpack.c.b16 %v7562, %v7561
    %v7643 = vpack.c.b16 %v7564, %v7563
    %v7644 = vpack.c.b16 %v7566, %v7565
    %v7645 = vpack.c.b16 %v7568, %v7567
    %v7646 = vpack.c.b16 %v7570, %v7569
    %v7647 = vpack.c.b16 %v7572, %v7571
    %v7648 = vpack.c.b16 %v7574, %v7573
    %v7649 = vpack.c.b16 %v7576, %v7575
    %v7650 = vpack.c.b16 %v7578, %v7577
    %7723 = vmatprep.subr.bf16.mxu0 0
    %7724 = vmatpush1.bf16.msra.mxu0 %v7579
    %7725 = vmatprep.subr.bf16.mxu0 0
    %7726 = vmatpush1.bf16.msra.mxu0 %v7580
    %7727 = vmatprep.subr.bf16.mxu0 0
    %7728 = vmatpush1.bf16.msra.mxu0 %v7581
    %7729 = vmatprep.subr.bf16.mxu0 0
    %7730 = vmatpush1.bf16.msra.mxu0 %v7582
    %7731 = vmatprep.subr.bf16.mxu0 0
    %7732 = vmatpush1.bf16.msra.mxu0 %v7583
    %7733 = vmatprep.subr.bf16.mxu0 0
    %7734 = vmatpush1.bf16.msra.mxu0 %v7584
    %7735 = vmatprep.subr.bf16.mxu0 0
    %7736 = vmatpush1.bf16.msra.mxu0 %v7585
    %7737 = vmatprep.subr.bf16.mxu0 0
    %7738 = vmatpush1.bf16.msra.mxu0 %v7586
    %7739 = vmatprep.subr.bf16.mxu0 0
    %7740 = vmatpush1.bf16.msra.mxu0 %v7587
    %7741 = vmatprep.subr.bf16.mxu0 0
    %7742 = vmatpush1.bf16.msra.mxu0 %v7588
    %7743 = vmatprep.subr.bf16.mxu0 0
    %7744 = vmatpush1.bf16.msra.mxu0 %v7589
    %7745 = vmatprep.subr.bf16.mxu0 0
    %7746 = vmatpush1.bf16.msra.mxu0 %v7590
    %7747 = vmatprep.subr.bf16.mxu0 0
    %7748 = vmatpush1.bf16.msra.mxu0 %v7591
    %7749 = vmatprep.subr.bf16.mxu0 0
    %7750 = vmatpush1.bf16.msra.mxu0 %v7592
    %7751 = vmatprep.subr.bf16.mxu0 0
    %7752 = vmatpush1.bf16.msra.mxu0 %v7593
    %7753 = vmatprep.subr.bf16.mxu0 0
    %7754 = vmatpush1.bf16.msra.mxu0 %v7594
    %7755 = vmatprep.mubr.bf16.mxu0 %v7134
    %7756 = vmatmul.mubr.bf16.gmra.mrb[0].mxu0 %v7133
    %v7757 = vpop.f32.mrb[0].mxu0
    %v7758 = vadd.f32 %v7290, %v7757
    %v7759 = vpop.f32.mrb[0].mxu0
    %v7760 = vpop.f32.mrb[0].mxu0
    %v7761 = vpop.f32.mrb[0].mxu0
    %7762 = vdwg.mxu0
    %7763 = vmatprep.subr.bf16.mxu0 0
    %7764 = vmatpush1.bf16.msra.mxu0 %v7595
    %7765 = vmatprep.subr.bf16.mxu0 0
    %7766 = vmatpush1.bf16.msra.mxu0 %v7596
    %7767 = vmatprep.subr.bf16.mxu0 0
    %7768 = vmatpush1.bf16.msra.mxu0 %v7597
    %7769 = vmatprep.subr.bf16.mxu0 0
    %7770 = vmatpush1.bf16.msra.mxu0 %v7598
    %7771 = vmatprep.subr.bf16.mxu0 0
    %7772 = vmatpush1.bf16.msra.mxu0 %v7599
    %7773 = vmatprep.subr.bf16.mxu0 0
    %7774 = vmatpush1.bf16.msra.mxu0 %v7600
    %7775 = vmatprep.subr.bf16.mxu0 0
    %7776 = vmatpush1.bf16.msra.mxu0 %v7601
    %7777 = vmatprep.subr.bf16.mxu0 0
    %7778 = vmatpush1.bf16.msra.mxu0 %v7602
    %7779 = vmatprep.subr.bf16.mxu0 0
    %7780 = vmatpush1.bf16.msra.mxu0 %v7603
    %7781 = vmatprep.subr.bf16.mxu0 0
    %7782 = vmatpush1.bf16.msra.mxu0 %v7604
    %7783 = vmatprep.subr.bf16.mxu0 0
    %7784 = vmatpush1.bf16.msra.mxu0 %v7605
    %7785 = vmatprep.subr.bf16.mxu0 0
    %7786 = vmatpush1.bf16.msra.mxu0 %v7606
    %7787 = vmatprep.subr.bf16.mxu0 0
    %7788 = vmatpush1.bf16.msra.mxu0 %v7607
    %7789 = vmatprep.subr.bf16.mxu0 0
    %7790 = vmatpush1.bf16.msra.mxu0 %v7608
    %7791 = vmatprep.subr.bf16.mxu0 0
    %7792 = vmatpush1.bf16.msra.mxu0 %v7609
    %7793 = vmatprep.subr.bf16.mxu0 0
    %7794 = vmatpush1.bf16.msra.mxu0 %v7610
    %7795 = vmatprep.mubr.bf16.mxu0 %v7136
    %7796 = vmatmul.mubr.bf16.gmra.mrb[0].mxu0 %v7135
    %v7797 = vpop.f32.mrb[0].mxu0
    %v7798 = vadd.f32 %v7758, %v7797
    %v7799 = vpop.f32.mrb[0].mxu0
    %v7800 = vpop.f32.mrb[0].mxu0
    %v7801 = vpop.f32.mrb[0].mxu0
    %7802 = vdwg.mxu0
    %7803 = vmatprep.subr.bf16.mxu0 0
    %7804 = vmatpush1.bf16.msra.mxu0 %v7611
    %7805 = vmatprep.subr.bf16.mxu0 0
    %7806 = vmatpush1.bf16.msra.mxu0 %v7612
    %7807 = vmatprep.subr.bf16.mxu0 0
    %7808 = vmatpush1.bf16.msra.mxu0 %v7613
    %7809 = vmatprep.subr.bf16.mxu0 0
    %7810 = vmatpush1.bf16.msra.mxu0 %v7614
    %7811 = vmatprep.subr.bf16.mxu0 0
    %7812 = vmatpush1.bf16.msra.mxu0 %v7615
    %7813 = vmatprep.subr.bf16.mxu0 0
    %7814 = vmatpush1.bf16.msra.mxu0 %v7616
    %7815 = vmatprep.subr.bf16.mxu0 0
    %7816 = vmatpush1.bf16.msra.mxu0 %v7617
    %7817 = vmatprep.subr.bf16.mxu0 0
    %7818 = vmatpush1.bf16.msra.mxu0 %v7618
    %7819 = vmatprep.subr.bf16.mxu0 0
    %7820 = vmatpush1.bf16.msra.mxu0 %v7619
    %7821 = vmatprep.subr.bf16.mxu0 0
    %7822 = vmatpush1.bf16.msra.mxu0 %v7620
    %7823 = vmatprep.subr.bf16.mxu0 0
    %7824 = vmatpush1.bf16.msra.mxu0 %v7621
    %7825 = vmatprep.subr.bf16.mxu0 0
    %7826 = vmatpush1.bf16.msra.mxu0 %v7622
    %7827 = vmatprep.subr.bf16.mxu0 0
    %7828 = vmatpush1.bf16.msra.mxu0 %v7623
    %7829 = vmatprep.subr.bf16.mxu0 0
    %7830 = vmatpush1.bf16.msra.mxu0 %v7624
    %7831 = vmatprep.subr.bf16.mxu0 0
    %7832 = vmatpush1.bf16.msra.mxu0 %v7625
    %7833 = vmatprep.subr.bf16.mxu0 0
    %7834 = vmatpush1.bf16.msra.mxu0 %v7626
    %7835 = vmatprep.mubr.bf16.mxu0 %v7138
    %7836 = vmatmul.mubr.bf16.gmra.mrb[0].mxu0 %v7137
    %v7837 = vpop.f32.mrb[0].mxu0
    %v7838 = vadd.f32 %v7798, %v7837
    %v7839 = vpop.f32.mrb[0].mxu0
    %v7840 = vpop.f32.mrb[0].mxu0
    %v7841 = vpop.f32.mrb[0].mxu0
    %7842 = vdwg.mxu0
    %7843 = vmatprep.subr.bf16.mxu0 0
    %7844 = vmatpush1.bf16.msra.mxu0 %v7627
    %7845 = vmatprep.subr.bf16.mxu0 0
    %7846 = vmatpush1.bf16.msra.mxu0 %v7628
    %7847 = vmatprep.subr.bf16.mxu0 0
    %7848 = vmatpush1.bf16.msra.mxu0 %v7629
    %7849 = vmatprep.subr.bf16.mxu0 0
    %7850 = vmatpush1.bf16.msra.mxu0 %v7630
    %7851 = vmatprep.subr.bf16.mxu0 0
    %7852 = vmatpush1.bf16.msra.mxu0 %v7631
    %7853 = vmatprep.subr.bf16.mxu0 0
    %7854 = vmatpush1.bf16.msra.mxu0 %v7632
    %7855 = vmatprep.subr.bf16.mxu0 0
    %7856 = vmatpush1.bf16.msra.mxu0 %v7633
    %7857 = vmatprep.subr.bf16.mxu0 0
    %7858 = vmatpush1.bf16.msra.mxu0 %v7634
    %7859 = vmatprep.subr.bf16.mxu0 0
    %7860 = vmatpush1.bf16.msra.mxu0 %v7635
    %7861 = vmatprep.subr.bf16.mxu0 0
    %7862 = vmatpush1.bf16.msra.mxu0 %v7636
    %7863 = vmatprep.subr.bf16.mxu0 0
    %7864 = vmatpush1.bf16.msra.mxu0 %v7637
    %7865 = vmatprep.subr.bf16.mxu0 0
    %7866 = vmatpush1.bf16.msra.mxu0 %v7638
    %7867 = vmatprep.subr.bf16.mxu0 0
    %7868 = vmatpush1.bf16.msra.mxu0 %v7639
    %7869 = vmatprep.subr.bf16.mxu0 0
    %7870 = vmatpush1.bf16.msra.mxu0 %v7640
    %7871 = vmatprep.subr.bf16.mxu0 0
    %7872 = vmatpush1.bf16.msra.mxu0 %v7641
    %7873 = vmatprep.subr.bf16.mxu0 0
    %7874 = vmatpush1.bf16.msra.mxu0 %v7642
    %7875 = vmatprep.mubr.bf16.mxu0 %v7140
    %7876 = vmatmul.mubr.bf16.gmra.mrb[0].mxu0 %v7139
    %v7877 = vpop.f32.mrb[0].mxu0
    %v7878 = vadd.f32 %v7838, %v7877
    %v7879 = vpop.f32.mrb[0].mxu0
    %v7880 = vpop.f32.mrb[0].mxu0
    %v7881 = vpop.f32.mrb[0].mxu0
    %7882 = vdwg.mxu0
    %7883 = vmatprep.subr.bf16.mxu0 0
    %7884 = vmatpush1.bf16.msra.mxu0 %v7643
    %7885 = vmatprep.subr.bf16.mxu0 0
    %7886 = vmatpush1.bf16.msra.mxu0 %v7644
    %7887 = vmatprep.subr.bf16.mxu0 0
    %7888 = vmatpush1.bf16.msra.mxu0 %v7645
    %7889 = vmatprep.subr.bf16.mxu0 0
    %7890 = vmatpush1.bf16.msra.mxu0 %v7646
    %7891 = vmatprep.subr.bf16.mxu0 0
    %7892 = vmatpush1.bf16.msra.mxu0 %v7647
    %7893 = vmatprep.subr.bf16.mxu0 0
    %7894 = vmatpush1.bf16.msra.mxu0 %v7648
    %7895 = vmatprep.subr.bf16.mxu0 0
    %7896 = vmatpush1.bf16.msra.mxu0 %v7649
    %7897 = vmatprep.subr.bf16.mxu0 0
    %7898 = vmatpush1.bf16.msra.mxu0 %v7650
    %7899 = vmatprep.subr.bf16.mxu0 0
    %7900 = vmatpush1.bf16.msra.mxu0 0
    %7901 = vmatprep.subr.bf16.mxu0 0
    %7902 = vmatpush1.bf16.msra.mxu0 0
    %7903 = vmatprep.subr.bf16.mxu0 0
    %7904 = vmatpush1.bf16.msra.mxu0 0
    %7905 = vmatprep.subr.bf16.mxu0 0
    %7906 = vmatpush1.bf16.msra.mxu0 0
    %7907 = vmatprep.subr.bf16.mxu0 0
    %7908 = vmatpush1.bf16.msra.mxu0 0
    %7909 = vmatprep.subr.bf16.mxu0 0
    %7910 = vmatpush1.bf16.msra.mxu0 0
    %7911 = vmatprep.subr.bf16.mxu0 0
    %7912 = vmatpush1.bf16.msra.mxu0 0
    %7913 = vmatprep.subr.bf16.mxu0 0
    %7914 = vmatpush1.bf16.msra.mxu0 0
    %7915 = vmatprep.mubr.bf16.mxu0 0
    %7916 = vmatmul.mubr.bf16.gmra.mrb[0].mxu0 %v7141
    %v7917 = vpop.f32.mrb[0].mxu0
    %v7918 = vadd.f32 %v7878, %v7917
    %v7919 = vpop.f32.mrb[0].mxu0
    %v7920 = vpop.f32.mrb[0].mxu0
    %v7921 = vpop.f32.mrb[0].mxu0
    %7922 = vdwg.mxu0
    %v7923 = vmax.f32 %v7918, 0.0
    %v7924 = vld [vmem:[#allocation7] sm:$0xff]
    %7926 = vset.pattern.permute.xlu0 39
    %7927 = vperm.xlu0 %7926, %v7924
    %v7928 = vpop.permute.xlu0 %7927
    %v7930 = vmul.f32 %v7923, %v7928
    %v7931 = vpack.c.bf16 %v7930, %v7930
    %v7932 = vld [vmem:[#allocation6 + $0x90] sm:$0xf]
    %vm7933 = vcmask 64512
    %v7935 = vsel %vm7933, %v7932, 0
    %v7938 = vsel %vm5781, %v7931, 0
    %7940 = vmatprep.subr.bf16.mxu0 0
    %7941 = vmatpush1.bf16.msra.mxu0 %v7938
    %7942 = vmatprep.subr.bf16.mxu0 0
    %7943 = vmatpush1.bf16.msra.mxu0 0
    %7944 = vmatprep.subr.bf16.mxu0 0
    %7945 = vmatpush1.bf16.msra.mxu0 0
    %7946 = vmatprep.subr.bf16.mxu0 0
    %7947 = vmatpush1.bf16.msra.mxu0 0
    %7948 = vmatprep.subr.bf16.mxu0 0
    %7949 = vmatpush1.bf16.msra.mxu0 0
    %7950 = vmatprep.subr.bf16.mxu0 0
    %7951 = vmatpush1.bf16.msra.mxu0 0
    %7952 = vmatprep.subr.bf16.mxu0 0
    %7953 = vmatpush1.bf16.msra.mxu0 0
    %7954 = vmatprep.subr.bf16.mxu0 0
    %7955 = vmatpush1.bf16.msra.mxu0 0
    %7956 = vmatprep.subr.bf16.mxu0 0
    %7957 = vmatpush1.bf16.msra.mxu0 0
    %7958 = vmatprep.subr.bf16.mxu0 0
    %7959 = vmatpush1.bf16.msra.mxu0 0
    %7960 = vmatprep.subr.bf16.mxu0 0
    %7961 = vmatpush1.bf16.msra.mxu0 0
    %7962 = vmatprep.subr.bf16.mxu0 0
    %7963 = vmatpush1.bf16.msra.mxu0 0
    %7964 = vmatprep.subr.bf16.mxu0 0
    %7965 = vmatpush1.bf16.msra.mxu0 0
    %7966 = vmatprep.subr.bf16.mxu0 0
    %7967 = vmatpush1.bf16.msra.mxu0 0
    %7968 = vmatprep.subr.bf16.mxu0 0
    %7969 = vmatpush1.bf16.msra.mxu0 0
    %7970 = vmatprep.subr.bf16.mxu0 0
    %7971 = vmatpush1.bf16.msra.mxu0 0
    %7972 = vmatprep.mubr.bf16.mxu0 0
    %7973 = vmatmul.mubr.bf16.gmra.mrb[0].mxu0 %v7935
    %v7974 = vpop.f32.mrb[0].mxu0
    %v7975 = vadd.f32 0.0, %v7974
    %v7976 = vpop.f32.mrb[0].mxu0
    %v7977 = vpop.f32.mrb[0].mxu0
    %v7978 = vpop.f32.mrb[0].mxu0
    %7979 = vdwg.mxu0
    %v7980 = vld [vmem:[#allocation6 + $0x94] sm:$0xf]
    %v7982 = vsel %vm7933, %v7980, 0
    %7984 = vmatprep.subr.bf16.mxu0 0
    %7985 = vmatpush1.bf16.msra.mxu0 %v7938
    %7986 = vmatprep.subr.bf16.mxu0 0
    %7987 = vmatpush1.bf16.msra.mxu0 0
    %7988 = vmatprep.subr.bf16.mxu0 0
    %7989 = vmatpush1.bf16.msra.mxu0 0
    %7990 = vmatprep.subr.bf16.mxu0 0
    %7991 = vmatpush1.bf16.msra.mxu0 0
    %7992 = vmatprep.subr.bf16.mxu0 0
    %7993 = vmatpush1.bf16.msra.mxu0 0
    %7994 = vmatprep.subr.bf16.mxu0 0
    %7995 = vmatpush1.bf16.msra.mxu0 0
    %7996 = vmatprep.subr.bf16.mxu0 0
    %7997 = vmatpush1.bf16.msra.mxu0 0
    %7998 = vmatprep.subr.bf16.mxu0 0
    %7999 = vmatpush1.bf16.msra.mxu0 0
    %8000 = vmatprep.subr.bf16.mxu0 0
    %8001 = vmatpush1.bf16.msra.mxu0 0
    %8002 = vmatprep.subr.bf16.mxu0 0
    %8003 = vmatpush1.bf16.msra.mxu0 0
    %8004 = vmatprep.subr.bf16.mxu0 0
    %8005 = vmatpush1.bf16.msra.mxu0 0
    %8006 = vmatprep.subr.bf16.mxu0 0
    %8007 = vmatpush1.bf16.msra.mxu0 0
    %8008 = vmatprep.subr.bf16.mxu0 0
    %8009 = vmatpush1.bf16.msra.mxu0 0
    %8010 = vmatprep.subr.bf16.mxu0 0
    %8011 = vmatpush1.bf16.msra.mxu0 0
    %8012 = vmatprep.subr.bf16.mxu0 0
    %8013 = vmatpush1.bf16.msra.mxu0 0
    %8014 = vmatprep.subr.bf16.mxu0 0
    %8015 = vmatpush1.bf16.msra.mxu0 0
    %8016 = vmatprep.mubr.bf16.mxu0 0
    %8017 = vmatmul.mubr.bf16.gmra.mrb[0].mxu0 %v7982
    %v8018 = vpop.f32.mrb[0].mxu0
    %v8019 = vadd.f32 0.0, %v8018
    %v8020 = vpop.f32.mrb[0].mxu0
    %v8021 = vpop.f32.mrb[0].mxu0
    %v8022 = vpop.f32.mrb[0].mxu0
    %8023 = vdwg.mxu0
    %v8024 = vld [vmem:[#allocation6 + $0x98] sm:$0xf]
    %v8026 = vsel %vm7933, %v8024, 0
    %8028 = vmatprep.subr.bf16.mxu0 0
    %8029 = vmatpush1.bf16.msra.mxu0 %v7938
    %8030 = vmatprep.subr.bf16.mxu0 0
    %8031 = vmatpush1.bf16.msra.mxu0 0
    %8032 = vmatprep.subr.bf16.mxu0 0
    %8033 = vmatpush1.bf16.msra.mxu0 0
    %8034 = vmatprep.subr.bf16.mxu0 0
    %8035 = vmatpush1.bf16.msra.mxu0 0
    %8036 = vmatprep.subr.bf16.mxu0 0
    %8037 = vmatpush1.bf16.msra.mxu0 0
    %8038 = vmatprep.subr.bf16.mxu0 0
    %8039 = vmatpush1.bf16.msra.mxu0 0
    %8040 = vmatprep.subr.bf16.mxu0 0
    %8041 = vmatpush1.bf16.msra.mxu0 0
    %8042 = vmatprep.subr.bf16.mxu0 0
    %8043 = vmatpush1.bf16.msra.mxu0 0
    %8044 = vmatprep.subr.bf16.mxu0 0
    %8045 = vmatpush1.bf16.msra.mxu0 0
    %8046 = vmatprep.subr.bf16.mxu0 0
    %8047 = vmatpush1.bf16.msra.mxu0 0
    %8048 = vmatprep.subr.bf16.mxu0 0
    %8049 = vmatpush1.bf16.msra.mxu0 0
    %8050 = vmatprep.subr.bf16.mxu0 0
    %8051 = vmatpush1.bf16.msra.mxu0 0
    %8052 = vmatprep.subr.bf16.mxu0 0
    %8053 = vmatpush1.bf16.msra.mxu0 0
    %8054 = vmatprep.subr.bf16.mxu0 0
    %8055 = vmatpush1.bf16.msra.mxu0 0
    %8056 = vmatprep.subr.bf16.mxu0 0
    %8057 = vmatpush1.bf16.msra.mxu0 0
    %8058 = vmatprep.subr.bf16.mxu0 0
    %8059 = vmatpush1.bf16.msra.mxu0 0
    %8060 = vmatprep.mubr.bf16.mxu0 0
    %8061 = vmatmul.mubr.bf16.gmra.mrb[0].mxu0 %v8026
    %v8062 = vpop.f32.mrb[0].mxu0
    %v8063 = vadd.f32 0.0, %v8062
    %v8064 = vpop.f32.mrb[0].mxu0
    %v8065 = vpop.f32.mrb[0].mxu0
    %v8066 = vpop.f32.mrb[0].mxu0
    %8067 = vdwg.mxu0
    %v8068 = vld [vmem:[#allocation6 + $0x9c] sm:$0xf]
    %v8070 = vsel %vm7933, %v8068, 0
    %8072 = vmatprep.subr.bf16.mxu0 0
    %8073 = vmatpush1.bf16.msra.mxu0 %v7938
    %8074 = vmatprep.subr.bf16.mxu0 0
    %8075 = vmatpush1.bf16.msra.mxu0 0
    %8076 = vmatprep.subr.bf16.mxu0 0
    %8077 = vmatpush1.bf16.msra.mxu0 0
    %8078 = vmatprep.subr.bf16.mxu0 0
    %8079 = vmatpush1.bf16.msra.mxu0 0
    %8080 = vmatprep.subr.bf16.mxu0 0
    %8081 = vmatpush1.bf16.msra.mxu0 0
    %8082 = vmatprep.subr.bf16.mxu0 0
    %8083 = vmatpush1.bf16.msra.mxu0 0
    %8084 = vmatprep.subr.bf16.mxu0 0
    %8085 = vmatpush1.bf16.msra.mxu0 0
    %8086 = vmatprep.subr.bf16.mxu0 0
    %8087 = vmatpush1.bf16.msra.mxu0 0
    %8088 = vmatprep.subr.bf16.mxu0 0
    %8089 = vmatpush1.bf16.msra.mxu0 0
    %8090 = vmatprep.subr.bf16.mxu0 0
    %8091 = vmatpush1.bf16.msra.mxu0 0
    %8092 = vmatprep.subr.bf16.mxu0 0
    %8093 = vmatpush1.bf16.msra.mxu0 0
    %8094 = vmatprep.subr.bf16.mxu0 0
    %8095 = vmatpush1.bf16.msra.mxu0 0
    %8096 = vmatprep.subr.bf16.mxu0 0
    %8097 = vmatpush1.bf16.msra.mxu0 0
    %8098 = vmatprep.subr.bf16.mxu0 0
    %8099 = vmatpush1.bf16.msra.mxu0 0
    %8100 = vmatprep.subr.bf16.mxu0 0
    %8101 = vmatpush1.bf16.msra.mxu0 0
    %8102 = vmatprep.subr.bf16.mxu0 0
    %8103 = vmatpush1.bf16.msra.mxu0 0
    %8104 = vmatprep.mubr.bf16.mxu0 0
    %8105 = vmatmul.mubr.bf16.gmra.mrb[0].mxu0 %v8070
    %v8106 = vpop.f32.mrb[0].mxu0
    %v8107 = vadd.f32 0.0, %v8106
    %v8108 = vpop.f32.mrb[0].mxu0
    %v8109 = vpop.f32.mrb[0].mxu0
    %v8110 = vpop.f32.mrb[0].mxu0
    %8111 = vdwg.mxu0
    %v8112 = vpack.c.bf16 %v7975, %v7975
    %v8113 = vpack.c.bf16 %v8019, %v8019
    %v8114 = vpack.c.bf16 %v8063, %v8063
    %v8115 = vpack.c.bf16 %v8107, %v8107
    %v8116 = vld [vmem:[#allocation4 + $0x480] sm:$0xf]
    %v8117 = vld [vmem:[#allocation4 + $0x484] sm:$0xf]
    %v8118 = vld [vmem:[#allocation4 + $0x488] sm:$0xf]
    %v8119 = vld [vmem:[#allocation4 + $0x48c] sm:$0xf]
    %v8120 = vld [vmem:[#allocation4 + $0x490] sm:$0xf]
    %v8121 = vld [vmem:[#allocation4 + $0x494] sm:$0xf]
    %v8122 = vld [vmem:[#allocation4 + $0x498] sm:$0xf]
    %v8123 = vld [vmem:[#allocation4 + $0x49c] sm:$0xf]
    %v8124 = vld [vmem:[#allocation4 + $0x4a0] sm:$0xf]
    %v8125 = vld [vmem:[#allocation4 + $0x4a4] sm:$0xf]
    %v8126 = vld [vmem:[#allocation4 + $0x4a8] sm:$0xf]
    %v8127 = vld [vmem:[#allocation4 + $0x4ac] sm:$0xf]
    %v8128 = vld [vmem:[#allocation4 + $0x4b0] sm:$0xf]
    %v8129 = vld [vmem:[#allocation4 + $0x4b4] sm:$0xf]
    %v8130 = vld [vmem:[#allocation4 + $0x4b8] sm:$0xf]
    %v8131 = vld [vmem:[#allocation4 + $0x4bc] sm:$0xf]
    %v8132 = vld [vmem:[#allocation4 + $0x4c0] sm:$0xf]
    %v8133 = vld [vmem:[#allocation4 + $0x4c4] sm:$0xf]
    %v8134 = vld [vmem:[#allocation4 + $0x4c8] sm:$0xf]
    %v8135 = vld [vmem:[#allocation4 + $0x4cc] sm:$0xf]
    %v8136 = vld [vmem:[#allocation4 + $0x4d0] sm:$0xf]
    %v8137 = vld [vmem:[#allocation4 + $0x4d4] sm:$0xf]
    %v8138 = vld [vmem:[#allocation4 + $0x4d8] sm:$0xf]
    %v8139 = vld [vmem:[#allocation4 + $0x4dc] sm:$0xf]
    %v8140 = vld [vmem:[#allocation4 + $0x4e0] sm:$0xf]
    %v8141 = vld [vmem:[#allocation4 + $0x4e4] sm:$0xf]
    %v8142 = vld [vmem:[#allocation4 + $0x4e8] sm:$0xf]
    %v8143 = vld [vmem:[#allocation4 + $0x4ec] sm:$0xf]
    %v8144 = vld [vmem:[#allocation4 + $0x4f0] sm:$0xf]
    %v8145 = vld [vmem:[#allocation4 + $0x4f4] sm:$0xf]
    %v8146 = vld [vmem:[#allocation4 + $0x4f8] sm:$0xf]
    %v8147 = vld [vmem:[#allocation4 + $0x4fc] sm:$0xf]
    %v8148 = vld [vmem:[#allocation4 + $0x500] sm:$0xf]
    %v8149 = vld [vmem:[#allocation4 + $0x504] sm:$0xf]
    %v8150 = vld [vmem:[#allocation4 + $0x508] sm:$0xf]
    %v8151 = vld [vmem:[#allocation4 + $0x50c] sm:$0xf]
    %v8152 = vld [vmem:[#allocation4 + $0x510] sm:$0xf]
    %v8153 = vld [vmem:[#allocation4 + $0x514] sm:$0xf]
    %v8154 = vld [vmem:[#allocation4 + $0x518] sm:$0xf]
    %v8155 = vld [vmem:[#allocation4 + $0x51c] sm:$0xf]
    %v8156 = vld [vmem:[#allocation4 + $0x520] sm:$0xf]
    %v8157 = vld [vmem:[#allocation4 + $0x524] sm:$0xf]
    %v8158 = vld [vmem:[#allocation4 + $0x528] sm:$0xf]
    %v8159 = vld [vmem:[#allocation4 + $0x52c] sm:$0xf]
    %v8160 = vld [vmem:[#allocation4 + $0x530] sm:$0xf]
    %v8161 = vld [vmem:[#allocation4 + $0x534] sm:$0xf]
    %v8162 = vld [vmem:[#allocation4 + $0x538] sm:$0xf]
    %v8163 = vld [vmem:[#allocation4 + $0x53c] sm:$0xf]
    %v8164 = vld [vmem:[#allocation4 + $0x540] sm:$0xf]
    %v8165 = vld [vmem:[#allocation4 + $0x544] sm:$0xf]
    %v8166 = vld [vmem:[#allocation4 + $0x548] sm:$0xf]
    %v8167 = vld [vmem:[#allocation4 + $0x54c] sm:$0xf]
    %v8168 = vld [vmem:[#allocation4 + $0x550] sm:$0xf]
    %v8169 = vld [vmem:[#allocation4 + $0x554] sm:$0xf]
    %v8170 = vld [vmem:[#allocation4 + $0x558] sm:$0xf]
    %v8171 = vld [vmem:[#allocation4 + $0x55c] sm:$0xf]
    %v8172 = vld [vmem:[#allocation4 + $0x560] sm:$0xf]
    %v8173 = vld [vmem:[#allocation4 + $0x564] sm:$0xf]
    %v8174 = vld [vmem:[#allocation4 + $0x568] sm:$0xf]
    %v8175 = vld [vmem:[#allocation4 + $0x56c] sm:$0xf]
    %v8176 = vld [vmem:[#allocation4 + $0x570] sm:$0xf]
    %v8177 = vld [vmem:[#allocation4 + $0x574] sm:$0xf]
    %v8178 = vld [vmem:[#allocation4 + $0x578] sm:$0xf]
    %v8179 = vld [vmem:[#allocation4 + $0x57c] sm:$0xf]
    %v8180 = vld [vmem:[#allocation9 + $0x6] sm:$0x1]
    %v8181 = vlaneseq
    %v8182 = vshrl.u32 %v8181, 7
    %v8183 = vsub.s32 0, %v8182
    %v8184 = vrot.slane %v8180, %v8183
    %v8249 = vunpack.c.l.b16 %v8116
    %v8250 = vunpack.c.l.b16 %v8117
    %v8251 = vunpack.c.l.b16 %v8118
    %v8252 = vunpack.c.l.b16 %v8119
    %v8253 = vunpack.c.l.b16 %v8120
    %v8254 = vunpack.c.l.b16 %v8121
    %v8255 = vunpack.c.l.b16 %v8122
    %v8256 = vunpack.c.l.b16 %v8123
    %v8257 = vunpack.c.l.b16 %v8124
    %v8258 = vunpack.c.l.b16 %v8125
    %v8259 = vunpack.c.l.b16 %v8126
    %v8260 = vunpack.c.l.b16 %v8127
    %v8261 = vunpack.c.l.b16 %v8128
    %v8262 = vunpack.c.l.b16 %v8129
    %v8263 = vunpack.c.l.b16 %v8130
    %v8264 = vunpack.c.l.b16 %v8131
    %v8265 = vunpack.c.l.b16 %v8132
    %v8266 = vunpack.c.l.b16 %v8133
    %v8267 = vunpack.c.l.b16 %v8134
    %v8268 = vunpack.c.l.b16 %v8135
    %v8269 = vunpack.c.l.b16 %v8136
    %v8270 = vunpack.c.l.b16 %v8137
    %v8271 = vunpack.c.l.b16 %v8138
    %v8272 = vunpack.c.l.b16 %v8139
    %v8273 = vunpack.c.l.b16 %v8140
    %v8274 = vunpack.c.l.b16 %v8141
    %v8275 = vunpack.c.l.b16 %v8142
    %v8276 = vunpack.c.l.b16 %v8143
    %v8277 = vunpack.c.l.b16 %v8144
    %v8278 = vunpack.c.l.b16 %v8145
    %v8279 = vunpack.c.l.b16 %v8146
    %v8280 = vunpack.c.l.b16 %v8147
    %v8281 = vunpack.c.l.b16 %v8148
    %v8282 = vunpack.c.l.b16 %v8149
    %v8283 = vunpack.c.l.b16 %v8150
    %v8284 = vunpack.c.l.b16 %v8151
    %v8285 = vunpack.c.l.b16 %v8152
    %v8286 = vunpack.c.l.b16 %v8153
    %v8287 = vunpack.c.l.b16 %v8154
    %v8288 = vunpack.c.l.b16 %v8155
    %v8289 = vunpack.c.l.b16 %v8156
    %v8290 = vunpack.c.l.b16 %v8157
    %v8291 = vunpack.c.l.b16 %v8158
    %v8292 = vunpack.c.l.b16 %v8159
    %v8293 = vunpack.c.l.b16 %v8160
    %v8294 = vunpack.c.l.b16 %v8161
    %v8295 = vunpack.c.l.b16 %v8162
    %v8296 = vunpack.c.l.b16 %v8163
    %v8297 = vunpack.c.l.b16 %v8164
    %v8298 = vunpack.c.l.b16 %v8165
    %v8299 = vunpack.c.l.b16 %v8166
    %v8300 = vunpack.c.l.b16 %v8167
    %v8301 = vunpack.c.l.b16 %v8168
    %v8302 = vunpack.c.l.b16 %v8169
    %v8303 = vunpack.c.l.b16 %v8170
    %v8304 = vunpack.c.l.b16 %v8171
    %v8305 = vunpack.c.l.b16 %v8172
    %v8306 = vunpack.c.l.b16 %v8173
    %v8307 = vunpack.c.l.b16 %v8174
    %v8308 = vunpack.c.l.b16 %v8175
    %v8309 = vunpack.c.l.b16 %v8176
    %v8310 = vunpack.c.l.b16 %v8177
    %v8311 = vunpack.c.l.b16 %v8178
    %v8312 = vunpack.c.l.b16 %v8179
    %v8313 = vpack.c.b16 %v8250, %v8249
    %v8314 = vpack.c.b16 %v8252, %v8251
    %v8315 = vpack.c.b16 %v8254, %v8253
    %v8316 = vpack.c.b16 %v8256, %v8255
    %v8317 = vpack.c.b16 %v8258, %v8257
    %v8318 = vpack.c.b16 %v8260, %v8259
    %v8319 = vpack.c.b16 %v8262, %v8261
    %v8320 = vpack.c.b16 %v8264, %v8263
    %v8321 = vpack.c.b16 %v8266, %v8265
    %v8322 = vpack.c.b16 %v8268, %v8267
    %v8323 = vpack.c.b16 %v8270, %v8269
    %v8324 = vpack.c.b16 %v8272, %v8271
    %v8325 = vpack.c.b16 %v8274, %v8273
    %v8326 = vpack.c.b16 %v8276, %v8275
    %v8327 = vpack.c.b16 %v8278, %v8277
    %v8328 = vpack.c.b16 %v8280, %v8279
    %v8329 = vpack.c.b16 %v8282, %v8281
    %v8330 = vpack.c.b16 %v8284, %v8283
    %v8331 = vpack.c.b16 %v8286, %v8285
    %v8332 = vpack.c.b16 %v8288, %v8287
    %v8333 = vpack.c.b16 %v8290, %v8289
    %v8334 = vpack.c.b16 %v8292, %v8291
    %v8335 = vpack.c.b16 %v8294, %v8293
    %v8336 = vpack.c.b16 %v8296, %v8295
    %v8337 = vpack.c.b16 %v8298, %v8297
    %v8338 = vpack.c.b16 %v8300, %v8299
    %v8339 = vpack.c.b16 %v8302, %v8301
    %v8340 = vpack.c.b16 %v8304, %v8303
    %v8341 = vpack.c.b16 %v8306, %v8305
    %v8342 = vpack.c.b16 %v8308, %v8307
    %v8343 = vpack.c.b16 %v8310, %v8309
    %v8344 = vpack.c.b16 %v8312, %v8311
    %8377 = vmatprep.subr.bf16.mxu0 0
    %8378 = vmatpush1.bf16.msra.mxu0 %v8313
    %8379 = vmatprep.subr.bf16.mxu0 0
    %8380 = vmatpush1.bf16.msra.mxu0 %v8314
    %8381 = vmatprep.subr.bf16.mxu0 0
    %8382 = vmatpush1.bf16.msra.mxu0 %v8315
    %8383 = vmatprep.subr.bf16.mxu0 0
    %8384 = vmatpush1.bf16.msra.mxu0 %v8316
    %8385 = vmatprep.subr.bf16.mxu0 0
    %8386 = vmatpush1.bf16.msra.mxu0 %v8317
    %8387 = vmatprep.subr.bf16.mxu0 0
    %8388 = vmatpush1.bf16.msra.mxu0 %v8318
    %8389 = vmatprep.subr.bf16.mxu0 0
    %8390 = vmatpush1.bf16.msra.mxu0 %v8319
    %8391 = vmatprep.subr.bf16.mxu0 0
    %8392 = vmatpush1.bf16.msra.mxu0 %v8320
    %8393 = vmatprep.subr.bf16.mxu0 0
    %8394 = vmatpush1.bf16.msra.mxu0 %v8321
    %8395 = vmatprep.subr.bf16.mxu0 0
    %8396 = vmatpush1.bf16.msra.mxu0 %v8322
    %8397 = vmatprep.subr.bf16.mxu0 0
    %8398 = vmatpush1.bf16.msra.mxu0 %v8323
    %8399 = vmatprep.subr.bf16.mxu0 0
    %8400 = vmatpush1.bf16.msra.mxu0 %v8324
    %8401 = vmatprep.subr.bf16.mxu0 0
    %8402 = vmatpush1.bf16.msra.mxu0 %v8325
    %8403 = vmatprep.subr.bf16.mxu0 0
    %8404 = vmatpush1.bf16.msra.mxu0 %v8326
    %8405 = vmatprep.subr.bf16.mxu0 0
    %8406 = vmatpush1.bf16.msra.mxu0 %v8327
    %8407 = vmatprep.subr.bf16.mxu0 0
    %8408 = vmatpush1.bf16.msra.mxu0 %v8328
    %8409 = vmatprep.mubr.bf16.mxu0 %v8113
    %8410 = vmatmul.mubr.bf16.gmra.mrb[0].mxu0 %v8112
    %v8411 = vpop.f32.mrb[0].mxu0
    %v8412 = vadd.f32 %v8184, %v8411
    %v8413 = vpop.f32.mrb[0].mxu0
    %v8414 = vpop.f32.mrb[0].mxu0
    %v8415 = vpop.f32.mrb[0].mxu0
    %8416 = vdwg.mxu0
    %8417 = vmatprep.subr.bf16.mxu0 0
    %8418 = vmatpush1.bf16.msra.mxu0 %v8329
    %8419 = vmatprep.subr.bf16.mxu0 0
    %8420 = vmatpush1.bf16.msra.mxu0 %v8330
    %8421 = vmatprep.subr.bf16.mxu0 0
    %8422 = vmatpush1.bf16.msra.mxu0 %v8331
    %8423 = vmatprep.subr.bf16.mxu0 0
    %8424 = vmatpush1.bf16.msra.mxu0 %v8332
    %8425 = vmatprep.subr.bf16.mxu0 0
    %8426 = vmatpush1.bf16.msra.mxu0 %v8333
    %8427 = vmatprep.subr.bf16.mxu0 0
    %8428 = vmatpush1.bf16.msra.mxu0 %v8334
    %8429 = vmatprep.subr.bf16.mxu0 0
    %8430 = vmatpush1.bf16.msra.mxu0 %v8335
    %8431 = vmatprep.subr.bf16.mxu0 0
    %8432 = vmatpush1.bf16.msra.mxu0 %v8336
    %8433 = vmatprep.subr.bf16.mxu0 0
    %8434 = vmatpush1.bf16.msra.mxu0 %v8337
    %8435 = vmatprep.subr.bf16.mxu0 0
    %8436 = vmatpush1.bf16.msra.mxu0 %v8338
    %8437 = vmatprep.subr.bf16.mxu0 0
    %8438 = vmatpush1.bf16.msra.mxu0 %v8339
    %8439 = vmatprep.subr.bf16.mxu0 0
    %8440 = vmatpush1.bf16.msra.mxu0 %v8340
    %8441 = vmatprep.subr.bf16.mxu0 0
    %8442 = vmatpush1.bf16.msra.mxu0 %v8341
    %8443 = vmatprep.subr.bf16.mxu0 0
    %8444 = vmatpush1.bf16.msra.mxu0 %v8342
    %8445 = vmatprep.subr.bf16.mxu0 0
    %8446 = vmatpush1.bf16.msra.mxu0 %v8343
    %8447 = vmatprep.subr.bf16.mxu0 0
    %8448 = vmatpush1.bf16.msra.mxu0 %v8344
    %8449 = vmatprep.mubr.bf16.mxu0 %v8115
    %8450 = vmatmul.mubr.bf16.gmra.mrb[0].mxu0 %v8114
    %v8451 = vpop.f32.mrb[0].mxu0
    %v8452 = vadd.f32 %v8412, %v8451
    %v8453 = vpop.f32.mrb[0].mxu0
    %v8454 = vpop.f32.mrb[0].mxu0
    %v8455 = vpop.f32.mrb[0].mxu0
    %8456 = vdwg.mxu0
    %v8457 = vmax.f32 %v8452, 0.0
    %v8458 = vpack.c.bf16 %v8457, %v8457
    %v8459 = vld [vmem:[#allocation6 + $0xa0] sm:$0xf]
    %v8460 = vld [vmem:[#allocation6 + $0xa4] sm:$0xf]
    %v8461 = vld [vmem:[#allocation6 + $0xa8] sm:$0xf]
    %v8465 = vunpack.c.l.b16 %v8459
    %v8466 = vunpack.c.l.b16 %v8460
    %v8467 = vunpack.c.l.b16 %v8461
    %v8468 = vpack.c.b16 %v8466, %v8465
    %v8469 = vpack.c.b16 %v8467, %v8467
    %v8471 = vsel %vm7933, %v8468, 0
    %v8474 = vsel %vm7933, %v8469, 0
    %v8477 = vsel %vm5781, %v8458, 0
    %8479 = vmatprep.subr.bf16.mxu0 0
    %8480 = vmatpush1.bf16.msra.mxu0 %v8477
    %8481 = vmatprep.subr.bf16.mxu0 0
    %8482 = vmatpush1.bf16.msra.mxu0 0
    %8483 = vmatprep.subr.bf16.mxu0 0
    %8484 = vmatpush1.bf16.msra.mxu0 0
    %8485 = vmatprep.subr.bf16.mxu0 0
    %8486 = vmatpush1.bf16.msra.mxu0 0
    %8487 = vmatprep.subr.bf16.mxu0 0
    %8488 = vmatpush1.bf16.msra.mxu0 0
    %8489 = vmatprep.subr.bf16.mxu0 0
    %8490 = vmatpush1.bf16.msra.mxu0 0
    %8491 = vmatprep.subr.bf16.mxu0 0
    %8492 = vmatpush1.bf16.msra.mxu0 0
    %8493 = vmatprep.subr.bf16.mxu0 0
    %8494 = vmatpush1.bf16.msra.mxu0 0
    %8495 = vmatprep.subr.bf16.mxu0 0
    %8496 = vmatpush1.bf16.msra.mxu0 0
    %8497 = vmatprep.subr.bf16.mxu0 0
    %8498 = vmatpush1.bf16.msra.mxu0 0
    %8499 = vmatprep.subr.bf16.mxu0 0
    %8500 = vmatpush1.bf16.msra.mxu0 0
    %8501 = vmatprep.subr.bf16.mxu0 0
    %8502 = vmatpush1.bf16.msra.mxu0 0
    %8503 = vmatprep.subr.bf16.mxu0 0
    %8504 = vmatpush1.bf16.msra.mxu0 0
    %8505 = vmatprep.subr.bf16.mxu0 0
    %8506 = vmatpush1.bf16.msra.mxu0 0
    %8507 = vmatprep.subr.bf16.mxu0 0
    %8508 = vmatpush1.bf16.msra.mxu0 0
    %8509 = vmatprep.subr.bf16.mxu0 0
    %8510 = vmatpush1.bf16.msra.mxu0 0
    %8511 = vmatprep.mubr.bf16.mxu0 0
    %8512 = vmatmul.mubr.bf16.gmra.mrb[0].mxu0 %v8471
    %v8513 = vpop.f32.mrb[0].mxu0
    %v8514 = vadd.f32 0.0, %v8513
    %v8515 = vpop.f32.mrb[0].mxu0
    %v8516 = vpop.f32.mrb[0].mxu0
    %v8517 = vadd.f32 0.0, %v8516
    %v8518 = vpop.f32.mrb[0].mxu0
    %8519 = vmatprep.mubr.bf16.mxu0 0
    %8520 = vmatmul.mubr.bf16.gmra.mrb[0].mxu0 %v8474
    %v8521 = vpop.f32.mrb[0].mxu0
    %v8522 = vadd.f32 0.0, %v8521
    %v8523 = vpop.f32.mrb[0].mxu0
    %v8524 = vpop.f32.mrb[0].mxu0
    %v8525 = vpop.f32.mrb[0].mxu0
    %8526 = vdwg.mxu0
    %v8527 = vld [vmem:[#allocation6 + $0xac] sm:$0xf]
    %v8528 = vld [vmem:[#allocation6 + $0xb0] sm:$0xf]
    %v8529 = vld [vmem:[#allocation6 + $0xb4] sm:$0xf]
    %v8533 = vunpack.c.l.b16 %v8527
    %v8534 = vunpack.c.l.b16 %v8528
    %v8535 = vunpack.c.l.b16 %v8529
    %v8536 = vpack.c.b16 %v8534, %v8533
    %v8537 = vpack.c.b16 %v8535, %v8535
    %v8539 = vsel %vm7933, %v8536, 0
    %v8542 = vsel %vm7933, %v8537, 0
    %8544 = vmatprep.subr.bf16.mxu0 0
    %8545 = vmatpush1.bf16.msra.mxu0 %v8477
    %8546 = vmatprep.subr.bf16.mxu0 0
    %8547 = vmatpush1.bf16.msra.mxu0 0
    %8548 = vmatprep.subr.bf16.mxu0 0
    %8549 = vmatpush1.bf16.msra.mxu0 0
    %8550 = vmatprep.subr.bf16.mxu0 0
    %8551 = vmatpush1.bf16.msra.mxu0 0
    %8552 = vmatprep.subr.bf16.mxu0 0
    %8553 = vmatpush1.bf16.msra.mxu0 0
    %8554 = vmatprep.subr.bf16.mxu0 0
    %8555 = vmatpush1.bf16.msra.mxu0 0
    %8556 = vmatprep.subr.bf16.mxu0 0
    %8557 = vmatpush1.bf16.msra.mxu0 0
    %8558 = vmatprep.subr.bf16.mxu0 0
    %8559 = vmatpush1.bf16.msra.mxu0 0
    %8560 = vmatprep.subr.bf16.mxu0 0
    %8561 = vmatpush1.bf16.msra.mxu0 0
    %8562 = vmatprep.subr.bf16.mxu0 0
    %8563 = vmatpush1.bf16.msra.mxu0 0
    %8564 = vmatprep.subr.bf16.mxu0 0
    %8565 = vmatpush1.bf16.msra.mxu0 0
    %8566 = vmatprep.subr.bf16.mxu0 0
    %8567 = vmatpush1.bf16.msra.mxu0 0
    %8568 = vmatprep.subr.bf16.mxu0 0
    %8569 = vmatpush1.bf16.msra.mxu0 0
    %8570 = vmatprep.subr.bf16.mxu0 0
    %8571 = vmatpush1.bf16.msra.mxu0 0
    %8572 = vmatprep.subr.bf16.mxu0 0
    %8573 = vmatpush1.bf16.msra.mxu0 0
    %8574 = vmatprep.subr.bf16.mxu0 0
    %8575 = vmatpush1.bf16.msra.mxu0 0
    %8576 = vmatprep.mubr.bf16.mxu0 0
    %8577 = vmatmul.mubr.bf16.gmra.mrb[0].mxu0 %v8539
    %v8578 = vpop.f32.mrb[0].mxu0
    %v8579 = vadd.f32 0.0, %v8578
    %v8580 = vpop.f32.mrb[0].mxu0
    %v8581 = vpop.f32.mrb[0].mxu0
    %v8582 = vadd.f32 0.0, %v8581
    %v8583 = vpop.f32.mrb[0].mxu0
    %8584 = vmatprep.mubr.bf16.mxu0 0
    %8585 = vmatmul.mubr.bf16.gmra.mrb[0].mxu0 %v8542
    %v8586 = vpop.f32.mrb[0].mxu0
    %v8587 = vadd.f32 0.0, %v8586
    %v8588 = vpop.f32.mrb[0].mxu0
    %v8589 = vpop.f32.mrb[0].mxu0
    %v8590 = vpop.f32.mrb[0].mxu0
    %8591 = vdwg.mxu0
    %v8592 = vld [vmem:[#allocation6 + $0xb8] sm:$0xf]
    %v8593 = vld [vmem:[#allocation6 + $0xbc] sm:$0xf]
    %v8594 = vld [vmem:[#allocation6 + $0xc0] sm:$0xf]
    %v8598 = vunpack.c.l.b16 %v8592
    %v8599 = vunpack.c.l.b16 %v8593
    %v8600 = vunpack.c.l.b16 %v8594
    %v8601 = vpack.c.b16 %v8599, %v8598
    %v8602 = vpack.c.b16 %v8600, %v8600
    %v8604 = vsel %vm7933, %v8601, 0
    %v8607 = vsel %vm7933, %v8602, 0
    %8609 = vmatprep.subr.bf16.mxu0 0
    %8610 = vmatpush1.bf16.msra.mxu0 %v8477
    %8611 = vmatprep.subr.bf16.mxu0 0
    %8612 = vmatpush1.bf16.msra.mxu0 0
    %8613 = vmatprep.subr.bf16.mxu0 0
    %8614 = vmatpush1.bf16.msra.mxu0 0
    %8615 = vmatprep.subr.bf16.mxu0 0
    %8616 = vmatpush1.bf16.msra.mxu0 0
    %8617 = vmatprep.subr.bf16.mxu0 0
    %8618 = vmatpush1.bf16.msra.mxu0 0
    %8619 = vmatprep.subr.bf16.mxu0 0
    %8620 = vmatpush1.bf16.msra.mxu0 0
    %8621 = vmatprep.subr.bf16.mxu0 0
    %8622 = vmatpush1.bf16.msra.mxu0 0
    %8623 = vmatprep.subr.bf16.mxu0 0
    %8624 = vmatpush1.bf16.msra.mxu0 0
    %8625 = vmatprep.subr.bf16.mxu0 0
    %8626 = vmatpush1.bf16.msra.mxu0 0
    %8627 = vmatprep.subr.bf16.mxu0 0
    %8628 = vmatpush1.bf16.msra.mxu0 0
    %8629 = vmatprep.subr.bf16.mxu0 0
    %8630 = vmatpush1.bf16.msra.mxu0 0
    %8631 = vmatprep.subr.bf16.mxu0 0
    %8632 = vmatpush1.bf16.msra.mxu0 0
    %8633 = vmatprep.subr.bf16.mxu0 0
    %8634 = vmatpush1.bf16.msra.mxu0 0
    %8635 = vmatprep.subr.bf16.mxu0 0
    %8636 = vmatpush1.bf16.msra.mxu0 0
    %8637 = vmatprep.subr.bf16.mxu0 0
    %8638 = vmatpush1.bf16.msra.mxu0 0
    %8639 = vmatprep.subr.bf16.mxu0 0
    %8640 = vmatpush1.bf16.msra.mxu0 0
    %8641 = vmatprep.mubr.bf16.mxu0 0
    %8642 = vmatmul.mubr.bf16.gmra.mrb[0].mxu0 %v8604
    %v8643 = vpop.f32.mrb[0].mxu0
    %v8644 = vadd.f32 0.0, %v8643
    %v8645 = vpop.f32.mrb[0].mxu0
    %v8646 = vpop.f32.mrb[0].mxu0
    %v8647 = vadd.f32 0.0, %v8646
    %v8648 = vpop.f32.mrb[0].mxu0
    %8649 = vmatprep.mubr.bf16.mxu0 0
    %8650 = vmatmul.mubr.bf16.gmra.mrb[0].mxu0 %v8607
    %v8651 = vpop.f32.mrb[0].mxu0
    %v8652 = vadd.f32 0.0, %v8651
    %v8653 = vpop.f32.mrb[0].mxu0
    %v8654 = vpop.f32.mrb[0].mxu0
    %v8655 = vpop.f32.mrb[0].mxu0
    %8656 = vdwg.mxu0
    %v8657 = vld [vmem:[#allocation6 + $0xc4] sm:$0xf]
    %v8658 = vld [vmem:[#allocation6 + $0xc8] sm:$0xf]
    %v8659 = vld [vmem:[#allocation6 + $0xcc] sm:$0xf]
    %v8663 = vunpack.c.l.b16 %v8657
    %v8664 = vunpack.c.l.b16 %v8658
    %v8665 = vunpack.c.l.b16 %v8659
    %v8666 = vpack.c.b16 %v8664, %v8663
    %v8667 = vpack.c.b16 %v8665, %v8665
    %v8669 = vsel %vm7933, %v8666, 0
    %v8672 = vsel %vm7933, %v8667, 0
    %8674 = vmatprep.subr.bf16.mxu0 0
    %8675 = vmatpush1.bf16.msra.mxu0 %v8477
    %8676 = vmatprep.subr.bf16.mxu0 0
    %8677 = vmatpush1.bf16.msra.mxu0 0
    %8678 = vmatprep.subr.bf16.mxu0 0
    %8679 = vmatpush1.bf16.msra.mxu0 0
    %8680 = vmatprep.subr.bf16.mxu0 0
    %8681 = vmatpush1.bf16.msra.mxu0 0
    %8682 = vmatprep.subr.bf16.mxu0 0
    %8683 = vmatpush1.bf16.msra.mxu0 0
    %8684 = vmatprep.subr.bf16.mxu0 0
    %8685 = vmatpush1.bf16.msra.mxu0 0
    %8686 = vmatprep.subr.bf16.mxu0 0
    %8687 = vmatpush1.bf16.msra.mxu0 0
    %8688 = vmatprep.subr.bf16.mxu0 0
    %8689 = vmatpush1.bf16.msra.mxu0 0
    %8690 = vmatprep.subr.bf16.mxu0 0
    %8691 = vmatpush1.bf16.msra.mxu0 0
    %8692 = vmatprep.subr.bf16.mxu0 0
    %8693 = vmatpush1.bf16.msra.mxu0 0
    %8694 = vmatprep.subr.bf16.mxu0 0
    %8695 = vmatpush1.bf16.msra.mxu0 0
    %8696 = vmatprep.subr.bf16.mxu0 0
    %8697 = vmatpush1.bf16.msra.mxu0 0
    %8698 = vmatprep.subr.bf16.mxu0 0
    %8699 = vmatpush1.bf16.msra.mxu0 0
    %8700 = vmatprep.subr.bf16.mxu0 0
    %8701 = vmatpush1.bf16.msra.mxu0 0
    %8702 = vmatprep.subr.bf16.mxu0 0
    %8703 = vmatpush1.bf16.msra.mxu0 0
    %8704 = vmatprep.subr.bf16.mxu0 0
    %8705 = vmatpush1.bf16.msra.mxu0 0
    %8706 = vmatprep.mubr.bf16.mxu0 0
    %8707 = vmatmul.mubr.bf16.gmra.mrb[0].mxu0 %v8669
    %v8708 = vpop.f32.mrb[0].mxu0
    %v8709 = vadd.f32 0.0, %v8708
    %v8710 = vpop.f32.mrb[0].mxu0
    %v8711 = vpop.f32.mrb[0].mxu0
    %v8712 = vadd.f32 0.0, %v8711
    %v8713 = vpop.f32.mrb[0].mxu0
    %8714 = vmatprep.mubr.bf16.mxu0 0
    %8715 = vmatmul.mubr.bf16.gmra.mrb[0].mxu0 %v8672
    %v8716 = vpop.f32.mrb[0].mxu0
    %v8717 = vadd.f32 0.0, %v8716
    %v8718 = vpop.f32.mrb[0].mxu0
    %v8719 = vpop.f32.mrb[0].mxu0
    %v8720 = vpop.f32.mrb[0].mxu0
    %8721 = vdwg.mxu0
    %v8722 = vpack.c.bf16 %v8517, %v8514
    %v8723 = vpack.c.bf16 %v8582, %v8579
    %v8724 = vpack.c.bf16 %v8647, %v8644
    %v8725 = vpack.c.bf16 %v8712, %v8709
    %v8726 = vpack.c.bf16 %v8522, %v8522
    %v8727 = vpack.c.bf16 %v8587, %v8587
    %v8728 = vpack.c.bf16 %v8652, %v8652
    %v8729 = vpack.c.bf16 %v8717, %v8717
    %v8730 = vld [vmem:[#allocation4 + $0x580] sm:$0xf]
    %v8731 = vld [vmem:[#allocation4 + $0x584] sm:$0xf]
    %v8732 = vld [vmem:[#allocation4 + $0x588] sm:$0xf]
    %v8733 = vld [vmem:[#allocation4 + $0x58c] sm:$0xf]
    %v8734 = vld [vmem:[#allocation4 + $0x590] sm:$0xf]
    %v8735 = vld [vmem:[#allocation4 + $0x594] sm:$0xf]
    %v8736 = vld [vmem:[#allocation4 + $0x598] sm:$0xf]
    %v8737 = vld [vmem:[#allocation4 + $0x59c] sm:$0xf]
    %v8738 = vld [vmem:[#allocation4 + $0x5a0] sm:$0xf]
    %v8739 = vld [vmem:[#allocation4 + $0x5a4] sm:$0xf]
    %v8740 = vld [vmem:[#allocation4 + $0x5a8] sm:$0xf]
    %v8741 = vld [vmem:[#allocation4 + $0x5ac] sm:$0xf]
    %v8742 = vld [vmem:[#allocation4 + $0x5b0] sm:$0xf]
    %v8743 = vld [vmem:[#allocation4 + $0x5b4] sm:$0xf]
    %v8744 = vld [vmem:[#allocation4 + $0x5b8] sm:$0xf]
    %v8745 = vld [vmem:[#allocation4 + $0x5bc] sm:$0xf]
    %v8746 = vld [vmem:[#allocation4 + $0x5c0] sm:$0xf]
    %v8747 = vld [vmem:[#allocation4 + $0x5c4] sm:$0xf]
    %v8748 = vld [vmem:[#allocation4 + $0x5c8] sm:$0xf]
    %v8749 = vld [vmem:[#allocation4 + $0x5cc] sm:$0xf]
    %v8750 = vld [vmem:[#allocation4 + $0x5d0] sm:$0xf]
    %v8751 = vld [vmem:[#allocation4 + $0x5d4] sm:$0xf]
    %v8752 = vld [vmem:[#allocation4 + $0x5d8] sm:$0xf]
    %v8753 = vld [vmem:[#allocation4 + $0x5dc] sm:$0xf]
    %v8754 = vld [vmem:[#allocation4 + $0x5e0] sm:$0xf]
    %v8755 = vld [vmem:[#allocation4 + $0x5e4] sm:$0xf]
    %v8756 = vld [vmem:[#allocation4 + $0x5e8] sm:$0xf]
    %v8757 = vld [vmem:[#allocation4 + $0x5ec] sm:$0xf]
    %v8758 = vld [vmem:[#allocation4 + $0x5f0] sm:$0xf]
    %v8759 = vld [vmem:[#allocation4 + $0x5f4] sm:$0xf]
    %v8760 = vld [vmem:[#allocation4 + $0x5f8] sm:$0xf]
    %v8761 = vld [vmem:[#allocation4 + $0x5fc] sm:$0xf]
    %v8762 = vld [vmem:[#allocation4 + $0x600] sm:$0xf]
    %v8763 = vld [vmem:[#allocation4 + $0x604] sm:$0xf]
    %v8764 = vld [vmem:[#allocation4 + $0x608] sm:$0xf]
    %v8765 = vld [vmem:[#allocation4 + $0x60c] sm:$0xf]
    %v8766 = vld [vmem:[#allocation4 + $0x610] sm:$0xf]
    %v8767 = vld [vmem:[#allocation4 + $0x614] sm:$0xf]
    %v8768 = vld [vmem:[#allocation4 + $0x618] sm:$0xf]
    %v8769 = vld [vmem:[#allocation4 + $0x61c] sm:$0xf]
    %v8770 = vld [vmem:[#allocation4 + $0x620] sm:$0xf]
    %v8771 = vld [vmem:[#allocation4 + $0x624] sm:$0xf]
    %v8772 = vld [vmem:[#allocation4 + $0x628] sm:$0xf]
    %v8773 = vld [vmem:[#allocation4 + $0x62c] sm:$0xf]
    %v8774 = vld [vmem:[#allocation4 + $0x630] sm:$0xf]
    %v8775 = vld [vmem:[#allocation4 + $0x634] sm:$0xf]
    %v8776 = vld [vmem:[#allocation4 + $0x638] sm:$0xf]
    %v8777 = vld [vmem:[#allocation4 + $0x63c] sm:$0xf]
    %v8778 = vld [vmem:[#allocation4 + $0x640] sm:$0xf]
    %v8779 = vld [vmem:[#allocation4 + $0x644] sm:$0xf]
    %v8780 = vld [vmem:[#allocation4 + $0x648] sm:$0xf]
    %v8781 = vld [vmem:[#allocation4 + $0x64c] sm:$0xf]
    %v8782 = vld [vmem:[#allocation4 + $0x650] sm:$0xf]
    %v8783 = vld [vmem:[#allocation4 + $0x654] sm:$0xf]
    %v8784 = vld [vmem:[#allocation4 + $0x658] sm:$0xf]
    %v8785 = vld [vmem:[#allocation4 + $0x65c] sm:$0xf]
    %v8786 = vld [vmem:[#allocation4 + $0x660] sm:$0xf]
    %v8787 = vld [vmem:[#allocation4 + $0x664] sm:$0xf]
    %v8788 = vld [vmem:[#allocation4 + $0x668] sm:$0xf]
    %v8789 = vld [vmem:[#allocation4 + $0x66c] sm:$0xf]
    %v8790 = vld [vmem:[#allocation4 + $0x670] sm:$0xf]
    %v8791 = vld [vmem:[#allocation4 + $0x674] sm:$0xf]
    %v8792 = vld [vmem:[#allocation4 + $0x678] sm:$0xf]
    %v8793 = vld [vmem:[#allocation4 + $0x67c] sm:$0xf]
    %v8794 = vld [vmem:[#allocation9 + $0x7] sm:$0x1]
    %v8795 = vlaneseq
    %v8796 = vshrl.u32 %v8795, 7
    %v8797 = vsub.s32 0, %v8796
    %v8798 = vrot.slane %v8794, %v8797
    %v8863 = vunpack.c.l.b16 %v8730
    %v8864 = vunpack.c.l.b16 %v8731
    %v8865 = vunpack.c.l.b16 %v8732
    %v8866 = vunpack.c.l.b16 %v8733
    %v8867 = vunpack.c.l.b16 %v8734
    %v8868 = vunpack.c.l.b16 %v8735
    %v8869 = vunpack.c.l.b16 %v8736
    %v8870 = vunpack.c.l.b16 %v8737
    %v8871 = vunpack.c.l.b16 %v8738
    %v8872 = vunpack.c.l.b16 %v8739
    %v8873 = vunpack.c.l.b16 %v8740
    %v8874 = vunpack.c.l.b16 %v8741
    %v8875 = vunpack.c.l.b16 %v8742
    %v8876 = vunpack.c.l.b16 %v8743
    %v8877 = vunpack.c.l.b16 %v8744
    %v8878 = vunpack.c.l.b16 %v8745
    %v8879 = vunpack.c.l.b16 %v8746
    %v8880 = vunpack.c.l.b16 %v8747
    %v8881 = vunpack.c.l.b16 %v8748
    %v8882 = vunpack.c.l.b16 %v8749
    %v8883 = vunpack.c.l.b16 %v8750
    %v8884 = vunpack.c.l.b16 %v8751
    %v8885 = vunpack.c.l.b16 %v8752
    %v8886 = vunpack.c.l.b16 %v8753
    %v8887 = vunpack.c.l.b16 %v8754
    %v8888 = vunpack.c.l.b16 %v8755
    %v8889 = vunpack.c.l.b16 %v8756
    %v8890 = vunpack.c.l.b16 %v8757
    %v8891 = vunpack.c.l.b16 %v8758
    %v8892 = vunpack.c.l.b16 %v8759
    %v8893 = vunpack.c.l.b16 %v8760
    %v8894 = vunpack.c.l.b16 %v8761
    %v8895 = vunpack.c.l.b16 %v8762
    %v8896 = vunpack.c.l.b16 %v8763
    %v8897 = vunpack.c.l.b16 %v8764
    %v8898 = vunpack.c.l.b16 %v8765
    %v8899 = vunpack.c.l.b16 %v8766
    %v8900 = vunpack.c.l.b16 %v8767
    %v8901 = vunpack.c.l.b16 %v8768
    %v8902 = vunpack.c.l.b16 %v8769
    %v8903 = vunpack.c.l.b16 %v8770
    %v8904 = vunpack.c.l.b16 %v8771
    %v8905 = vunpack.c.l.b16 %v8772
    %v8906 = vunpack.c.l.b16 %v8773
    %v8907 = vunpack.c.l.b16 %v8774
    %v8908 = vunpack.c.l.b16 %v8775
    %v8909 = vunpack.c.l.b16 %v8776
    %v8910 = vunpack.c.l.b16 %v8777
    %v8911 = vunpack.c.l.b16 %v8778
    %v8912 = vunpack.c.l.b16 %v8779
    %v8913 = vunpack.c.l.b16 %v8780
    %v8914 = vunpack.c.l.b16 %v8781
    %v8915 = vunpack.c.l.b16 %v8782
    %v8916 = vunpack.c.l.b16 %v8783
    %v8917 = vunpack.c.l.b16 %v8784
    %v8918 = vunpack.c.l.b16 %v8785
    %v8919 = vunpack.c.l.b16 %v8786
    %v8920 = vunpack.c.l.b16 %v8787
    %v8921 = vunpack.c.l.b16 %v8788
    %v8922 = vunpack.c.l.b16 %v8789
    %v8923 = vunpack.c.l.b16 %v8790
    %v8924 = vunpack.c.l.b16 %v8791
    %v8925 = vunpack.c.l.b16 %v8792
    %v8926 = vunpack.c.l.b16 %v8793
    %v8927 = vpack.c.b16 %v8864, %v8863
    %v8928 = vpack.c.b16 %v8866, %v8865
    %v8929 = vpack.c.b16 %v8868, %v8867
    %v8930 = vpack.c.b16 %v8870, %v8869
    %v8931 = vpack.c.b16 %v8872, %v8871
    %v8932 = vpack.c.b16 %v8874, %v8873
    %v8933 = vpack.c.b16 %v8876, %v8875
    %v8934 = vpack.c.b16 %v8878, %v8877
    %v8935 = vpack.c.b16 %v8880, %v8879
    %v8936 = vpack.c.b16 %v8882, %v8881
    %v8937 = vpack.c.b16 %v8884, %v8883
    %v8938 = vpack.c.b16 %v8886, %v8885
    %v8939 = vpack.c.b16 %v8888, %v8887
    %v8940 = vpack.c.b16 %v8890, %v8889
    %v8941 = vpack.c.b16 %v8892, %v8891
    %v8942 = vpack.c.b16 %v8894, %v8893
    %v8943 = vpack.c.b16 %v8896, %v8895
    %v8944 = vpack.c.b16 %v8898, %v8897
    %v8945 = vpack.c.b16 %v8900, %v8899
    %v8946 = vpack.c.b16 %v8902, %v8901
    %v8947 = vpack.c.b16 %v8904, %v8903
    %v8948 = vpack.c.b16 %v8906, %v8905
    %v8949 = vpack.c.b16 %v8908, %v8907
    %v8950 = vpack.c.b16 %v8910, %v8909
    %v8951 = vpack.c.b16 %v8912, %v8911
    %v8952 = vpack.c.b16 %v8914, %v8913
    %v8953 = vpack.c.b16 %v8916, %v8915
    %v8954 = vpack.c.b16 %v8918, %v8917
    %v8955 = vpack.c.b16 %v8920, %v8919
    %v8956 = vpack.c.b16 %v8922, %v8921
    %v8957 = vpack.c.b16 %v8924, %v8923
    %v8958 = vpack.c.b16 %v8926, %v8925
    %8991 = vmatprep.subr.bf16.mxu0 0
    %8992 = vmatpush1.bf16.msra.mxu0 %v8927
    %8993 = vmatprep.subr.bf16.mxu0 0
    %8994 = vmatpush1.bf16.msra.mxu0 %v8928
    %8995 = vmatprep.subr.bf16.mxu0 0
    %8996 = vmatpush1.bf16.msra.mxu0 %v8929
    %8997 = vmatprep.subr.bf16.mxu0 0
    %8998 = vmatpush1.bf16.msra.mxu0 %v8930
    %8999 = vmatprep.subr.bf16.mxu0 0
    %9000 = vmatpush1.bf16.msra.mxu0 %v8931
    %9001 = vmatprep.subr.bf16.mxu0 0
    %9002 = vmatpush1.bf16.msra.mxu0 %v8932
    %9003 = vmatprep.subr.bf16.mxu0 0
    %9004 = vmatpush1.bf16.msra.mxu0 %v8933
    %9005 = vmatprep.subr.bf16.mxu0 0
    %9006 = vmatpush1.bf16.msra.mxu0 %v8934
    %9007 = vmatprep.subr.bf16.mxu0 0
    %9008 = vmatpush1.bf16.msra.mxu0 %v8935
    %9009 = vmatprep.subr.bf16.mxu0 0
    %9010 = vmatpush1.bf16.msra.mxu0 %v8936
    %9011 = vmatprep.subr.bf16.mxu0 0
    %9012 = vmatpush1.bf16.msra.mxu0 %v8937
    %9013 = vmatprep.subr.bf16.mxu0 0
    %9014 = vmatpush1.bf16.msra.mxu0 %v8938
    %9015 = vmatprep.subr.bf16.mxu0 0
    %9016 = vmatpush1.bf16.msra.mxu0 %v8939
    %9017 = vmatprep.subr.bf16.mxu0 0
    %9018 = vmatpush1.bf16.msra.mxu0 %v8940
    %9019 = vmatprep.subr.bf16.mxu0 0
    %9020 = vmatpush1.bf16.msra.mxu0 %v8941
    %9021 = vmatprep.subr.bf16.mxu0 0
    %9022 = vmatpush1.bf16.msra.mxu0 %v8942
    %9023 = vmatprep.mubr.bf16.mxu0 %v8723
    %9024 = vmatmul.mubr.bf16.gmra.mrb[0].mxu0 %v8722
    %v9025 = vpop.f32.mrb[0].mxu0
    %v9026 = vadd.f32 %v8798, %v9025
    %v9027 = vpop.f32.mrb[0].mxu0
    %v9028 = vpop.f32.mrb[0].mxu0
    %v9029 = vadd.f32 %v8798, %v9028
    %v9030 = vpop.f32.mrb[0].mxu0
    %9031 = vmatprep.mubr.bf16.mxu0 %v8727
    %9032 = vmatmul.mubr.bf16.gmra.mrb[0].mxu0 %v8726
    %v9033 = vpop.f32.mrb[0].mxu0
    %v9034 = vadd.f32 %v8798, %v9033
    %v9035 = vpop.f32.mrb[0].mxu0
    %v9036 = vpop.f32.mrb[0].mxu0
    %v9037 = vpop.f32.mrb[0].mxu0
    %9038 = vdwg.mxu0
    %9039 = vmatprep.subr.bf16.mxu0 0
    %9040 = vmatpush1.bf16.msra.mxu0 %v8943
    %9041 = vmatprep.subr.bf16.mxu0 0
    %9042 = vmatpush1.bf16.msra.mxu0 %v8944
    %9043 = vmatprep.subr.bf16.mxu0 0
    %9044 = vmatpush1.bf16.msra.mxu0 %v8945
    %9045 = vmatprep.subr.bf16.mxu0 0
    %9046 = vmatpush1.bf16.msra.mxu0 %v8946
    %9047 = vmatprep.subr.bf16.mxu0 0
    %9048 = vmatpush1.bf16.msra.mxu0 %v8947
    %9049 = vmatprep.subr.bf16.mxu0 0
    %9050 = vmatpush1.bf16.msra.mxu0 %v8948
    %9051 = vmatprep.subr.bf16.mxu0 0
    %9052 = vmatpush1.bf16.msra.mxu0 %v8949
    %9053 = vmatprep.subr.bf16.mxu0 0
    %9054 = vmatpush1.bf16.msra.mxu0 %v8950
    %9055 = vmatprep.subr.bf16.mxu0 0
    %9056 = vmatpush1.bf16.msra.mxu0 %v8951
    %9057 = vmatprep.subr.bf16.mxu0 0
    %9058 = vmatpush1.bf16.msra.mxu0 %v8952
    %9059 = vmatprep.subr.bf16.mxu0 0
    %9060 = vmatpush1.bf16.msra.mxu0 %v8953
    %9061 = vmatprep.subr.bf16.mxu0 0
    %9062 = vmatpush1.bf16.msra.mxu0 %v8954
    %9063 = vmatprep.subr.bf16.mxu0 0
    %9064 = vmatpush1.bf16.msra.mxu0 %v8955
    %9065 = vmatprep.subr.bf16.mxu0 0
    %9066 = vmatpush1.bf16.msra.mxu0 %v8956
    %9067 = vmatprep.subr.bf16.mxu0 0
    %9068 = vmatpush1.bf16.msra.mxu0 %v8957
    %9069 = vmatprep.subr.bf16.mxu0 0
    %9070 = vmatpush1.bf16.msra.mxu0 %v8958
    %9071 = vmatprep.mubr.bf16.mxu0 %v8725
    %9072 = vmatmul.mubr.bf16.gmra.mrb[0].mxu0 %v8724
    %v9073 = vpop.f32.mrb[0].mxu0
    %v9074 = vadd.f32 %v9026, %v9073
    %v9075 = vpop.f32.mrb[0].mxu0
    %v9076 = vpop.f32.mrb[0].mxu0
    %v9077 = vadd.f32 %v9029, %v9076
    %v9078 = vpop.f32.mrb[0].mxu0
    %9079 = vmatprep.mubr.bf16.mxu0 %v8729
    %9080 = vmatmul.mubr.bf16.gmra.mrb[0].mxu0 %v8728
    %v9081 = vpop.f32.mrb[0].mxu0
    %v9082 = vadd.f32 %v9034, %v9081
    %v9083 = vpop.f32.mrb[0].mxu0
    %v9084 = vpop.f32.mrb[0].mxu0
    %v9085 = vpop.f32.mrb[0].mxu0
    %9086 = vdwg.mxu0
    %v9087 = vmax.f32 %v9074, 0.0
    %v9088 = vmax.f32 %v9077, 0.0
    %v9089 = vmax.f32 %v9082, 0.0
    %9090 = vset.pattern.permute.xlu0 40
    %9091 = vperm.xlu0 %9090, %v5389
    %v9092 = vpop.permute.xlu0 %9091
    %9094 = vset.pattern.permute.xlu0 40
    %9095 = vperm.xlu0 %9094, %v5390
    %v9096 = vpop.permute.xlu0 %9095
    %9098 = vset.pattern.permute.xlu0 40
    %9099 = vperm.xlu0 %9098, %v5391
    %v9100 = vpop.permute.xlu0 %9099
    %v9102 = vmul.f32 %v9087, %v9092
    %v9103 = vmul.f32 %v9088, %v9096
    %v9104 = vmul.f32 %v9089, %v9100
    %v9105 = vpack.c.bf16 %v9103, %v9102
    %v9106 = vpack.c.bf16 %v9104, %v9104
    %v9107 = vld [vmem:[#allocation6 + $0xd0] sm:$0xf]
    %v9109 = vsel %vm6734, %v9107, 0
    %v9112 = vsel %vm5781, %v9106, 0
    %9114 = vmatprep.subr.bf16.mxu0 0
    %9115 = vmatpush1.bf16.msra.mxu0 %v9105
    %9116 = vmatprep.subr.bf16.mxu0 0
    %9117 = vmatpush1.bf16.msra.mxu0 %v9112
    %9118 = vmatprep.subr.bf16.mxu0 0
    %9119 = vmatpush1.bf16.msra.mxu0 0
    %9120 = vmatprep.subr.bf16.mxu0 0
    %9121 = vmatpush1.bf16.msra.mxu0 0
    %9122 = vmatprep.subr.bf16.mxu0 0
    %9123 = vmatpush1.bf16.msra.mxu0 0
    %9124 = vmatprep.subr.bf16.mxu0 0
    %9125 = vmatpush1.bf16.msra.mxu0 0
    %9126 = vmatprep.subr.bf16.mxu0 0
    %9127 = vmatpush1.bf16.msra.mxu0 0
    %9128 = vmatprep.subr.bf16.mxu0 0
    %9129 = vmatpush1.bf16.msra.mxu0 0
    %9130 = vmatprep.subr.bf16.mxu0 0
    %9131 = vmatpush1.bf16.msra.mxu0 0
    %9132 = vmatprep.subr.bf16.mxu0 0
    %9133 = vmatpush1.bf16.msra.mxu0 0
    %9134 = vmatprep.subr.bf16.mxu0 0
    %9135 = vmatpush1.bf16.msra.mxu0 0
    %9136 = vmatprep.subr.bf16.mxu0 0
    %9137 = vmatpush1.bf16.msra.mxu0 0
    %9138 = vmatprep.subr.bf16.mxu0 0
    %9139 = vmatpush1.bf16.msra.mxu0 0
    %9140 = vmatprep.subr.bf16.mxu0 0
    %9141 = vmatpush1.bf16.msra.mxu0 0
    %9142 = vmatprep.subr.bf16.mxu0 0
    %9143 = vmatpush1.bf16.msra.mxu0 0
    %9144 = vmatprep.subr.bf16.mxu0 0
    %9145 = vmatpush1.bf16.msra.mxu0 0
    %9146 = vmatprep.mubr.bf16.mxu0 0
    %9147 = vmatmul.mubr.bf16.gmra.mrb[0].mxu0 %v9109
    %v9148 = vpop.f32.mrb[0].mxu0
    %v9149 = vadd.f32 0.0, %v9148
    %v9150 = vpop.f32.mrb[0].mxu0
    %v9151 = vpop.f32.mrb[0].mxu0
    %v9152 = vpop.f32.mrb[0].mxu0
    %9153 = vdwg.mxu0
    %v9154 = vld [vmem:[#allocation6 + $0xd4] sm:$0xf]
    %v9156 = vsel %vm6734, %v9154, 0
    %9158 = vmatprep.subr.bf16.mxu0 0
    %9159 = vmatpush1.bf16.msra.mxu0 %v9105
    %9160 = vmatprep.subr.bf16.mxu0 0
    %9161 = vmatpush1.bf16.msra.mxu0 %v9112
    %9162 = vmatprep.subr.bf16.mxu0 0
    %9163 = vmatpush1.bf16.msra.mxu0 0
    %9164 = vmatprep.subr.bf16.mxu0 0
    %9165 = vmatpush1.bf16.msra.mxu0 0
    %9166 = vmatprep.subr.bf16.mxu0 0
    %9167 = vmatpush1.bf16.msra.mxu0 0
    %9168 = vmatprep.subr.bf16.mxu0 0
    %9169 = vmatpush1.bf16.msra.mxu0 0
    %9170 = vmatprep.subr.bf16.mxu0 0
    %9171 = vmatpush1.bf16.msra.mxu0 0
    %9172 = vmatprep.subr.bf16.mxu0 0
    %9173 = vmatpush1.bf16.msra.mxu0 0
    %9174 = vmatprep.subr.bf16.mxu0 0
    %9175 = vmatpush1.bf16.msra.mxu0 0
    %9176 = vmatprep.subr.bf16.mxu0 0
    %9177 = vmatpush1.bf16.msra.mxu0 0
    %9178 = vmatprep.subr.bf16.mxu0 0
    %9179 = vmatpush1.bf16.msra.mxu0 0
    %9180 = vmatprep.subr.bf16.mxu0 0
    %9181 = vmatpush1.bf16.msra.mxu0 0
    %9182 = vmatprep.subr.bf16.mxu0 0
    %9183 = vmatpush1.bf16.msra.mxu0 0
    %9184 = vmatprep.subr.bf16.mxu0 0
    %9185 = vmatpush1.bf16.msra.mxu0 0
    %9186 = vmatprep.subr.bf16.mxu0 0
    %9187 = vmatpush1.bf16.msra.mxu0 0
    %9188 = vmatprep.subr.bf16.mxu0 0
    %9189 = vmatpush1.bf16.msra.mxu0 0
    %9190 = vmatprep.mubr.bf16.mxu0 0
    %9191 = vmatmul.mubr.bf16.gmra.mrb[0].mxu0 %v9156
    %v9192 = vpop.f32.mrb[0].mxu0
    %v9193 = vadd.f32 0.0, %v9192
    %v9194 = vpop.f32.mrb[0].mxu0
    %v9195 = vpop.f32.mrb[0].mxu0
    %v9196 = vpop.f32.mrb[0].mxu0
    %9197 = vdwg.mxu0
    %v9198 = vld [vmem:[#allocation6 + $0xd8] sm:$0xf]
    %v9200 = vsel %vm6734, %v9198, 0
    %9202 = vmatprep.subr.bf16.mxu0 0
    %9203 = vmatpush1.bf16.msra.mxu0 %v9105
    %9204 = vmatprep.subr.bf16.mxu0 0
    %9205 = vmatpush1.bf16.msra.mxu0 %v9112
    %9206 = vmatprep.subr.bf16.mxu0 0
    %9207 = vmatpush1.bf16.msra.mxu0 0
    %9208 = vmatprep.subr.bf16.mxu0 0
    %9209 = vmatpush1.bf16.msra.mxu0 0
    %9210 = vmatprep.subr.bf16.mxu0 0
    %9211 = vmatpush1.bf16.msra.mxu0 0
    %9212 = vmatprep.subr.bf16.mxu0 0
    %9213 = vmatpush1.bf16.msra.mxu0 0
    %9214 = vmatprep.subr.bf16.mxu0 0
    %9215 = vmatpush1.bf16.msra.mxu0 0
    %9216 = vmatprep.subr.bf16.mxu0 0
    %9217 = vmatpush1.bf16.msra.mxu0 0
    %9218 = vmatprep.subr.bf16.mxu0 0
    %9219 = vmatpush1.bf16.msra.mxu0 0
    %9220 = vmatprep.subr.bf16.mxu0 0
    %9221 = vmatpush1.bf16.msra.mxu0 0
    %9222 = vmatprep.subr.bf16.mxu0 0
    %9223 = vmatpush1.bf16.msra.mxu0 0
    %9224 = vmatprep.subr.bf16.mxu0 0
    %9225 = vmatpush1.bf16.msra.mxu0 0
    %9226 = vmatprep.subr.bf16.mxu0 0
    %9227 = vmatpush1.bf16.msra.mxu0 0
    %9228 = vmatprep.subr.bf16.mxu0 0
    %9229 = vmatpush1.bf16.msra.mxu0 0
    %9230 = vmatprep.subr.bf16.mxu0 0
    %9231 = vmatpush1.bf16.msra.mxu0 0
    %9232 = vmatprep.subr.bf16.mxu0 0
    %9233 = vmatpush1.bf16.msra.mxu0 0
    %9234 = vmatprep.mubr.bf16.mxu0 0
    %9235 = vmatmul.mubr.bf16.gmra.mrb[0].mxu0 %v9200
    %v9236 = vpop.f32.mrb[0].mxu0
    %v9237 = vadd.f32 0.0, %v9236
    %v9238 = vpop.f32.mrb[0].mxu0
    %v9239 = vpop.f32.mrb[0].mxu0
    %v9240 = vpop.f32.mrb[0].mxu0
    %9241 = vdwg.mxu0
    %v9242 = vld [vmem:[#allocation6 + $0xdc] sm:$0xf]
    %v9244 = vsel %vm6734, %v9242, 0
    %9246 = vmatprep.subr.bf16.mxu0 0
    %9247 = vmatpush1.bf16.msra.mxu0 %v9105
    %9248 = vmatprep.subr.bf16.mxu0 0
    %9249 = vmatpush1.bf16.msra.mxu0 %v9112
    %9250 = vmatprep.subr.bf16.mxu0 0
    %9251 = vmatpush1.bf16.msra.mxu0 0
    %9252 = vmatprep.subr.bf16.mxu0 0
    %9253 = vmatpush1.bf16.msra.mxu0 0
    %9254 = vmatprep.subr.bf16.mxu0 0
    %9255 = vmatpush1.bf16.msra.mxu0 0
    %9256 = vmatprep.subr.bf16.mxu0 0
    %9257 = vmatpush1.bf16.msra.mxu0 0
    %9258 = vmatprep.subr.bf16.mxu0 0
    %9259 = vmatpush1.bf16.msra.mxu0 0
    %9260 = vmatprep.subr.bf16.mxu0 0
    %9261 = vmatpush1.bf16.msra.mxu0 0
    %9262 = vmatprep.subr.bf16.mxu0 0
    %9263 = vmatpush1.bf16.msra.mxu0 0
    %9264 = vmatprep.subr.bf16.mxu0 0
    %9265 = vmatpush1.bf16.msra.mxu0 0
    %9266 = vmatprep.subr.bf16.mxu0 0
    %9267 = vmatpush1.bf16.msra.mxu0 0
    %9268 = vmatprep.subr.bf16.mxu0 0
    %9269 = vmatpush1.bf16.msra.mxu0 0
    %9270 = vmatprep.subr.bf16.mxu0 0
    %9271 = vmatpush1.bf16.msra.mxu0 0
    %9272 = vmatprep.subr.bf16.mxu0 0
    %9273 = vmatpush1.bf16.msra.mxu0 0
    %9274 = vmatprep.subr.bf16.mxu0 0
    %9275 = vmatpush1.bf16.msra.mxu0 0
    %9276 = vmatprep.subr.bf16.mxu0 0
    %9277 = vmatpush1.bf16.msra.mxu0 0
    %9278 = vmatprep.mubr.bf16.mxu0 0
    %9279 = vmatmul.mubr.bf16.gmra.mrb[0].mxu0 %v9244
    %v9280 = vpop.f32.mrb[0].mxu0
    %v9281 = vadd.f32 0.0, %v9280
    %v9282 = vpop.f32.mrb[0].mxu0
    %v9283 = vpop.f32.mrb[0].mxu0
    %v9284 = vpop.f32.mrb[0].mxu0
    %9285 = vdwg.mxu0
    %v9286 = vpack.c.bf16 %v9149, %v9149
    %v9287 = vpack.c.bf16 %v9193, %v9193
    %v9288 = vpack.c.bf16 %v9237, %v9237
    %v9289 = vpack.c.bf16 %v9281, %v9281
    %v9290 = vld [vmem:[#allocation4 + $0x680] sm:$0xf]
    %v9291 = vld [vmem:[#allocation4 + $0x684] sm:$0xf]
    %v9292 = vld [vmem:[#allocation4 + $0x688] sm:$0xf]
    %v9293 = vld [vmem:[#allocation4 + $0x68c] sm:$0xf]
    %v9294 = vld [vmem:[#allocation4 + $0x690] sm:$0xf]
    %v9295 = vld [vmem:[#allocation4 + $0x694] sm:$0xf]
    %v9296 = vld [vmem:[#allocation4 + $0x698] sm:$0xf]
    %v9297 = vld [vmem:[#allocation4 + $0x69c] sm:$0xf]
    %v9298 = vld [vmem:[#allocation4 + $0x6a0] sm:$0xf]
    %v9299 = vld [vmem:[#allocation4 + $0x6a4] sm:$0xf]
    %v9300 = vld [vmem:[#allocation4 + $0x6a8] sm:$0xf]
    %v9301 = vld [vmem:[#allocation4 + $0x6ac] sm:$0xf]
    %v9302 = vld [vmem:[#allocation4 + $0x6b0] sm:$0xf]
    %v9303 = vld [vmem:[#allocation4 + $0x6b4] sm:$0xf]
    %v9304 = vld [vmem:[#allocation4 + $0x6b8] sm:$0xf]
    %v9305 = vld [vmem:[#allocation4 + $0x6bc] sm:$0xf]
    %v9306 = vld [vmem:[#allocation4 + $0x6c0] sm:$0xf]
    %v9307 = vld [vmem:[#allocation4 + $0x6c4] sm:$0xf]
    %v9308 = vld [vmem:[#allocation4 + $0x6c8] sm:$0xf]
    %v9309 = vld [vmem:[#allocation4 + $0x6cc] sm:$0xf]
    %v9310 = vld [vmem:[#allocation4 + $0x6d0] sm:$0xf]
    %v9311 = vld [vmem:[#allocation4 + $0x6d4] sm:$0xf]
    %v9312 = vld [vmem:[#allocation4 + $0x6d8] sm:$0xf]
    %v9313 = vld [vmem:[#allocation4 + $0x6dc] sm:$0xf]
    %v9314 = vld [vmem:[#allocation4 + $0x6e0] sm:$0xf]
    %v9315 = vld [vmem:[#allocation4 + $0x6e4] sm:$0xf]
    %v9316 = vld [vmem:[#allocation4 + $0x6e8] sm:$0xf]
    %v9317 = vld [vmem:[#allocation4 + $0x6ec] sm:$0xf]
    %v9318 = vld [vmem:[#allocation4 + $0x6f0] sm:$0xf]
    %v9319 = vld [vmem:[#allocation4 + $0x6f4] sm:$0xf]
    %v9320 = vld [vmem:[#allocation4 + $0x6f8] sm:$0xf]
    %v9321 = vld [vmem:[#allocation4 + $0x6fc] sm:$0xf]
    %v9322 = vld [vmem:[#allocation4 + $0x700] sm:$0xf]
    %v9323 = vld [vmem:[#allocation4 + $0x704] sm:$0xf]
    %v9324 = vld [vmem:[#allocation4 + $0x708] sm:$0xf]
    %v9325 = vld [vmem:[#allocation4 + $0x70c] sm:$0xf]
    %v9326 = vld [vmem:[#allocation4 + $0x710] sm:$0xf]
    %v9327 = vld [vmem:[#allocation4 + $0x714] sm:$0xf]
    %v9328 = vld [vmem:[#allocation4 + $0x718] sm:$0xf]
    %v9329 = vld [vmem:[#allocation4 + $0x71c] sm:$0xf]
    %v9330 = vld [vmem:[#allocation4 + $0x720] sm:$0xf]
    %v9331 = vld [vmem:[#allocation4 + $0x724] sm:$0xf]
    %v9332 = vld [vmem:[#allocation4 + $0x728] sm:$0xf]
    %v9333 = vld [vmem:[#allocation4 + $0x72c] sm:$0xf]
    %v9334 = vld [vmem:[#allocation4 + $0x730] sm:$0xf]
    %v9335 = vld [vmem:[#allocation4 + $0x734] sm:$0xf]
    %v9336 = vld [vmem:[#allocation4 + $0x738] sm:$0xf]
    %v9337 = vld [vmem:[#allocation4 + $0x73c] sm:$0xf]
    %v9338 = vld [vmem:[#allocation4 + $0x740] sm:$0xf]
    %v9339 = vld [vmem:[#allocation4 + $0x744] sm:$0xf]
    %v9340 = vld [vmem:[#allocation4 + $0x748] sm:$0xf]
    %v9341 = vld [vmem:[#allocation4 + $0x74c] sm:$0xf]
    %v9342 = vld [vmem:[#allocation4 + $0x750] sm:$0xf]
    %v9343 = vld [vmem:[#allocation4 + $0x754] sm:$0xf]
    %v9344 = vld [vmem:[#allocation4 + $0x758] sm:$0xf]
    %v9345 = vld [vmem:[#allocation4 + $0x75c] sm:$0xf]
    %v9346 = vld [vmem:[#allocation4 + $0x760] sm:$0xf]
    %v9347 = vld [vmem:[#allocation4 + $0x764] sm:$0xf]
    %v9348 = vld [vmem:[#allocation4 + $0x768] sm:$0xf]
    %v9349 = vld [vmem:[#allocation4 + $0x76c] sm:$0xf]
    %v9350 = vld [vmem:[#allocation4 + $0x770] sm:$0xf]
    %v9351 = vld [vmem:[#allocation4 + $0x774] sm:$0xf]
    %v9352 = vld [vmem:[#allocation4 + $0x778] sm:$0xf]
    %v9353 = vld [vmem:[#allocation4 + $0x77c] sm:$0xf]
    %v9354 = vld [vmem:[#allocation9 + $0x8] sm:$0x1]
    %v9355 = vlaneseq
    %v9356 = vshrl.u32 %v9355, 7
    %v9357 = vsub.s32 0, %v9356
    %v9358 = vrot.slane %v9354, %v9357
    %v9423 = vunpack.c.l.b16 %v9290
    %v9424 = vunpack.c.l.b16 %v9291
    %v9425 = vunpack.c.l.b16 %v9292
    %v9426 = vunpack.c.l.b16 %v9293
    %v9427 = vunpack.c.l.b16 %v9294
    %v9428 = vunpack.c.l.b16 %v9295
    %v9429 = vunpack.c.l.b16 %v9296
    %v9430 = vunpack.c.l.b16 %v9297
    %v9431 = vunpack.c.l.b16 %v9298
    %v9432 = vunpack.c.l.b16 %v9299
    %v9433 = vunpack.c.l.b16 %v9300
    %v9434 = vunpack.c.l.b16 %v9301
    %v9435 = vunpack.c.l.b16 %v9302
    %v9436 = vunpack.c.l.b16 %v9303
    %v9437 = vunpack.c.l.b16 %v9304
    %v9438 = vunpack.c.l.b16 %v9305
    %v9439 = vunpack.c.l.b16 %v9306
    %v9440 = vunpack.c.l.b16 %v9307
    %v9441 = vunpack.c.l.b16 %v9308
    %v9442 = vunpack.c.l.b16 %v9309
    %v9443 = vunpack.c.l.b16 %v9310
    %v9444 = vunpack.c.l.b16 %v9311
    %v9445 = vunpack.c.l.b16 %v9312
    %v9446 = vunpack.c.l.b16 %v9313
    %v9447 = vunpack.c.l.b16 %v9314
    %v9448 = vunpack.c.l.b16 %v9315
    %v9449 = vunpack.c.l.b16 %v9316
    %v9450 = vunpack.c.l.b16 %v9317
    %v9451 = vunpack.c.l.b16 %v9318
    %v9452 = vunpack.c.l.b16 %v9319
    %v9453 = vunpack.c.l.b16 %v9320
    %v9454 = vunpack.c.l.b16 %v9321
    %v9455 = vunpack.c.l.b16 %v9322
    %v9456 = vunpack.c.l.b16 %v9323
    %v9457 = vunpack.c.l.b16 %v9324
    %v9458 = vunpack.c.l.b16 %v9325
    %v9459 = vunpack.c.l.b16 %v9326
    %v9460 = vunpack.c.l.b16 %v9327
    %v9461 = vunpack.c.l.b16 %v9328
    %v9462 = vunpack.c.l.b16 %v9329
    %v9463 = vunpack.c.l.b16 %v9330
    %v9464 = vunpack.c.l.b16 %v9331
    %v9465 = vunpack.c.l.b16 %v9332
    %v9466 = vunpack.c.l.b16 %v9333
    %v9467 = vunpack.c.l.b16 %v9334
    %v9468 = vunpack.c.l.b16 %v9335
    %v9469 = vunpack.c.l.b16 %v9336
    %v9470 = vunpack.c.l.b16 %v9337
    %v9471 = vunpack.c.l.b16 %v9338
    %v9472 = vunpack.c.l.b16 %v9339
    %v9473 = vunpack.c.l.b16 %v9340
    %v9474 = vunpack.c.l.b16 %v9341
    %v9475 = vunpack.c.l.b16 %v9342
    %v9476 = vunpack.c.l.b16 %v9343
    %v9477 = vunpack.c.l.b16 %v9344
    %v9478 = vunpack.c.l.b16 %v9345
    %v9479 = vunpack.c.l.b16 %v9346
    %v9480 = vunpack.c.l.b16 %v9347
    %v9481 = vunpack.c.l.b16 %v9348
    %v9482 = vunpack.c.l.b16 %v9349
    %v9483 = vunpack.c.l.b16 %v9350
    %v9484 = vunpack.c.l.b16 %v9351
    %v9485 = vunpack.c.l.b16 %v9352
    %v9486 = vunpack.c.l.b16 %v9353
    %v9487 = vpack.c.b16 %v9424, %v9423
    %v9488 = vpack.c.b16 %v9426, %v9425
    %v9489 = vpack.c.b16 %v9428, %v9427
    %v9490 = vpack.c.b16 %v9430, %v9429
    %v9491 = vpack.c.b16 %v9432, %v9431
    %v9492 = vpack.c.b16 %v9434, %v9433
    %v9493 = vpack.c.b16 %v9436, %v9435
    %v9494 = vpack.c.b16 %v9438, %v9437
    %v9495 = vpack.c.b16 %v9440, %v9439
    %v9496 = vpack.c.b16 %v9442, %v9441
    %v9497 = vpack.c.b16 %v9444, %v9443
    %v9498 = vpack.c.b16 %v9446, %v9445
    %v9499 = vpack.c.b16 %v9448, %v9447
    %v9500 = vpack.c.b16 %v9450, %v9449
    %v9501 = vpack.c.b16 %v9452, %v9451
    %v9502 = vpack.c.b16 %v9454, %v9453
    %v9503 = vpack.c.b16 %v9456, %v9455
    %v9504 = vpack.c.b16 %v9458, %v9457
    %v9505 = vpack.c.b16 %v9460, %v9459
    %v9506 = vpack.c.b16 %v9462, %v9461
    %v9507 = vpack.c.b16 %v9464, %v9463
    %v9508 = vpack.c.b16 %v9466, %v9465
    %v9509 = vpack.c.b16 %v9468, %v9467
    %v9510 = vpack.c.b16 %v9470, %v9469
    %v9511 = vpack.c.b16 %v9472, %v9471
    %v9512 = vpack.c.b16 %v9474, %v9473
    %v9513 = vpack.c.b16 %v9476, %v9475
    %v9514 = vpack.c.b16 %v9478, %v9477
    %v9515 = vpack.c.b16 %v9480, %v9479
    %v9516 = vpack.c.b16 %v9482, %v9481
    %v9517 = vpack.c.b16 %v9484, %v9483
    %v9518 = vpack.c.b16 %v9486, %v9485
    %9551 = vmatprep.subr.bf16.mxu0 0
    %9552 = vmatpush1.bf16.msra.mxu0 %v9487
    %9553 = vmatprep.subr.bf16.mxu0 0
    %9554 = vmatpush1.bf16.msra.mxu0 %v9488
    %9555 = vmatprep.subr.bf16.mxu0 0
    %9556 = vmatpush1.bf16.msra.mxu0 %v9489
    %9557 = vmatprep.subr.bf16.mxu0 0
    %9558 = vmatpush1.bf16.msra.mxu0 %v9490
    %9559 = vmatprep.subr.bf16.mxu0 0
    %9560 = vmatpush1.bf16.msra.mxu0 %v9491
    %9561 = vmatprep.subr.bf16.mxu0 0
    %9562 = vmatpush1.bf16.msra.mxu0 %v9492
    %9563 = vmatprep.subr.bf16.mxu0 0
    %9564 = vmatpush1.bf16.msra.mxu0 %v9493
    %9565 = vmatprep.subr.bf16.mxu0 0
    %9566 = vmatpush1.bf16.msra.mxu0 %v9494
    %9567 = vmatprep.subr.bf16.mxu0 0
    %9568 = vmatpush1.bf16.msra.mxu0 %v9495
    %9569 = vmatprep.subr.bf16.mxu0 0
    %9570 = vmatpush1.bf16.msra.mxu0 %v9496
    %9571 = vmatprep.subr.bf16.mxu0 0
    %9572 = vmatpush1.bf16.msra.mxu0 %v9497
    %9573 = vmatprep.subr.bf16.mxu0 0
    %9574 = vmatpush1.bf16.msra.mxu0 %v9498
    %9575 = vmatprep.subr.bf16.mxu0 0
    %9576 = vmatpush1.bf16.msra.mxu0 %v9499
    %9577 = vmatprep.subr.bf16.mxu0 0
    %9578 = vmatpush1.bf16.msra.mxu0 %v9500
    %9579 = vmatprep.subr.bf16.mxu0 0
    %9580 = vmatpush1.bf16.msra.mxu0 %v9501
    %9581 = vmatprep.subr.bf16.mxu0 0
    %9582 = vmatpush1.bf16.msra.mxu0 %v9502
    %9583 = vmatprep.mubr.bf16.mxu0 %v9287
    %9584 = vmatmul.mubr.bf16.gmra.mrb[0].mxu0 %v9286
    %v9585 = vpop.f32.mrb[0].mxu0
    %v9586 = vadd.f32 %v9358, %v9585
    %v9587 = vpop.f32.mrb[0].mxu0
    %v9588 = vpop.f32.mrb[0].mxu0
    %v9589 = vpop.f32.mrb[0].mxu0
    %9590 = vdwg.mxu0
    %9591 = vmatprep.subr.bf16.mxu0 0
    %9592 = vmatpush1.bf16.msra.mxu0 %v9503
    %9593 = vmatprep.subr.bf16.mxu0 0
    %9594 = vmatpush1.bf16.msra.mxu0 %v9504
    %9595 = vmatprep.subr.bf16.mxu0 0
    %9596 = vmatpush1.bf16.msra.mxu0 %v9505
    %9597 = vmatprep.subr.bf16.mxu0 0
    %9598 = vmatpush1.bf16.msra.mxu0 %v9506
    %9599 = vmatprep.subr.bf16.mxu0 0
    %9600 = vmatpush1.bf16.msra.mxu0 %v9507
    %9601 = vmatprep.subr.bf16.mxu0 0
    %9602 = vmatpush1.bf16.msra.mxu0 %v9508
    %9603 = vmatprep.subr.bf16.mxu0 0
    %9604 = vmatpush1.bf16.msra.mxu0 %v9509
    %9605 = vmatprep.subr.bf16.mxu0 0
    %9606 = vmatpush1.bf16.msra.mxu0 %v9510
    %9607 = vmatprep.subr.bf16.mxu0 0
    %9608 = vmatpush1.bf16.msra.mxu0 %v9511
    %9609 = vmatprep.subr.bf16.mxu0 0
    %9610 = vmatpush1.bf16.msra.mxu0 %v9512
    %9611 = vmatprep.subr.bf16.mxu0 0
    %9612 = vmatpush1.bf16.msra.mxu0 %v9513
    %9613 = vmatprep.subr.bf16.mxu0 0
    %9614 = vmatpush1.bf16.msra.mxu0 %v9514
    %9615 = vmatprep.subr.bf16.mxu0 0
    %9616 = vmatpush1.bf16.msra.mxu0 %v9515
    %9617 = vmatprep.subr.bf16.mxu0 0
    %9618 = vmatpush1.bf16.msra.mxu0 %v9516
    %9619 = vmatprep.subr.bf16.mxu0 0
    %9620 = vmatpush1.bf16.msra.mxu0 %v9517
    %9621 = vmatprep.subr.bf16.mxu0 0
    %9622 = vmatpush1.bf16.msra.mxu0 %v9518
    %9623 = vmatprep.mubr.bf16.mxu0 %v9289
    %9624 = vmatmul.mubr.bf16.gmra.mrb[0].mxu0 %v9288
    %v9625 = vpop.f32.mrb[0].mxu0
    %v9626 = vadd.f32 %v9586, %v9625
    %v9627 = vpop.f32.mrb[0].mxu0
    %v9628 = vpop.f32.mrb[0].mxu0
    %v9629 = vpop.f32.mrb[0].mxu0
    %9630 = vdwg.mxu0
    %v9631 = vmax.f32 %v9626, 0.0
    %9632 = vset.pattern.permute.xlu0 41
    %9633 = vperm.xlu0 %9632, %v7924
    %v9634 = vpop.permute.xlu0 %9633
    %v9636 = vmul.f32 %v9631, %v9634
    %v9637 = vpack.c.bf16 %v9636, %v9636
    %v9638 = vld [vmem:[#allocation4 + $0x780] sm:$0xf]
    %v9639 = vld [vmem:[#allocation4 + $0x784] sm:$0xf]
    %v9640 = vld [vmem:[#allocation4 + $0x788] sm:$0xf]
    %v9641 = vld [vmem:[#allocation4 + $0x78c] sm:$0xf]
    %v9642 = vld [vmem:[#allocation4 + $0x790] sm:$0xf]
    %v9643 = vld [vmem:[#allocation4 + $0x794] sm:$0xf]
    %v9644 = vld [vmem:[#allocation4 + $0x798] sm:$0xf]
    %v9645 = vld [vmem:[#allocation4 + $0x79c] sm:$0xf]
    %v9646 = vld [vmem:[#allocation4 + $0x7a0] sm:$0xf]
    %v9647 = vld [vmem:[#allocation4 + $0x7a4] sm:$0xf]
    %v9648 = vld [vmem:[#allocation4 + $0x7a8] sm:$0xf]
    %v9649 = vld [vmem:[#allocation4 + $0x7ac] sm:$0xf]
    %v9650 = vld [vmem:[#allocation4 + $0x7b0] sm:$0xf]
    %v9651 = vld [vmem:[#allocation4 + $0x7b4] sm:$0xf]
    %v9652 = vld [vmem:[#allocation4 + $0x7b8] sm:$0xf]
    %v9653 = vld [vmem:[#allocation4 + $0x7bc] sm:$0xf]
    %v9654 = vld [vmem:[#allocation9 + $0x9] sm:$0x1]
    %v9655 = vlaneseq
    %v9656 = vshrl.u32 %v9655, 7
    %v9657 = vsub.s32 0, %v9656
    %v9658 = vrot.slane %v9654, %v9657
    %v9675 = vunpack.c.l.b16 %v9638
    %v9676 = vunpack.c.l.b16 %v9639
    %v9677 = vunpack.c.l.b16 %v9640
    %v9678 = vunpack.c.l.b16 %v9641
    %v9679 = vunpack.c.l.b16 %v9642
    %v9680 = vunpack.c.l.b16 %v9643
    %v9681 = vunpack.c.l.b16 %v9644
    %v9682 = vunpack.c.l.b16 %v9645
    %v9683 = vunpack.c.l.b16 %v9646
    %v9684 = vunpack.c.l.b16 %v9647
    %v9685 = vunpack.c.l.b16 %v9648
    %v9686 = vunpack.c.l.b16 %v9649
    %v9687 = vunpack.c.l.b16 %v9650
    %v9688 = vunpack.c.l.b16 %v9651
    %v9689 = vunpack.c.l.b16 %v9652
    %v9690 = vunpack.c.l.b16 %v9653
    %v9691 = vpack.c.b16 %v9676, %v9675
    %v9692 = vpack.c.b16 %v9678, %v9677
    %v9693 = vpack.c.b16 %v9680, %v9679
    %v9694 = vpack.c.b16 %v9682, %v9681
    %v9695 = vpack.c.b16 %v9684, %v9683
    %v9696 = vpack.c.b16 %v9686, %v9685
    %v9697 = vpack.c.b16 %v9688, %v9687
    %v9698 = vpack.c.b16 %v9690, %v9689
    %9707 = vmatprep.subr.bf16.mxu0 0
    %9708 = vmatpush1.bf16.msra.mxu0 %v9691
    %9709 = vmatprep.subr.bf16.mxu0 0
    %9710 = vmatpush1.bf16.msra.mxu0 %v9692
    %9711 = vmatprep.subr.bf16.mxu0 0
    %9712 = vmatpush1.bf16.msra.mxu0 %v9693
    %9713 = vmatprep.subr.bf16.mxu0 0
    %9714 = vmatpush1.bf16.msra.mxu0 %v9694
    %9715 = vmatprep.subr.bf16.mxu0 0
    %9716 = vmatpush1.bf16.msra.mxu0 %v9695
    %9717 = vmatprep.subr.bf16.mxu0 0
    %9718 = vmatpush1.bf16.msra.mxu0 %v9696
    %9719 = vmatprep.subr.bf16.mxu0 0
    %9720 = vmatpush1.bf16.msra.mxu0 %v9697
    %9721 = vmatprep.subr.bf16.mxu0 0
    %9722 = vmatpush1.bf16.msra.mxu0 %v9698
    %9723 = vmatprep.subr.bf16.mxu0 0
    %9724 = vmatpush1.bf16.msra.mxu0 0
    %9725 = vmatprep.subr.bf16.mxu0 0
    %9726 = vmatpush1.bf16.msra.mxu0 0
    %9727 = vmatprep.subr.bf16.mxu0 0
    %9728 = vmatpush1.bf16.msra.mxu0 0
    %9729 = vmatprep.subr.bf16.mxu0 0
    %9730 = vmatpush1.bf16.msra.mxu0 0
    %9731 = vmatprep.subr.bf16.mxu0 0
    %9732 = vmatpush1.bf16.msra.mxu0 0
    %9733 = vmatprep.subr.bf16.mxu0 0
    %9734 = vmatpush1.bf16.msra.mxu0 0
    %9735 = vmatprep.subr.bf16.mxu0 0
    %9736 = vmatpush1.bf16.msra.mxu0 0
    %9737 = vmatprep.subr.bf16.mxu0 0
    %9738 = vmatpush1.bf16.msra.mxu0 0
    %9739 = vmatprep.mubr.bf16.mxu0 0
    %9740 = vmatmul.mubr.bf16.gmra.mrb[0].mxu0 %v9637
    %v9741 = vpop.f32.mrb[0].mxu0
    %v9742 = vadd.f32 %v9658, %v9741
    %v9743 = vpop.f32.mrb[0].mxu0
    %v9744 = vpop.f32.mrb[0].mxu0
    %v9745 = vpop.f32.mrb[0].mxu0
    %9746 = vdwg.mxu0
    %v9747 = vmax.f32 %v9742, 0.0
    %9748 = vset.pattern.permute.xlu0 42
    %9749 = vperm.xlu0 %9748, %v7924
    %v9750 = vpop.permute.xlu0 %9749
    %v9752 = vmul.f32 %v9747, %v9750
    %v9753 = vpack.c.bf16 %v9752, %v9752
    %v9754 = vld [vmem:[#allocation4 + $0x7c0] sm:$0xf]
    %v9755 = vld [vmem:[#allocation4 + $0x7c4] sm:$0xf]
    %v9756 = vld [vmem:[#allocation4 + $0x7c8] sm:$0xf]
    %v9757 = vld [vmem:[#allocation4 + $0x7cc] sm:$0xf]
    %v9758 = vld [vmem:[#allocation4 + $0x7d0] sm:$0xf]
    %v9759 = vld [vmem:[#allocation4 + $0x7d4] sm:$0xf]
    %v9760 = vld [vmem:[#allocation4 + $0x7d8] sm:$0xf]
    %v9761 = vld [vmem:[#allocation4 + $0x7dc] sm:$0xf]
    %v9762 = vld [vmem:[#allocation4 + $0x7e0] sm:$0xf]
    %v9763 = vld [vmem:[#allocation4 + $0x7e4] sm:$0xf]
    %v9764 = vld [vmem:[#allocation4 + $0x7e8] sm:$0xf]
    %v9765 = vld [vmem:[#allocation4 + $0x7ec] sm:$0xf]
    %v9766 = vld [vmem:[#allocation4 + $0x7f0] sm:$0xf]
    %v9767 = vld [vmem:[#allocation4 + $0x7f4] sm:$0xf]
    %v9768 = vld [vmem:[#allocation4 + $0x7f8] sm:$0xf]
    %v9769 = vld [vmem:[#allocation4 + $0x7fc] sm:$0xf]
    %v9770 = vld [vmem:[#allocation9 + $0xa] sm:$0x1]
    %v9771 = vlaneseq
    %v9772 = vshrl.u32 %v9771, 7
    %v9773 = vsub.s32 0, %v9772
    %v9774 = vrot.slane %v9770, %v9773
    %v9791 = vunpack.c.l.b16 %v9754
    %v9792 = vunpack.c.l.b16 %v9755
    %v9793 = vunpack.c.l.b16 %v9756
    %v9794 = vunpack.c.l.b16 %v9757
    %v9795 = vunpack.c.l.b16 %v9758
    %v9796 = vunpack.c.l.b16 %v9759
    %v9797 = vunpack.c.l.b16 %v9760
    %v9798 = vunpack.c.l.b16 %v9761
    %v9799 = vunpack.c.l.b16 %v9762
    %v9800 = vunpack.c.l.b16 %v9763
    %v9801 = vunpack.c.l.b16 %v9764
    %v9802 = vunpack.c.l.b16 %v9765
    %v9803 = vunpack.c.l.b16 %v9766
    %v9804 = vunpack.c.l.b16 %v9767
    %v9805 = vunpack.c.l.b16 %v9768
    %v9806 = vunpack.c.l.b16 %v9769
    %v9807 = vpack.c.b16 %v9792, %v9791
    %v9808 = vpack.c.b16 %v9794, %v9793
    %v9809 = vpack.c.b16 %v9796, %v9795
    %v9810 = vpack.c.b16 %v9798, %v9797
    %v9811 = vpack.c.b16 %v9800, %v9799
    %v9812 = vpack.c.b16 %v9802, %v9801
    %v9813 = vpack.c.b16 %v9804, %v9803
    %v9814 = vpack.c.b16 %v9806, %v9805
    %9823 = vmatprep.subr.bf16.mxu0 0
    %9824 = vmatpush1.bf16.msra.mxu0 %v9807
    %9825 = vmatprep.subr.bf16.mxu0 0
    %9826 = vmatpush1.bf16.msra.mxu0 %v9808
    %9827 = vmatprep.subr.bf16.mxu0 0
    %9828 = vmatpush1.bf16.msra.mxu0 %v9809
    %9829 = vmatprep.subr.bf16.mxu0 0
    %9830 = vmatpush1.bf16.msra.mxu0 %v9810
    %9831 = vmatprep.subr.bf16.mxu0 0
    %9832 = vmatpush1.bf16.msra.mxu0 %v9811
    %9833 = vmatprep.subr.bf16.mxu0 0
    %9834 = vmatpush1.bf16.msra.mxu0 %v9812
    %9835 = vmatprep.subr.bf16.mxu0 0
    %9836 = vmatpush1.bf16.msra.mxu0 %v9813
    %9837 = vmatprep.subr.bf16.mxu0 0
    %9838 = vmatpush1.bf16.msra.mxu0 %v9814
    %9839 = vmatprep.subr.bf16.mxu0 0
    %9840 = vmatpush1.bf16.msra.mxu0 0
    %9841 = vmatprep.subr.bf16.mxu0 0
    %9842 = vmatpush1.bf16.msra.mxu0 0
    %9843 = vmatprep.subr.bf16.mxu0 0
    %9844 = vmatpush1.bf16.msra.mxu0 0
    %9845 = vmatprep.subr.bf16.mxu0 0
    %9846 = vmatpush1.bf16.msra.mxu0 0
    %9847 = vmatprep.subr.bf16.mxu0 0
    %9848 = vmatpush1.bf16.msra.mxu0 0
    %9849 = vmatprep.subr.bf16.mxu0 0
    %9850 = vmatpush1.bf16.msra.mxu0 0
    %9851 = vmatprep.subr.bf16.mxu0 0
    %9852 = vmatpush1.bf16.msra.mxu0 0
    %9853 = vmatprep.subr.bf16.mxu0 0
    %9854 = vmatpush1.bf16.msra.mxu0 0
    %9855 = vmatprep.mubr.bf16.mxu0 0
    %9856 = vmatmul.mubr.bf16.gmra.mrb[0].mxu0 %v9753
    %v9857 = vpop.f32.mrb[0].mxu0
    %v9858 = vadd.f32 %v9774, %v9857
    %v9859 = vpop.f32.mrb[0].mxu0
    %v9860 = vpop.f32.mrb[0].mxu0
    %v9861 = vpop.f32.mrb[0].mxu0
    %9862 = vdwg.mxu0
    %v9863 = vmax.f32 %v9858, 0.0
    %9864 = vset.pattern.permute.xlu0 43
    %9865 = vperm.xlu0 %9864, %v7924
    %v9866 = vpop.permute.xlu0 %9865
    %v9868 = vmul.f32 %v9863, %v9866
    %v9869 = vpack.c.bf16 %v9868, %v9868
    %v9870 = vld [vmem:[#allocation4 + $0x800] sm:$0xf]
    %v9871 = vld [vmem:[#allocation4 + $0x804] sm:$0xf]
    %v9872 = vld [vmem:[#allocation4 + $0x808] sm:$0xf]
    %v9873 = vld [vmem:[#allocation4 + $0x80c] sm:$0xf]
    %v9874 = vld [vmem:[#allocation4 + $0x810] sm:$0xf]
    %v9875 = vld [vmem:[#allocation4 + $0x814] sm:$0xf]
    %v9876 = vld [vmem:[#allocation4 + $0x818] sm:$0xf]
    %v9877 = vld [vmem:[#allocation4 + $0x81c] sm:$0xf]
    %v9878 = vld [vmem:[#allocation4 + $0x820] sm:$0xf]
    %v9879 = vld [vmem:[#allocation4 + $0x824] sm:$0xf]
    %v9880 = vld [vmem:[#allocation4 + $0x828] sm:$0xf]
    %v9881 = vld [vmem:[#allocation4 + $0x82c] sm:$0xf]
    %v9882 = vld [vmem:[#allocation4 + $0x830] sm:$0xf]
    %v9883 = vld [vmem:[#allocation4 + $0x834] sm:$0xf]
    %v9884 = vld [vmem:[#allocation4 + $0x838] sm:$0xf]
    %v9885 = vld [vmem:[#allocation4 + $0x83c] sm:$0xf]
    %v9886 = vld [vmem:[#allocation9 + $0xb] sm:$0x1]
    %v9887 = vlaneseq
    %v9888 = vshrl.u32 %v9887, 7
    %v9889 = vsub.s32 0, %v9888
    %v9890 = vrot.slane %v9886, %v9889
    %v9907 = vunpack.c.l.b16 %v9870
    %v9908 = vunpack.c.l.b16 %v9871
    %v9909 = vunpack.c.l.b16 %v9872
    %v9910 = vunpack.c.l.b16 %v9873
    %v9911 = vunpack.c.l.b16 %v9874
    %v9912 = vunpack.c.l.b16 %v9875
    %v9913 = vunpack.c.l.b16 %v9876
    %v9914 = vunpack.c.l.b16 %v9877
    %v9915 = vunpack.c.l.b16 %v9878
    %v9916 = vunpack.c.l.b16 %v9879
    %v9917 = vunpack.c.l.b16 %v9880
    %v9918 = vunpack.c.l.b16 %v9881
    %v9919 = vunpack.c.l.b16 %v9882
    %v9920 = vunpack.c.l.b16 %v9883
    %v9921 = vunpack.c.l.b16 %v9884
    %v9922 = vunpack.c.l.b16 %v9885
    %v9923 = vpack.c.b16 %v9908, %v9907
    %v9924 = vpack.c.b16 %v9910, %v9909
    %v9925 = vpack.c.b16 %v9912, %v9911
    %v9926 = vpack.c.b16 %v9914, %v9913
    %v9927 = vpack.c.b16 %v9916, %v9915
    %v9928 = vpack.c.b16 %v9918, %v9917
    %v9929 = vpack.c.b16 %v9920, %v9919
    %v9930 = vpack.c.b16 %v9922, %v9921
    %9939 = vmatprep.subr.bf16.mxu0 0
    %9940 = vmatpush1.bf16.msra.mxu0 %v9923
    %9941 = vmatprep.subr.bf16.mxu0 0
    %9942 = vmatpush1.bf16.msra.mxu0 %v9924
    %9943 = vmatprep.subr.bf16.mxu0 0
    %9944 = vmatpush1.bf16.msra.mxu0 %v9925
    %9945 = vmatprep.subr.bf16.mxu0 0
    %9946 = vmatpush1.bf16.msra.mxu0 %v9926
    %9947 = vmatprep.subr.bf16.mxu0 0
    %9948 = vmatpush1.bf16.msra.mxu0 %v9927
    %9949 = vmatprep.subr.bf16.mxu0 0
    %9950 = vmatpush1.bf16.msra.mxu0 %v9928
    %9951 = vmatprep.subr.bf16.mxu0 0
    %9952 = vmatpush1.bf16.msra.mxu0 %v9929
    %9953 = vmatprep.subr.bf16.mxu0 0
    %9954 = vmatpush1.bf16.msra.mxu0 %v9930
    %9955 = vmatprep.subr.bf16.mxu0 0
    %9956 = vmatpush1.bf16.msra.mxu0 0
    %9957 = vmatprep.subr.bf16.mxu0 0
    %9958 = vmatpush1.bf16.msra.mxu0 0
    %9959 = vmatprep.subr.bf16.mxu0 0
    %9960 = vmatpush1.bf16.msra.mxu0 0
    %9961 = vmatprep.subr.bf16.mxu0 0
    %9962 = vmatpush1.bf16.msra.mxu0 0
    %9963 = vmatprep.subr.bf16.mxu0 0
    %9964 = vmatpush1.bf16.msra.mxu0 0
    %9965 = vmatprep.subr.bf16.mxu0 0
    %9966 = vmatpush1.bf16.msra.mxu0 0
    %9967 = vmatprep.subr.bf16.mxu0 0
    %9968 = vmatpush1.bf16.msra.mxu0 0
    %9969 = vmatprep.subr.bf16.mxu0 0
    %9970 = vmatpush1.bf16.msra.mxu0 0
    %9971 = vmatprep.mubr.bf16.mxu0 0
    %9972 = vmatmul.mubr.bf16.gmra.mrb[0].mxu0 %v9869
    %v9973 = vpop.f32.mrb[0].mxu0
    %v9974 = vadd.f32 %v9890, %v9973
    %v9975 = vpop.f32.mrb[0].mxu0
    %v9976 = vpop.f32.mrb[0].mxu0
    %v9977 = vpop.f32.mrb[0].mxu0
    %9978 = vdwg.mxu0
    %v9979 = vmax.f32 %v9974, 0.0
    %9980 = vset.pattern.permute.xlu0 44
    %9981 = vperm.xlu0 %9980, %v7924
    %v9982 = vpop.permute.xlu0 %9981
    %v9984 = vmul.f32 %v9979, %v9982
    %v9985 = vpack.c.bf16 %v9984, %v9984
    %v9986 = vld [vmem:[#allocation9 + $0xc] sm:$0x1]
    %v9987 = vld [vmem:[#allocation9 + $0xd] sm:$0x1]
    %v9988 = vunpack.c.l.bf16 %v9985
    %v9989 = vlaneseq
    %v9990 = vshrl.u32 %v9989, 7
    %v9991 = vsub.s32 0, %v9990
    %v9992 = vrot.slane %v9986, %v9991
    %v9993 = vmul.f32 %v9988, %v9992
    %9994 = vadd.xlane.f32.xlu0 %v9993
    %v9995 = vpop.xlane.xlu0 %9994
    %v9996 = vlaneseq
    %v9997 = vshrl.u32 %v9996, 7
    %v9998 = vsub.s32 0, %v9997
    %v9999 = vrot.slane %v9987, %v9998
    %v10000 = vadd.f32 %v9995, %v9999
    %v10001 = vtanh.pop %v10000
    %vm10002 = vcmask 1024
    %10003 = vst.msk [vmem:[%s6] sm:$0x3] %vm10002, %v10001
    // Predicated region
    $region46: #{forward.1} parent=1 // pred_check
      _
    $region47: #{forward.1} parent=1 // pred_check_branch
      %10005 = sbr.rel (0) target = $region49
    $region48: #{forward.1} parent=1 // pred_region
      _
    $region49: #{forward.1} parent=1 // pred_fallthru
      _
    // Predicated region
    $region50: #{forward.1} parent=1 // pred_check
      _
    $region51: #{forward.1} parent=1 // pred_check_branch
      %10007 = sbr.rel (0) target = $region53
    $region52: #{forward.1} parent=1 // pred_region
      _
    $region53: #{forward.1} parent=1 // pred_fallthru
      _
    %10008 = vsyncpa [#allocation3], 1
    %10009 = vsyncpa [#allocation5], 1
    %10010 = vsyncpa [#allocation8], 1

</llo_original>
